<compile_context>
chip_gen: v7x
topology: tpu7x:2x2x1
jax: 0.10.0
libtpu: 0.0.40
codegen_flags: <defaults>
</compile_context>

<pallas_src>
import functools

import jax
import jax.numpy as jnp
from jax.experimental import pallas as pl
from jax.experimental.pallas import tpu as pltpu


# ---------------------------------------------------------------------------
# Fused trunk kernel (Bt batch elements per grid step)
# ---------------------------------------------------------------------------
def _trunk_kernel(x_ref, w1_ref, b1_ref, w2_ref, b2_ref, w3_ref, b3_ref,
                  w4_ref, b4_ref, o_ref, xp1, xp2, xp3, xp4, *, bt, H, W):
    """x_ref : (bt, H, W, 3) f32
    wN_ref: (9*Cin, Cout) bf16 (im2col-flattened),  bN_ref: (1, Cout) f32
    o_ref : (bt, 64, H//4 * W//4) f32   (channel-major -> free NCHW flatten)
    xpN   : f32 zero-halo padded activation scratch in VMEM."""
    H2, W2 = H // 2, W // 2
    H4, W4 = H // 4, W // 4

    def zero_halo(xp_ref):
        """Zero only the 1-pixel border (interior is overwritten every step)."""
        bt_, hp, wp, c = xp_ref.shape
        z_row = jnp.zeros((bt_, 1, wp, c), xp_ref.dtype)
        z_col = jnp.zeros((bt_, hp, 1, c), xp_ref.dtype)
        xp_ref[:, 0:1, :, :] = z_row
        xp_ref[:, hp - 1:hp, :, :] = z_row
        xp_ref[:, :, 0:1, :] = z_col
        xp_ref[:, :, wp - 1:wp, :] = z_col

    def pad_into(xp_ref, src):
        """src: (bt, h, w, c) f32 -> interior of zero-halo scratch."""
        _, h, w, _ = src.shape
        zero_halo(xp_ref)
        xp_ref[:, 1:h + 1, 1:w + 1, :] = src

    def conv3x3_relu(xp_ref, wf_ref, b_ref, h, w):
        """3x3 'same' conv + bias + ReLU as ONE im2col MXU matmul.

        xp_ref: (bt, h+2, w+2, cin) padded activations; wf_ref: (9*cin, cout)
        bf16; returns (bt, h, w, cout) f32."""
        cin = xp_ref.shape[-1]
        cout = wf_ref.shape[-1]
        # 9 shifted taps (bf16) concatenated along K -> (bt, h, w, 9*cin).
        taps = [xp_ref[:, dy:dy + h, dx:dx + w, :].astype(jnp.bfloat16)
                for dy in range(3) for dx in range(3)]
        patches = jnp.concatenate(taps, axis=-1).reshape(bt * h * w, 9 * cin)
        acc = jnp.dot(patches, wf_ref[...],
                      preferred_element_type=jnp.float32)     # (bt*h*w, cout)
        y = jnp.maximum(acc + b_ref[...], 0.0)                # single epilogue
        return y.reshape(bt, h, w, cout)

    def maxpool2x2(y):
        """2x2 / stride-2 max pool, all intermediates rank <= 4."""
        bt_, h, w, c = y.shape
        y = y.reshape(bt_ * h, w, c)
        # vertical: split a non-minor dim (free) + vreg-wise max
        y = jnp.max(y.reshape(bt_ * h // 2, 2, w, c), axis=1)
        # horizontal: sublane-splitting reshape + max (small relayout)
        y = jnp.max(y.reshape(bt_ * h // 2, w // 2, 2, c), axis=2)
        return y.reshape(bt_, h // 2, w // 2, c)

    # ---- block 1: conv1 -> relu -> conv2 -> relu -> maxpool -----------------
    pad_into(xp1, x_ref[...])
    y = conv3x3_relu(xp1, w1_ref, b1_ref, H, W)               # (bt, H, W, 32)
    pad_into(xp2, y)
    y = conv3x3_relu(xp2, w2_ref, b2_ref, H, W)               # (bt, H, W, 32)
    y = maxpool2x2(y)                                         # (bt, H/2, W/2, 32)
    # TODO(synk): nn.Dropout(0.25) is identity in eval mode; training-mode
    # dropout (pltpu.prng_seed / prng_random_bits masking) not implemented.

    # ---- block 2: conv3 -> relu -> conv4 -> relu -> maxpool -----------------
    pad_into(xp3, y)
    y = conv3x3_relu(xp3, w3_ref, b3_ref, H2, W2)             # (bt, H/2, W/2, 64)
    pad_into(xp4, y)
    y = conv3x3_relu(xp4, w4_ref, b4_ref, H2, W2)             # (bt, H/2, W/2, 64)
    y = maxpool2x2(y)                                         # (bt, H/4, W/4, 64)

    # ---- fused NCHW flatten: write channel-major (c, i*W4+j) so the wrapper's
    # final view(B, -1) is a free contiguous reshape (no XLA transpose op).
    for b in range(bt):
        o_ref[b] = y[b].reshape(H4 * W4, 64).T                # (64, H4*W4)


# ---------------------------------------------------------------------------
# Wrapper
# ---------------------------------------------------------------------------
def _pick_bt(batch):
    """Largest batch block (<=8) that still leaves >=2 grid steps, so both
    v7x TensorCores get work while M stays as fat as possible."""
    if batch <= 1:
        return 1
    best = 1
    for d in range(1, batch + 1):
        if batch % d == 0 and d <= 8 and batch // d >= 2:
            best = d
    return best


def trunk_simple_forward(x_nchw, params, bt=None):
    """x_nchw: (B, 3, H, W) float32 -> feature: (B, 64 * H/4 * W/4)."""
    B, Cin, H, W = x_nchw.shape
    assert H % 4 == 0 and W % 4 == 0, "H and W must be divisible by 4"
    if bt is None:
        bt = _pick_bt(B)
    assert B % bt == 0, (B, bt)
    H2, W2, H4, W4 = H // 2, W // 2, H // 4, W // 4

    # NCHW -> NHWC at the boundary (tiny op at these sizes).
    # TODO(synk): fold into the kernel if it ever shows up in profiles.
    x = jnp.transpose(x_nchw, (0, 2, 3, 1))

    # Flatten each (3,3,Cin,Cout) weight to the im2col layout (9*Cin, Cout) and
    # cast to bf16 for the MXU; biases stay f32 for the epilogue add.
    flat = []
    for (w, b) in params:
        kh, kw, cin, cout = w.shape
        flat.append((w.reshape(kh * kw * cin, cout).astype(jnp.bfloat16),
                     b.astype(jnp.float32)))
    (w1, b1), (w2, b2), (w3, b3), (w4, b4) = flat

    const2 = lambda g: (0, 0)        # weights/biases DMA'd to VMEM once
    out = pl.pallas_call(
        functools.partial(_trunk_kernel, bt=bt, H=H, W=W),
        out_shape=jax.ShapeDtypeStruct((B, 64, H4 * W4), jnp.float32),
        grid=(B // bt,),
        in_specs=[
            pl.BlockSpec((bt, H, W, Cin), lambda g: (g, 0, 0, 0)),
            pl.BlockSpec(w1.shape, const2), pl.BlockSpec(b1.shape, const2),
            pl.BlockSpec(w2.shape, const2), pl.BlockSpec(b2.shape, const2),
            pl.BlockSpec(w3.shape, const2), pl.BlockSpec(b3.shape, const2),
            pl.BlockSpec(w4.shape, const2), pl.BlockSpec(b4.shape, const2),
        ],
        out_specs=pl.BlockSpec((bt, 64, H4 * W4), lambda g: (g, 0, 0)),
        scratch_shapes=[
            pltpu.VMEM((bt, H + 2, W + 2, Cin), jnp.float32),      # conv1 in (padded)
            pltpu.VMEM((bt, H + 2, W + 2, 32), jnp.float32),       # conv2 in
            pltpu.VMEM((bt, H2 + 2, W2 + 2, 32), jnp.float32),     # conv3 in
            pltpu.VMEM((bt, H2 + 2, W2 + 2, 64), jnp.float32),     # conv4 in
        ],
        compiler_params=pltpu.CompilerParams(
            dimension_semantics=("parallel",),
            # ample for these shapes; valid on v5e/v6e (128 MiB) and v7x (64 MiB)
            vmem_limit_bytes=32 * 1024 * 1024),
    )(x, w1, b1, w2, b2, w3, b3, w4, b4)

    # Kernel already wrote (B, C, H4*W4) channel-major -> free contiguous
    # collapse, exactly torch's x.view(x.size(0), -1) on NCHW.
    return out.reshape(B, 64 * H4 * W4)


# ---------------------------------------------------------------------------
# Deterministic synthetic parameters (PyTorch layout -> HWIO)
# ---------------------------------------------------------------------------
def init_params(key):
    shapes = [(32, 3), (32, 32), (64, 32), (64, 64)]
    params = []
    for i, (cout, cin) in enumerate(shapes):
        kw, kb = jax.random.split(jax.random.fold_in(key, i))
        w_pt = jax.random.normal(kw, (cout, cin, 3, 3), jnp.float32) * 0.05
        b = jax.random.normal(kb, (cout,), jnp.float32) * 0.05
        w = jnp.transpose(w_pt, (2, 3, 1, 0))            # (3, 3, Cin, Cout) HWIO
        params.append((w, b.reshape(1, cout)))
    return params


# ---------------------------------------------------------------------------
# Pure-JAX reference (correctness check)
# ---------------------------------------------------------------------------
def _reference_forward(x_nchw, params):
    x = jnp.transpose(x_nchw, (0, 2, 3, 1))
    for i, (w, b) in enumerate(params):
        x = jax.lax.conv_general_dilated(
            x, w, window_strides=(1, 1), padding="SAME",
            dimension_numbers=("NHWC", "HWIO", "NHWC"))
        x = jnp.maximum(x + b.reshape(1, 1, 1, -1), 0.0)
        if i in (1, 3):
            x = jax.lax.reduce_window(x, -jnp.inf, jax.lax.max,
                                      (1, 2, 2, 1), (1, 2, 2, 1), "VALID")
    x = jnp.transpose(x, (0, 3, 1, 2))
    return x.reshape(x.shape[0], -1)


# ---------------------------------------------------------------------------
if __name__ == "__main__":
    key = jax.random.PRNGKey(0)
    k_x, k_p = jax.random.split(key)

    B, C, H, W = 4, 3, 16, 16
    x = jax.random.normal(k_x, (B, C, H, W), jnp.float32)
    params = init_params(k_p)

    fwd = jax.jit(trunk_simple_forward)
    feature = jax.block_until_ready(fwd(x, params))

    expected = (B, 64 * (H // 4) * (W // 4))
    assert feature.shape == expected, (feature.shape, expected)
    assert bool(jnp.isfinite(feature).all())

    ref = _reference_forward(x, params)
    max_err = float(jnp.max(jnp.abs(feature - ref)))
    # bf16 MXU operands (f32 accumulate) -> slightly looser tolerance than f32.
    assert max_err < 5e-2, f"mismatch vs reference, max abs err {max_err}"

    print("KERNEL_OK")
</pallas_src>

<mosaic_0001>
module attributes {stable_mosaic.version = 11 : i64} {
  func.func @_trunk_kernel(%arg0: i32, %arg1: memref<2x16x16x3xf32, #tpu.memory_space<vmem>>, %arg2: memref<27x32xbf16, #tpu.memory_space<vmem>>, %arg3: memref<1x32xf32, #tpu.memory_space<vmem>>, %arg4: memref<288x32xbf16, #tpu.memory_space<vmem>>, %arg5: memref<1x32xf32, #tpu.memory_space<vmem>>, %arg6: memref<288x64xbf16, #tpu.memory_space<vmem>>, %arg7: memref<1x64xf32, #tpu.memory_space<vmem>>, %arg8: memref<576x64xbf16, #tpu.memory_space<vmem>>, %arg9: memref<1x64xf32, #tpu.memory_space<vmem>>, %arg10: memref<2x64x16xf32, #tpu.memory_space<vmem>>, %arg11: memref<2x18x18x3xf32, #tpu.memory_space<vmem>>, %arg12: memref<2x18x18x32xf32, #tpu.memory_space<vmem>>, %arg13: memref<2x10x10x32xf32, #tpu.memory_space<vmem>>, %arg14: memref<2x10x10x64xf32, #tpu.memory_space<vmem>>) attributes {dimension_semantics = [#tpu.dimension_semantics<parallel>], iteration_bounds = array<i64: 2>, scalar_prefetch = 0 : i64, scratch_operands = 4 : i64, tpu.core_type = #tpu.core_type<tc>, window_params = [{transform_indices = @transform_0, window_bounds = array<i64: 2, 16, 16, 3>}, {pipeline_mode = #tpu.pipeline_mode<synchronous>, transform_indices = @transform_1, window_bounds = array<i64: 27, 32>}, {pipeline_mode = #tpu.pipeline_mode<synchronous>, transform_indices = @transform_2, window_bounds = array<i64: 1, 32>}, {pipeline_mode = #tpu.pipeline_mode<synchronous>, transform_indices = @transform_3, window_bounds = array<i64: 288, 32>}, {pipeline_mode = #tpu.pipeline_mode<synchronous>, transform_indices = @transform_4, window_bounds = array<i64: 1, 32>}, {pipeline_mode = #tpu.pipeline_mode<synchronous>, transform_indices = @transform_5, window_bounds = array<i64: 288, 64>}, {pipeline_mode = #tpu.pipeline_mode<synchronous>, transform_indices = @transform_6, window_bounds = array<i64: 1, 64>}, {pipeline_mode = #tpu.pipeline_mode<synchronous>, transform_indices = @transform_7, window_bounds = array<i64: 576, 64>}, {pipeline_mode = #tpu.pipeline_mode<synchronous>, transform_indices = @transform_8, window_bounds = array<i64: 1, 64>}, {transform_indices = @transform_9, window_bounds = array<i64: 2, 64, 16>}]} {
    %c0 = arith.constant 0 : index
    %c0_0 = arith.constant 0 : index
    %c0_1 = arith.constant 0 : index
    %c0_2 = arith.constant 0 : index
    %0 = vector.load %arg1[%c0, %c0_0, %c0_1, %c0_2] : memref<2x16x16x3xf32, #tpu.memory_space<vmem>>, vector<2x16x16x3xf32>
    %cst = arith.constant 0.000000e+00 : f32
    %1 = vector.broadcast %cst : f32 to vector<2x1x18x3xf32>
    %cst_3 = arith.constant 0.000000e+00 : f32
    %2 = vector.broadcast %cst_3 : f32 to vector<2x18x1x3xf32>
    %c0_4 = arith.constant 0 : index
    %c0_5 = arith.constant 0 : index
    %c0_6 = arith.constant 0 : index
    %c0_7 = arith.constant 0 : index
    %3 = vector.load %arg11[%c0_4, %c0_5, %c0_6, %c0_7] : memref<2x18x18x3xf32, #tpu.memory_space<vmem>>, vector<2x1x18x3xf32>
    tpu.vector_store %arg11[%c0_4, %c0_5, %c0_6, %c0_7], %1 {strides = array<i32>} : memref<2x18x18x3xf32, #tpu.memory_space<vmem>>, vector<2x1x18x3xf32>,
    %c0_8 = arith.constant 0 : index
    %c17 = arith.constant 17 : index
    %c0_9 = arith.constant 0 : index
    %c0_10 = arith.constant 0 : index
    %4 = vector.load %arg11[%c0_8, %c17, %c0_9, %c0_10] : memref<2x18x18x3xf32, #tpu.memory_space<vmem>>, vector<2x1x18x3xf32>
    tpu.vector_store %arg11[%c0_8, %c17, %c0_9, %c0_10], %1 {strides = array<i32>} : memref<2x18x18x3xf32, #tpu.memory_space<vmem>>, vector<2x1x18x3xf32>,
    %c0_11 = arith.constant 0 : index
    %c0_12 = arith.constant 0 : index
    %c0_13 = arith.constant 0 : index
    %c0_14 = arith.constant 0 : index
    %5 = vector.load %arg11[%c0_11, %c0_12, %c0_13, %c0_14] : memref<2x18x18x3xf32, #tpu.memory_space<vmem>>, vector<2x18x1x3xf32>
    tpu.vector_store %arg11[%c0_11, %c0_12, %c0_13, %c0_14], %2 {strides = array<i32>} : memref<2x18x18x3xf32, #tpu.memory_space<vmem>>, vector<2x18x1x3xf32>,
    %c0_15 = arith.constant 0 : index
    %c0_16 = arith.constant 0 : index
    %c17_17 = arith.constant 17 : index
    %c0_18 = arith.constant 0 : index
    %6 = vector.load %arg11[%c0_15, %c0_16, %c17_17, %c0_18] : memref<2x18x18x3xf32, #tpu.memory_space<vmem>>, vector<2x18x1x3xf32>
    tpu.vector_store %arg11[%c0_15, %c0_16, %c17_17, %c0_18], %2 {strides = array<i32>} : memref<2x18x18x3xf32, #tpu.memory_space<vmem>>, vector<2x18x1x3xf32>,
    %c0_19 = arith.constant 0 : index
    %c1 = arith.constant 1 : index
    %c1_20 = arith.constant 1 : index
    %c0_21 = arith.constant 0 : index
    %7 = vector.load %arg11[%c0_19, %c1, %c1_20, %c0_21] : memref<2x18x18x3xf32, #tpu.memory_space<vmem>>, vector<2x16x16x3xf32>
    tpu.vector_store %arg11[%c0_19, %c1, %c1_20, %c0_21], %0 {strides = array<i32>} : memref<2x18x18x3xf32, #tpu.memory_space<vmem>>, vector<2x16x16x3xf32>,
    %c0_22 = arith.constant 0 : index
    %c0_23 = arith.constant 0 : index
    %c0_24 = arith.constant 0 : index
    %c0_25 = arith.constant 0 : index
    %8 = vector.load %arg11[%c0_22, %c0_23, %c0_24, %c0_25] : memref<2x18x18x3xf32, #tpu.memory_space<vmem>>, vector<2x16x16x3xf32>
    %9 = arith.truncf %8 : vector<2x16x16x3xf32> to vector<2x16x16x3xbf16>
    %c0_26 = arith.constant 0 : index
    %c0_27 = arith.constant 0 : index
    %c1_28 = arith.constant 1 : index
    %c0_29 = arith.constant 0 : index
    %10 = vector.load %arg11[%c0_26, %c0_27, %c1_28, %c0_29] : memref<2x18x18x3xf32, #tpu.memory_space<vmem>>, vector<2x16x16x3xf32>
    %11 = arith.truncf %10 : vector<2x16x16x3xf32> to vector<2x16x16x3xbf16>
    %c0_30 = arith.constant 0 : index
    %c0_31 = arith.constant 0 : index
    %c2 = arith.constant 2 : index
    %c0_32 = arith.constant 0 : index
    %12 = vector.load %arg11[%c0_30, %c0_31, %c2, %c0_32] : memref<2x18x18x3xf32, #tpu.memory_space<vmem>>, vector<2x16x16x3xf32>
    %13 = arith.truncf %12 : vector<2x16x16x3xf32> to vector<2x16x16x3xbf16>
    %c0_33 = arith.constant 0 : index
    %c1_34 = arith.constant 1 : index
    %c0_35 = arith.constant 0 : index
    %c0_36 = arith.constant 0 : index
    %14 = vector.load %arg11[%c0_33, %c1_34, %c0_35, %c0_36] : memref<2x18x18x3xf32, #tpu.memory_space<vmem>>, vector<2x16x16x3xf32>
    %15 = arith.truncf %14 : vector<2x16x16x3xf32> to vector<2x16x16x3xbf16>
    %c0_37 = arith.constant 0 : index
    %c1_38 = arith.constant 1 : index
    %c1_39 = arith.constant 1 : index
    %c0_40 = arith.constant 0 : index
    %16 = vector.load %arg11[%c0_37, %c1_38, %c1_39, %c0_40] : memref<2x18x18x3xf32, #tpu.memory_space<vmem>>, vector<2x16x16x3xf32>
    %17 = arith.truncf %16 : vector<2x16x16x3xf32> to vector<2x16x16x3xbf16>
    %c0_41 = arith.constant 0 : index
    %c1_42 = arith.constant 1 : index
    %c2_43 = arith.constant 2 : index
    %c0_44 = arith.constant 0 : index
    %18 = vector.load %arg11[%c0_41, %c1_42, %c2_43, %c0_44] : memref<2x18x18x3xf32, #tpu.memory_space<vmem>>, vector<2x16x16x3xf32>
    %19 = arith.truncf %18 : vector<2x16x16x3xf32> to vector<2x16x16x3xbf16>
    %c0_45 = arith.constant 0 : index
    %c2_46 = arith.constant 2 : index
    %c0_47 = arith.constant 0 : index
    %c0_48 = arith.constant 0 : index
    %20 = vector.load %arg11[%c0_45, %c2_46, %c0_47, %c0_48] : memref<2x18x18x3xf32, #tpu.memory_space<vmem>>, vector<2x16x16x3xf32>
    %21 = arith.truncf %20 : vector<2x16x16x3xf32> to vector<2x16x16x3xbf16>
    %c0_49 = arith.constant 0 : index
    %c2_50 = arith.constant 2 : index
    %c1_51 = arith.constant 1 : index
    %c0_52 = arith.constant 0 : index
    %22 = vector.load %arg11[%c0_49, %c2_50, %c1_51, %c0_52] : memref<2x18x18x3xf32, #tpu.memory_space<vmem>>, vector<2x16x16x3xf32>
    %23 = arith.truncf %22 : vector<2x16x16x3xf32> to vector<2x16x16x3xbf16>
    %c0_53 = arith.constant 0 : index
    %c2_54 = arith.constant 2 : index
    %c2_55 = arith.constant 2 : index
    %c0_56 = arith.constant 0 : index
    %24 = vector.load %arg11[%c0_53, %c2_54, %c2_55, %c0_56] : memref<2x18x18x3xf32, #tpu.memory_space<vmem>>, vector<2x16x16x3xf32>
    %25 = arith.truncf %24 : vector<2x16x16x3xf32> to vector<2x16x16x3xbf16>
    %26 = tpu.concatenate %9, %11, %13, %15, %17, %19, %21, %23, %25 in 3 : vector<2x16x16x3xbf16>, vector<2x16x16x3xbf16>, vector<2x16x16x3xbf16>, vector<2x16x16x3xbf16>, vector<2x16x16x3xbf16>, vector<2x16x16x3xbf16>, vector<2x16x16x3xbf16>, vector<2x16x16x3xbf16>, vector<2x16x16x3xbf16> -> vector<2x16x16x27xbf16>
    %27 = vector.shape_cast %26 : vector<2x16x16x27xbf16> to vector<512x27xbf16>
    %c0_57 = arith.constant 0 : index
    %c0_58 = arith.constant 0 : index
    %28 = vector.load %arg2[%c0_57, %c0_58] : memref<27x32xbf16, #tpu.memory_space<vmem>>, vector<27x32xbf16>
    %cst_59 = arith.constant dense<0.000000e+00> : vector<512x32xf32>
    %29 = tpu.matmul %27, %28, %cst_59 {dimension_numbers = #tpu.dot_dimension_numbers<[1], [0], [0], [1], [0, 0, 1, 1], [], []>} : vector<512x27xbf16>, vector<27x32xbf16>, vector<512x32xf32> -> vector<512x32xf32>
    %c0_60 = arith.constant 0 : index
    %c0_61 = arith.constant 0 : index
    %30 = vector.load %arg3[%c0_60, %c0_61] : memref<1x32xf32, #tpu.memory_space<vmem>>, vector<1x32xf32>
    %31 = vector.broadcast %30 : vector<1x32xf32> to vector<512x32xf32>
    %32 = arith.addf %29, %31 : vector<512x32xf32>
    %cst_62 = arith.constant 0.000000e+00 : f32
    %33 = vector.broadcast %cst_62 : f32 to vector<512x32xf32>
    %34 = arith.maximumf %32, %33 : vector<512x32xf32>
    %35 = vector.shape_cast %34 : vector<512x32xf32> to vector<2x16x16x32xf32>
    %cst_63 = arith.constant 0.000000e+00 : f32
    %36 = vector.broadcast %cst_63 : f32 to vector<2x1x18x32xf32>
    %cst_64 = arith.constant 0.000000e+00 : f32
    %37 = vector.broadcast %cst_64 : f32 to vector<2x18x1x32xf32>
    %c0_65 = arith.constant 0 : index
    %c0_66 = arith.constant 0 : index
    %c0_67 = arith.constant 0 : index
    %c0_68 = arith.constant 0 : index
    %38 = vector.load %arg12[%c0_65, %c0_66, %c0_67, %c0_68] : memref<2x18x18x32xf32, #tpu.memory_space<vmem>>, vector<2x1x18x32xf32>
    tpu.vector_store %arg12[%c0_65, %c0_66, %c0_67, %c0_68], %36 {strides = array<i32>} : memref<2x18x18x32xf32, #tpu.memory_space<vmem>>, vector<2x1x18x32xf32>,
    %c0_69 = arith.constant 0 : index
    %c17_70 = arith.constant 17 : index
    %c0_71 = arith.constant 0 : index
    %c0_72 = arith.constant 0 : index
    %39 = vector.load %arg12[%c0_69, %c17_70, %c0_71, %c0_72] : memref<2x18x18x32xf32, #tpu.memory_space<vmem>>, vector<2x1x18x32xf32>
    tpu.vector_store %arg12[%c0_69, %c17_70, %c0_71, %c0_72], %36 {strides = array<i32>} : memref<2x18x18x32xf32, #tpu.memory_space<vmem>>, vector<2x1x18x32xf32>,
    %c0_73 = arith.constant 0 : index
    %c0_74 = arith.constant 0 : index
    %c0_75 = arith.constant 0 : index
    %c0_76 = arith.constant 0 : index
    %40 = vector.load %arg12[%c0_73, %c0_74, %c0_75, %c0_76] : memref<2x18x18x32xf32, #tpu.memory_space<vmem>>, vector<2x18x1x32xf32>
    tpu.vector_store %arg12[%c0_73, %c0_74, %c0_75, %c0_76], %37 {strides = array<i32>} : memref<2x18x18x32xf32, #tpu.memory_space<vmem>>, vector<2x18x1x32xf32>,
    %c0_77 = arith.constant 0 : index
    %c0_78 = arith.constant 0 : index
    %c17_79 = arith.constant 17 : index
    %c0_80 = arith.constant 0 : index
    %41 = vector.load %arg12[%c0_77, %c0_78, %c17_79, %c0_80] : memref<2x18x18x32xf32, #tpu.memory_space<vmem>>, vector<2x18x1x32xf32>
    tpu.vector_store %arg12[%c0_77, %c0_78, %c17_79, %c0_80], %37 {strides = array<i32>} : memref<2x18x18x32xf32, #tpu.memory_space<vmem>>, vector<2x18x1x32xf32>,
    %c0_81 = arith.constant 0 : index
    %c1_82 = arith.constant 1 : index
    %c1_83 = arith.constant 1 : index
    %c0_84 = arith.constant 0 : index
    %42 = vector.load %arg12[%c0_81, %c1_82, %c1_83, %c0_84] : memref<2x18x18x32xf32, #tpu.memory_space<vmem>>, vector<2x16x16x32xf32>
    tpu.vector_store %arg12[%c0_81, %c1_82, %c1_83, %c0_84], %35 {strides = array<i32>} : memref<2x18x18x32xf32, #tpu.memory_space<vmem>>, vector<2x16x16x32xf32>,
    %c0_85 = arith.constant 0 : index
    %c0_86 = arith.constant 0 : index
    %c0_87 = arith.constant 0 : index
    %c0_88 = arith.constant 0 : index
    %43 = vector.load %arg12[%c0_85, %c0_86, %c0_87, %c0_88] : memref<2x18x18x32xf32, #tpu.memory_space<vmem>>, vector<2x16x16x32xf32>
    %44 = arith.truncf %43 : vector<2x16x16x32xf32> to vector<2x16x16x32xbf16>
    %c0_89 = arith.constant 0 : index
    %c0_90 = arith.constant 0 : index
    %c1_91 = arith.constant 1 : index
    %c0_92 = arith.constant 0 : index
    %45 = vector.load %arg12[%c0_89, %c0_90, %c1_91, %c0_92] : memref<2x18x18x32xf32, #tpu.memory_space<vmem>>, vector<2x16x16x32xf32>
    %46 = arith.truncf %45 : vector<2x16x16x32xf32> to vector<2x16x16x32xbf16>
    %c0_93 = arith.constant 0 : index
    %c0_94 = arith.constant 0 : index
    %c2_95 = arith.constant 2 : index
    %c0_96 = arith.constant 0 : index
    %47 = vector.load %arg12[%c0_93, %c0_94, %c2_95, %c0_96] : memref<2x18x18x32xf32, #tpu.memory_space<vmem>>, vector<2x16x16x32xf32>
    %48 = arith.truncf %47 : vector<2x16x16x32xf32> to vector<2x16x16x32xbf16>
    %c0_97 = arith.constant 0 : index
    %c1_98 = arith.constant 1 : index
    %c0_99 = arith.constant 0 : index
    %c0_100 = arith.constant 0 : index
    %49 = vector.load %arg12[%c0_97, %c1_98, %c0_99, %c0_100] : memref<2x18x18x32xf32, #tpu.memory_space<vmem>>, vector<2x16x16x32xf32>
    %50 = arith.truncf %49 : vector<2x16x16x32xf32> to vector<2x16x16x32xbf16>
    %c0_101 = arith.constant 0 : index
    %c1_102 = arith.constant 1 : index
    %c1_103 = arith.constant 1 : index
    %c0_104 = arith.constant 0 : index
    %51 = vector.load %arg12[%c0_101, %c1_102, %c1_103, %c0_104] : memref<2x18x18x32xf32, #tpu.memory_space<vmem>>, vector<2x16x16x32xf32>
    %52 = arith.truncf %51 : vector<2x16x16x32xf32> to vector<2x16x16x32xbf16>
    %c0_105 = arith.constant 0 : index
    %c1_106 = arith.constant 1 : index
    %c2_107 = arith.constant 2 : index
    %c0_108 = arith.constant 0 : index
    %53 = vector.load %arg12[%c0_105, %c1_106, %c2_107, %c0_108] : memref<2x18x18x32xf32, #tpu.memory_space<vmem>>, vector<2x16x16x32xf32>
    %54 = arith.truncf %53 : vector<2x16x16x32xf32> to vector<2x16x16x32xbf16>
    %c0_109 = arith.constant 0 : index
    %c2_110 = arith.constant 2 : index
    %c0_111 = arith.constant 0 : index
    %c0_112 = arith.constant 0 : index
    %55 = vector.load %arg12[%c0_109, %c2_110, %c0_111, %c0_112] : memref<2x18x18x32xf32, #tpu.memory_space<vmem>>, vector<2x16x16x32xf32>
    %56 = arith.truncf %55 : vector<2x16x16x32xf32> to vector<2x16x16x32xbf16>
    %c0_113 = arith.constant 0 : index
    %c2_114 = arith.constant 2 : index
    %c1_115 = arith.constant 1 : index
    %c0_116 = arith.constant 0 : index
    %57 = vector.load %arg12[%c0_113, %c2_114, %c1_115, %c0_116] : memref<2x18x18x32xf32, #tpu.memory_space<vmem>>, vector<2x16x16x32xf32>
    %58 = arith.truncf %57 : vector<2x16x16x32xf32> to vector<2x16x16x32xbf16>
    %c0_117 = arith.constant 0 : index
    %c2_118 = arith.constant 2 : index
    %c2_119 = arith.constant 2 : index
    %c0_120 = arith.constant 0 : index
    %59 = vector.load %arg12[%c0_117, %c2_118, %c2_119, %c0_120] : memref<2x18x18x32xf32, #tpu.memory_space<vmem>>, vector<2x16x16x32xf32>
    %60 = arith.truncf %59 : vector<2x16x16x32xf32> to vector<2x16x16x32xbf16>
    %61 = tpu.concatenate %44, %46, %48, %50, %52, %54, %56, %58, %60 in 3 : vector<2x16x16x32xbf16>, vector<2x16x16x32xbf16>, vector<2x16x16x32xbf16>, vector<2x16x16x32xbf16>, vector<2x16x16x32xbf16>, vector<2x16x16x32xbf16>, vector<2x16x16x32xbf16>, vector<2x16x16x32xbf16>, vector<2x16x16x32xbf16> -> vector<2x16x16x288xbf16>
    %62 = vector.shape_cast %61 : vector<2x16x16x288xbf16> to vector<512x288xbf16>
    %c0_121 = arith.constant 0 : index
    %c0_122 = arith.constant 0 : index
    %63 = vector.load %arg4[%c0_121, %c0_122] : memref<288x32xbf16, #tpu.memory_space<vmem>>, vector<288x32xbf16>
    %cst_123 = arith.constant dense<0.000000e+00> : vector<512x32xf32>
    %64 = tpu.matmul %62, %63, %cst_123 {dimension_numbers = #tpu.dot_dimension_numbers<[1], [0], [0], [1], [0, 0, 1, 1], [], []>} : vector<512x288xbf16>, vector<288x32xbf16>, vector<512x32xf32> -> vector<512x32xf32>
    %c0_124 = arith.constant 0 : index
    %c0_125 = arith.constant 0 : index
    %65 = vector.load %arg5[%c0_124, %c0_125] : memref<1x32xf32, #tpu.memory_space<vmem>>, vector<1x32xf32>
    %66 = vector.broadcast %65 : vector<1x32xf32> to vector<512x32xf32>
    %67 = arith.addf %64, %66 : vector<512x32xf32>
    %cst_126 = arith.constant 0.000000e+00 : f32
    %68 = vector.broadcast %cst_126 : f32 to vector<512x32xf32>
    %69 = arith.maximumf %67, %68 : vector<512x32xf32>
    %70 = vector.shape_cast %69 : vector<512x32xf32> to vector<2x16x16x32xf32>
    %71 = vector.shape_cast %70 : vector<2x16x16x32xf32> to vector<32x16x32xf32>
    %72 = vector.shape_cast %71 : vector<32x16x32xf32> to vector<16x2x16x32xf32>
    %cst_127 = arith.constant dense<0xFF800000> : vector<16x16x32xf32>
    %73 = vector.multi_reduction <maximumf>, %72, %cst_127 [1] : vector<16x2x16x32xf32> to vector<16x16x32xf32>
    %74 = vector.shape_cast %73 : vector<16x16x32xf32> to vector<16x8x2x32xf32>
    %cst_128 = arith.constant dense<0xFF800000> : vector<16x8x32xf32>
    %75 = vector.multi_reduction <maximumf>, %74, %cst_128 [2] : vector<16x8x2x32xf32> to vector<16x8x32xf32>
    %76 = vector.shape_cast %75 : vector<16x8x32xf32> to vector<2x8x8x32xf32>
    %cst_129 = arith.constant 0.000000e+00 : f32
    %77 = vector.broadcast %cst_129 : f32 to vector<2x1x10x32xf32>
    %cst_130 = arith.constant 0.000000e+00 : f32
    %78 = vector.broadcast %cst_130 : f32 to vector<2x10x1x32xf32>
    %c0_131 = arith.constant 0 : index
    %c0_132 = arith.constant 0 : index
    %c0_133 = arith.constant 0 : index
    %c0_134 = arith.constant 0 : index
    %79 = vector.load %arg13[%c0_131, %c0_132, %c0_133, %c0_134] : memref<2x10x10x32xf32, #tpu.memory_space<vmem>>, vector<2x1x10x32xf32>
    tpu.vector_store %arg13[%c0_131, %c0_132, %c0_133, %c0_134], %77 {strides = array<i32>} : memref<2x10x10x32xf32, #tpu.memory_space<vmem>>, vector<2x1x10x32xf32>,
    %c0_135 = arith.constant 0 : index
    %c9 = arith.constant 9 : index
    %c0_136 = arith.constant 0 : index
    %c0_137 = arith.constant 0 : index
    %80 = vector.load %arg13[%c0_135, %c9, %c0_136, %c0_137] : memref<2x10x10x32xf32, #tpu.memory_space<vmem>>, vector<2x1x10x32xf32>
    tpu.vector_store %arg13[%c0_135, %c9, %c0_136, %c0_137], %77 {strides = array<i32>} : memref<2x10x10x32xf32, #tpu.memory_space<vmem>>, vector<2x1x10x32xf32>,
    %c0_138 = arith.constant 0 : index
    %c0_139 = arith.constant 0 : index
    %c0_140 = arith.constant 0 : index
    %c0_141 = arith.constant 0 : index
    %81 = vector.load %arg13[%c0_138, %c0_139, %c0_140, %c0_141] : memref<2x10x10x32xf32, #tpu.memory_space<vmem>>, vector<2x10x1x32xf32>
    tpu.vector_store %arg13[%c0_138, %c0_139, %c0_140, %c0_141], %78 {strides = array<i32>} : memref<2x10x10x32xf32, #tpu.memory_space<vmem>>, vector<2x10x1x32xf32>,
    %c0_142 = arith.constant 0 : index
    %c0_143 = arith.constant 0 : index
    %c9_144 = arith.constant 9 : index
    %c0_145 = arith.constant 0 : index
    %82 = vector.load %arg13[%c0_142, %c0_143, %c9_144, %c0_145] : memref<2x10x10x32xf32, #tpu.memory_space<vmem>>, vector<2x10x1x32xf32>
    tpu.vector_store %arg13[%c0_142, %c0_143, %c9_144, %c0_145], %78 {strides = array<i32>} : memref<2x10x10x32xf32, #tpu.memory_space<vmem>>, vector<2x10x1x32xf32>,
    %c0_146 = arith.constant 0 : index
    %c1_147 = arith.constant 1 : index
    %c1_148 = arith.constant 1 : index
    %c0_149 = arith.constant 0 : index
    %83 = vector.load %arg13[%c0_146, %c1_147, %c1_148, %c0_149] : memref<2x10x10x32xf32, #tpu.memory_space<vmem>>, vector<2x8x8x32xf32>
    tpu.vector_store %arg13[%c0_146, %c1_147, %c1_148, %c0_149], %76 {strides = array<i32>} : memref<2x10x10x32xf32, #tpu.memory_space<vmem>>, vector<2x8x8x32xf32>,
    %c0_150 = arith.constant 0 : index
    %c0_151 = arith.constant 0 : index
    %c0_152 = arith.constant 0 : index
    %c0_153 = arith.constant 0 : index
    %84 = vector.load %arg13[%c0_150, %c0_151, %c0_152, %c0_153] : memref<2x10x10x32xf32, #tpu.memory_space<vmem>>, vector<2x8x8x32xf32>
    %85 = arith.truncf %84 : vector<2x8x8x32xf32> to vector<2x8x8x32xbf16>
    %c0_154 = arith.constant 0 : index
    %c0_155 = arith.constant 0 : index
    %c1_156 = arith.constant 1 : index
    %c0_157 = arith.constant 0 : index
    %86 = vector.load %arg13[%c0_154, %c0_155, %c1_156, %c0_157] : memref<2x10x10x32xf32, #tpu.memory_space<vmem>>, vector<2x8x8x32xf32>
    %87 = arith.truncf %86 : vector<2x8x8x32xf32> to vector<2x8x8x32xbf16>
    %c0_158 = arith.constant 0 : index
    %c0_159 = arith.constant 0 : index
    %c2_160 = arith.constant 2 : index
    %c0_161 = arith.constant 0 : index
    %88 = vector.load %arg13[%c0_158, %c0_159, %c2_160, %c0_161] : memref<2x10x10x32xf32, #tpu.memory_space<vmem>>, vector<2x8x8x32xf32>
    %89 = arith.truncf %88 : vector<2x8x8x32xf32> to vector<2x8x8x32xbf16>
    %c0_162 = arith.constant 0 : index
    %c1_163 = arith.constant 1 : index
    %c0_164 = arith.constant 0 : index
    %c0_165 = arith.constant 0 : index
    %90 = vector.load %arg13[%c0_162, %c1_163, %c0_164, %c0_165] : memref<2x10x10x32xf32, #tpu.memory_space<vmem>>, vector<2x8x8x32xf32>
    %91 = arith.truncf %90 : vector<2x8x8x32xf32> to vector<2x8x8x32xbf16>
    %c0_166 = arith.constant 0 : index
    %c1_167 = arith.constant 1 : index
    %c1_168 = arith.constant 1 : index
    %c0_169 = arith.constant 0 : index
    %92 = vector.load %arg13[%c0_166, %c1_167, %c1_168, %c0_169] : memref<2x10x10x32xf32, #tpu.memory_space<vmem>>, vector<2x8x8x32xf32>
    %93 = arith.truncf %92 : vector<2x8x8x32xf32> to vector<2x8x8x32xbf16>
    %c0_170 = arith.constant 0 : index
    %c1_171 = arith.constant 1 : index
    %c2_172 = arith.constant 2 : index
    %c0_173 = arith.constant 0 : index
    %94 = vector.load %arg13[%c0_170, %c1_171, %c2_172, %c0_173] : memref<2x10x10x32xf32, #tpu.memory_space<vmem>>, vector<2x8x8x32xf32>
    %95 = arith.truncf %94 : vector<2x8x8x32xf32> to vector<2x8x8x32xbf16>
    %c0_174 = arith.constant 0 : index
    %c2_175 = arith.constant 2 : index
    %c0_176 = arith.constant 0 : index
    %c0_177 = arith.constant 0 : index
    %96 = vector.load %arg13[%c0_174, %c2_175, %c0_176, %c0_177] : memref<2x10x10x32xf32, #tpu.memory_space<vmem>>, vector<2x8x8x32xf32>
    %97 = arith.truncf %96 : vector<2x8x8x32xf32> to vector<2x8x8x32xbf16>
    %c0_178 = arith.constant 0 : index
    %c2_179 = arith.constant 2 : index
    %c1_180 = arith.constant 1 : index
    %c0_181 = arith.constant 0 : index
    %98 = vector.load %arg13[%c0_178, %c2_179, %c1_180, %c0_181] : memref<2x10x10x32xf32, #tpu.memory_space<vmem>>, vector<2x8x8x32xf32>
    %99 = arith.truncf %98 : vector<2x8x8x32xf32> to vector<2x8x8x32xbf16>
    %c0_182 = arith.constant 0 : index
    %c2_183 = arith.constant 2 : index
    %c2_184 = arith.constant 2 : index
    %c0_185 = arith.constant 0 : index
    %100 = vector.load %arg13[%c0_182, %c2_183, %c2_184, %c0_185] : memref<2x10x10x32xf32, #tpu.memory_space<vmem>>, vector<2x8x8x32xf32>
    %101 = arith.truncf %100 : vector<2x8x8x32xf32> to vector<2x8x8x32xbf16>
    %102 = tpu.concatenate %85, %87, %89, %91, %93, %95, %97, %99, %101 in 3 : vector<2x8x8x32xbf16>, vector<2x8x8x32xbf16>, vector<2x8x8x32xbf16>, vector<2x8x8x32xbf16>, vector<2x8x8x32xbf16>, vector<2x8x8x32xbf16>, vector<2x8x8x32xbf16>, vector<2x8x8x32xbf16>, vector<2x8x8x32xbf16> -> vector<2x8x8x288xbf16>
    %103 = vector.shape_cast %102 : vector<2x8x8x288xbf16> to vector<128x288xbf16>
    %c0_186 = arith.constant 0 : index
    %c0_187 = arith.constant 0 : index
    %104 = vector.load %arg6[%c0_186, %c0_187] : memref<288x64xbf16, #tpu.memory_space<vmem>>, vector<288x64xbf16>
    %cst_188 = arith.constant dense<0.000000e+00> : vector<128x64xf32>
    %105 = tpu.matmul %103, %104, %cst_188 {dimension_numbers = #tpu.dot_dimension_numbers<[1], [0], [0], [1], [0, 0, 1, 1], [], []>} : vector<128x288xbf16>, vector<288x64xbf16>, vector<128x64xf32> -> vector<128x64xf32>
    %c0_189 = arith.constant 0 : index
    %c0_190 = arith.constant 0 : index
    %106 = vector.load %arg7[%c0_189, %c0_190] : memref<1x64xf32, #tpu.memory_space<vmem>>, vector<1x64xf32>
    %107 = vector.broadcast %106 : vector<1x64xf32> to vector<128x64xf32>
    %108 = arith.addf %105, %107 : vector<128x64xf32>
    %cst_191 = arith.constant 0.000000e+00 : f32
    %109 = vector.broadcast %cst_191 : f32 to vector<128x64xf32>
    %110 = arith.maximumf %108, %109 : vector<128x64xf32>
    %111 = vector.shape_cast %110 : vector<128x64xf32> to vector<2x8x8x64xf32>
    %cst_192 = arith.constant 0.000000e+00 : f32
    %112 = vector.broadcast %cst_192 : f32 to vector<2x1x10x64xf32>
    %cst_193 = arith.constant 0.000000e+00 : f32
    %113 = vector.broadcast %cst_193 : f32 to vector<2x10x1x64xf32>
    %c0_194 = arith.constant 0 : index
    %c0_195 = arith.constant 0 : index
    %c0_196 = arith.constant 0 : index
    %c0_197 = arith.constant 0 : index
    %114 = vector.load %arg14[%c0_194, %c0_195, %c0_196, %c0_197] : memref<2x10x10x64xf32, #tpu.memory_space<vmem>>, vector<2x1x10x64xf32>
    tpu.vector_store %arg14[%c0_194, %c0_195, %c0_196, %c0_197], %112 {strides = array<i32>} : memref<2x10x10x64xf32, #tpu.memory_space<vmem>>, vector<2x1x10x64xf32>,
    %c0_198 = arith.constant 0 : index
    %c9_199 = arith.constant 9 : index
    %c0_200 = arith.constant 0 : index
    %c0_201 = arith.constant 0 : index
    %115 = vector.load %arg14[%c0_198, %c9_199, %c0_200, %c0_201] : memref<2x10x10x64xf32, #tpu.memory_space<vmem>>, vector<2x1x10x64xf32>
    tpu.vector_store %arg14[%c0_198, %c9_199, %c0_200, %c0_201], %112 {strides = array<i32>} : memref<2x10x10x64xf32, #tpu.memory_space<vmem>>, vector<2x1x10x64xf32>,
    %c0_202 = arith.constant 0 : index
    %c0_203 = arith.constant 0 : index
    %c0_204 = arith.constant 0 : index
    %c0_205 = arith.constant 0 : index
    %116 = vector.load %arg14[%c0_202, %c0_203, %c0_204, %c0_205] : memref<2x10x10x64xf32, #tpu.memory_space<vmem>>, vector<2x10x1x64xf32>
    tpu.vector_store %arg14[%c0_202, %c0_203, %c0_204, %c0_205], %113 {strides = array<i32>} : memref<2x10x10x64xf32, #tpu.memory_space<vmem>>, vector<2x10x1x64xf32>,
    %c0_206 = arith.constant 0 : index
    %c0_207 = arith.constant 0 : index
    %c9_208 = arith.constant 9 : index
    %c0_209 = arith.constant 0 : index
    %117 = vector.load %arg14[%c0_206, %c0_207, %c9_208, %c0_209] : memref<2x10x10x64xf32, #tpu.memory_space<vmem>>, vector<2x10x1x64xf32>
    tpu.vector_store %arg14[%c0_206, %c0_207, %c9_208, %c0_209], %113 {strides = array<i32>} : memref<2x10x10x64xf32, #tpu.memory_space<vmem>>, vector<2x10x1x64xf32>,
    %c0_210 = arith.constant 0 : index
    %c1_211 = arith.constant 1 : index
    %c1_212 = arith.constant 1 : index
    %c0_213 = arith.constant 0 : index
    %118 = vector.load %arg14[%c0_210, %c1_211, %c1_212, %c0_213] : memref<2x10x10x64xf32, #tpu.memory_space<vmem>>, vector<2x8x8x64xf32>
    tpu.vector_store %arg14[%c0_210, %c1_211, %c1_212, %c0_213], %111 {strides = array<i32>} : memref<2x10x10x64xf32, #tpu.memory_space<vmem>>, vector<2x8x8x64xf32>,
    %c0_214 = arith.constant 0 : index
    %c0_215 = arith.constant 0 : index
    %c0_216 = arith.constant 0 : index
    %c0_217 = arith.constant 0 : index
    %119 = vector.load %arg14[%c0_214, %c0_215, %c0_216, %c0_217] : memref<2x10x10x64xf32, #tpu.memory_space<vmem>>, vector<2x8x8x64xf32>
    %120 = arith.truncf %119 : vector<2x8x8x64xf32> to vector<2x8x8x64xbf16>
    %c0_218 = arith.constant 0 : index
    %c0_219 = arith.constant 0 : index
    %c1_220 = arith.constant 1 : index
    %c0_221 = arith.constant 0 : index
    %121 = vector.load %arg14[%c0_218, %c0_219, %c1_220, %c0_221] : memref<2x10x10x64xf32, #tpu.memory_space<vmem>>, vector<2x8x8x64xf32>
    %122 = arith.truncf %121 : vector<2x8x8x64xf32> to vector<2x8x8x64xbf16>
    %c0_222 = arith.constant 0 : index
    %c0_223 = arith.constant 0 : index
    %c2_224 = arith.constant 2 : index
    %c0_225 = arith.constant 0 : index
    %123 = vector.load %arg14[%c0_222, %c0_223, %c2_224, %c0_225] : memref<2x10x10x64xf32, #tpu.memory_space<vmem>>, vector<2x8x8x64xf32>
    %124 = arith.truncf %123 : vector<2x8x8x64xf32> to vector<2x8x8x64xbf16>
    %c0_226 = arith.constant 0 : index
    %c1_227 = arith.constant 1 : index
    %c0_228 = arith.constant 0 : index
    %c0_229 = arith.constant 0 : index
    %125 = vector.load %arg14[%c0_226, %c1_227, %c0_228, %c0_229] : memref<2x10x10x64xf32, #tpu.memory_space<vmem>>, vector<2x8x8x64xf32>
    %126 = arith.truncf %125 : vector<2x8x8x64xf32> to vector<2x8x8x64xbf16>
    %c0_230 = arith.constant 0 : index
    %c1_231 = arith.constant 1 : index
    %c1_232 = arith.constant 1 : index
    %c0_233 = arith.constant 0 : index
    %127 = vector.load %arg14[%c0_230, %c1_231, %c1_232, %c0_233] : memref<2x10x10x64xf32, #tpu.memory_space<vmem>>, vector<2x8x8x64xf32>
    %128 = arith.truncf %127 : vector<2x8x8x64xf32> to vector<2x8x8x64xbf16>
    %c0_234 = arith.constant 0 : index
    %c1_235 = arith.constant 1 : index
    %c2_236 = arith.constant 2 : index
    %c0_237 = arith.constant 0 : index
    %129 = vector.load %arg14[%c0_234, %c1_235, %c2_236, %c0_237] : memref<2x10x10x64xf32, #tpu.memory_space<vmem>>, vector<2x8x8x64xf32>
    %130 = arith.truncf %129 : vector<2x8x8x64xf32> to vector<2x8x8x64xbf16>
    %c0_238 = arith.constant 0 : index
    %c2_239 = arith.constant 2 : index
    %c0_240 = arith.constant 0 : index
    %c0_241 = arith.constant 0 : index
    %131 = vector.load %arg14[%c0_238, %c2_239, %c0_240, %c0_241] : memref<2x10x10x64xf32, #tpu.memory_space<vmem>>, vector<2x8x8x64xf32>
    %132 = arith.truncf %131 : vector<2x8x8x64xf32> to vector<2x8x8x64xbf16>
    %c0_242 = arith.constant 0 : index
    %c2_243 = arith.constant 2 : index
    %c1_244 = arith.constant 1 : index
    %c0_245 = arith.constant 0 : index
    %133 = vector.load %arg14[%c0_242, %c2_243, %c1_244, %c0_245] : memref<2x10x10x64xf32, #tpu.memory_space<vmem>>, vector<2x8x8x64xf32>
    %134 = arith.truncf %133 : vector<2x8x8x64xf32> to vector<2x8x8x64xbf16>
    %c0_246 = arith.constant 0 : index
    %c2_247 = arith.constant 2 : index
    %c2_248 = arith.constant 2 : index
    %c0_249 = arith.constant 0 : index
    %135 = vector.load %arg14[%c0_246, %c2_247, %c2_248, %c0_249] : memref<2x10x10x64xf32, #tpu.memory_space<vmem>>, vector<2x8x8x64xf32>
    %136 = arith.truncf %135 : vector<2x8x8x64xf32> to vector<2x8x8x64xbf16>
    %137 = tpu.concatenate %120, %122, %124, %126, %128, %130, %132, %134, %136 in 3 : vector<2x8x8x64xbf16>, vector<2x8x8x64xbf16>, vector<2x8x8x64xbf16>, vector<2x8x8x64xbf16>, vector<2x8x8x64xbf16>, vector<2x8x8x64xbf16>, vector<2x8x8x64xbf16>, vector<2x8x8x64xbf16>, vector<2x8x8x64xbf16> -> vector<2x8x8x576xbf16>
    %138 = vector.shape_cast %137 : vector<2x8x8x576xbf16> to vector<128x576xbf16>
    %c0_250 = arith.constant 0 : index
    %c0_251 = arith.constant 0 : index
    %139 = vector.load %arg8[%c0_250, %c0_251] : memref<576x64xbf16, #tpu.memory_space<vmem>>, vector<576x64xbf16>
    %cst_252 = arith.constant dense<0.000000e+00> : vector<128x64xf32>
    %140 = tpu.matmul %138, %139, %cst_252 {dimension_numbers = #tpu.dot_dimension_numbers<[1], [0], [0], [1], [0, 0, 1, 1], [], []>} : vector<128x576xbf16>, vector<576x64xbf16>, vector<128x64xf32> -> vector<128x64xf32>
    %c0_253 = arith.constant 0 : index
    %c0_254 = arith.constant 0 : index
    %141 = vector.load %arg9[%c0_253, %c0_254] : memref<1x64xf32, #tpu.memory_space<vmem>>, vector<1x64xf32>
    %142 = vector.broadcast %141 : vector<1x64xf32> to vector<128x64xf32>
    %143 = arith.addf %140, %142 : vector<128x64xf32>
    %cst_255 = arith.constant 0.000000e+00 : f32
    %144 = vector.broadcast %cst_255 : f32 to vector<128x64xf32>
    %145 = arith.maximumf %143, %144 : vector<128x64xf32>
    %146 = vector.shape_cast %145 : vector<128x64xf32> to vector<2x8x8x64xf32>
    %147 = vector.shape_cast %146 : vector<2x8x8x64xf32> to vector<16x8x64xf32>
    %148 = vector.shape_cast %147 : vector<16x8x64xf32> to vector<8x2x8x64xf32>
    %cst_256 = arith.constant dense<0xFF800000> : vector<8x8x64xf32>
    %149 = vector.multi_reduction <maximumf>, %148, %cst_256 [1] : vector<8x2x8x64xf32> to vector<8x8x64xf32>
    %150 = vector.shape_cast %149 : vector<8x8x64xf32> to vector<8x4x2x64xf32>
    %cst_257 = arith.constant dense<0xFF800000> : vector<8x4x64xf32>
    %151 = vector.multi_reduction <maximumf>, %150, %cst_257 [2] : vector<8x4x2x64xf32> to vector<8x4x64xf32>
    %152 = vector.shape_cast %151 : vector<8x4x64xf32> to vector<2x4x4x64xf32>
    %153 = vector.extract_strided_slice %152 {offsets = [0, 0, 0, 0], sizes = [1, 4, 4, 64], strides = [1, 1, 1, 1]} : vector<2x4x4x64xf32> to vector<1x4x4x64xf32>
    %154 = vector.shape_cast %153 : vector<1x4x4x64xf32> to vector<4x4x64xf32>
    %155 = vector.shape_cast %154 : vector<4x4x64xf32> to vector<16x64xf32>
    %156 = tpu.transpose %155, [1, 0] : vector<16x64xf32> -> vector<64x16xf32>
    %c0_258 = arith.constant 0 : index
    %c0_259 = arith.constant 0 : index
    %c0_260 = arith.constant 0 : index
    %157 = vector.load %arg10[%c0_258, %c0_259, %c0_260] : memref<2x64x16xf32, #tpu.memory_space<vmem>>, vector<1x64x16xf32>
    %158 = vector.shape_cast %157 : vector<1x64x16xf32> to vector<64x16xf32>
    %159 = vector.shape_cast %156 : vector<64x16xf32> to vector<1x64x16xf32>
    tpu.vector_store %arg10[%c0_258, %c0_259, %c0_260], %159 {strides = array<i32>} : memref<2x64x16xf32, #tpu.memory_space<vmem>>, vector<1x64x16xf32>,
    %160 = vector.extract_strided_slice %152 {offsets = [1, 0, 0, 0], sizes = [1, 4, 4, 64], strides = [1, 1, 1, 1]} : vector<2x4x4x64xf32> to vector<1x4x4x64xf32>
    %161 = vector.shape_cast %160 : vector<1x4x4x64xf32> to vector<4x4x64xf32>
    %162 = vector.shape_cast %161 : vector<4x4x64xf32> to vector<16x64xf32>
    %163 = tpu.transpose %162, [1, 0] : vector<16x64xf32> -> vector<64x16xf32>
    %c1_261 = arith.constant 1 : index
    %c0_262 = arith.constant 0 : index
    %c0_263 = arith.constant 0 : index
    %164 = vector.load %arg10[%c1_261, %c0_262, %c0_263] : memref<2x64x16xf32, #tpu.memory_space<vmem>>, vector<1x64x16xf32>
    %165 = vector.shape_cast %164 : vector<1x64x16xf32> to vector<64x16xf32>
    %166 = vector.shape_cast %163 : vector<64x16xf32> to vector<1x64x16xf32>
    tpu.vector_store %arg10[%c1_261, %c0_262, %c0_263], %166 {strides = array<i32>} : memref<2x64x16xf32, #tpu.memory_space<vmem>>, vector<1x64x16xf32>,
    return
  }
  func.func @transform_0(%arg0: i32) -> (i32, i32, i32, i32) {
    %c0_i32 = arith.constant 0 : i32
    %c0_i32_0 = arith.constant 0 : i32
    %c0_i32_1 = arith.constant 0 : i32
    %c0_i32_2 = arith.constant 0 : i32
    return %arg0, %c0_i32, %c0_i32_0, %c0_i32_1 : i32, i32, i32, i32
  }
  func.func @transform_1(%arg0: i32) -> (i32, i32) {
    %c0_i32 = arith.constant 0 : i32
    %c0_i32_0 = arith.constant 0 : i32
    %c0_i32_1 = arith.constant 0 : i32
    return %c0_i32, %c0_i32_0 : i32, i32
  }
  func.func @transform_2(%arg0: i32) -> (i32, i32) {
    %c0_i32 = arith.constant 0 : i32
    %c0_i32_0 = arith.constant 0 : i32
    %c0_i32_1 = arith.constant 0 : i32
    return %c0_i32, %c0_i32_0 : i32, i32
  }
  func.func @transform_3(%arg0: i32) -> (i32, i32) {
    %c0_i32 = arith.constant 0 : i32
    %c0_i32_0 = arith.constant 0 : i32
    %c0_i32_1 = arith.constant 0 : i32
    return %c0_i32, %c0_i32_0 : i32, i32
  }
  func.func @transform_4(%arg0: i32) -> (i32, i32) {
    %c0_i32 = arith.constant 0 : i32
    %c0_i32_0 = arith.constant 0 : i32
    %c0_i32_1 = arith.constant 0 : i32
    return %c0_i32, %c0_i32_0 : i32, i32
  }
  func.func @transform_5(%arg0: i32) -> (i32, i32) {
    %c0_i32 = arith.constant 0 : i32
    %c0_i32_0 = arith.constant 0 : i32
    %c0_i32_1 = arith.constant 0 : i32
    return %c0_i32, %c0_i32_0 : i32, i32
  }
  func.func @transform_6(%arg0: i32) -> (i32, i32) {
    %c0_i32 = arith.constant 0 : i32
    %c0_i32_0 = arith.constant 0 : i32
    %c0_i32_1 = arith.constant 0 : i32
    return %c0_i32, %c0_i32_0 : i32, i32
  }
  func.func @transform_7(%arg0: i32) -> (i32, i32) {
    %c0_i32 = arith.constant 0 : i32
    %c0_i32_0 = arith.constant 0 : i32
    %c0_i32_1 = arith.constant 0 : i32
    return %c0_i32, %c0_i32_0 : i32, i32
  }
  func.func @transform_8(%arg0: i32) -> (i32, i32) {
    %c0_i32 = arith.constant 0 : i32
    %c0_i32_0 = arith.constant 0 : i32
    %c0_i32_1 = arith.constant 0 : i32
    return %c0_i32, %c0_i32_0 : i32, i32
  }
  func.func @transform_9(%arg0: i32) -> (i32, i32, i32) {
    %c0_i32 = arith.constant 0 : i32
    %c0_i32_0 = arith.constant 0 : i32
    %c0_i32_1 = arith.constant 0 : i32
    return %arg0, %c0_i32, %c0_i32_0 : i32, i32, i32
  }
}

</mosaic_0001>

<llo_original>
// kernel: trunk_simple_forward.1
$region0: #{trunk_simple_forward.1}
  #allocation0 [shape = 'u32[]', space=smem, size = 0x4, offset = 0x4, fixed_abs, tag = 'smem constant byte address 0x4 - core index']
  #allocation1 [shape = 'u32[144,128]{1,0:T(1,128)}', space=vmem, size = 0x12000, scoped, tag = 'internal scratch']
  #allocation2 [shape = 'f32[2,18,18,3]{3,2,1,0:T(8,128)}', space=vmem, size = 0x6c000, scoped, tag = 'scratch operand']
  #allocation3 [shape = 'f32[2,18,18,32]{3,2,1,0:T(8,128)}', space=vmem, size = 0x6c000, scoped, tag = 'scratch operand']
  #allocation4 [shape = 'f32[2,10,10,32]{3,2,1,0:T(8,128)}', space=vmem, size = 0x28000, scoped, tag = 'scratch operand']
  #allocation5 [shape = 'f32[2,10,10,64]{3,2,1,0:T(8,128)}', space=vmem, size = 0x28000, scoped, tag = 'scratch operand']
  %s0 = inlined_call_operand.vmem [shape: f32[4,16,16,3], index: 0, kind: input, shape index: {}]
  %s1 = inlined_call_operand.vmem [shape: bf16[27,32], index: 1, kind: input, shape index: {}]
  %s2 = inlined_call_operand.vmem [shape: f32[1,32], index: 2, kind: input, shape index: {}]
  %s3 = inlined_call_operand.vmem [shape: bf16[288,32], index: 3, kind: input, shape index: {}]
  %s4 = inlined_call_operand.vmem [shape: f32[1,32], index: 4, kind: input, shape index: {}]
  %s5 = inlined_call_operand.vmem [shape: bf16[288,64], index: 5, kind: input, shape index: {}]
  %s6 = inlined_call_operand.vmem [shape: f32[1,64], index: 6, kind: input, shape index: {}]
  %s7 = inlined_call_operand.vmem [shape: bf16[576,64], index: 7, kind: input, shape index: {}]
  %s8 = inlined_call_operand.vmem [shape: f32[1,64], index: 8, kind: input, shape index: {}]
  %s9 = inlined_call_operand.vmem [shape: f32[4,64,16], index: 9, kind: output, shape index: {}]
  %s10 = sld [smem:[#allocation0]]
  $region69: #{trunk_simple_forward.1} parent=0
    _
  %s12 = ssub.s32 1, %s10
  %s13 = scalar_select 0, %s12, %s10
  loop: start=0, step=1, limit=4
  $region2: #{trunk_simple_forward.1} parent=0 // loop_pre_header
    _
  $region3: #{trunk_simple_forward.1} parent=0 // loop_header
    %s15 = sphi 0, %s19
    %p16 = scmp.ge.s32.totalorder %s15, 4
    %s25 = sphi 0, %s27
    %s28 = sphi 0, %s25
    %s29 = sphi 0, %s28
    %s45 = sphi 0, %s29
    %s49 = sphi 0, %s49
    %s51 = sphi 0, %s49
    %s52 = sphi 0, %s51
    %s66 = sphi 0, %s52
    %s70 = sphi 0, %s70
    %s72 = sphi 0, %s70
    %s73 = sphi 0, %s72
    %s87 = sphi 0, %s73
    %s91 = sphi 0, %s91
    %s93 = sphi 0, %s91
    %s94 = sphi 0, %s93
    %s108 = sphi 0, %s94
    %s112 = sphi 0, %s112
    %s114 = sphi 0, %s112
    %s115 = sphi 0, %s114
    %s129 = sphi 0, %s115
    %s133 = sphi 0, %s133
    %s135 = sphi 0, %s133
    %s136 = sphi 0, %s135
    %s150 = sphi 0, %s136
    %s154 = sphi 0, %s154
    %s156 = sphi 0, %s154
    %s157 = sphi 0, %s156
    %s171 = sphi 0, %s157
    %s175 = sphi 0, %s175
    %s177 = sphi 0, %s175
    %s178 = sphi 0, %s177
    %s192 = sphi 0, %s178
    %s196 = sphi 0, %s196
    %s198 = sphi 0, %s196
    %s199 = sphi 0, %s198
    %s213 = sphi 0, %s199
    %s219 = sphi 0, %s221
    %s222 = sphi 0, %s219
    %s223 = sphi 0, %s222
    %s239 = sphi 0, %s223
  $region4: #{trunk_simple_forward.1} parent=0 // loop_header_branch
    %18 = sbr.rel (%p16) target = $region8
  $region5: #{trunk_simple_forward.1} parent=0 // loop_body
    %s20 = ssub.s32 %s15, 1
    %s21 = ssub.s32 %s15, 2
    %s22 = sadd.s32 %s15, 1
    %s23 = ssub.s32 %s15, %s22
    %p24 = scmp.eq.s32.totalorder %s23, 0
    %s26 = sadd.s32 %s25, 1
    %s27 = scalar_select %p24, %s25, %s26
    %p30 = pneg %p24
    %p31 = scmp.eq.s32.totalorder %s15, 1
    %p32 = por %p30, %p31
    %p33 = scmp.ne.s32.totalorder %s25, %s28
    %p34 = scmp.eq.s32.totalorder %s15, 0
    %p35 = por %p33, %p34
    %p36 = scmp.ne.s32.totalorder %s25, %s28
    %p37 = scmp.eq.s32.totalorder %s20, 1
    %p38 = por %p36, %p37
    %p39 = scmp.ne.s32.totalorder %s28, %s29
    %p40 = scmp.eq.s32.totalorder %s20, 0
    %p41 = por %p39, %p40
    %p42 = scmp.ne.s32.totalorder %s28, %s29
    %p43 = scmp.eq.s32.totalorder %s21, 1
    %p44 = por %p42, %p43
    %p46 = scmp.ne.s32.totalorder %s29, %s45
    %p47 = scmp.eq.s32.totalorder %s21, 0
    %p48 = por %p46, %p47
    %s50 = sadd.s32 %s49, 1
    %p53 = scmp.eq.s32.totalorder %s15, 1
    %p54 = scmp.ne.s32.totalorder %s49, %s51
    %p55 = scmp.eq.s32.totalorder %s15, 0
    %p56 = por %p54, %p55
    %p57 = scmp.ne.s32.totalorder %s49, %s51
    %p58 = scmp.eq.s32.totalorder %s20, 1
    %p59 = por %p57, %p58
    %p60 = scmp.ne.s32.totalorder %s51, %s52
    %p61 = scmp.eq.s32.totalorder %s20, 0
    %p62 = por %p60, %p61
    %p63 = scmp.ne.s32.totalorder %s51, %s52
    %p64 = scmp.eq.s32.totalorder %s21, 1
    %p65 = por %p63, %p64
    %p67 = scmp.ne.s32.totalorder %s52, %s66
    %p68 = scmp.eq.s32.totalorder %s21, 0
    %p69 = por %p67, %p68
    %s71 = sadd.s32 %s70, 1
    %p74 = scmp.eq.s32.totalorder %s15, 1
    %p75 = scmp.ne.s32.totalorder %s70, %s72
    %p76 = scmp.eq.s32.totalorder %s15, 0
    %p77 = por %p75, %p76
    %p78 = scmp.ne.s32.totalorder %s70, %s72
    %p79 = scmp.eq.s32.totalorder %s20, 1
    %p80 = por %p78, %p79
    %p81 = scmp.ne.s32.totalorder %s72, %s73
    %p82 = scmp.eq.s32.totalorder %s20, 0
    %p83 = por %p81, %p82
    %p84 = scmp.ne.s32.totalorder %s72, %s73
    %p85 = scmp.eq.s32.totalorder %s21, 1
    %p86 = por %p84, %p85
    %p88 = scmp.ne.s32.totalorder %s73, %s87
    %p89 = scmp.eq.s32.totalorder %s21, 0
    %p90 = por %p88, %p89
    %s92 = sadd.s32 %s91, 1
    %p95 = scmp.eq.s32.totalorder %s15, 1
    %p96 = scmp.ne.s32.totalorder %s91, %s93
    %p97 = scmp.eq.s32.totalorder %s15, 0
    %p98 = por %p96, %p97
    %p99 = scmp.ne.s32.totalorder %s91, %s93
    %p100 = scmp.eq.s32.totalorder %s20, 1
    %p101 = por %p99, %p100
    %p102 = scmp.ne.s32.totalorder %s93, %s94
    %p103 = scmp.eq.s32.totalorder %s20, 0
    %p104 = por %p102, %p103
    %p105 = scmp.ne.s32.totalorder %s93, %s94
    %p106 = scmp.eq.s32.totalorder %s21, 1
    %p107 = por %p105, %p106
    %p109 = scmp.ne.s32.totalorder %s94, %s108
    %p110 = scmp.eq.s32.totalorder %s21, 0
    %p111 = por %p109, %p110
    %s113 = sadd.s32 %s112, 1
    %p116 = scmp.eq.s32.totalorder %s15, 1
    %p117 = scmp.ne.s32.totalorder %s112, %s114
    %p118 = scmp.eq.s32.totalorder %s15, 0
    %p119 = por %p117, %p118
    %p120 = scmp.ne.s32.totalorder %s112, %s114
    %p121 = scmp.eq.s32.totalorder %s20, 1
    %p122 = por %p120, %p121
    %p123 = scmp.ne.s32.totalorder %s114, %s115
    %p124 = scmp.eq.s32.totalorder %s20, 0
    %p125 = por %p123, %p124
    %p126 = scmp.ne.s32.totalorder %s114, %s115
    %p127 = scmp.eq.s32.totalorder %s21, 1
    %p128 = por %p126, %p127
    %p130 = scmp.ne.s32.totalorder %s115, %s129
    %p131 = scmp.eq.s32.totalorder %s21, 0
    %p132 = por %p130, %p131
    %s134 = sadd.s32 %s133, 1
    %p137 = scmp.eq.s32.totalorder %s15, 1
    %p138 = scmp.ne.s32.totalorder %s133, %s135
    %p139 = scmp.eq.s32.totalorder %s15, 0
    %p140 = por %p138, %p139
    %p141 = scmp.ne.s32.totalorder %s133, %s135
    %p142 = scmp.eq.s32.totalorder %s20, 1
    %p143 = por %p141, %p142
    %p144 = scmp.ne.s32.totalorder %s135, %s136
    %p145 = scmp.eq.s32.totalorder %s20, 0
    %p146 = por %p144, %p145
    %p147 = scmp.ne.s32.totalorder %s135, %s136
    %p148 = scmp.eq.s32.totalorder %s21, 1
    %p149 = por %p147, %p148
    %p151 = scmp.ne.s32.totalorder %s136, %s150
    %p152 = scmp.eq.s32.totalorder %s21, 0
    %p153 = por %p151, %p152
    %s155 = sadd.s32 %s154, 1
    %p158 = scmp.eq.s32.totalorder %s15, 1
    %p159 = scmp.ne.s32.totalorder %s154, %s156
    %p160 = scmp.eq.s32.totalorder %s15, 0
    %p161 = por %p159, %p160
    %p162 = scmp.ne.s32.totalorder %s154, %s156
    %p163 = scmp.eq.s32.totalorder %s20, 1
    %p164 = por %p162, %p163
    %p165 = scmp.ne.s32.totalorder %s156, %s157
    %p166 = scmp.eq.s32.totalorder %s20, 0
    %p167 = por %p165, %p166
    %p168 = scmp.ne.s32.totalorder %s156, %s157
    %p169 = scmp.eq.s32.totalorder %s21, 1
    %p170 = por %p168, %p169
    %p172 = scmp.ne.s32.totalorder %s157, %s171
    %p173 = scmp.eq.s32.totalorder %s21, 0
    %p174 = por %p172, %p173
    %s176 = sadd.s32 %s175, 1
    %p179 = scmp.eq.s32.totalorder %s15, 1
    %p180 = scmp.ne.s32.totalorder %s175, %s177
    %p181 = scmp.eq.s32.totalorder %s15, 0
    %p182 = por %p180, %p181
    %p183 = scmp.ne.s32.totalorder %s175, %s177
    %p184 = scmp.eq.s32.totalorder %s20, 1
    %p185 = por %p183, %p184
    %p186 = scmp.ne.s32.totalorder %s177, %s178
    %p187 = scmp.eq.s32.totalorder %s20, 0
    %p188 = por %p186, %p187
    %p189 = scmp.ne.s32.totalorder %s177, %s178
    %p190 = scmp.eq.s32.totalorder %s21, 1
    %p191 = por %p189, %p190
    %p193 = scmp.ne.s32.totalorder %s178, %s192
    %p194 = scmp.eq.s32.totalorder %s21, 0
    %p195 = por %p193, %p194
    %s197 = sadd.s32 %s196, 1
    %p200 = scmp.eq.s32.totalorder %s15, 1
    %p201 = scmp.ne.s32.totalorder %s196, %s198
    %p202 = scmp.eq.s32.totalorder %s15, 0
    %p203 = por %p201, %p202
    %p204 = scmp.ne.s32.totalorder %s196, %s198
    %p205 = scmp.eq.s32.totalorder %s20, 1
    %p206 = por %p204, %p205
    %p207 = scmp.ne.s32.totalorder %s198, %s199
    %p208 = scmp.eq.s32.totalorder %s20, 0
    %p209 = por %p207, %p208
    %p210 = scmp.ne.s32.totalorder %s198, %s199
    %p211 = scmp.eq.s32.totalorder %s21, 1
    %p212 = por %p210, %p211
    %p214 = scmp.ne.s32.totalorder %s199, %s213
    %p215 = scmp.eq.s32.totalorder %s21, 0
    %p216 = por %p214, %p215
    %s217 = ssub.s32 %s15, %s22
    %p218 = scmp.eq.s32.totalorder %s217, 0
    %s220 = sadd.s32 %s219, 1
    %s221 = scalar_select %p218, %s219, %s220
    %p224 = pneg %p218
    %p225 = scmp.eq.s32.totalorder %s15, 1
    %p226 = por %p224, %p225
    %p227 = scmp.ne.s32.totalorder %s219, %s222
    %p228 = scmp.eq.s32.totalorder %s15, 0
    %p229 = por %p227, %p228
    %p230 = scmp.ne.s32.totalorder %s219, %s222
    %p231 = scmp.eq.s32.totalorder %s20, 1
    %p232 = por %p230, %p231
    %p233 = scmp.ne.s32.totalorder %s222, %s223
    %p234 = scmp.eq.s32.totalorder %s20, 0
    %p235 = por %p233, %p234
    %p236 = scmp.ne.s32.totalorder %s222, %s223
    %p237 = scmp.eq.s32.totalorder %s21, 1
    %p238 = por %p236, %p237
    %p240 = scmp.ne.s32.totalorder %s223, %s239
    %p241 = scmp.eq.s32.totalorder %s21, 0
    %p242 = por %p240, %p241
    %p243 = scmp.le.s32.totalorder 1, %s15
    %p244 = scmp.lt.s32.totalorder %s15, 3
    %p245 = pnand %p243, %p244
    %p246 = pneg %p245
    // Predicated region
    $region9: #{trunk_simple_forward.1} parent=5 // pred_check
      _
    $region10: #{trunk_simple_forward.1} parent=5 // pred_check_branch
      %248 = sbr.rel (%p245) target = $region12
    $region11: #{trunk_simple_forward.1} parent=5 // pred_region
      %s249 = ssub.s32 %s15, 1
      // Predicated region
      $region13: #{trunk_simple_forward.1} parent=11 // pred_check
        %p250 = pneg %p62
      $region14: #{trunk_simple_forward.1} parent=11 // pred_check_branch
        %252 = sbr.rel (%p250) target = $region16
      $region15: #{trunk_simple_forward.1} parent=11 // pred_region
        _
      $region16: #{trunk_simple_forward.1} parent=11 // pred_fallthru
        _
      // Predicated region
      $region17: #{trunk_simple_forward.1} parent=11 // pred_check
        %p253 = pneg %p83
      $region18: #{trunk_simple_forward.1} parent=11 // pred_check_branch
        %255 = sbr.rel (%p253) target = $region20
      $region19: #{trunk_simple_forward.1} parent=11 // pred_region
        _
      $region20: #{trunk_simple_forward.1} parent=11 // pred_fallthru
        _
      // Predicated region
      $region21: #{trunk_simple_forward.1} parent=11 // pred_check
        %p256 = pneg %p104
      $region22: #{trunk_simple_forward.1} parent=11 // pred_check_branch
        %258 = sbr.rel (%p256) target = $region24
      $region23: #{trunk_simple_forward.1} parent=11 // pred_region
        _
      $region24: #{trunk_simple_forward.1} parent=11 // pred_fallthru
        _
      // Predicated region
      $region25: #{trunk_simple_forward.1} parent=11 // pred_check
        %p259 = pneg %p125
      $region26: #{trunk_simple_forward.1} parent=11 // pred_check_branch
        %261 = sbr.rel (%p259) target = $region28
      $region27: #{trunk_simple_forward.1} parent=11 // pred_region
        _
      $region28: #{trunk_simple_forward.1} parent=11 // pred_fallthru
        _
      // Predicated region
      $region29: #{trunk_simple_forward.1} parent=11 // pred_check
        %p262 = pneg %p146
      $region30: #{trunk_simple_forward.1} parent=11 // pred_check_branch
        %264 = sbr.rel (%p262) target = $region32
      $region31: #{trunk_simple_forward.1} parent=11 // pred_region
        _
      $region32: #{trunk_simple_forward.1} parent=11 // pred_fallthru
        _
      // Predicated region
      $region33: #{trunk_simple_forward.1} parent=11 // pred_check
        %p265 = pneg %p167
      $region34: #{trunk_simple_forward.1} parent=11 // pred_check_branch
        %267 = sbr.rel (%p265) target = $region36
      $region35: #{trunk_simple_forward.1} parent=11 // pred_region
        _
      $region36: #{trunk_simple_forward.1} parent=11 // pred_fallthru
        _
      // Predicated region
      $region37: #{trunk_simple_forward.1} parent=11 // pred_check
        %p268 = pneg %p188
      $region38: #{trunk_simple_forward.1} parent=11 // pred_check_branch
        %270 = sbr.rel (%p268) target = $region40
      $region39: #{trunk_simple_forward.1} parent=11 // pred_region
        _
      $region40: #{trunk_simple_forward.1} parent=11 // pred_fallthru
        _
      // Predicated region
      $region41: #{trunk_simple_forward.1} parent=11 // pred_check
        %p271 = pneg %p209
      $region42: #{trunk_simple_forward.1} parent=11 // pred_check_branch
        %273 = sbr.rel (%p271) target = $region44
      $region43: #{trunk_simple_forward.1} parent=11 // pred_region
        _
      $region44: #{trunk_simple_forward.1} parent=11 // pred_fallthru
        _
    $region12: #{trunk_simple_forward.1} parent=5 // pred_fallthru
      _
    %p274 = scmp.lt.s32.totalorder %s15, 2
    // Predicated region
    $region45: #{trunk_simple_forward.1} parent=5 // pred_check
      %p275 = pneg %p274
    $region46: #{trunk_simple_forward.1} parent=5 // pred_check_branch
      %277 = sbr.rel (%p275) target = $region48
    $region47: #{trunk_simple_forward.1} parent=5 // pred_region
      // Predicated region
      $region49: #{trunk_simple_forward.1} parent=47 // pred_check
        %p278 = pneg %p35
      $region50: #{trunk_simple_forward.1} parent=47 // pred_check_branch
        %280 = sbr.rel (%p278) target = $region52
      $region51: #{trunk_simple_forward.1} parent=47 // pred_region
        %s281 = smul.u32 2, %s15
        %p282 = scmp.lt.s32.totalorder %s281, 3
        %s283 = scalar_select %p282, %s281, 3
        %s284 = smul.addr %s283, 32
        %s285 = smul.addr %s284, 8
        %s286 = scalar_lea.vmem %s0, %s285
        %s287 = smul.u32 2, %s15
      $region52: #{trunk_simple_forward.1} parent=47 // pred_fallthru
        _
    $region48: #{trunk_simple_forward.1} parent=5 // pred_fallthru
      _
    %p288 = scmp.le.s32.totalorder 1, %s15
    %p289 = scmp.lt.s32.totalorder %s15, 3
    %p290 = pnand %p288, %p289
    %p291 = pneg %p290
    // Predicated region
    $region53: #{trunk_simple_forward.1} parent=5 // pred_check
      _
    $region54: #{trunk_simple_forward.1} parent=5 // pred_check_branch
      %293 = sbr.rel (%p290) target = $region56
    $region55: #{trunk_simple_forward.1} parent=5 // pred_region
      %s294 = ssub.s32 %s15, 1
      %s295 = smul.u32 2, %s20
      %p296 = scmp.lt.s32.totalorder %s295, 3
      %s297 = scalar_select %p296, %s295, 3
      %s298 = smul.addr %s297, 32
      %s299 = smul.addr %s298, 8
      %s300 = scalar_lea.vmem %s0, %s299
      %p301 = pneg %p41
      %p302 = pneg %p38
      %p303 = pneg %p62
      %p304 = pneg %p59
      %p305 = pneg %p83
      %p306 = pneg %p80
      %p307 = pneg %p104
      %p308 = pneg %p101
      %p309 = pneg %p125
      %p310 = pneg %p122
      %p311 = pneg %p146
      %p312 = pneg %p143
      %p313 = pneg %p167
      %p314 = pneg %p164
      %p315 = pneg %p188
      %p316 = pneg %p185
      %p317 = pneg %p209
      %p318 = pneg %p206
      %p319 = pneg %p235
      %p320 = pneg %p232
      %s321 = smul.u32 2, %s20
      %p322 = scmp.lt.s32.totalorder %s321, 3
      %s323 = scalar_select %p322, %s321, 3
      %s324 = smul.addr %s323, 8
      %s325 = smul.addr %s324, 8
      %s326 = scalar_lea.vmem %s9, %s325
      %s327 = smul.u32 2, %s20
      %p328 = scmp.lt.s32.totalorder %s327, 3
      %s329 = scalar_select %p328, %s327, 3
      %s330 = smul.addr %s329, 32
      %s331 = smul.addr %s330, 8
      %s332 = scalar_lea.vmem %s0, %s331
      %s333 = smul.u32 2, %s20
      %s334 = smul.u32 2, %s20
      %p335 = scmp.lt.s32.totalorder %s334, 3
      %s336 = scalar_select %p335, %s334, 3
      %s337 = smul.addr %s336, 8
      %s338 = smul.addr %s337, 8
      %s339 = scalar_lea.vmem %s9, %s338
      %s340 = smul.u32 2, %s20
      %v342 = vld [vmem:[%s332] sm:$0xff]
      %v343 = vld [vmem:[%s332 + $0x8] sm:$0xff]
      %v344 = vld [vmem:[%s332 + $0x10] sm:$0xff]
      %v345 = vld [vmem:[%s332 + $0x18] sm:$0xff]
      %v346 = vld [vmem:[%s332 + $0x20] sm:$0xff]
      %v347 = vld [vmem:[%s332 + $0x28] sm:$0xff]
      %v348 = vld [vmem:[%s332 + $0x30] sm:$0xff]
      %v349 = vld [vmem:[%s332 + $0x38] sm:$0xff]
      %v350 = vld [vmem:[%s332 + $0x40] sm:$0xff]
      %v351 = vld [vmem:[%s332 + $0x48] sm:$0xff]
      %v352 = vld [vmem:[%s332 + $0x50] sm:$0xff]
      %v353 = vld [vmem:[%s332 + $0x58] sm:$0xff]
      %v354 = vld [vmem:[%s332 + $0x60] sm:$0xff]
      %v355 = vld [vmem:[%s332 + $0x68] sm:$0xff]
      %v356 = vld [vmem:[%s332 + $0x70] sm:$0xff]
      %v357 = vld [vmem:[%s332 + $0x78] sm:$0xff]
      %v358 = vld [vmem:[%s332 + $0x80] sm:$0xff]
      %v359 = vld [vmem:[%s332 + $0x88] sm:$0xff]
      %v360 = vld [vmem:[%s332 + $0x90] sm:$0xff]
      %v361 = vld [vmem:[%s332 + $0x98] sm:$0xff]
      %v362 = vld [vmem:[%s332 + $0xa0] sm:$0xff]
      %v363 = vld [vmem:[%s332 + $0xa8] sm:$0xff]
      %v364 = vld [vmem:[%s332 + $0xb0] sm:$0xff]
      %v365 = vld [vmem:[%s332 + $0xb8] sm:$0xff]
      %v366 = vld [vmem:[%s332 + $0xc0] sm:$0xff]
      %v367 = vld [vmem:[%s332 + $0xc8] sm:$0xff]
      %v368 = vld [vmem:[%s332 + $0xd0] sm:$0xff]
      %v369 = vld [vmem:[%s332 + $0xd8] sm:$0xff]
      %v370 = vld [vmem:[%s332 + $0xe0] sm:$0xff]
      %v371 = vld [vmem:[%s332 + $0xe8] sm:$0xff]
      %v372 = vld [vmem:[%s332 + $0xf0] sm:$0xff]
      %v373 = vld [vmem:[%s332 + $0xf8] sm:$0xff]
      %v374 = vld [vmem:[%s332 + $0x100] sm:$0xff]
      %v375 = vld [vmem:[%s332 + $0x108] sm:$0xff]
      %v376 = vld [vmem:[%s332 + $0x110] sm:$0xff]
      %v377 = vld [vmem:[%s332 + $0x118] sm:$0xff]
      %v378 = vld [vmem:[%s332 + $0x120] sm:$0xff]
      %v379 = vld [vmem:[%s332 + $0x128] sm:$0xff]
      %v380 = vld [vmem:[%s332 + $0x130] sm:$0xff]
      %v381 = vld [vmem:[%s332 + $0x138] sm:$0xff]
      %v382 = vld [vmem:[%s332 + $0x140] sm:$0xff]
      %v383 = vld [vmem:[%s332 + $0x148] sm:$0xff]
      %v384 = vld [vmem:[%s332 + $0x150] sm:$0xff]
      %v385 = vld [vmem:[%s332 + $0x158] sm:$0xff]
      %v386 = vld [vmem:[%s332 + $0x160] sm:$0xff]
      %v387 = vld [vmem:[%s332 + $0x168] sm:$0xff]
      %v388 = vld [vmem:[%s332 + $0x170] sm:$0xff]
      %v389 = vld [vmem:[%s332 + $0x178] sm:$0xff]
      %v390 = vld [vmem:[%s332 + $0x180] sm:$0xff]
      %v391 = vld [vmem:[%s332 + $0x188] sm:$0xff]
      %v392 = vld [vmem:[%s332 + $0x190] sm:$0xff]
      %v393 = vld [vmem:[%s332 + $0x198] sm:$0xff]
      %v394 = vld [vmem:[%s332 + $0x1a0] sm:$0xff]
      %v395 = vld [vmem:[%s332 + $0x1a8] sm:$0xff]
      %v396 = vld [vmem:[%s332 + $0x1b0] sm:$0xff]
      %v397 = vld [vmem:[%s332 + $0x1b8] sm:$0xff]
      %v398 = vld [vmem:[%s332 + $0x1c0] sm:$0xff]
      %v399 = vld [vmem:[%s332 + $0x1c8] sm:$0xff]
      %v400 = vld [vmem:[%s332 + $0x1d0] sm:$0xff]
      %v401 = vld [vmem:[%s332 + $0x1d8] sm:$0xff]
      %v402 = vld [vmem:[%s332 + $0x1e0] sm:$0xff]
      %v403 = vld [vmem:[%s332 + $0x1e8] sm:$0xff]
      %v404 = vld [vmem:[%s332 + $0x1f0] sm:$0xff]
      %v405 = vld [vmem:[%s332 + $0x1f8] sm:$0xff]
      %vm406 = vcmask 23552
      %407 = vst.msk [vmem:[#allocation2] sm:$0xff] %vm406, 0.0
      %408 = vst.msk [vmem:[#allocation2 + $0x8] sm:$0xff] %vm406, 0.0
      %vm409 = vcmask 17408
      %410 = vst.msk [vmem:[#allocation2 + $0x10] sm:$0x3] %vm409, 0.0
      %411 = vst.msk [vmem:[#allocation2 + $0x1b0] sm:$0xff] %vm406, 0.0
      %412 = vst.msk [vmem:[#allocation2 + $0x1b8] sm:$0xff] %vm406, 0.0
      %413 = vst.msk [vmem:[#allocation2 + $0x1c0] sm:$0x3] %vm409, 0.0
      %s414 = scalar_lea.vmem [#allocation2], 408
      %415 = vst.msk [vmem:[%s414] sm:$0xff] %vm406, 0.0
      %416 = vst.msk [vmem:[%s414 + $0x8] sm:$0xff] %vm406, 0.0
      %417 = vst.msk [vmem:[%s414 + $0x10] sm:$0x3] %vm409, 0.0
      %418 = vst.msk [vmem:[%s414 + $0x1b0] sm:$0xff] %vm406, 0.0
      %419 = vst.msk [vmem:[%s414 + $0x1b8] sm:$0xff] %vm406, 0.0
      %420 = vst.msk [vmem:[%s414 + $0x1c0] sm:$0x3] %vm409, 0.0
      %vm421 = vcmask 16384
      %422 = vst.msk [vmem:[#allocation2] sm:$0x1] %vm421, 0.0
      %423 = vst.msk [vmem:[#allocation2 + $0x18] sm:$0x1] %vm421, 0.0
      %424 = vst.msk [vmem:[#allocation2 + $0x30] sm:$0x1] %vm421, 0.0
      %425 = vst.msk [vmem:[#allocation2 + $0x48] sm:$0x1] %vm421, 0.0
      %426 = vst.msk [vmem:[#allocation2 + $0x60] sm:$0x1] %vm421, 0.0
      %427 = vst.msk [vmem:[#allocation2 + $0x78] sm:$0x1] %vm421, 0.0
      %428 = vst.msk [vmem:[#allocation2 + $0x90] sm:$0x1] %vm421, 0.0
      %429 = vst.msk [vmem:[#allocation2 + $0xa8] sm:$0x1] %vm421, 0.0
      %430 = vst.msk [vmem:[#allocation2 + $0xc0] sm:$0x1] %vm421, 0.0
      %431 = vst.msk [vmem:[#allocation2 + $0xd8] sm:$0x1] %vm421, 0.0
      %432 = vst.msk [vmem:[#allocation2 + $0xf0] sm:$0x1] %vm421, 0.0
      %433 = vst.msk [vmem:[#allocation2 + $0x108] sm:$0x1] %vm421, 0.0
      %434 = vst.msk [vmem:[#allocation2 + $0x120] sm:$0x1] %vm421, 0.0
      %435 = vst.msk [vmem:[#allocation2 + $0x138] sm:$0x1] %vm421, 0.0
      %436 = vst.msk [vmem:[#allocation2 + $0x150] sm:$0x1] %vm421, 0.0
      %437 = vst.msk [vmem:[#allocation2 + $0x168] sm:$0x1] %vm421, 0.0
      %438 = vst.msk [vmem:[#allocation2 + $0x180] sm:$0x1] %vm421, 0.0
      %439 = vst.msk [vmem:[#allocation2 + $0x198] sm:$0x1] %vm421, 0.0
      %440 = vst.msk [vmem:[#allocation2 + $0x1b0] sm:$0x1] %vm421, 0.0
      %441 = vst.msk [vmem:[#allocation2 + $0x1c8] sm:$0x1] %vm421, 0.0
      %442 = vst.msk [vmem:[#allocation2 + $0x1e0] sm:$0x1] %vm421, 0.0
      %443 = vst.msk [vmem:[#allocation2 + $0x1f8] sm:$0x1] %vm421, 0.0
      %444 = vst.msk [vmem:[#allocation2 + $0x210] sm:$0x1] %vm421, 0.0
      %445 = vst.msk [vmem:[#allocation2 + $0x228] sm:$0x1] %vm421, 0.0
      %446 = vst.msk [vmem:[#allocation2 + $0x240] sm:$0x1] %vm421, 0.0
      %447 = vst.msk [vmem:[#allocation2 + $0x258] sm:$0x1] %vm421, 0.0
      %448 = vst.msk [vmem:[#allocation2 + $0x270] sm:$0x1] %vm421, 0.0
      %449 = vst.msk [vmem:[#allocation2 + $0x288] sm:$0x1] %vm421, 0.0
      %450 = vst.msk [vmem:[#allocation2 + $0x2a0] sm:$0x1] %vm421, 0.0
      %451 = vst.msk [vmem:[#allocation2 + $0x2b8] sm:$0x1] %vm421, 0.0
      %452 = vst.msk [vmem:[#allocation2 + $0x2d0] sm:$0x1] %vm421, 0.0
      %453 = vst.msk [vmem:[#allocation2 + $0x2e8] sm:$0x1] %vm421, 0.0
      %454 = vst.msk [vmem:[#allocation2 + $0x300] sm:$0x1] %vm421, 0.0
      %455 = vst.msk [vmem:[#allocation2 + $0x318] sm:$0x1] %vm421, 0.0
      %456 = vst.msk [vmem:[#allocation2 + $0x330] sm:$0x1] %vm421, 0.0
      %457 = vst.msk [vmem:[#allocation2 + $0x348] sm:$0x1] %vm421, 0.0
      %458 = vst.msk [vmem:[#allocation2 + $0x11] sm:$0x1] %vm421, 0.0
      %459 = vst.msk [vmem:[#allocation2 + $0x29] sm:$0x1] %vm421, 0.0
      %460 = vst.msk [vmem:[#allocation2 + $0x41] sm:$0x1] %vm421, 0.0
      %461 = vst.msk [vmem:[#allocation2 + $0x59] sm:$0x1] %vm421, 0.0
      %462 = vst.msk [vmem:[#allocation2 + $0x71] sm:$0x1] %vm421, 0.0
      %463 = vst.msk [vmem:[#allocation2 + $0x89] sm:$0x1] %vm421, 0.0
      %464 = vst.msk [vmem:[#allocation2 + $0xa1] sm:$0x1] %vm421, 0.0
      %465 = vst.msk [vmem:[#allocation2 + $0xb9] sm:$0x1] %vm421, 0.0
      %466 = vst.msk [vmem:[#allocation2 + $0xd1] sm:$0x1] %vm421, 0.0
      %467 = vst.msk [vmem:[#allocation2 + $0xe9] sm:$0x1] %vm421, 0.0
      %468 = vst.msk [vmem:[#allocation2 + $0x101] sm:$0x1] %vm421, 0.0
      %469 = vst.msk [vmem:[#allocation2 + $0x119] sm:$0x1] %vm421, 0.0
      %470 = vst.msk [vmem:[#allocation2 + $0x131] sm:$0x1] %vm421, 0.0
      %471 = vst.msk [vmem:[#allocation2 + $0x149] sm:$0x1] %vm421, 0.0
      %472 = vst.msk [vmem:[#allocation2 + $0x161] sm:$0x1] %vm421, 0.0
      %473 = vst.msk [vmem:[#allocation2 + $0x179] sm:$0x1] %vm421, 0.0
      %474 = vst.msk [vmem:[#allocation2 + $0x191] sm:$0x1] %vm421, 0.0
      %475 = vst.msk [vmem:[#allocation2 + $0x1a9] sm:$0x1] %vm421, 0.0
      %476 = vst.msk [vmem:[#allocation2 + $0x1c1] sm:$0x1] %vm421, 0.0
      %477 = vst.msk [vmem:[#allocation2 + $0x1d9] sm:$0x1] %vm421, 0.0
      %478 = vst.msk [vmem:[#allocation2 + $0x1f1] sm:$0x1] %vm421, 0.0
      %479 = vst.msk [vmem:[#allocation2 + $0x209] sm:$0x1] %vm421, 0.0
      %480 = vst.msk [vmem:[#allocation2 + $0x221] sm:$0x1] %vm421, 0.0
      %481 = vst.msk [vmem:[#allocation2 + $0x239] sm:$0x1] %vm421, 0.0
      %482 = vst.msk [vmem:[#allocation2 + $0x251] sm:$0x1] %vm421, 0.0
      %483 = vst.msk [vmem:[#allocation2 + $0x269] sm:$0x1] %vm421, 0.0
      %484 = vst.msk [vmem:[#allocation2 + $0x281] sm:$0x1] %vm421, 0.0
      %485 = vst.msk [vmem:[#allocation2 + $0x299] sm:$0x1] %vm421, 0.0
      %486 = vst.msk [vmem:[#allocation2 + $0x2b1] sm:$0x1] %vm421, 0.0
      %487 = vst.msk [vmem:[#allocation2 + $0x2c9] sm:$0x1] %vm421, 0.0
      %488 = vst.msk [vmem:[#allocation2 + $0x2e1] sm:$0x1] %vm421, 0.0
      %489 = vst.msk [vmem:[#allocation2 + $0x2f9] sm:$0x1] %vm421, 0.0
      %490 = vst.msk [vmem:[#allocation2 + $0x311] sm:$0x1] %vm421, 0.0
      %491 = vst.msk [vmem:[#allocation2 + $0x329] sm:$0x1] %vm421, 0.0
      %492 = vst.msk [vmem:[#allocation2 + $0x341] sm:$0x1] %vm421, 0.0
      %493 = vst.msk [vmem:[#allocation2 + $0x359] sm:$0x1] %vm421, 0.0
      %s494 = scalar_lea.vmem [#allocation2], 24
      %495 = vst.msk [vmem:[%s494 + $0x1] sm:$0xff] %vm406, %v342
      %496 = vst.msk [vmem:[%s494 + $0x9] sm:$0xff] %vm406, %v343
      %497 = vst.msk [vmem:[%s494 + $0x19] sm:$0xff] %vm406, %v344
      %498 = vst.msk [vmem:[%s494 + $0x21] sm:$0xff] %vm406, %v345
      %499 = vst.msk [vmem:[%s494 + $0x31] sm:$0xff] %vm406, %v346
      %500 = vst.msk [vmem:[%s494 + $0x39] sm:$0xff] %vm406, %v347
      %501 = vst.msk [vmem:[%s494 + $0x49] sm:$0xff] %vm406, %v348
      %502 = vst.msk [vmem:[%s494 + $0x51] sm:$0xff] %vm406, %v349
      %503 = vst.msk [vmem:[%s494 + $0x61] sm:$0xff] %vm406, %v350
      %504 = vst.msk [vmem:[%s494 + $0x69] sm:$0xff] %vm406, %v351
      %505 = vst.msk [vmem:[%s494 + $0x79] sm:$0xff] %vm406, %v352
      %506 = vst.msk [vmem:[%s494 + $0x81] sm:$0xff] %vm406, %v353
      %507 = vst.msk [vmem:[%s494 + $0x91] sm:$0xff] %vm406, %v354
      %508 = vst.msk [vmem:[%s494 + $0x99] sm:$0xff] %vm406, %v355
      %509 = vst.msk [vmem:[%s494 + $0xa9] sm:$0xff] %vm406, %v356
      %510 = vst.msk [vmem:[%s494 + $0xb1] sm:$0xff] %vm406, %v357
      %511 = vst.msk [vmem:[%s494 + $0xc1] sm:$0xff] %vm406, %v358
      %512 = vst.msk [vmem:[%s494 + $0xc9] sm:$0xff] %vm406, %v359
      %513 = vst.msk [vmem:[%s494 + $0xd9] sm:$0xff] %vm406, %v360
      %514 = vst.msk [vmem:[%s494 + $0xe1] sm:$0xff] %vm406, %v361
      %515 = vst.msk [vmem:[%s494 + $0xf1] sm:$0xff] %vm406, %v362
      %516 = vst.msk [vmem:[%s494 + $0xf9] sm:$0xff] %vm406, %v363
      %517 = vst.msk [vmem:[%s494 + $0x109] sm:$0xff] %vm406, %v364
      %518 = vst.msk [vmem:[%s494 + $0x111] sm:$0xff] %vm406, %v365
      %519 = vst.msk [vmem:[%s494 + $0x121] sm:$0xff] %vm406, %v366
      %520 = vst.msk [vmem:[%s494 + $0x129] sm:$0xff] %vm406, %v367
      %521 = vst.msk [vmem:[%s494 + $0x139] sm:$0xff] %vm406, %v368
      %522 = vst.msk [vmem:[%s494 + $0x141] sm:$0xff] %vm406, %v369
      %523 = vst.msk [vmem:[%s494 + $0x151] sm:$0xff] %vm406, %v370
      %524 = vst.msk [vmem:[%s494 + $0x159] sm:$0xff] %vm406, %v371
      %525 = vst.msk [vmem:[%s494 + $0x169] sm:$0xff] %vm406, %v372
      %526 = vst.msk [vmem:[%s494 + $0x171] sm:$0xff] %vm406, %v373
      %527 = vst.msk [vmem:[%s494 + $0x1b1] sm:$0xff] %vm406, %v374
      %528 = vst.msk [vmem:[%s494 + $0x1b9] sm:$0xff] %vm406, %v375
      %529 = vst.msk [vmem:[%s494 + $0x1c9] sm:$0xff] %vm406, %v376
      %530 = vst.msk [vmem:[%s494 + $0x1d1] sm:$0xff] %vm406, %v377
      %531 = vst.msk [vmem:[%s494 + $0x1e1] sm:$0xff] %vm406, %v378
      %532 = vst.msk [vmem:[%s494 + $0x1e9] sm:$0xff] %vm406, %v379
      %533 = vst.msk [vmem:[%s494 + $0x1f9] sm:$0xff] %vm406, %v380
      %534 = vst.msk [vmem:[%s494 + $0x201] sm:$0xff] %vm406, %v381
      %535 = vst.msk [vmem:[%s494 + $0x211] sm:$0xff] %vm406, %v382
      %536 = vst.msk [vmem:[%s494 + $0x219] sm:$0xff] %vm406, %v383
      %537 = vst.msk [vmem:[%s494 + $0x229] sm:$0xff] %vm406, %v384
      %538 = vst.msk [vmem:[%s494 + $0x231] sm:$0xff] %vm406, %v385
      %539 = vst.msk [vmem:[%s494 + $0x241] sm:$0xff] %vm406, %v386
      %540 = vst.msk [vmem:[%s494 + $0x249] sm:$0xff] %vm406, %v387
      %541 = vst.msk [vmem:[%s494 + $0x259] sm:$0xff] %vm406, %v388
      %542 = vst.msk [vmem:[%s494 + $0x261] sm:$0xff] %vm406, %v389
      %543 = vst.msk [vmem:[%s494 + $0x271] sm:$0xff] %vm406, %v390
      %544 = vst.msk [vmem:[%s494 + $0x279] sm:$0xff] %vm406, %v391
      %545 = vst.msk [vmem:[%s494 + $0x289] sm:$0xff] %vm406, %v392
      %546 = vst.msk [vmem:[%s494 + $0x291] sm:$0xff] %vm406, %v393
      %547 = vst.msk [vmem:[%s494 + $0x2a1] sm:$0xff] %vm406, %v394
      %548 = vst.msk [vmem:[%s494 + $0x2a9] sm:$0xff] %vm406, %v395
      %549 = vst.msk [vmem:[%s494 + $0x2b9] sm:$0xff] %vm406, %v396
      %550 = vst.msk [vmem:[%s494 + $0x2c1] sm:$0xff] %vm406, %v397
      %551 = vst.msk [vmem:[%s494 + $0x2d1] sm:$0xff] %vm406, %v398
      %552 = vst.msk [vmem:[%s494 + $0x2d9] sm:$0xff] %vm406, %v399
      %553 = vst.msk [vmem:[%s494 + $0x2e9] sm:$0xff] %vm406, %v400
      %554 = vst.msk [vmem:[%s494 + $0x2f1] sm:$0xff] %vm406, %v401
      %555 = vst.msk [vmem:[%s494 + $0x301] sm:$0xff] %vm406, %v402
      %556 = vst.msk [vmem:[%s494 + $0x309] sm:$0xff] %vm406, %v403
      %557 = vst.msk [vmem:[%s494 + $0x319] sm:$0xff] %vm406, %v404
      %558 = vst.msk [vmem:[%s494 + $0x321] sm:$0xff] %vm406, %v405
      %v559 = vld [vmem:[#allocation2] sm:$0xff]
      %v560 = vld [vmem:[#allocation2 + $0x8] sm:$0xff]
      %v561 = vld [vmem:[#allocation2 + $0x18] sm:$0xff]
      %v562 = vld [vmem:[#allocation2 + $0x20] sm:$0xff]
      %v563 = vld [vmem:[#allocation2 + $0x30] sm:$0xff]
      %v564 = vld [vmem:[#allocation2 + $0x38] sm:$0xff]
      %v565 = vld [vmem:[#allocation2 + $0x48] sm:$0xff]
      %v566 = vld [vmem:[#allocation2 + $0x50] sm:$0xff]
      %v567 = vld [vmem:[#allocation2 + $0x60] sm:$0xff]
      %v568 = vld [vmem:[#allocation2 + $0x68] sm:$0xff]
      %v569 = vld [vmem:[#allocation2 + $0x78] sm:$0xff]
      %v570 = vld [vmem:[#allocation2 + $0x80] sm:$0xff]
      %v571 = vld [vmem:[#allocation2 + $0x90] sm:$0xff]
      %v572 = vld [vmem:[#allocation2 + $0x98] sm:$0xff]
      %v573 = vld [vmem:[#allocation2 + $0xa8] sm:$0xff]
      %v574 = vld [vmem:[#allocation2 + $0xb0] sm:$0xff]
      %v575 = vld [vmem:[#allocation2 + $0xc0] sm:$0xff]
      %v576 = vld [vmem:[#allocation2 + $0xc8] sm:$0xff]
      %v577 = vld [vmem:[#allocation2 + $0xd8] sm:$0xff]
      %v578 = vld [vmem:[#allocation2 + $0xe0] sm:$0xff]
      %v579 = vld [vmem:[#allocation2 + $0xf0] sm:$0xff]
      %v580 = vld [vmem:[#allocation2 + $0xf8] sm:$0xff]
      %v581 = vld [vmem:[#allocation2 + $0x108] sm:$0xff]
      %v582 = vld [vmem:[#allocation2 + $0x110] sm:$0xff]
      %v583 = vld [vmem:[#allocation2 + $0x120] sm:$0xff]
      %v584 = vld [vmem:[#allocation2 + $0x128] sm:$0xff]
      %v585 = vld [vmem:[#allocation2 + $0x138] sm:$0xff]
      %v586 = vld [vmem:[#allocation2 + $0x140] sm:$0xff]
      %v587 = vld [vmem:[#allocation2 + $0x150] sm:$0xff]
      %v588 = vld [vmem:[#allocation2 + $0x158] sm:$0xff]
      %v589 = vld [vmem:[#allocation2 + $0x168] sm:$0xff]
      %v590 = vld [vmem:[#allocation2 + $0x170] sm:$0xff]
      %v591 = vld [vmem:[#allocation2 + $0x1b0] sm:$0xff]
      %v592 = vld [vmem:[#allocation2 + $0x1b8] sm:$0xff]
      %v593 = vld [vmem:[#allocation2 + $0x1c8] sm:$0xff]
      %v594 = vld [vmem:[#allocation2 + $0x1d0] sm:$0xff]
      %v595 = vld [vmem:[#allocation2 + $0x1e0] sm:$0xff]
      %v596 = vld [vmem:[#allocation2 + $0x1e8] sm:$0xff]
      %v597 = vld [vmem:[#allocation2 + $0x1f8] sm:$0xff]
      %v598 = vld [vmem:[#allocation2 + $0x200] sm:$0xff]
      %v599 = vld [vmem:[#allocation2 + $0x210] sm:$0xff]
      %v600 = vld [vmem:[#allocation2 + $0x218] sm:$0xff]
      %v601 = vld [vmem:[#allocation2 + $0x228] sm:$0xff]
      %v602 = vld [vmem:[#allocation2 + $0x230] sm:$0xff]
      %v603 = vld [vmem:[#allocation2 + $0x240] sm:$0xff]
      %v604 = vld [vmem:[#allocation2 + $0x248] sm:$0xff]
      %v605 = vld [vmem:[#allocation2 + $0x258] sm:$0xff]
      %v606 = vld [vmem:[#allocation2 + $0x260] sm:$0xff]
      %v607 = vld [vmem:[#allocation2 + $0x270] sm:$0xff]
      %v608 = vld [vmem:[#allocation2 + $0x278] sm:$0xff]
      %v609 = vld [vmem:[#allocation2 + $0x288] sm:$0xff]
      %v610 = vld [vmem:[#allocation2 + $0x290] sm:$0xff]
      %v611 = vld [vmem:[#allocation2 + $0x2a0] sm:$0xff]
      %v612 = vld [vmem:[#allocation2 + $0x2a8] sm:$0xff]
      %v613 = vld [vmem:[#allocation2 + $0x2b8] sm:$0xff]
      %v614 = vld [vmem:[#allocation2 + $0x2c0] sm:$0xff]
      %v615 = vld [vmem:[#allocation2 + $0x2d0] sm:$0xff]
      %v616 = vld [vmem:[#allocation2 + $0x2d8] sm:$0xff]
      %v617 = vld [vmem:[#allocation2 + $0x2e8] sm:$0xff]
      %v618 = vld [vmem:[#allocation2 + $0x2f0] sm:$0xff]
      %v619 = vld [vmem:[#allocation2 + $0x300] sm:$0xff]
      %v620 = vld [vmem:[#allocation2 + $0x308] sm:$0xff]
      %v621 = vld [vmem:[#allocation2 + $0x318] sm:$0xff]
      %v622 = vld [vmem:[#allocation2 + $0x320] sm:$0xff]
      %v623 = vpack.c.bf16 %v560, %v559
      %v624 = vpack.c.bf16 %v562, %v561
      %v625 = vpack.c.bf16 %v564, %v563
      %v626 = vpack.c.bf16 %v566, %v565
      %v627 = vpack.c.bf16 %v568, %v567
      %v628 = vpack.c.bf16 %v570, %v569
      %v629 = vpack.c.bf16 %v572, %v571
      %v630 = vpack.c.bf16 %v574, %v573
      %v631 = vpack.c.bf16 %v576, %v575
      %v632 = vpack.c.bf16 %v578, %v577
      %v633 = vpack.c.bf16 %v580, %v579
      %v634 = vpack.c.bf16 %v582, %v581
      %v635 = vpack.c.bf16 %v584, %v583
      %v636 = vpack.c.bf16 %v586, %v585
      %v637 = vpack.c.bf16 %v588, %v587
      %v638 = vpack.c.bf16 %v590, %v589
      %v639 = vpack.c.bf16 %v592, %v591
      %v640 = vpack.c.bf16 %v594, %v593
      %v641 = vpack.c.bf16 %v596, %v595
      %v642 = vpack.c.bf16 %v598, %v597
      %v643 = vpack.c.bf16 %v600, %v599
      %v644 = vpack.c.bf16 %v602, %v601
      %v645 = vpack.c.bf16 %v604, %v603
      %v646 = vpack.c.bf16 %v606, %v605
      %v647 = vpack.c.bf16 %v608, %v607
      %v648 = vpack.c.bf16 %v610, %v609
      %v649 = vpack.c.bf16 %v612, %v611
      %v650 = vpack.c.bf16 %v614, %v613
      %v651 = vpack.c.bf16 %v616, %v615
      %v652 = vpack.c.bf16 %v618, %v617
      %v653 = vpack.c.bf16 %v620, %v619
      %v654 = vpack.c.bf16 %v622, %v621
      %v655 = vld [vmem:[#allocation2 + $0x1] sm:$0xff]
      %v656 = vld [vmem:[#allocation2 + $0x9] sm:$0xff]
      %v657 = vld [vmem:[#allocation2 + $0x19] sm:$0xff]
      %v658 = vld [vmem:[#allocation2 + $0x21] sm:$0xff]
      %v659 = vld [vmem:[#allocation2 + $0x31] sm:$0xff]
      %v660 = vld [vmem:[#allocation2 + $0x39] sm:$0xff]
      %v661 = vld [vmem:[#allocation2 + $0x49] sm:$0xff]
      %v662 = vld [vmem:[#allocation2 + $0x51] sm:$0xff]
      %v663 = vld [vmem:[#allocation2 + $0x61] sm:$0xff]
      %v664 = vld [vmem:[#allocation2 + $0x69] sm:$0xff]
      %v665 = vld [vmem:[#allocation2 + $0x79] sm:$0xff]
      %v666 = vld [vmem:[#allocation2 + $0x81] sm:$0xff]
      %v667 = vld [vmem:[#allocation2 + $0x91] sm:$0xff]
      %v668 = vld [vmem:[#allocation2 + $0x99] sm:$0xff]
      %v669 = vld [vmem:[#allocation2 + $0xa9] sm:$0xff]
      %v670 = vld [vmem:[#allocation2 + $0xb1] sm:$0xff]
      %v671 = vld [vmem:[#allocation2 + $0xc1] sm:$0xff]
      %v672 = vld [vmem:[#allocation2 + $0xc9] sm:$0xff]
      %v673 = vld [vmem:[#allocation2 + $0xd9] sm:$0xff]
      %v674 = vld [vmem:[#allocation2 + $0xe1] sm:$0xff]
      %v675 = vld [vmem:[#allocation2 + $0xf1] sm:$0xff]
      %v676 = vld [vmem:[#allocation2 + $0xf9] sm:$0xff]
      %v677 = vld [vmem:[#allocation2 + $0x109] sm:$0xff]
      %v678 = vld [vmem:[#allocation2 + $0x111] sm:$0xff]
      %v679 = vld [vmem:[#allocation2 + $0x121] sm:$0xff]
      %v680 = vld [vmem:[#allocation2 + $0x129] sm:$0xff]
      %v681 = vld [vmem:[#allocation2 + $0x139] sm:$0xff]
      %v682 = vld [vmem:[#allocation2 + $0x141] sm:$0xff]
      %v683 = vld [vmem:[#allocation2 + $0x151] sm:$0xff]
      %v684 = vld [vmem:[#allocation2 + $0x159] sm:$0xff]
      %v685 = vld [vmem:[#allocation2 + $0x169] sm:$0xff]
      %v686 = vld [vmem:[#allocation2 + $0x171] sm:$0xff]
      %v687 = vld [vmem:[#allocation2 + $0x1b1] sm:$0xff]
      %v688 = vld [vmem:[#allocation2 + $0x1b9] sm:$0xff]
      %v689 = vld [vmem:[#allocation2 + $0x1c9] sm:$0xff]
      %v690 = vld [vmem:[#allocation2 + $0x1d1] sm:$0xff]
      %v691 = vld [vmem:[#allocation2 + $0x1e1] sm:$0xff]
      %v692 = vld [vmem:[#allocation2 + $0x1e9] sm:$0xff]
      %v693 = vld [vmem:[#allocation2 + $0x1f9] sm:$0xff]
      %v694 = vld [vmem:[#allocation2 + $0x201] sm:$0xff]
      %v695 = vld [vmem:[#allocation2 + $0x211] sm:$0xff]
      %v696 = vld [vmem:[#allocation2 + $0x219] sm:$0xff]
      %v697 = vld [vmem:[#allocation2 + $0x229] sm:$0xff]
      %v698 = vld [vmem:[#allocation2 + $0x231] sm:$0xff]
      %v699 = vld [vmem:[#allocation2 + $0x241] sm:$0xff]
      %v700 = vld [vmem:[#allocation2 + $0x249] sm:$0xff]
      %v701 = vld [vmem:[#allocation2 + $0x259] sm:$0xff]
      %v702 = vld [vmem:[#allocation2 + $0x261] sm:$0xff]
      %v703 = vld [vmem:[#allocation2 + $0x271] sm:$0xff]
      %v704 = vld [vmem:[#allocation2 + $0x279] sm:$0xff]
      %v705 = vld [vmem:[#allocation2 + $0x289] sm:$0xff]
      %v706 = vld [vmem:[#allocation2 + $0x291] sm:$0xff]
      %v707 = vld [vmem:[#allocation2 + $0x2a1] sm:$0xff]
      %v708 = vld [vmem:[#allocation2 + $0x2a9] sm:$0xff]
      %v709 = vld [vmem:[#allocation2 + $0x2b9] sm:$0xff]
      %v710 = vld [vmem:[#allocation2 + $0x2c1] sm:$0xff]
      %v711 = vld [vmem:[#allocation2 + $0x2d1] sm:$0xff]
      %v712 = vld [vmem:[#allocation2 + $0x2d9] sm:$0xff]
      %v713 = vld [vmem:[#allocation2 + $0x2e9] sm:$0xff]
      %v714 = vld [vmem:[#allocation2 + $0x2f1] sm:$0xff]
      %v715 = vld [vmem:[#allocation2 + $0x301] sm:$0xff]
      %v716 = vld [vmem:[#allocation2 + $0x309] sm:$0xff]
      %v717 = vld [vmem:[#allocation2 + $0x319] sm:$0xff]
      %v718 = vld [vmem:[#allocation2 + $0x321] sm:$0xff]
      %v719 = vpack.c.bf16 %v656, %v655
      %v720 = vpack.c.bf16 %v658, %v657
      %v721 = vpack.c.bf16 %v660, %v659
      %v722 = vpack.c.bf16 %v662, %v661
      %v723 = vpack.c.bf16 %v664, %v663
      %v724 = vpack.c.bf16 %v666, %v665
      %v725 = vpack.c.bf16 %v668, %v667
      %v726 = vpack.c.bf16 %v670, %v669
      %v727 = vpack.c.bf16 %v672, %v671
      %v728 = vpack.c.bf16 %v674, %v673
      %v729 = vpack.c.bf16 %v676, %v675
      %v730 = vpack.c.bf16 %v678, %v677
      %v731 = vpack.c.bf16 %v680, %v679
      %v732 = vpack.c.bf16 %v682, %v681
      %v733 = vpack.c.bf16 %v684, %v683
      %v734 = vpack.c.bf16 %v686, %v685
      %v735 = vpack.c.bf16 %v688, %v687
      %v736 = vpack.c.bf16 %v690, %v689
      %v737 = vpack.c.bf16 %v692, %v691
      %v738 = vpack.c.bf16 %v694, %v693
      %v739 = vpack.c.bf16 %v696, %v695
      %v740 = vpack.c.bf16 %v698, %v697
      %v741 = vpack.c.bf16 %v700, %v699
      %v742 = vpack.c.bf16 %v702, %v701
      %v743 = vpack.c.bf16 %v704, %v703
      %v744 = vpack.c.bf16 %v706, %v705
      %v745 = vpack.c.bf16 %v708, %v707
      %v746 = vpack.c.bf16 %v710, %v709
      %v747 = vpack.c.bf16 %v712, %v711
      %v748 = vpack.c.bf16 %v714, %v713
      %v749 = vpack.c.bf16 %v716, %v715
      %v750 = vpack.c.bf16 %v718, %v717
      %v751 = vld [vmem:[#allocation2 + $0x2] sm:$0xff]
      %v752 = vld [vmem:[#allocation2 + $0xa] sm:$0xff]
      %v753 = vld [vmem:[#allocation2 + $0x1a] sm:$0xff]
      %v754 = vld [vmem:[#allocation2 + $0x22] sm:$0xff]
      %v755 = vld [vmem:[#allocation2 + $0x32] sm:$0xff]
      %v756 = vld [vmem:[#allocation2 + $0x3a] sm:$0xff]
      %v757 = vld [vmem:[#allocation2 + $0x4a] sm:$0xff]
      %v758 = vld [vmem:[#allocation2 + $0x52] sm:$0xff]
      %v759 = vld [vmem:[#allocation2 + $0x62] sm:$0xff]
      %v760 = vld [vmem:[#allocation2 + $0x6a] sm:$0xff]
      %v761 = vld [vmem:[#allocation2 + $0x7a] sm:$0xff]
      %v762 = vld [vmem:[#allocation2 + $0x82] sm:$0xff]
      %v763 = vld [vmem:[#allocation2 + $0x92] sm:$0xff]
      %v764 = vld [vmem:[#allocation2 + $0x9a] sm:$0xff]
      %v765 = vld [vmem:[#allocation2 + $0xaa] sm:$0xff]
      %v766 = vld [vmem:[#allocation2 + $0xb2] sm:$0xff]
      %v767 = vld [vmem:[#allocation2 + $0xc2] sm:$0xff]
      %v768 = vld [vmem:[#allocation2 + $0xca] sm:$0xff]
      %v769 = vld [vmem:[#allocation2 + $0xda] sm:$0xff]
      %v770 = vld [vmem:[#allocation2 + $0xe2] sm:$0xff]
      %v771 = vld [vmem:[#allocation2 + $0xf2] sm:$0xff]
      %v772 = vld [vmem:[#allocation2 + $0xfa] sm:$0xff]
      %v773 = vld [vmem:[#allocation2 + $0x10a] sm:$0xff]
      %v774 = vld [vmem:[#allocation2 + $0x112] sm:$0xff]
      %v775 = vld [vmem:[#allocation2 + $0x122] sm:$0xff]
      %v776 = vld [vmem:[#allocation2 + $0x12a] sm:$0xff]
      %v777 = vld [vmem:[#allocation2 + $0x13a] sm:$0xff]
      %v778 = vld [vmem:[#allocation2 + $0x142] sm:$0xff]
      %v779 = vld [vmem:[#allocation2 + $0x152] sm:$0xff]
      %v780 = vld [vmem:[#allocation2 + $0x15a] sm:$0xff]
      %v781 = vld [vmem:[#allocation2 + $0x16a] sm:$0xff]
      %v782 = vld [vmem:[#allocation2 + $0x172] sm:$0xff]
      %v783 = vld [vmem:[#allocation2 + $0x1b2] sm:$0xff]
      %v784 = vld [vmem:[#allocation2 + $0x1ba] sm:$0xff]
      %v785 = vld [vmem:[#allocation2 + $0x1ca] sm:$0xff]
      %v786 = vld [vmem:[#allocation2 + $0x1d2] sm:$0xff]
      %v787 = vld [vmem:[#allocation2 + $0x1e2] sm:$0xff]
      %v788 = vld [vmem:[#allocation2 + $0x1ea] sm:$0xff]
      %v789 = vld [vmem:[#allocation2 + $0x1fa] sm:$0xff]
      %v790 = vld [vmem:[#allocation2 + $0x202] sm:$0xff]
      %v791 = vld [vmem:[#allocation2 + $0x212] sm:$0xff]
      %v792 = vld [vmem:[#allocation2 + $0x21a] sm:$0xff]
      %v793 = vld [vmem:[#allocation2 + $0x22a] sm:$0xff]
      %v794 = vld [vmem:[#allocation2 + $0x232] sm:$0xff]
      %v795 = vld [vmem:[#allocation2 + $0x242] sm:$0xff]
      %v796 = vld [vmem:[#allocation2 + $0x24a] sm:$0xff]
      %v797 = vld [vmem:[#allocation2 + $0x25a] sm:$0xff]
      %v798 = vld [vmem:[#allocation2 + $0x262] sm:$0xff]
      %v799 = vld [vmem:[#allocation2 + $0x272] sm:$0xff]
      %v800 = vld [vmem:[#allocation2 + $0x27a] sm:$0xff]
      %v801 = vld [vmem:[#allocation2 + $0x28a] sm:$0xff]
      %v802 = vld [vmem:[#allocation2 + $0x292] sm:$0xff]
      %v803 = vld [vmem:[#allocation2 + $0x2a2] sm:$0xff]
      %v804 = vld [vmem:[#allocation2 + $0x2aa] sm:$0xff]
      %v805 = vld [vmem:[#allocation2 + $0x2ba] sm:$0xff]
      %v806 = vld [vmem:[#allocation2 + $0x2c2] sm:$0xff]
      %v807 = vld [vmem:[#allocation2 + $0x2d2] sm:$0xff]
      %v808 = vld [vmem:[#allocation2 + $0x2da] sm:$0xff]
      %v809 = vld [vmem:[#allocation2 + $0x2ea] sm:$0xff]
      %v810 = vld [vmem:[#allocation2 + $0x2f2] sm:$0xff]
      %v811 = vld [vmem:[#allocation2 + $0x302] sm:$0xff]
      %v812 = vld [vmem:[#allocation2 + $0x30a] sm:$0xff]
      %v813 = vld [vmem:[#allocation2 + $0x31a] sm:$0xff]
      %v814 = vld [vmem:[#allocation2 + $0x322] sm:$0xff]
      %v815 = vpack.c.bf16 %v752, %v751
      %v816 = vpack.c.bf16 %v754, %v753
      %v817 = vpack.c.bf16 %v756, %v755
      %v818 = vpack.c.bf16 %v758, %v757
      %v819 = vpack.c.bf16 %v760, %v759
      %v820 = vpack.c.bf16 %v762, %v761
      %v821 = vpack.c.bf16 %v764, %v763
      %v822 = vpack.c.bf16 %v766, %v765
      %v823 = vpack.c.bf16 %v768, %v767
      %v824 = vpack.c.bf16 %v770, %v769
      %v825 = vpack.c.bf16 %v772, %v771
      %v826 = vpack.c.bf16 %v774, %v773
      %v827 = vpack.c.bf16 %v776, %v775
      %v828 = vpack.c.bf16 %v778, %v777
      %v829 = vpack.c.bf16 %v780, %v779
      %v830 = vpack.c.bf16 %v782, %v781
      %v831 = vpack.c.bf16 %v784, %v783
      %v832 = vpack.c.bf16 %v786, %v785
      %v833 = vpack.c.bf16 %v788, %v787
      %v834 = vpack.c.bf16 %v790, %v789
      %v835 = vpack.c.bf16 %v792, %v791
      %v836 = vpack.c.bf16 %v794, %v793
      %v837 = vpack.c.bf16 %v796, %v795
      %v838 = vpack.c.bf16 %v798, %v797
      %v839 = vpack.c.bf16 %v800, %v799
      %v840 = vpack.c.bf16 %v802, %v801
      %v841 = vpack.c.bf16 %v804, %v803
      %v842 = vpack.c.bf16 %v806, %v805
      %v843 = vpack.c.bf16 %v808, %v807
      %v844 = vpack.c.bf16 %v810, %v809
      %v845 = vpack.c.bf16 %v812, %v811
      %v846 = vpack.c.bf16 %v814, %v813
      %v847 = vld [vmem:[%s494] sm:$0xff]
      %v848 = vld [vmem:[%s494 + $0x8] sm:$0xff]
      %v849 = vld [vmem:[%s494 + $0x18] sm:$0xff]
      %v850 = vld [vmem:[%s494 + $0x20] sm:$0xff]
      %v851 = vld [vmem:[%s494 + $0x30] sm:$0xff]
      %v852 = vld [vmem:[%s494 + $0x38] sm:$0xff]
      %v853 = vld [vmem:[%s494 + $0x48] sm:$0xff]
      %v854 = vld [vmem:[%s494 + $0x50] sm:$0xff]
      %v855 = vld [vmem:[%s494 + $0x60] sm:$0xff]
      %v856 = vld [vmem:[%s494 + $0x68] sm:$0xff]
      %v857 = vld [vmem:[%s494 + $0x78] sm:$0xff]
      %v858 = vld [vmem:[%s494 + $0x80] sm:$0xff]
      %v859 = vld [vmem:[%s494 + $0x90] sm:$0xff]
      %v860 = vld [vmem:[%s494 + $0x98] sm:$0xff]
      %v861 = vld [vmem:[%s494 + $0xa8] sm:$0xff]
      %v862 = vld [vmem:[%s494 + $0xb0] sm:$0xff]
      %v863 = vld [vmem:[%s494 + $0xc0] sm:$0xff]
      %v864 = vld [vmem:[%s494 + $0xc8] sm:$0xff]
      %v865 = vld [vmem:[%s494 + $0xd8] sm:$0xff]
      %v866 = vld [vmem:[%s494 + $0xe0] sm:$0xff]
      %v867 = vld [vmem:[%s494 + $0xf0] sm:$0xff]
      %v868 = vld [vmem:[%s494 + $0xf8] sm:$0xff]
      %v869 = vld [vmem:[%s494 + $0x108] sm:$0xff]
      %v870 = vld [vmem:[%s494 + $0x110] sm:$0xff]
      %v871 = vld [vmem:[%s494 + $0x120] sm:$0xff]
      %v872 = vld [vmem:[%s494 + $0x128] sm:$0xff]
      %v873 = vld [vmem:[%s494 + $0x138] sm:$0xff]
      %v874 = vld [vmem:[%s494 + $0x140] sm:$0xff]
      %v875 = vld [vmem:[%s494 + $0x150] sm:$0xff]
      %v876 = vld [vmem:[%s494 + $0x158] sm:$0xff]
      %v877 = vld [vmem:[%s494 + $0x168] sm:$0xff]
      %v878 = vld [vmem:[%s494 + $0x170] sm:$0xff]
      %v879 = vld [vmem:[%s494 + $0x1b0] sm:$0xff]
      %v880 = vld [vmem:[%s494 + $0x1b8] sm:$0xff]
      %v881 = vld [vmem:[%s494 + $0x1c8] sm:$0xff]
      %v882 = vld [vmem:[%s494 + $0x1d0] sm:$0xff]
      %v883 = vld [vmem:[%s494 + $0x1e0] sm:$0xff]
      %v884 = vld [vmem:[%s494 + $0x1e8] sm:$0xff]
      %v885 = vld [vmem:[%s494 + $0x1f8] sm:$0xff]
      %v886 = vld [vmem:[%s494 + $0x200] sm:$0xff]
      %v887 = vld [vmem:[%s494 + $0x210] sm:$0xff]
      %v888 = vld [vmem:[%s494 + $0x218] sm:$0xff]
      %v889 = vld [vmem:[%s494 + $0x228] sm:$0xff]
      %v890 = vld [vmem:[%s494 + $0x230] sm:$0xff]
      %v891 = vld [vmem:[%s494 + $0x240] sm:$0xff]
      %v892 = vld [vmem:[%s494 + $0x248] sm:$0xff]
      %v893 = vld [vmem:[%s494 + $0x258] sm:$0xff]
      %v894 = vld [vmem:[%s494 + $0x260] sm:$0xff]
      %v895 = vld [vmem:[%s494 + $0x270] sm:$0xff]
      %v896 = vld [vmem:[%s494 + $0x278] sm:$0xff]
      %v897 = vld [vmem:[%s494 + $0x288] sm:$0xff]
      %v898 = vld [vmem:[%s494 + $0x290] sm:$0xff]
      %v899 = vld [vmem:[%s494 + $0x2a0] sm:$0xff]
      %v900 = vld [vmem:[%s494 + $0x2a8] sm:$0xff]
      %v901 = vld [vmem:[%s494 + $0x2b8] sm:$0xff]
      %v902 = vld [vmem:[%s494 + $0x2c0] sm:$0xff]
      %v903 = vld [vmem:[%s494 + $0x2d0] sm:$0xff]
      %v904 = vld [vmem:[%s494 + $0x2d8] sm:$0xff]
      %v905 = vld [vmem:[%s494 + $0x2e8] sm:$0xff]
      %v906 = vld [vmem:[%s494 + $0x2f0] sm:$0xff]
      %v907 = vld [vmem:[%s494 + $0x300] sm:$0xff]
      %v908 = vld [vmem:[%s494 + $0x308] sm:$0xff]
      %v909 = vld [vmem:[%s494 + $0x318] sm:$0xff]
      %v910 = vld [vmem:[%s494 + $0x320] sm:$0xff]
      %v911 = vpack.c.bf16 %v848, %v847
      %v912 = vpack.c.bf16 %v850, %v849
      %v913 = vpack.c.bf16 %v852, %v851
      %v914 = vpack.c.bf16 %v854, %v853
      %v915 = vpack.c.bf16 %v856, %v855
      %v916 = vpack.c.bf16 %v858, %v857
      %v917 = vpack.c.bf16 %v860, %v859
      %v918 = vpack.c.bf16 %v862, %v861
      %v919 = vpack.c.bf16 %v864, %v863
      %v920 = vpack.c.bf16 %v866, %v865
      %v921 = vpack.c.bf16 %v868, %v867
      %v922 = vpack.c.bf16 %v870, %v869
      %v923 = vpack.c.bf16 %v872, %v871
      %v924 = vpack.c.bf16 %v874, %v873
      %v925 = vpack.c.bf16 %v876, %v875
      %v926 = vpack.c.bf16 %v878, %v877
      %v927 = vpack.c.bf16 %v880, %v879
      %v928 = vpack.c.bf16 %v882, %v881
      %v929 = vpack.c.bf16 %v884, %v883
      %v930 = vpack.c.bf16 %v886, %v885
      %v931 = vpack.c.bf16 %v888, %v887
      %v932 = vpack.c.bf16 %v890, %v889
      %v933 = vpack.c.bf16 %v892, %v891
      %v934 = vpack.c.bf16 %v894, %v893
      %v935 = vpack.c.bf16 %v896, %v895
      %v936 = vpack.c.bf16 %v898, %v897
      %v937 = vpack.c.bf16 %v900, %v899
      %v938 = vpack.c.bf16 %v902, %v901
      %v939 = vpack.c.bf16 %v904, %v903
      %v940 = vpack.c.bf16 %v906, %v905
      %v941 = vpack.c.bf16 %v908, %v907
      %v942 = vpack.c.bf16 %v910, %v909
      %v943 = vld [vmem:[%s494 + $0x1] sm:$0xff]
      %v944 = vld [vmem:[%s494 + $0x9] sm:$0xff]
      %v945 = vld [vmem:[%s494 + $0x19] sm:$0xff]
      %v946 = vld [vmem:[%s494 + $0x21] sm:$0xff]
      %v947 = vld [vmem:[%s494 + $0x31] sm:$0xff]
      %v948 = vld [vmem:[%s494 + $0x39] sm:$0xff]
      %v949 = vld [vmem:[%s494 + $0x49] sm:$0xff]
      %v950 = vld [vmem:[%s494 + $0x51] sm:$0xff]
      %v951 = vld [vmem:[%s494 + $0x61] sm:$0xff]
      %v952 = vld [vmem:[%s494 + $0x69] sm:$0xff]
      %v953 = vld [vmem:[%s494 + $0x79] sm:$0xff]
      %v954 = vld [vmem:[%s494 + $0x81] sm:$0xff]
      %v955 = vld [vmem:[%s494 + $0x91] sm:$0xff]
      %v956 = vld [vmem:[%s494 + $0x99] sm:$0xff]
      %v957 = vld [vmem:[%s494 + $0xa9] sm:$0xff]
      %v958 = vld [vmem:[%s494 + $0xb1] sm:$0xff]
      %v959 = vld [vmem:[%s494 + $0xc1] sm:$0xff]
      %v960 = vld [vmem:[%s494 + $0xc9] sm:$0xff]
      %v961 = vld [vmem:[%s494 + $0xd9] sm:$0xff]
      %v962 = vld [vmem:[%s494 + $0xe1] sm:$0xff]
      %v963 = vld [vmem:[%s494 + $0xf1] sm:$0xff]
      %v964 = vld [vmem:[%s494 + $0xf9] sm:$0xff]
      %v965 = vld [vmem:[%s494 + $0x109] sm:$0xff]
      %v966 = vld [vmem:[%s494 + $0x111] sm:$0xff]
      %v967 = vld [vmem:[%s494 + $0x121] sm:$0xff]
      %v968 = vld [vmem:[%s494 + $0x129] sm:$0xff]
      %v969 = vld [vmem:[%s494 + $0x139] sm:$0xff]
      %v970 = vld [vmem:[%s494 + $0x141] sm:$0xff]
      %v971 = vld [vmem:[%s494 + $0x151] sm:$0xff]
      %v972 = vld [vmem:[%s494 + $0x159] sm:$0xff]
      %v973 = vld [vmem:[%s494 + $0x169] sm:$0xff]
      %v974 = vld [vmem:[%s494 + $0x171] sm:$0xff]
      %v975 = vld [vmem:[%s494 + $0x1b1] sm:$0xff]
      %v976 = vld [vmem:[%s494 + $0x1b9] sm:$0xff]
      %v977 = vld [vmem:[%s494 + $0x1c9] sm:$0xff]
      %v978 = vld [vmem:[%s494 + $0x1d1] sm:$0xff]
      %v979 = vld [vmem:[%s494 + $0x1e1] sm:$0xff]
      %v980 = vld [vmem:[%s494 + $0x1e9] sm:$0xff]
      %v981 = vld [vmem:[%s494 + $0x1f9] sm:$0xff]
      %v982 = vld [vmem:[%s494 + $0x201] sm:$0xff]
      %v983 = vld [vmem:[%s494 + $0x211] sm:$0xff]
      %v984 = vld [vmem:[%s494 + $0x219] sm:$0xff]
      %v985 = vld [vmem:[%s494 + $0x229] sm:$0xff]
      %v986 = vld [vmem:[%s494 + $0x231] sm:$0xff]
      %v987 = vld [vmem:[%s494 + $0x241] sm:$0xff]
      %v988 = vld [vmem:[%s494 + $0x249] sm:$0xff]
      %v989 = vld [vmem:[%s494 + $0x259] sm:$0xff]
      %v990 = vld [vmem:[%s494 + $0x261] sm:$0xff]
      %v991 = vld [vmem:[%s494 + $0x271] sm:$0xff]
      %v992 = vld [vmem:[%s494 + $0x279] sm:$0xff]
      %v993 = vld [vmem:[%s494 + $0x289] sm:$0xff]
      %v994 = vld [vmem:[%s494 + $0x291] sm:$0xff]
      %v995 = vld [vmem:[%s494 + $0x2a1] sm:$0xff]
      %v996 = vld [vmem:[%s494 + $0x2a9] sm:$0xff]
      %v997 = vld [vmem:[%s494 + $0x2b9] sm:$0xff]
      %v998 = vld [vmem:[%s494 + $0x2c1] sm:$0xff]
      %v999 = vld [vmem:[%s494 + $0x2d1] sm:$0xff]
      %v1000 = vld [vmem:[%s494 + $0x2d9] sm:$0xff]
      %v1001 = vld [vmem:[%s494 + $0x2e9] sm:$0xff]
      %v1002 = vld [vmem:[%s494 + $0x2f1] sm:$0xff]
      %v1003 = vld [vmem:[%s494 + $0x301] sm:$0xff]
      %v1004 = vld [vmem:[%s494 + $0x309] sm:$0xff]
      %v1005 = vld [vmem:[%s494 + $0x319] sm:$0xff]
      %v1006 = vld [vmem:[%s494 + $0x321] sm:$0xff]
      %v1007 = vpack.c.bf16 %v944, %v943
      %v1008 = vpack.c.bf16 %v946, %v945
      %v1009 = vpack.c.bf16 %v948, %v947
      %v1010 = vpack.c.bf16 %v950, %v949
      %v1011 = vpack.c.bf16 %v952, %v951
      %v1012 = vpack.c.bf16 %v954, %v953
      %v1013 = vpack.c.bf16 %v956, %v955
      %v1014 = vpack.c.bf16 %v958, %v957
      %v1015 = vpack.c.bf16 %v960, %v959
      %v1016 = vpack.c.bf16 %v962, %v961
      %v1017 = vpack.c.bf16 %v964, %v963
      %v1018 = vpack.c.bf16 %v966, %v965
      %v1019 = vpack.c.bf16 %v968, %v967
      %v1020 = vpack.c.bf16 %v970, %v969
      %v1021 = vpack.c.bf16 %v972, %v971
      %v1022 = vpack.c.bf16 %v974, %v973
      %v1023 = vpack.c.bf16 %v976, %v975
      %v1024 = vpack.c.bf16 %v978, %v977
      %v1025 = vpack.c.bf16 %v980, %v979
      %v1026 = vpack.c.bf16 %v982, %v981
      %v1027 = vpack.c.bf16 %v984, %v983
      %v1028 = vpack.c.bf16 %v986, %v985
      %v1029 = vpack.c.bf16 %v988, %v987
      %v1030 = vpack.c.bf16 %v990, %v989
      %v1031 = vpack.c.bf16 %v992, %v991
      %v1032 = vpack.c.bf16 %v994, %v993
      %v1033 = vpack.c.bf16 %v996, %v995
      %v1034 = vpack.c.bf16 %v998, %v997
      %v1035 = vpack.c.bf16 %v1000, %v999
      %v1036 = vpack.c.bf16 %v1002, %v1001
      %v1037 = vpack.c.bf16 %v1004, %v1003
      %v1038 = vpack.c.bf16 %v1006, %v1005
      %v1039 = vld [vmem:[%s494 + $0x2] sm:$0xff]
      %v1040 = vld [vmem:[%s494 + $0xa] sm:$0xff]
      %v1041 = vld [vmem:[%s494 + $0x1a] sm:$0xff]
      %v1042 = vld [vmem:[%s494 + $0x22] sm:$0xff]
      %v1043 = vld [vmem:[%s494 + $0x32] sm:$0xff]
      %v1044 = vld [vmem:[%s494 + $0x3a] sm:$0xff]
      %v1045 = vld [vmem:[%s494 + $0x4a] sm:$0xff]
      %v1046 = vld [vmem:[%s494 + $0x52] sm:$0xff]
      %v1047 = vld [vmem:[%s494 + $0x62] sm:$0xff]
      %v1048 = vld [vmem:[%s494 + $0x6a] sm:$0xff]
      %v1049 = vld [vmem:[%s494 + $0x7a] sm:$0xff]
      %v1050 = vld [vmem:[%s494 + $0x82] sm:$0xff]
      %v1051 = vld [vmem:[%s494 + $0x92] sm:$0xff]
      %v1052 = vld [vmem:[%s494 + $0x9a] sm:$0xff]
      %v1053 = vld [vmem:[%s494 + $0xaa] sm:$0xff]
      %v1054 = vld [vmem:[%s494 + $0xb2] sm:$0xff]
      %v1055 = vld [vmem:[%s494 + $0xc2] sm:$0xff]
      %v1056 = vld [vmem:[%s494 + $0xca] sm:$0xff]
      %v1057 = vld [vmem:[%s494 + $0xda] sm:$0xff]
      %v1058 = vld [vmem:[%s494 + $0xe2] sm:$0xff]
      %v1059 = vld [vmem:[%s494 + $0xf2] sm:$0xff]
      %v1060 = vld [vmem:[%s494 + $0xfa] sm:$0xff]
      %v1061 = vld [vmem:[%s494 + $0x10a] sm:$0xff]
      %v1062 = vld [vmem:[%s494 + $0x112] sm:$0xff]
      %v1063 = vld [vmem:[%s494 + $0x122] sm:$0xff]
      %v1064 = vld [vmem:[%s494 + $0x12a] sm:$0xff]
      %v1065 = vld [vmem:[%s494 + $0x13a] sm:$0xff]
      %v1066 = vld [vmem:[%s494 + $0x142] sm:$0xff]
      %v1067 = vld [vmem:[%s494 + $0x152] sm:$0xff]
      %v1068 = vld [vmem:[%s494 + $0x15a] sm:$0xff]
      %v1069 = vld [vmem:[%s494 + $0x16a] sm:$0xff]
      %v1070 = vld [vmem:[%s494 + $0x172] sm:$0xff]
      %v1071 = vld [vmem:[%s494 + $0x1b2] sm:$0xff]
      %v1072 = vld [vmem:[%s494 + $0x1ba] sm:$0xff]
      %v1073 = vld [vmem:[%s494 + $0x1ca] sm:$0xff]
      %v1074 = vld [vmem:[%s494 + $0x1d2] sm:$0xff]
      %v1075 = vld [vmem:[%s494 + $0x1e2] sm:$0xff]
      %v1076 = vld [vmem:[%s494 + $0x1ea] sm:$0xff]
      %v1077 = vld [vmem:[%s494 + $0x1fa] sm:$0xff]
      %v1078 = vld [vmem:[%s494 + $0x202] sm:$0xff]
      %v1079 = vld [vmem:[%s494 + $0x212] sm:$0xff]
      %v1080 = vld [vmem:[%s494 + $0x21a] sm:$0xff]
      %v1081 = vld [vmem:[%s494 + $0x22a] sm:$0xff]
      %v1082 = vld [vmem:[%s494 + $0x232] sm:$0xff]
      %v1083 = vld [vmem:[%s494 + $0x242] sm:$0xff]
      %v1084 = vld [vmem:[%s494 + $0x24a] sm:$0xff]
      %v1085 = vld [vmem:[%s494 + $0x25a] sm:$0xff]
      %v1086 = vld [vmem:[%s494 + $0x262] sm:$0xff]
      %v1087 = vld [vmem:[%s494 + $0x272] sm:$0xff]
      %v1088 = vld [vmem:[%s494 + $0x27a] sm:$0xff]
      %v1089 = vld [vmem:[%s494 + $0x28a] sm:$0xff]
      %v1090 = vld [vmem:[%s494 + $0x292] sm:$0xff]
      %v1091 = vld [vmem:[%s494 + $0x2a2] sm:$0xff]
      %v1092 = vld [vmem:[%s494 + $0x2aa] sm:$0xff]
      %v1093 = vld [vmem:[%s494 + $0x2ba] sm:$0xff]
      %v1094 = vld [vmem:[%s494 + $0x2c2] sm:$0xff]
      %v1095 = vld [vmem:[%s494 + $0x2d2] sm:$0xff]
      %v1096 = vld [vmem:[%s494 + $0x2da] sm:$0xff]
      %v1097 = vld [vmem:[%s494 + $0x2ea] sm:$0xff]
      %v1098 = vld [vmem:[%s494 + $0x2f2] sm:$0xff]
      %v1099 = vld [vmem:[%s494 + $0x302] sm:$0xff]
      %v1100 = vld [vmem:[%s494 + $0x30a] sm:$0xff]
      %v1101 = vld [vmem:[%s494 + $0x31a] sm:$0xff]
      %v1102 = vld [vmem:[%s494 + $0x322] sm:$0xff]
      %v1103 = vpack.c.bf16 %v1040, %v1039
      %v1104 = vpack.c.bf16 %v1042, %v1041
      %v1105 = vpack.c.bf16 %v1044, %v1043
      %v1106 = vpack.c.bf16 %v1046, %v1045
      %v1107 = vpack.c.bf16 %v1048, %v1047
      %v1108 = vpack.c.bf16 %v1050, %v1049
      %v1109 = vpack.c.bf16 %v1052, %v1051
      %v1110 = vpack.c.bf16 %v1054, %v1053
      %v1111 = vpack.c.bf16 %v1056, %v1055
      %v1112 = vpack.c.bf16 %v1058, %v1057
      %v1113 = vpack.c.bf16 %v1060, %v1059
      %v1114 = vpack.c.bf16 %v1062, %v1061
      %v1115 = vpack.c.bf16 %v1064, %v1063
      %v1116 = vpack.c.bf16 %v1066, %v1065
      %v1117 = vpack.c.bf16 %v1068, %v1067
      %v1118 = vpack.c.bf16 %v1070, %v1069
      %v1119 = vpack.c.bf16 %v1072, %v1071
      %v1120 = vpack.c.bf16 %v1074, %v1073
      %v1121 = vpack.c.bf16 %v1076, %v1075
      %v1122 = vpack.c.bf16 %v1078, %v1077
      %v1123 = vpack.c.bf16 %v1080, %v1079
      %v1124 = vpack.c.bf16 %v1082, %v1081
      %v1125 = vpack.c.bf16 %v1084, %v1083
      %v1126 = vpack.c.bf16 %v1086, %v1085
      %v1127 = vpack.c.bf16 %v1088, %v1087
      %v1128 = vpack.c.bf16 %v1090, %v1089
      %v1129 = vpack.c.bf16 %v1092, %v1091
      %v1130 = vpack.c.bf16 %v1094, %v1093
      %v1131 = vpack.c.bf16 %v1096, %v1095
      %v1132 = vpack.c.bf16 %v1098, %v1097
      %v1133 = vpack.c.bf16 %v1100, %v1099
      %v1134 = vpack.c.bf16 %v1102, %v1101
      %s1135 = scalar_lea.vmem [#allocation2], 48
      %v1136 = vld [vmem:[%s1135] sm:$0xff]
      %v1137 = vld [vmem:[%s1135 + $0x8] sm:$0xff]
      %v1138 = vld [vmem:[%s1135 + $0x18] sm:$0xff]
      %v1139 = vld [vmem:[%s1135 + $0x20] sm:$0xff]
      %v1140 = vld [vmem:[%s1135 + $0x30] sm:$0xff]
      %v1141 = vld [vmem:[%s1135 + $0x38] sm:$0xff]
      %v1142 = vld [vmem:[%s1135 + $0x48] sm:$0xff]
      %v1143 = vld [vmem:[%s1135 + $0x50] sm:$0xff]
      %v1144 = vld [vmem:[%s1135 + $0x60] sm:$0xff]
      %v1145 = vld [vmem:[%s1135 + $0x68] sm:$0xff]
      %v1146 = vld [vmem:[%s1135 + $0x78] sm:$0xff]
      %v1147 = vld [vmem:[%s1135 + $0x80] sm:$0xff]
      %v1148 = vld [vmem:[%s1135 + $0x90] sm:$0xff]
      %v1149 = vld [vmem:[%s1135 + $0x98] sm:$0xff]
      %v1150 = vld [vmem:[%s1135 + $0xa8] sm:$0xff]
      %v1151 = vld [vmem:[%s1135 + $0xb0] sm:$0xff]
      %v1152 = vld [vmem:[%s1135 + $0xc0] sm:$0xff]
      %v1153 = vld [vmem:[%s1135 + $0xc8] sm:$0xff]
      %v1154 = vld [vmem:[%s1135 + $0xd8] sm:$0xff]
      %v1155 = vld [vmem:[%s1135 + $0xe0] sm:$0xff]
      %v1156 = vld [vmem:[%s1135 + $0xf0] sm:$0xff]
      %v1157 = vld [vmem:[%s1135 + $0xf8] sm:$0xff]
      %v1158 = vld [vmem:[%s1135 + $0x108] sm:$0xff]
      %v1159 = vld [vmem:[%s1135 + $0x110] sm:$0xff]
      %v1160 = vld [vmem:[%s1135 + $0x120] sm:$0xff]
      %v1161 = vld [vmem:[%s1135 + $0x128] sm:$0xff]
      %v1162 = vld [vmem:[%s1135 + $0x138] sm:$0xff]
      %v1163 = vld [vmem:[%s1135 + $0x140] sm:$0xff]
      %v1164 = vld [vmem:[%s1135 + $0x150] sm:$0xff]
      %v1165 = vld [vmem:[%s1135 + $0x158] sm:$0xff]
      %v1166 = vld [vmem:[%s1135 + $0x168] sm:$0xff]
      %v1167 = vld [vmem:[%s1135 + $0x170] sm:$0xff]
      %v1168 = vld [vmem:[%s1135 + $0x1b0] sm:$0xff]
      %v1169 = vld [vmem:[%s1135 + $0x1b8] sm:$0xff]
      %v1170 = vld [vmem:[%s1135 + $0x1c8] sm:$0xff]
      %v1171 = vld [vmem:[%s1135 + $0x1d0] sm:$0xff]
      %v1172 = vld [vmem:[%s1135 + $0x1e0] sm:$0xff]
      %v1173 = vld [vmem:[%s1135 + $0x1e8] sm:$0xff]
      %v1174 = vld [vmem:[%s1135 + $0x1f8] sm:$0xff]
      %v1175 = vld [vmem:[%s1135 + $0x200] sm:$0xff]
      %v1176 = vld [vmem:[%s1135 + $0x210] sm:$0xff]
      %v1177 = vld [vmem:[%s1135 + $0x218] sm:$0xff]
      %v1178 = vld [vmem:[%s1135 + $0x228] sm:$0xff]
      %v1179 = vld [vmem:[%s1135 + $0x230] sm:$0xff]
      %v1180 = vld [vmem:[%s1135 + $0x240] sm:$0xff]
      %v1181 = vld [vmem:[%s1135 + $0x248] sm:$0xff]
      %v1182 = vld [vmem:[%s1135 + $0x258] sm:$0xff]
      %v1183 = vld [vmem:[%s1135 + $0x260] sm:$0xff]
      %v1184 = vld [vmem:[%s1135 + $0x270] sm:$0xff]
      %v1185 = vld [vmem:[%s1135 + $0x278] sm:$0xff]
      %v1186 = vld [vmem:[%s1135 + $0x288] sm:$0xff]
      %v1187 = vld [vmem:[%s1135 + $0x290] sm:$0xff]
      %v1188 = vld [vmem:[%s1135 + $0x2a0] sm:$0xff]
      %v1189 = vld [vmem:[%s1135 + $0x2a8] sm:$0xff]
      %v1190 = vld [vmem:[%s1135 + $0x2b8] sm:$0xff]
      %v1191 = vld [vmem:[%s1135 + $0x2c0] sm:$0xff]
      %v1192 = vld [vmem:[%s1135 + $0x2d0] sm:$0xff]
      %v1193 = vld [vmem:[%s1135 + $0x2d8] sm:$0xff]
      %v1194 = vld [vmem:[%s1135 + $0x2e8] sm:$0xff]
      %v1195 = vld [vmem:[%s1135 + $0x2f0] sm:$0xff]
      %v1196 = vld [vmem:[%s1135 + $0x300] sm:$0xff]
      %v1197 = vld [vmem:[%s1135 + $0x308] sm:$0xff]
      %v1198 = vld [vmem:[%s1135 + $0x318] sm:$0xff]
      %v1199 = vld [vmem:[%s1135 + $0x320] sm:$0xff]
      %v1200 = vpack.c.bf16 %v1137, %v1136
      %v1201 = vpack.c.bf16 %v1139, %v1138
      %v1202 = vpack.c.bf16 %v1141, %v1140
      %v1203 = vpack.c.bf16 %v1143, %v1142
      %v1204 = vpack.c.bf16 %v1145, %v1144
      %v1205 = vpack.c.bf16 %v1147, %v1146
      %v1206 = vpack.c.bf16 %v1149, %v1148
      %v1207 = vpack.c.bf16 %v1151, %v1150
      %v1208 = vpack.c.bf16 %v1153, %v1152
      %v1209 = vpack.c.bf16 %v1155, %v1154
      %v1210 = vpack.c.bf16 %v1157, %v1156
      %v1211 = vpack.c.bf16 %v1159, %v1158
      %v1212 = vpack.c.bf16 %v1161, %v1160
      %v1213 = vpack.c.bf16 %v1163, %v1162
      %v1214 = vpack.c.bf16 %v1165, %v1164
      %v1215 = vpack.c.bf16 %v1167, %v1166
      %v1216 = vpack.c.bf16 %v1169, %v1168
      %v1217 = vpack.c.bf16 %v1171, %v1170
      %v1218 = vpack.c.bf16 %v1173, %v1172
      %v1219 = vpack.c.bf16 %v1175, %v1174
      %v1220 = vpack.c.bf16 %v1177, %v1176
      %v1221 = vpack.c.bf16 %v1179, %v1178
      %v1222 = vpack.c.bf16 %v1181, %v1180
      %v1223 = vpack.c.bf16 %v1183, %v1182
      %v1224 = vpack.c.bf16 %v1185, %v1184
      %v1225 = vpack.c.bf16 %v1187, %v1186
      %v1226 = vpack.c.bf16 %v1189, %v1188
      %v1227 = vpack.c.bf16 %v1191, %v1190
      %v1228 = vpack.c.bf16 %v1193, %v1192
      %v1229 = vpack.c.bf16 %v1195, %v1194
      %v1230 = vpack.c.bf16 %v1197, %v1196
      %v1231 = vpack.c.bf16 %v1199, %v1198
      %v1232 = vld [vmem:[%s1135 + $0x1] sm:$0xff]
      %v1233 = vld [vmem:[%s1135 + $0x9] sm:$0xff]
      %v1234 = vld [vmem:[%s1135 + $0x19] sm:$0xff]
      %v1235 = vld [vmem:[%s1135 + $0x21] sm:$0xff]
      %v1236 = vld [vmem:[%s1135 + $0x31] sm:$0xff]
      %v1237 = vld [vmem:[%s1135 + $0x39] sm:$0xff]
      %v1238 = vld [vmem:[%s1135 + $0x49] sm:$0xff]
      %v1239 = vld [vmem:[%s1135 + $0x51] sm:$0xff]
      %v1240 = vld [vmem:[%s1135 + $0x61] sm:$0xff]
      %v1241 = vld [vmem:[%s1135 + $0x69] sm:$0xff]
      %v1242 = vld [vmem:[%s1135 + $0x79] sm:$0xff]
      %v1243 = vld [vmem:[%s1135 + $0x81] sm:$0xff]
      %v1244 = vld [vmem:[%s1135 + $0x91] sm:$0xff]
      %v1245 = vld [vmem:[%s1135 + $0x99] sm:$0xff]
      %v1246 = vld [vmem:[%s1135 + $0xa9] sm:$0xff]
      %v1247 = vld [vmem:[%s1135 + $0xb1] sm:$0xff]
      %v1248 = vld [vmem:[%s1135 + $0xc1] sm:$0xff]
      %v1249 = vld [vmem:[%s1135 + $0xc9] sm:$0xff]
      %v1250 = vld [vmem:[%s1135 + $0xd9] sm:$0xff]
      %v1251 = vld [vmem:[%s1135 + $0xe1] sm:$0xff]
      %v1252 = vld [vmem:[%s1135 + $0xf1] sm:$0xff]
      %v1253 = vld [vmem:[%s1135 + $0xf9] sm:$0xff]
      %v1254 = vld [vmem:[%s1135 + $0x109] sm:$0xff]
      %v1255 = vld [vmem:[%s1135 + $0x111] sm:$0xff]
      %v1256 = vld [vmem:[%s1135 + $0x121] sm:$0xff]
      %v1257 = vld [vmem:[%s1135 + $0x129] sm:$0xff]
      %v1258 = vld [vmem:[%s1135 + $0x139] sm:$0xff]
      %v1259 = vld [vmem:[%s1135 + $0x141] sm:$0xff]
      %v1260 = vld [vmem:[%s1135 + $0x151] sm:$0xff]
      %v1261 = vld [vmem:[%s1135 + $0x159] sm:$0xff]
      %v1262 = vld [vmem:[%s1135 + $0x169] sm:$0xff]
      %v1263 = vld [vmem:[%s1135 + $0x171] sm:$0xff]
      %v1264 = vld [vmem:[%s1135 + $0x1b1] sm:$0xff]
      %v1265 = vld [vmem:[%s1135 + $0x1b9] sm:$0xff]
      %v1266 = vld [vmem:[%s1135 + $0x1c9] sm:$0xff]
      %v1267 = vld [vmem:[%s1135 + $0x1d1] sm:$0xff]
      %v1268 = vld [vmem:[%s1135 + $0x1e1] sm:$0xff]
      %v1269 = vld [vmem:[%s1135 + $0x1e9] sm:$0xff]
      %v1270 = vld [vmem:[%s1135 + $0x1f9] sm:$0xff]
      %v1271 = vld [vmem:[%s1135 + $0x201] sm:$0xff]
      %v1272 = vld [vmem:[%s1135 + $0x211] sm:$0xff]
      %v1273 = vld [vmem:[%s1135 + $0x219] sm:$0xff]
      %v1274 = vld [vmem:[%s1135 + $0x229] sm:$0xff]
      %v1275 = vld [vmem:[%s1135 + $0x231] sm:$0xff]
      %v1276 = vld [vmem:[%s1135 + $0x241] sm:$0xff]
      %v1277 = vld [vmem:[%s1135 + $0x249] sm:$0xff]
      %v1278 = vld [vmem:[%s1135 + $0x259] sm:$0xff]
      %v1279 = vld [vmem:[%s1135 + $0x261] sm:$0xff]
      %v1280 = vld [vmem:[%s1135 + $0x271] sm:$0xff]
      %v1281 = vld [vmem:[%s1135 + $0x279] sm:$0xff]
      %v1282 = vld [vmem:[%s1135 + $0x289] sm:$0xff]
      %v1283 = vld [vmem:[%s1135 + $0x291] sm:$0xff]
      %v1284 = vld [vmem:[%s1135 + $0x2a1] sm:$0xff]
      %v1285 = vld [vmem:[%s1135 + $0x2a9] sm:$0xff]
      %v1286 = vld [vmem:[%s1135 + $0x2b9] sm:$0xff]
      %v1287 = vld [vmem:[%s1135 + $0x2c1] sm:$0xff]
      %v1288 = vld [vmem:[%s1135 + $0x2d1] sm:$0xff]
      %v1289 = vld [vmem:[%s1135 + $0x2d9] sm:$0xff]
      %v1290 = vld [vmem:[%s1135 + $0x2e9] sm:$0xff]
      %v1291 = vld [vmem:[%s1135 + $0x2f1] sm:$0xff]
      %v1292 = vld [vmem:[%s1135 + $0x301] sm:$0xff]
      %v1293 = vld [vmem:[%s1135 + $0x309] sm:$0xff]
      %v1294 = vld [vmem:[%s1135 + $0x319] sm:$0xff]
      %v1295 = vld [vmem:[%s1135 + $0x321] sm:$0xff]
      %v1296 = vpack.c.bf16 %v1233, %v1232
      %v1297 = vpack.c.bf16 %v1235, %v1234
      %v1298 = vpack.c.bf16 %v1237, %v1236
      %v1299 = vpack.c.bf16 %v1239, %v1238
      %v1300 = vpack.c.bf16 %v1241, %v1240
      %v1301 = vpack.c.bf16 %v1243, %v1242
      %v1302 = vpack.c.bf16 %v1245, %v1244
      %v1303 = vpack.c.bf16 %v1247, %v1246
      %v1304 = vpack.c.bf16 %v1249, %v1248
      %v1305 = vpack.c.bf16 %v1251, %v1250
      %v1306 = vpack.c.bf16 %v1253, %v1252
      %v1307 = vpack.c.bf16 %v1255, %v1254
      %v1308 = vpack.c.bf16 %v1257, %v1256
      %v1309 = vpack.c.bf16 %v1259, %v1258
      %v1310 = vpack.c.bf16 %v1261, %v1260
      %v1311 = vpack.c.bf16 %v1263, %v1262
      %v1312 = vpack.c.bf16 %v1265, %v1264
      %v1313 = vpack.c.bf16 %v1267, %v1266
      %v1314 = vpack.c.bf16 %v1269, %v1268
      %v1315 = vpack.c.bf16 %v1271, %v1270
      %v1316 = vpack.c.bf16 %v1273, %v1272
      %v1317 = vpack.c.bf16 %v1275, %v1274
      %v1318 = vpack.c.bf16 %v1277, %v1276
      %v1319 = vpack.c.bf16 %v1279, %v1278
      %v1320 = vpack.c.bf16 %v1281, %v1280
      %v1321 = vpack.c.bf16 %v1283, %v1282
      %v1322 = vpack.c.bf16 %v1285, %v1284
      %v1323 = vpack.c.bf16 %v1287, %v1286
      %v1324 = vpack.c.bf16 %v1289, %v1288
      %v1325 = vpack.c.bf16 %v1291, %v1290
      %v1326 = vpack.c.bf16 %v1293, %v1292
      %v1327 = vpack.c.bf16 %v1295, %v1294
      %v1328 = vld [vmem:[%s1135 + $0x2] sm:$0xff]
      %v1329 = vld [vmem:[%s1135 + $0xa] sm:$0xff]
      %v1330 = vld [vmem:[%s1135 + $0x1a] sm:$0xff]
      %v1331 = vld [vmem:[%s1135 + $0x22] sm:$0xff]
      %v1332 = vld [vmem:[%s1135 + $0x32] sm:$0xff]
      %v1333 = vld [vmem:[%s1135 + $0x3a] sm:$0xff]
      %v1334 = vld [vmem:[%s1135 + $0x4a] sm:$0xff]
      %v1335 = vld [vmem:[%s1135 + $0x52] sm:$0xff]
      %v1336 = vld [vmem:[%s1135 + $0x62] sm:$0xff]
      %v1337 = vld [vmem:[%s1135 + $0x6a] sm:$0xff]
      %v1338 = vld [vmem:[%s1135 + $0x7a] sm:$0xff]
      %v1339 = vld [vmem:[%s1135 + $0x82] sm:$0xff]
      %v1340 = vld [vmem:[%s1135 + $0x92] sm:$0xff]
      %v1341 = vld [vmem:[%s1135 + $0x9a] sm:$0xff]
      %v1342 = vld [vmem:[%s1135 + $0xaa] sm:$0xff]
      %v1343 = vld [vmem:[%s1135 + $0xb2] sm:$0xff]
      %v1344 = vld [vmem:[%s1135 + $0xc2] sm:$0xff]
      %v1345 = vld [vmem:[%s1135 + $0xca] sm:$0xff]
      %v1346 = vld [vmem:[%s1135 + $0xda] sm:$0xff]
      %v1347 = vld [vmem:[%s1135 + $0xe2] sm:$0xff]
      %v1348 = vld [vmem:[%s1135 + $0xf2] sm:$0xff]
      %v1349 = vld [vmem:[%s1135 + $0xfa] sm:$0xff]
      %v1350 = vld [vmem:[%s1135 + $0x10a] sm:$0xff]
      %v1351 = vld [vmem:[%s1135 + $0x112] sm:$0xff]
      %v1352 = vld [vmem:[%s1135 + $0x122] sm:$0xff]
      %v1353 = vld [vmem:[%s1135 + $0x12a] sm:$0xff]
      %v1354 = vld [vmem:[%s1135 + $0x13a] sm:$0xff]
      %v1355 = vld [vmem:[%s1135 + $0x142] sm:$0xff]
      %v1356 = vld [vmem:[%s1135 + $0x152] sm:$0xff]
      %v1357 = vld [vmem:[%s1135 + $0x15a] sm:$0xff]
      %v1358 = vld [vmem:[%s1135 + $0x16a] sm:$0xff]
      %v1359 = vld [vmem:[%s1135 + $0x172] sm:$0xff]
      %v1360 = vld [vmem:[%s1135 + $0x1b2] sm:$0xff]
      %v1361 = vld [vmem:[%s1135 + $0x1ba] sm:$0xff]
      %v1362 = vld [vmem:[%s1135 + $0x1ca] sm:$0xff]
      %v1363 = vld [vmem:[%s1135 + $0x1d2] sm:$0xff]
      %v1364 = vld [vmem:[%s1135 + $0x1e2] sm:$0xff]
      %v1365 = vld [vmem:[%s1135 + $0x1ea] sm:$0xff]
      %v1366 = vld [vmem:[%s1135 + $0x1fa] sm:$0xff]
      %v1367 = vld [vmem:[%s1135 + $0x202] sm:$0xff]
      %v1368 = vld [vmem:[%s1135 + $0x212] sm:$0xff]
      %v1369 = vld [vmem:[%s1135 + $0x21a] sm:$0xff]
      %v1370 = vld [vmem:[%s1135 + $0x22a] sm:$0xff]
      %v1371 = vld [vmem:[%s1135 + $0x232] sm:$0xff]
      %v1372 = vld [vmem:[%s1135 + $0x242] sm:$0xff]
      %v1373 = vld [vmem:[%s1135 + $0x24a] sm:$0xff]
      %v1374 = vld [vmem:[%s1135 + $0x25a] sm:$0xff]
      %v1375 = vld [vmem:[%s1135 + $0x262] sm:$0xff]
      %v1376 = vld [vmem:[%s1135 + $0x272] sm:$0xff]
      %v1377 = vld [vmem:[%s1135 + $0x27a] sm:$0xff]
      %v1378 = vld [vmem:[%s1135 + $0x28a] sm:$0xff]
      %v1379 = vld [vmem:[%s1135 + $0x292] sm:$0xff]
      %v1380 = vld [vmem:[%s1135 + $0x2a2] sm:$0xff]
      %v1381 = vld [vmem:[%s1135 + $0x2aa] sm:$0xff]
      %v1382 = vld [vmem:[%s1135 + $0x2ba] sm:$0xff]
      %v1383 = vld [vmem:[%s1135 + $0x2c2] sm:$0xff]
      %v1384 = vld [vmem:[%s1135 + $0x2d2] sm:$0xff]
      %v1385 = vld [vmem:[%s1135 + $0x2da] sm:$0xff]
      %v1386 = vld [vmem:[%s1135 + $0x2ea] sm:$0xff]
      %v1387 = vld [vmem:[%s1135 + $0x2f2] sm:$0xff]
      %v1388 = vld [vmem:[%s1135 + $0x302] sm:$0xff]
      %v1389 = vld [vmem:[%s1135 + $0x30a] sm:$0xff]
      %v1390 = vld [vmem:[%s1135 + $0x31a] sm:$0xff]
      %v1391 = vld [vmem:[%s1135 + $0x322] sm:$0xff]
      %v1392 = vpack.c.bf16 %v1329, %v1328
      %v1393 = vpack.c.bf16 %v1331, %v1330
      %v1394 = vpack.c.bf16 %v1333, %v1332
      %v1395 = vpack.c.bf16 %v1335, %v1334
      %v1396 = vpack.c.bf16 %v1337, %v1336
      %v1397 = vpack.c.bf16 %v1339, %v1338
      %v1398 = vpack.c.bf16 %v1341, %v1340
      %v1399 = vpack.c.bf16 %v1343, %v1342
      %v1400 = vpack.c.bf16 %v1345, %v1344
      %v1401 = vpack.c.bf16 %v1347, %v1346
      %v1402 = vpack.c.bf16 %v1349, %v1348
      %v1403 = vpack.c.bf16 %v1351, %v1350
      %v1404 = vpack.c.bf16 %v1353, %v1352
      %v1405 = vpack.c.bf16 %v1355, %v1354
      %v1406 = vpack.c.bf16 %v1357, %v1356
      %v1407 = vpack.c.bf16 %v1359, %v1358
      %v1408 = vpack.c.bf16 %v1361, %v1360
      %v1409 = vpack.c.bf16 %v1363, %v1362
      %v1410 = vpack.c.bf16 %v1365, %v1364
      %v1411 = vpack.c.bf16 %v1367, %v1366
      %v1412 = vpack.c.bf16 %v1369, %v1368
      %v1413 = vpack.c.bf16 %v1371, %v1370
      %v1414 = vpack.c.bf16 %v1373, %v1372
      %v1415 = vpack.c.bf16 %v1375, %v1374
      %v1416 = vpack.c.bf16 %v1377, %v1376
      %v1417 = vpack.c.bf16 %v1379, %v1378
      %v1418 = vpack.c.bf16 %v1381, %v1380
      %v1419 = vpack.c.bf16 %v1383, %v1382
      %v1420 = vpack.c.bf16 %v1385, %v1384
      %v1421 = vpack.c.bf16 %v1387, %v1386
      %v1422 = vpack.c.bf16 %v1389, %v1388
      %v1423 = vpack.c.bf16 %v1391, %v1390
      %1456 = vrot.lane.b32.xlu0 %v719, 3
      %v1457 = vpop.permute.xlu0 %1456
      %1458 = vrot.lane.b32.xlu0 %v720, 3
      %v1459 = vpop.permute.xlu0 %1458
      %1460 = vrot.lane.b32.xlu0 %v721, 3
      %v1461 = vpop.permute.xlu0 %1460
      %1462 = vrot.lane.b32.xlu0 %v722, 3
      %v1463 = vpop.permute.xlu0 %1462
      %1464 = vrot.lane.b32.xlu0 %v723, 3
      %v1465 = vpop.permute.xlu0 %1464
      %1466 = vrot.lane.b32.xlu0 %v724, 3
      %v1467 = vpop.permute.xlu0 %1466
      %1468 = vrot.lane.b32.xlu0 %v725, 3
      %v1469 = vpop.permute.xlu0 %1468
      %1470 = vrot.lane.b32.xlu0 %v726, 3
      %v1471 = vpop.permute.xlu0 %1470
      %1472 = vrot.lane.b32.xlu0 %v727, 3
      %v1473 = vpop.permute.xlu0 %1472
      %1474 = vrot.lane.b32.xlu0 %v728, 3
      %v1475 = vpop.permute.xlu0 %1474
      %1476 = vrot.lane.b32.xlu0 %v729, 3
      %v1477 = vpop.permute.xlu0 %1476
      %1478 = vrot.lane.b32.xlu0 %v730, 3
      %v1479 = vpop.permute.xlu0 %1478
      %1480 = vrot.lane.b32.xlu0 %v731, 3
      %v1481 = vpop.permute.xlu0 %1480
      %1482 = vrot.lane.b32.xlu0 %v732, 3
      %v1483 = vpop.permute.xlu0 %1482
      %1484 = vrot.lane.b32.xlu0 %v733, 3
      %v1485 = vpop.permute.xlu0 %1484
      %1486 = vrot.lane.b32.xlu0 %v734, 3
      %v1487 = vpop.permute.xlu0 %1486
      %1488 = vrot.lane.b32.xlu0 %v735, 3
      %v1489 = vpop.permute.xlu0 %1488
      %1490 = vrot.lane.b32.xlu0 %v736, 3
      %v1491 = vpop.permute.xlu0 %1490
      %1492 = vrot.lane.b32.xlu0 %v737, 3
      %v1493 = vpop.permute.xlu0 %1492
      %1494 = vrot.lane.b32.xlu0 %v738, 3
      %v1495 = vpop.permute.xlu0 %1494
      %1496 = vrot.lane.b32.xlu0 %v739, 3
      %v1497 = vpop.permute.xlu0 %1496
      %1498 = vrot.lane.b32.xlu0 %v740, 3
      %v1499 = vpop.permute.xlu0 %1498
      %1500 = vrot.lane.b32.xlu0 %v741, 3
      %v1501 = vpop.permute.xlu0 %1500
      %1502 = vrot.lane.b32.xlu0 %v742, 3
      %v1503 = vpop.permute.xlu0 %1502
      %1504 = vrot.lane.b32.xlu0 %v743, 3
      %v1505 = vpop.permute.xlu0 %1504
      %1506 = vrot.lane.b32.xlu0 %v744, 3
      %v1507 = vpop.permute.xlu0 %1506
      %1508 = vrot.lane.b32.xlu0 %v745, 3
      %v1509 = vpop.permute.xlu0 %1508
      %1510 = vrot.lane.b32.xlu0 %v746, 3
      %v1511 = vpop.permute.xlu0 %1510
      %1512 = vrot.lane.b32.xlu0 %v747, 3
      %v1513 = vpop.permute.xlu0 %1512
      %1514 = vrot.lane.b32.xlu0 %v748, 3
      %v1515 = vpop.permute.xlu0 %1514
      %1516 = vrot.lane.b32.xlu0 %v749, 3
      %v1517 = vpop.permute.xlu0 %1516
      %1518 = vrot.lane.b32.xlu0 %v750, 3
      %v1519 = vpop.permute.xlu0 %1518
      %1552 = vrot.lane.b32.xlu0 %v815, 6
      %v1553 = vpop.permute.xlu0 %1552
      %1554 = vrot.lane.b32.xlu0 %v816, 6
      %v1555 = vpop.permute.xlu0 %1554
      %1556 = vrot.lane.b32.xlu0 %v817, 6
      %v1557 = vpop.permute.xlu0 %1556
      %1558 = vrot.lane.b32.xlu0 %v818, 6
      %v1559 = vpop.permute.xlu0 %1558
      %1560 = vrot.lane.b32.xlu0 %v819, 6
      %v1561 = vpop.permute.xlu0 %1560
      %1562 = vrot.lane.b32.xlu0 %v820, 6
      %v1563 = vpop.permute.xlu0 %1562
      %1564 = vrot.lane.b32.xlu0 %v821, 6
      %v1565 = vpop.permute.xlu0 %1564
      %1566 = vrot.lane.b32.xlu0 %v822, 6
      %v1567 = vpop.permute.xlu0 %1566
      %1568 = vrot.lane.b32.xlu0 %v823, 6
      %v1569 = vpop.permute.xlu0 %1568
      %1570 = vrot.lane.b32.xlu0 %v824, 6
      %v1571 = vpop.permute.xlu0 %1570
      %1572 = vrot.lane.b32.xlu0 %v825, 6
      %v1573 = vpop.permute.xlu0 %1572
      %1574 = vrot.lane.b32.xlu0 %v826, 6
      %v1575 = vpop.permute.xlu0 %1574
      %1576 = vrot.lane.b32.xlu0 %v827, 6
      %v1577 = vpop.permute.xlu0 %1576
      %1578 = vrot.lane.b32.xlu0 %v828, 6
      %v1579 = vpop.permute.xlu0 %1578
      %1580 = vrot.lane.b32.xlu0 %v829, 6
      %v1581 = vpop.permute.xlu0 %1580
      %1582 = vrot.lane.b32.xlu0 %v830, 6
      %v1583 = vpop.permute.xlu0 %1582
      %1584 = vrot.lane.b32.xlu0 %v831, 6
      %v1585 = vpop.permute.xlu0 %1584
      %1586 = vrot.lane.b32.xlu0 %v832, 6
      %v1587 = vpop.permute.xlu0 %1586
      %1588 = vrot.lane.b32.xlu0 %v833, 6
      %v1589 = vpop.permute.xlu0 %1588
      %1590 = vrot.lane.b32.xlu0 %v834, 6
      %v1591 = vpop.permute.xlu0 %1590
      %1592 = vrot.lane.b32.xlu0 %v835, 6
      %v1593 = vpop.permute.xlu0 %1592
      %1594 = vrot.lane.b32.xlu0 %v836, 6
      %v1595 = vpop.permute.xlu0 %1594
      %1596 = vrot.lane.b32.xlu0 %v837, 6
      %v1597 = vpop.permute.xlu0 %1596
      %1598 = vrot.lane.b32.xlu0 %v838, 6
      %v1599 = vpop.permute.xlu0 %1598
      %1600 = vrot.lane.b32.xlu0 %v839, 6
      %v1601 = vpop.permute.xlu0 %1600
      %1602 = vrot.lane.b32.xlu0 %v840, 6
      %v1603 = vpop.permute.xlu0 %1602
      %1604 = vrot.lane.b32.xlu0 %v841, 6
      %v1605 = vpop.permute.xlu0 %1604
      %1606 = vrot.lane.b32.xlu0 %v842, 6
      %v1607 = vpop.permute.xlu0 %1606
      %1608 = vrot.lane.b32.xlu0 %v843, 6
      %v1609 = vpop.permute.xlu0 %1608
      %1610 = vrot.lane.b32.xlu0 %v844, 6
      %v1611 = vpop.permute.xlu0 %1610
      %1612 = vrot.lane.b32.xlu0 %v845, 6
      %v1613 = vpop.permute.xlu0 %1612
      %1614 = vrot.lane.b32.xlu0 %v846, 6
      %v1615 = vpop.permute.xlu0 %1614
      %1648 = vrot.lane.b32.xlu0 %v911, 9
      %v1649 = vpop.permute.xlu0 %1648
      %1650 = vrot.lane.b32.xlu0 %v912, 9
      %v1651 = vpop.permute.xlu0 %1650
      %1652 = vrot.lane.b32.xlu0 %v913, 9
      %v1653 = vpop.permute.xlu0 %1652
      %1654 = vrot.lane.b32.xlu0 %v914, 9
      %v1655 = vpop.permute.xlu0 %1654
      %1656 = vrot.lane.b32.xlu0 %v915, 9
      %v1657 = vpop.permute.xlu0 %1656
      %1658 = vrot.lane.b32.xlu0 %v916, 9
      %v1659 = vpop.permute.xlu0 %1658
      %1660 = vrot.lane.b32.xlu0 %v917, 9
      %v1661 = vpop.permute.xlu0 %1660
      %1662 = vrot.lane.b32.xlu0 %v918, 9
      %v1663 = vpop.permute.xlu0 %1662
      %1664 = vrot.lane.b32.xlu0 %v919, 9
      %v1665 = vpop.permute.xlu0 %1664
      %1666 = vrot.lane.b32.xlu0 %v920, 9
      %v1667 = vpop.permute.xlu0 %1666
      %1668 = vrot.lane.b32.xlu0 %v921, 9
      %v1669 = vpop.permute.xlu0 %1668
      %1670 = vrot.lane.b32.xlu0 %v922, 9
      %v1671 = vpop.permute.xlu0 %1670
      %1672 = vrot.lane.b32.xlu0 %v923, 9
      %v1673 = vpop.permute.xlu0 %1672
      %1674 = vrot.lane.b32.xlu0 %v924, 9
      %v1675 = vpop.permute.xlu0 %1674
      %1676 = vrot.lane.b32.xlu0 %v925, 9
      %v1677 = vpop.permute.xlu0 %1676
      %1678 = vrot.lane.b32.xlu0 %v926, 9
      %v1679 = vpop.permute.xlu0 %1678
      %1680 = vrot.lane.b32.xlu0 %v927, 9
      %v1681 = vpop.permute.xlu0 %1680
      %1682 = vrot.lane.b32.xlu0 %v928, 9
      %v1683 = vpop.permute.xlu0 %1682
      %1684 = vrot.lane.b32.xlu0 %v929, 9
      %v1685 = vpop.permute.xlu0 %1684
      %1686 = vrot.lane.b32.xlu0 %v930, 9
      %v1687 = vpop.permute.xlu0 %1686
      %1688 = vrot.lane.b32.xlu0 %v931, 9
      %v1689 = vpop.permute.xlu0 %1688
      %1690 = vrot.lane.b32.xlu0 %v932, 9
      %v1691 = vpop.permute.xlu0 %1690
      %1692 = vrot.lane.b32.xlu0 %v933, 9
      %v1693 = vpop.permute.xlu0 %1692
      %1694 = vrot.lane.b32.xlu0 %v934, 9
      %v1695 = vpop.permute.xlu0 %1694
      %1696 = vrot.lane.b32.xlu0 %v935, 9
      %v1697 = vpop.permute.xlu0 %1696
      %1698 = vrot.lane.b32.xlu0 %v936, 9
      %v1699 = vpop.permute.xlu0 %1698
      %1700 = vrot.lane.b32.xlu0 %v937, 9
      %v1701 = vpop.permute.xlu0 %1700
      %1702 = vrot.lane.b32.xlu0 %v938, 9
      %v1703 = vpop.permute.xlu0 %1702
      %1704 = vrot.lane.b32.xlu0 %v939, 9
      %v1705 = vpop.permute.xlu0 %1704
      %1706 = vrot.lane.b32.xlu0 %v940, 9
      %v1707 = vpop.permute.xlu0 %1706
      %1708 = vrot.lane.b32.xlu0 %v941, 9
      %v1709 = vpop.permute.xlu0 %1708
      %1710 = vrot.lane.b32.xlu0 %v942, 9
      %v1711 = vpop.permute.xlu0 %1710
      %1744 = vrot.lane.b32.xlu0 %v1007, 12
      %v1745 = vpop.permute.xlu0 %1744
      %1746 = vrot.lane.b32.xlu0 %v1008, 12
      %v1747 = vpop.permute.xlu0 %1746
      %1748 = vrot.lane.b32.xlu0 %v1009, 12
      %v1749 = vpop.permute.xlu0 %1748
      %1750 = vrot.lane.b32.xlu0 %v1010, 12
      %v1751 = vpop.permute.xlu0 %1750
      %1752 = vrot.lane.b32.xlu0 %v1011, 12
      %v1753 = vpop.permute.xlu0 %1752
      %1754 = vrot.lane.b32.xlu0 %v1012, 12
      %v1755 = vpop.permute.xlu0 %1754
      %1756 = vrot.lane.b32.xlu0 %v1013, 12
      %v1757 = vpop.permute.xlu0 %1756
      %1758 = vrot.lane.b32.xlu0 %v1014, 12
      %v1759 = vpop.permute.xlu0 %1758
      %1760 = vrot.lane.b32.xlu0 %v1015, 12
      %v1761 = vpop.permute.xlu0 %1760
      %1762 = vrot.lane.b32.xlu0 %v1016, 12
      %v1763 = vpop.permute.xlu0 %1762
      %1764 = vrot.lane.b32.xlu0 %v1017, 12
      %v1765 = vpop.permute.xlu0 %1764
      %1766 = vrot.lane.b32.xlu0 %v1018, 12
      %v1767 = vpop.permute.xlu0 %1766
      %1768 = vrot.lane.b32.xlu0 %v1019, 12
      %v1769 = vpop.permute.xlu0 %1768
      %1770 = vrot.lane.b32.xlu0 %v1020, 12
      %v1771 = vpop.permute.xlu0 %1770
      %1772 = vrot.lane.b32.xlu0 %v1021, 12
      %v1773 = vpop.permute.xlu0 %1772
      %1774 = vrot.lane.b32.xlu0 %v1022, 12
      %v1775 = vpop.permute.xlu0 %1774
      %1776 = vrot.lane.b32.xlu0 %v1023, 12
      %v1777 = vpop.permute.xlu0 %1776
      %1778 = vrot.lane.b32.xlu0 %v1024, 12
      %v1779 = vpop.permute.xlu0 %1778
      %1780 = vrot.lane.b32.xlu0 %v1025, 12
      %v1781 = vpop.permute.xlu0 %1780
      %1782 = vrot.lane.b32.xlu0 %v1026, 12
      %v1783 = vpop.permute.xlu0 %1782
      %1784 = vrot.lane.b32.xlu0 %v1027, 12
      %v1785 = vpop.permute.xlu0 %1784
      %1786 = vrot.lane.b32.xlu0 %v1028, 12
      %v1787 = vpop.permute.xlu0 %1786
      %1788 = vrot.lane.b32.xlu0 %v1029, 12
      %v1789 = vpop.permute.xlu0 %1788
      %1790 = vrot.lane.b32.xlu0 %v1030, 12
      %v1791 = vpop.permute.xlu0 %1790
      %1792 = vrot.lane.b32.xlu0 %v1031, 12
      %v1793 = vpop.permute.xlu0 %1792
      %1794 = vrot.lane.b32.xlu0 %v1032, 12
      %v1795 = vpop.permute.xlu0 %1794
      %1796 = vrot.lane.b32.xlu0 %v1033, 12
      %v1797 = vpop.permute.xlu0 %1796
      %1798 = vrot.lane.b32.xlu0 %v1034, 12
      %v1799 = vpop.permute.xlu0 %1798
      %1800 = vrot.lane.b32.xlu0 %v1035, 12
      %v1801 = vpop.permute.xlu0 %1800
      %1802 = vrot.lane.b32.xlu0 %v1036, 12
      %v1803 = vpop.permute.xlu0 %1802
      %1804 = vrot.lane.b32.xlu0 %v1037, 12
      %v1805 = vpop.permute.xlu0 %1804
      %1806 = vrot.lane.b32.xlu0 %v1038, 12
      %v1807 = vpop.permute.xlu0 %1806
      %1840 = vrot.lane.b32.xlu0 %v1103, 15
      %v1841 = vpop.permute.xlu0 %1840
      %1842 = vrot.lane.b32.xlu0 %v1104, 15
      %v1843 = vpop.permute.xlu0 %1842
      %1844 = vrot.lane.b32.xlu0 %v1105, 15
      %v1845 = vpop.permute.xlu0 %1844
      %1846 = vrot.lane.b32.xlu0 %v1106, 15
      %v1847 = vpop.permute.xlu0 %1846
      %1848 = vrot.lane.b32.xlu0 %v1107, 15
      %v1849 = vpop.permute.xlu0 %1848
      %1850 = vrot.lane.b32.xlu0 %v1108, 15
      %v1851 = vpop.permute.xlu0 %1850
      %1852 = vrot.lane.b32.xlu0 %v1109, 15
      %v1853 = vpop.permute.xlu0 %1852
      %1854 = vrot.lane.b32.xlu0 %v1110, 15
      %v1855 = vpop.permute.xlu0 %1854
      %1856 = vrot.lane.b32.xlu0 %v1111, 15
      %v1857 = vpop.permute.xlu0 %1856
      %1858 = vrot.lane.b32.xlu0 %v1112, 15
      %v1859 = vpop.permute.xlu0 %1858
      %1860 = vrot.lane.b32.xlu0 %v1113, 15
      %v1861 = vpop.permute.xlu0 %1860
      %1862 = vrot.lane.b32.xlu0 %v1114, 15
      %v1863 = vpop.permute.xlu0 %1862
      %1864 = vrot.lane.b32.xlu0 %v1115, 15
      %v1865 = vpop.permute.xlu0 %1864
      %1866 = vrot.lane.b32.xlu0 %v1116, 15
      %v1867 = vpop.permute.xlu0 %1866
      %1868 = vrot.lane.b32.xlu0 %v1117, 15
      %v1869 = vpop.permute.xlu0 %1868
      %1870 = vrot.lane.b32.xlu0 %v1118, 15
      %v1871 = vpop.permute.xlu0 %1870
      %1872 = vrot.lane.b32.xlu0 %v1119, 15
      %v1873 = vpop.permute.xlu0 %1872
      %1874 = vrot.lane.b32.xlu0 %v1120, 15
      %v1875 = vpop.permute.xlu0 %1874
      %1876 = vrot.lane.b32.xlu0 %v1121, 15
      %v1877 = vpop.permute.xlu0 %1876
      %1878 = vrot.lane.b32.xlu0 %v1122, 15
      %v1879 = vpop.permute.xlu0 %1878
      %1880 = vrot.lane.b32.xlu0 %v1123, 15
      %v1881 = vpop.permute.xlu0 %1880
      %1882 = vrot.lane.b32.xlu0 %v1124, 15
      %v1883 = vpop.permute.xlu0 %1882
      %1884 = vrot.lane.b32.xlu0 %v1125, 15
      %v1885 = vpop.permute.xlu0 %1884
      %1886 = vrot.lane.b32.xlu0 %v1126, 15
      %v1887 = vpop.permute.xlu0 %1886
      %1888 = vrot.lane.b32.xlu0 %v1127, 15
      %v1889 = vpop.permute.xlu0 %1888
      %1890 = vrot.lane.b32.xlu0 %v1128, 15
      %v1891 = vpop.permute.xlu0 %1890
      %1892 = vrot.lane.b32.xlu0 %v1129, 15
      %v1893 = vpop.permute.xlu0 %1892
      %1894 = vrot.lane.b32.xlu0 %v1130, 15
      %v1895 = vpop.permute.xlu0 %1894
      %1896 = vrot.lane.b32.xlu0 %v1131, 15
      %v1897 = vpop.permute.xlu0 %1896
      %1898 = vrot.lane.b32.xlu0 %v1132, 15
      %v1899 = vpop.permute.xlu0 %1898
      %1900 = vrot.lane.b32.xlu0 %v1133, 15
      %v1901 = vpop.permute.xlu0 %1900
      %1902 = vrot.lane.b32.xlu0 %v1134, 15
      %v1903 = vpop.permute.xlu0 %1902
      %1936 = vrot.lane.b32.xlu0 %v1200, 18
      %v1937 = vpop.permute.xlu0 %1936
      %1938 = vrot.lane.b32.xlu0 %v1201, 18
      %v1939 = vpop.permute.xlu0 %1938
      %1940 = vrot.lane.b32.xlu0 %v1202, 18
      %v1941 = vpop.permute.xlu0 %1940
      %1942 = vrot.lane.b32.xlu0 %v1203, 18
      %v1943 = vpop.permute.xlu0 %1942
      %1944 = vrot.lane.b32.xlu0 %v1204, 18
      %v1945 = vpop.permute.xlu0 %1944
      %1946 = vrot.lane.b32.xlu0 %v1205, 18
      %v1947 = vpop.permute.xlu0 %1946
      %1948 = vrot.lane.b32.xlu0 %v1206, 18
      %v1949 = vpop.permute.xlu0 %1948
      %1950 = vrot.lane.b32.xlu0 %v1207, 18
      %v1951 = vpop.permute.xlu0 %1950
      %1952 = vrot.lane.b32.xlu0 %v1208, 18
      %v1953 = vpop.permute.xlu0 %1952
      %1954 = vrot.lane.b32.xlu0 %v1209, 18
      %v1955 = vpop.permute.xlu0 %1954
      %1956 = vrot.lane.b32.xlu0 %v1210, 18
      %v1957 = vpop.permute.xlu0 %1956
      %1958 = vrot.lane.b32.xlu0 %v1211, 18
      %v1959 = vpop.permute.xlu0 %1958
      %1960 = vrot.lane.b32.xlu0 %v1212, 18
      %v1961 = vpop.permute.xlu0 %1960
      %1962 = vrot.lane.b32.xlu0 %v1213, 18
      %v1963 = vpop.permute.xlu0 %1962
      %1964 = vrot.lane.b32.xlu0 %v1214, 18
      %v1965 = vpop.permute.xlu0 %1964
      %1966 = vrot.lane.b32.xlu0 %v1215, 18
      %v1967 = vpop.permute.xlu0 %1966
      %1968 = vrot.lane.b32.xlu0 %v1216, 18
      %v1969 = vpop.permute.xlu0 %1968
      %1970 = vrot.lane.b32.xlu0 %v1217, 18
      %v1971 = vpop.permute.xlu0 %1970
      %1972 = vrot.lane.b32.xlu0 %v1218, 18
      %v1973 = vpop.permute.xlu0 %1972
      %1974 = vrot.lane.b32.xlu0 %v1219, 18
      %v1975 = vpop.permute.xlu0 %1974
      %1976 = vrot.lane.b32.xlu0 %v1220, 18
      %v1977 = vpop.permute.xlu0 %1976
      %1978 = vrot.lane.b32.xlu0 %v1221, 18
      %v1979 = vpop.permute.xlu0 %1978
      %1980 = vrot.lane.b32.xlu0 %v1222, 18
      %v1981 = vpop.permute.xlu0 %1980
      %1982 = vrot.lane.b32.xlu0 %v1223, 18
      %v1983 = vpop.permute.xlu0 %1982
      %1984 = vrot.lane.b32.xlu0 %v1224, 18
      %v1985 = vpop.permute.xlu0 %1984
      %1986 = vrot.lane.b32.xlu0 %v1225, 18
      %v1987 = vpop.permute.xlu0 %1986
      %1988 = vrot.lane.b32.xlu0 %v1226, 18
      %v1989 = vpop.permute.xlu0 %1988
      %1990 = vrot.lane.b32.xlu0 %v1227, 18
      %v1991 = vpop.permute.xlu0 %1990
      %1992 = vrot.lane.b32.xlu0 %v1228, 18
      %v1993 = vpop.permute.xlu0 %1992
      %1994 = vrot.lane.b32.xlu0 %v1229, 18
      %v1995 = vpop.permute.xlu0 %1994
      %1996 = vrot.lane.b32.xlu0 %v1230, 18
      %v1997 = vpop.permute.xlu0 %1996
      %1998 = vrot.lane.b32.xlu0 %v1231, 18
      %v1999 = vpop.permute.xlu0 %1998
      %2032 = vrot.lane.b32.xlu0 %v1296, 21
      %v2033 = vpop.permute.xlu0 %2032
      %2034 = vrot.lane.b32.xlu0 %v1297, 21
      %v2035 = vpop.permute.xlu0 %2034
      %2036 = vrot.lane.b32.xlu0 %v1298, 21
      %v2037 = vpop.permute.xlu0 %2036
      %2038 = vrot.lane.b32.xlu0 %v1299, 21
      %v2039 = vpop.permute.xlu0 %2038
      %2040 = vrot.lane.b32.xlu0 %v1300, 21
      %v2041 = vpop.permute.xlu0 %2040
      %2042 = vrot.lane.b32.xlu0 %v1301, 21
      %v2043 = vpop.permute.xlu0 %2042
      %2044 = vrot.lane.b32.xlu0 %v1302, 21
      %v2045 = vpop.permute.xlu0 %2044
      %2046 = vrot.lane.b32.xlu0 %v1303, 21
      %v2047 = vpop.permute.xlu0 %2046
      %2048 = vrot.lane.b32.xlu0 %v1304, 21
      %v2049 = vpop.permute.xlu0 %2048
      %2050 = vrot.lane.b32.xlu0 %v1305, 21
      %v2051 = vpop.permute.xlu0 %2050
      %2052 = vrot.lane.b32.xlu0 %v1306, 21
      %v2053 = vpop.permute.xlu0 %2052
      %2054 = vrot.lane.b32.xlu0 %v1307, 21
      %v2055 = vpop.permute.xlu0 %2054
      %2056 = vrot.lane.b32.xlu0 %v1308, 21
      %v2057 = vpop.permute.xlu0 %2056
      %2058 = vrot.lane.b32.xlu0 %v1309, 21
      %v2059 = vpop.permute.xlu0 %2058
      %2060 = vrot.lane.b32.xlu0 %v1310, 21
      %v2061 = vpop.permute.xlu0 %2060
      %2062 = vrot.lane.b32.xlu0 %v1311, 21
      %v2063 = vpop.permute.xlu0 %2062
      %2064 = vrot.lane.b32.xlu0 %v1312, 21
      %v2065 = vpop.permute.xlu0 %2064
      %2066 = vrot.lane.b32.xlu0 %v1313, 21
      %v2067 = vpop.permute.xlu0 %2066
      %2068 = vrot.lane.b32.xlu0 %v1314, 21
      %v2069 = vpop.permute.xlu0 %2068
      %2070 = vrot.lane.b32.xlu0 %v1315, 21
      %v2071 = vpop.permute.xlu0 %2070
      %2072 = vrot.lane.b32.xlu0 %v1316, 21
      %v2073 = vpop.permute.xlu0 %2072
      %2074 = vrot.lane.b32.xlu0 %v1317, 21
      %v2075 = vpop.permute.xlu0 %2074
      %2076 = vrot.lane.b32.xlu0 %v1318, 21
      %v2077 = vpop.permute.xlu0 %2076
      %2078 = vrot.lane.b32.xlu0 %v1319, 21
      %v2079 = vpop.permute.xlu0 %2078
      %2080 = vrot.lane.b32.xlu0 %v1320, 21
      %v2081 = vpop.permute.xlu0 %2080
      %2082 = vrot.lane.b32.xlu0 %v1321, 21
      %v2083 = vpop.permute.xlu0 %2082
      %2084 = vrot.lane.b32.xlu0 %v1322, 21
      %v2085 = vpop.permute.xlu0 %2084
      %2086 = vrot.lane.b32.xlu0 %v1323, 21
      %v2087 = vpop.permute.xlu0 %2086
      %2088 = vrot.lane.b32.xlu0 %v1324, 21
      %v2089 = vpop.permute.xlu0 %2088
      %2090 = vrot.lane.b32.xlu0 %v1325, 21
      %v2091 = vpop.permute.xlu0 %2090
      %2092 = vrot.lane.b32.xlu0 %v1326, 21
      %v2093 = vpop.permute.xlu0 %2092
      %2094 = vrot.lane.b32.xlu0 %v1327, 21
      %v2095 = vpop.permute.xlu0 %2094
      %2128 = vrot.lane.b32.xlu0 %v1392, 24
      %v2129 = vpop.permute.xlu0 %2128
      %2130 = vrot.lane.b32.xlu0 %v1393, 24
      %v2131 = vpop.permute.xlu0 %2130
      %2132 = vrot.lane.b32.xlu0 %v1394, 24
      %v2133 = vpop.permute.xlu0 %2132
      %2134 = vrot.lane.b32.xlu0 %v1395, 24
      %v2135 = vpop.permute.xlu0 %2134
      %2136 = vrot.lane.b32.xlu0 %v1396, 24
      %v2137 = vpop.permute.xlu0 %2136
      %2138 = vrot.lane.b32.xlu0 %v1397, 24
      %v2139 = vpop.permute.xlu0 %2138
      %2140 = vrot.lane.b32.xlu0 %v1398, 24
      %v2141 = vpop.permute.xlu0 %2140
      %2142 = vrot.lane.b32.xlu0 %v1399, 24
      %v2143 = vpop.permute.xlu0 %2142
      %2144 = vrot.lane.b32.xlu0 %v1400, 24
      %v2145 = vpop.permute.xlu0 %2144
      %2146 = vrot.lane.b32.xlu0 %v1401, 24
      %v2147 = vpop.permute.xlu0 %2146
      %2148 = vrot.lane.b32.xlu0 %v1402, 24
      %v2149 = vpop.permute.xlu0 %2148
      %2150 = vrot.lane.b32.xlu0 %v1403, 24
      %v2151 = vpop.permute.xlu0 %2150
      %2152 = vrot.lane.b32.xlu0 %v1404, 24
      %v2153 = vpop.permute.xlu0 %2152
      %2154 = vrot.lane.b32.xlu0 %v1405, 24
      %v2155 = vpop.permute.xlu0 %2154
      %2156 = vrot.lane.b32.xlu0 %v1406, 24
      %v2157 = vpop.permute.xlu0 %2156
      %2158 = vrot.lane.b32.xlu0 %v1407, 24
      %v2159 = vpop.permute.xlu0 %2158
      %2160 = vrot.lane.b32.xlu0 %v1408, 24
      %v2161 = vpop.permute.xlu0 %2160
      %2162 = vrot.lane.b32.xlu0 %v1409, 24
      %v2163 = vpop.permute.xlu0 %2162
      %2164 = vrot.lane.b32.xlu0 %v1410, 24
      %v2165 = vpop.permute.xlu0 %2164
      %2166 = vrot.lane.b32.xlu0 %v1411, 24
      %v2167 = vpop.permute.xlu0 %2166
      %2168 = vrot.lane.b32.xlu0 %v1412, 24
      %v2169 = vpop.permute.xlu0 %2168
      %2170 = vrot.lane.b32.xlu0 %v1413, 24
      %v2171 = vpop.permute.xlu0 %2170
      %2172 = vrot.lane.b32.xlu0 %v1414, 24
      %v2173 = vpop.permute.xlu0 %2172
      %2174 = vrot.lane.b32.xlu0 %v1415, 24
      %v2175 = vpop.permute.xlu0 %2174
      %2176 = vrot.lane.b32.xlu0 %v1416, 24
      %v2177 = vpop.permute.xlu0 %2176
      %2178 = vrot.lane.b32.xlu0 %v1417, 24
      %v2179 = vpop.permute.xlu0 %2178
      %2180 = vrot.lane.b32.xlu0 %v1418, 24
      %v2181 = vpop.permute.xlu0 %2180
      %2182 = vrot.lane.b32.xlu0 %v1419, 24
      %v2183 = vpop.permute.xlu0 %2182
      %2184 = vrot.lane.b32.xlu0 %v1420, 24
      %v2185 = vpop.permute.xlu0 %2184
      %2186 = vrot.lane.b32.xlu0 %v1421, 24
      %v2187 = vpop.permute.xlu0 %2186
      %2188 = vrot.lane.b32.xlu0 %v1422, 24
      %v2189 = vpop.permute.xlu0 %2188
      %2190 = vrot.lane.b32.xlu0 %v1423, 24
      %v2191 = vpop.permute.xlu0 %2190
      %v2194 = vsel %vm406, %v623, %v1457
      %v2197 = vsel %vm406, %v624, %v1459
      %v2200 = vsel %vm406, %v625, %v1461
      %v2203 = vsel %vm406, %v626, %v1463
      %v2206 = vsel %vm406, %v627, %v1465
      %v2209 = vsel %vm406, %v628, %v1467
      %v2212 = vsel %vm406, %v629, %v1469
      %v2215 = vsel %vm406, %v630, %v1471
      %v2218 = vsel %vm406, %v631, %v1473
      %v2221 = vsel %vm406, %v632, %v1475
      %v2224 = vsel %vm406, %v633, %v1477
      %v2227 = vsel %vm406, %v634, %v1479
      %v2230 = vsel %vm406, %v635, %v1481
      %v2233 = vsel %vm406, %v636, %v1483
      %v2236 = vsel %vm406, %v637, %v1485
      %v2239 = vsel %vm406, %v638, %v1487
      %v2242 = vsel %vm406, %v639, %v1489
      %v2245 = vsel %vm406, %v640, %v1491
      %v2248 = vsel %vm406, %v641, %v1493
      %v2251 = vsel %vm406, %v642, %v1495
      %v2254 = vsel %vm406, %v643, %v1497
      %v2257 = vsel %vm406, %v644, %v1499
      %v2260 = vsel %vm406, %v645, %v1501
      %v2263 = vsel %vm406, %v646, %v1503
      %v2266 = vsel %vm406, %v647, %v1505
      %v2269 = vsel %vm406, %v648, %v1507
      %v2272 = vsel %vm406, %v649, %v1509
      %v2275 = vsel %vm406, %v650, %v1511
      %v2278 = vsel %vm406, %v651, %v1513
      %v2281 = vsel %vm406, %v652, %v1515
      %v2284 = vsel %vm406, %v653, %v1517
      %v2287 = vsel %vm406, %v654, %v1519
      %vm2288 = vcmask 48128
      %v2290 = vsel %vm2288, %v2194, %v1553
      %v2292 = vsel %vm2288, %v2197, %v1555
      %v2294 = vsel %vm2288, %v2200, %v1557
      %v2296 = vsel %vm2288, %v2203, %v1559
      %v2298 = vsel %vm2288, %v2206, %v1561
      %v2300 = vsel %vm2288, %v2209, %v1563
      %v2302 = vsel %vm2288, %v2212, %v1565
      %v2304 = vsel %vm2288, %v2215, %v1567
      %v2306 = vsel %vm2288, %v2218, %v1569
      %v2308 = vsel %vm2288, %v2221, %v1571
      %v2310 = vsel %vm2288, %v2224, %v1573
      %v2312 = vsel %vm2288, %v2227, %v1575
      %v2314 = vsel %vm2288, %v2230, %v1577
      %v2316 = vsel %vm2288, %v2233, %v1579
      %v2318 = vsel %vm2288, %v2236, %v1581
      %v2320 = vsel %vm2288, %v2239, %v1583
      %v2322 = vsel %vm2288, %v2242, %v1585
      %v2324 = vsel %vm2288, %v2245, %v1587
      %v2326 = vsel %vm2288, %v2248, %v1589
      %v2328 = vsel %vm2288, %v2251, %v1591
      %v2330 = vsel %vm2288, %v2254, %v1593
      %v2332 = vsel %vm2288, %v2257, %v1595
      %v2334 = vsel %vm2288, %v2260, %v1597
      %v2336 = vsel %vm2288, %v2263, %v1599
      %v2338 = vsel %vm2288, %v2266, %v1601
      %v2340 = vsel %vm2288, %v2269, %v1603
      %v2342 = vsel %vm2288, %v2272, %v1605
      %v2344 = vsel %vm2288, %v2275, %v1607
      %v2346 = vsel %vm2288, %v2278, %v1609
      %v2348 = vsel %vm2288, %v2281, %v1611
      %v2350 = vsel %vm2288, %v2284, %v1613
      %v2352 = vsel %vm2288, %v2287, %v1615
      %vm2353 = vcmask 72704
      %v2355 = vsel %vm2353, %v2290, %v1649
      %v2357 = vsel %vm2353, %v2292, %v1651
      %v2359 = vsel %vm2353, %v2294, %v1653
      %v2361 = vsel %vm2353, %v2296, %v1655
      %v2363 = vsel %vm2353, %v2298, %v1657
      %v2365 = vsel %vm2353, %v2300, %v1659
      %v2367 = vsel %vm2353, %v2302, %v1661
      %v2369 = vsel %vm2353, %v2304, %v1663
      %v2371 = vsel %vm2353, %v2306, %v1665
      %v2373 = vsel %vm2353, %v2308, %v1667
      %v2375 = vsel %vm2353, %v2310, %v1669
      %v2377 = vsel %vm2353, %v2312, %v1671
      %v2379 = vsel %vm2353, %v2314, %v1673
      %v2381 = vsel %vm2353, %v2316, %v1675
      %v2383 = vsel %vm2353, %v2318, %v1677
      %v2385 = vsel %vm2353, %v2320, %v1679
      %v2387 = vsel %vm2353, %v2322, %v1681
      %v2389 = vsel %vm2353, %v2324, %v1683
      %v2391 = vsel %vm2353, %v2326, %v1685
      %v2393 = vsel %vm2353, %v2328, %v1687
      %v2395 = vsel %vm2353, %v2330, %v1689
      %v2397 = vsel %vm2353, %v2332, %v1691
      %v2399 = vsel %vm2353, %v2334, %v1693
      %v2401 = vsel %vm2353, %v2336, %v1695
      %v2403 = vsel %vm2353, %v2338, %v1697
      %v2405 = vsel %vm2353, %v2340, %v1699
      %v2407 = vsel %vm2353, %v2342, %v1701
      %v2409 = vsel %vm2353, %v2344, %v1703
      %v2411 = vsel %vm2353, %v2346, %v1705
      %v2413 = vsel %vm2353, %v2348, %v1707
      %v2415 = vsel %vm2353, %v2350, %v1709
      %v2417 = vsel %vm2353, %v2352, %v1711
      %vm2418 = vcmask 97280
      %v2420 = vsel %vm2418, %v2355, %v1745
      %v2422 = vsel %vm2418, %v2357, %v1747
      %v2424 = vsel %vm2418, %v2359, %v1749
      %v2426 = vsel %vm2418, %v2361, %v1751
      %v2428 = vsel %vm2418, %v2363, %v1753
      %v2430 = vsel %vm2418, %v2365, %v1755
      %v2432 = vsel %vm2418, %v2367, %v1757
      %v2434 = vsel %vm2418, %v2369, %v1759
      %v2436 = vsel %vm2418, %v2371, %v1761
      %v2438 = vsel %vm2418, %v2373, %v1763
      %v2440 = vsel %vm2418, %v2375, %v1765
      %v2442 = vsel %vm2418, %v2377, %v1767
      %v2444 = vsel %vm2418, %v2379, %v1769
      %v2446 = vsel %vm2418, %v2381, %v1771
      %v2448 = vsel %vm2418, %v2383, %v1773
      %v2450 = vsel %vm2418, %v2385, %v1775
      %v2452 = vsel %vm2418, %v2387, %v1777
      %v2454 = vsel %vm2418, %v2389, %v1779
      %v2456 = vsel %vm2418, %v2391, %v1781
      %v2458 = vsel %vm2418, %v2393, %v1783
      %v2460 = vsel %vm2418, %v2395, %v1785
      %v2462 = vsel %vm2418, %v2397, %v1787
      %v2464 = vsel %vm2418, %v2399, %v1789
      %v2466 = vsel %vm2418, %v2401, %v1791
      %v2468 = vsel %vm2418, %v2403, %v1793
      %v2470 = vsel %vm2418, %v2405, %v1795
      %v2472 = vsel %vm2418, %v2407, %v1797
      %v2474 = vsel %vm2418, %v2409, %v1799
      %v2476 = vsel %vm2418, %v2411, %v1801
      %v2478 = vsel %vm2418, %v2413, %v1803
      %v2480 = vsel %vm2418, %v2415, %v1805
      %v2482 = vsel %vm2418, %v2417, %v1807
      %vm2483 = vcmask 121856
      %v2485 = vsel %vm2483, %v2420, %v1841
      %v2487 = vsel %vm2483, %v2422, %v1843
      %v2489 = vsel %vm2483, %v2424, %v1845
      %v2491 = vsel %vm2483, %v2426, %v1847
      %v2493 = vsel %vm2483, %v2428, %v1849
      %v2495 = vsel %vm2483, %v2430, %v1851
      %v2497 = vsel %vm2483, %v2432, %v1853
      %v2499 = vsel %vm2483, %v2434, %v1855
      %v2501 = vsel %vm2483, %v2436, %v1857
      %v2503 = vsel %vm2483, %v2438, %v1859
      %v2505 = vsel %vm2483, %v2440, %v1861
      %v2507 = vsel %vm2483, %v2442, %v1863
      %v2509 = vsel %vm2483, %v2444, %v1865
      %v2511 = vsel %vm2483, %v2446, %v1867
      %v2513 = vsel %vm2483, %v2448, %v1869
      %v2515 = vsel %vm2483, %v2450, %v1871
      %v2517 = vsel %vm2483, %v2452, %v1873
      %v2519 = vsel %vm2483, %v2454, %v1875
      %v2521 = vsel %vm2483, %v2456, %v1877
      %v2523 = vsel %vm2483, %v2458, %v1879
      %v2525 = vsel %vm2483, %v2460, %v1881
      %v2527 = vsel %vm2483, %v2462, %v1883
      %v2529 = vsel %vm2483, %v2464, %v1885
      %v2531 = vsel %vm2483, %v2466, %v1887
      %v2533 = vsel %vm2483, %v2468, %v1889
      %v2535 = vsel %vm2483, %v2470, %v1891
      %v2537 = vsel %vm2483, %v2472, %v1893
      %v2539 = vsel %vm2483, %v2474, %v1895
      %v2541 = vsel %vm2483, %v2476, %v1897
      %v2543 = vsel %vm2483, %v2478, %v1899
      %v2545 = vsel %vm2483, %v2480, %v1901
      %v2547 = vsel %vm2483, %v2482, %v1903
      %vm2548 = vcmask 146432
      %v2550 = vsel %vm2548, %v2485, %v1937
      %v2552 = vsel %vm2548, %v2487, %v1939
      %v2554 = vsel %vm2548, %v2489, %v1941
      %v2556 = vsel %vm2548, %v2491, %v1943
      %v2558 = vsel %vm2548, %v2493, %v1945
      %v2560 = vsel %vm2548, %v2495, %v1947
      %v2562 = vsel %vm2548, %v2497, %v1949
      %v2564 = vsel %vm2548, %v2499, %v1951
      %v2566 = vsel %vm2548, %v2501, %v1953
      %v2568 = vsel %vm2548, %v2503, %v1955
      %v2570 = vsel %vm2548, %v2505, %v1957
      %v2572 = vsel %vm2548, %v2507, %v1959
      %v2574 = vsel %vm2548, %v2509, %v1961
      %v2576 = vsel %vm2548, %v2511, %v1963
      %v2578 = vsel %vm2548, %v2513, %v1965
      %v2580 = vsel %vm2548, %v2515, %v1967
      %v2582 = vsel %vm2548, %v2517, %v1969
      %v2584 = vsel %vm2548, %v2519, %v1971
      %v2586 = vsel %vm2548, %v2521, %v1973
      %v2588 = vsel %vm2548, %v2523, %v1975
      %v2590 = vsel %vm2548, %v2525, %v1977
      %v2592 = vsel %vm2548, %v2527, %v1979
      %v2594 = vsel %vm2548, %v2529, %v1981
      %v2596 = vsel %vm2548, %v2531, %v1983
      %v2598 = vsel %vm2548, %v2533, %v1985
      %v2600 = vsel %vm2548, %v2535, %v1987
      %v2602 = vsel %vm2548, %v2537, %v1989
      %v2604 = vsel %vm2548, %v2539, %v1991
      %v2606 = vsel %vm2548, %v2541, %v1993
      %v2608 = vsel %vm2548, %v2543, %v1995
      %v2610 = vsel %vm2548, %v2545, %v1997
      %v2612 = vsel %vm2548, %v2547, %v1999
      %vm2613 = vcmask 171008
      %v2615 = vsel %vm2613, %v2550, %v2033
      %v2617 = vsel %vm2613, %v2552, %v2035
      %v2619 = vsel %vm2613, %v2554, %v2037
      %v2621 = vsel %vm2613, %v2556, %v2039
      %v2623 = vsel %vm2613, %v2558, %v2041
      %v2625 = vsel %vm2613, %v2560, %v2043
      %v2627 = vsel %vm2613, %v2562, %v2045
      %v2629 = vsel %vm2613, %v2564, %v2047
      %v2631 = vsel %vm2613, %v2566, %v2049
      %v2633 = vsel %vm2613, %v2568, %v2051
      %v2635 = vsel %vm2613, %v2570, %v2053
      %v2637 = vsel %vm2613, %v2572, %v2055
      %v2639 = vsel %vm2613, %v2574, %v2057
      %v2641 = vsel %vm2613, %v2576, %v2059
      %v2643 = vsel %vm2613, %v2578, %v2061
      %v2645 = vsel %vm2613, %v2580, %v2063
      %v2647 = vsel %vm2613, %v2582, %v2065
      %v2649 = vsel %vm2613, %v2584, %v2067
      %v2651 = vsel %vm2613, %v2586, %v2069
      %v2653 = vsel %vm2613, %v2588, %v2071
      %v2655 = vsel %vm2613, %v2590, %v2073
      %v2657 = vsel %vm2613, %v2592, %v2075
      %v2659 = vsel %vm2613, %v2594, %v2077
      %v2661 = vsel %vm2613, %v2596, %v2079
      %v2663 = vsel %vm2613, %v2598, %v2081
      %v2665 = vsel %vm2613, %v2600, %v2083
      %v2667 = vsel %vm2613, %v2602, %v2085
      %v2669 = vsel %vm2613, %v2604, %v2087
      %v2671 = vsel %vm2613, %v2606, %v2089
      %v2673 = vsel %vm2613, %v2608, %v2091
      %v2675 = vsel %vm2613, %v2610, %v2093
      %v2677 = vsel %vm2613, %v2612, %v2095
      %vm2678 = vcmask 195584
      %v2680 = vsel %vm2678, %v2615, %v2129
      %v2682 = vsel %vm2678, %v2617, %v2131
      %v2684 = vsel %vm2678, %v2619, %v2133
      %v2686 = vsel %vm2678, %v2621, %v2135
      %v2688 = vsel %vm2678, %v2623, %v2137
      %v2690 = vsel %vm2678, %v2625, %v2139
      %v2692 = vsel %vm2678, %v2627, %v2141
      %v2694 = vsel %vm2678, %v2629, %v2143
      %v2696 = vsel %vm2678, %v2631, %v2145
      %v2698 = vsel %vm2678, %v2633, %v2147
      %v2700 = vsel %vm2678, %v2635, %v2149
      %v2702 = vsel %vm2678, %v2637, %v2151
      %v2704 = vsel %vm2678, %v2639, %v2153
      %v2706 = vsel %vm2678, %v2641, %v2155
      %v2708 = vsel %vm2678, %v2643, %v2157
      %v2710 = vsel %vm2678, %v2645, %v2159
      %v2712 = vsel %vm2678, %v2647, %v2161
      %v2714 = vsel %vm2678, %v2649, %v2163
      %v2716 = vsel %vm2678, %v2651, %v2165
      %v2718 = vsel %vm2678, %v2653, %v2167
      %v2720 = vsel %vm2678, %v2655, %v2169
      %v2722 = vsel %vm2678, %v2657, %v2171
      %v2724 = vsel %vm2678, %v2659, %v2173
      %v2726 = vsel %vm2678, %v2661, %v2175
      %v2728 = vsel %vm2678, %v2663, %v2177
      %v2730 = vsel %vm2678, %v2665, %v2179
      %v2732 = vsel %vm2678, %v2667, %v2181
      %v2734 = vsel %vm2678, %v2669, %v2183
      %v2736 = vsel %vm2678, %v2671, %v2185
      %v2738 = vsel %vm2678, %v2673, %v2187
      %v2740 = vsel %vm2678, %v2675, %v2189
      %v2742 = vsel %vm2678, %v2677, %v2191
      %v2743 = vld [vmem:[%s1] sm:$0xf]
      %v2744 = vld [vmem:[%s1 + $0x4] sm:$0xf]
      %v2745 = vld [vmem:[%s1 + $0x8] sm:$0xf]
      %v2746 = vld [vmem:[%s1 + $0xc] sm:$0x3]
      %v2747 = vld [vmem:[%s2] sm:$0x1]
      %v2749 = vlaneseq
      %v2750 = vshrl.u32 %v2749, 7
      %v2751 = vsub.s32 0, %v2750
      %v2752 = vrot.slane %v2747, %v2751
      %v2758 = vunpack.c.l.b16 %v2743
      %v2759 = vunpack.c.l.b16 %v2744
      %v2760 = vunpack.c.l.b16 %v2745
      %v2761 = vunpack.c.l.b16 %v2746
      %v2762 = vpack.c.b16 %v2759, %v2758
      %v2763 = vpack.c.b16 %v2761, %v2760
      %vm2765 = vcmask 220160
      %v2766 = vsel %vm2765, %v2680, 0
      %v2768 = vsel %vm2765, %v2682, 0
      %v2770 = vsel %vm2765, %v2684, 0
      %v2772 = vsel %vm2765, %v2686, 0
      %v2774 = vsel %vm2765, %v2688, 0
      %v2776 = vsel %vm2765, %v2690, 0
      %v2778 = vsel %vm2765, %v2692, 0
      %v2780 = vsel %vm2765, %v2694, 0
      %v2782 = vsel %vm2765, %v2696, 0
      %v2784 = vsel %vm2765, %v2698, 0
      %v2786 = vsel %vm2765, %v2700, 0
      %v2788 = vsel %vm2765, %v2702, 0
      %v2790 = vsel %vm2765, %v2704, 0
      %v2792 = vsel %vm2765, %v2706, 0
      %v2794 = vsel %vm2765, %v2708, 0
      %v2796 = vsel %vm2765, %v2710, 0
      %v2798 = vsel %vm2765, %v2712, 0
      %v2800 = vsel %vm2765, %v2714, 0
      %v2802 = vsel %vm2765, %v2716, 0
      %v2804 = vsel %vm2765, %v2718, 0
      %v2806 = vsel %vm2765, %v2720, 0
      %v2808 = vsel %vm2765, %v2722, 0
      %v2810 = vsel %vm2765, %v2724, 0
      %v2812 = vsel %vm2765, %v2726, 0
      %v2814 = vsel %vm2765, %v2728, 0
      %v2816 = vsel %vm2765, %v2730, 0
      %v2818 = vsel %vm2765, %v2732, 0
      %v2820 = vsel %vm2765, %v2734, 0
      %v2822 = vsel %vm2765, %v2736, 0
      %v2824 = vsel %vm2765, %v2738, 0
      %v2826 = vsel %vm2765, %v2740, 0
      %v2828 = vsel %vm2765, %v2742, 0
      %vm2830 = vcmask 1044480
      %vm2831 = vcmask 1045504
      %v2832 = vsel %vm2830, 4294967295, 65535
      %v2833 = vsel %vm2831, %v2832, 0
      %v2835 = vand.u32 %v2763, %v2833
      %2837 = vmatprep.subr.bf16.mxu0 0
      %2838 = vmatpush1.bf16.msra.mxu0 %v2762
      %2839 = vmatprep.subr.bf16.mxu0 0
      %2840 = vmatpush1.bf16.msra.mxu0 %v2835
      %2841 = vmatprep.subr.bf16.mxu0 0
      %2842 = vmatpush1.bf16.msra.mxu0 0
      %2843 = vmatprep.subr.bf16.mxu0 0
      %2844 = vmatpush1.bf16.msra.mxu0 0
      %2845 = vmatprep.subr.bf16.mxu0 0
      %2846 = vmatpush1.bf16.msra.mxu0 0
      %2847 = vmatprep.subr.bf16.mxu0 0
      %2848 = vmatpush1.bf16.msra.mxu0 0
      %2849 = vmatprep.subr.bf16.mxu0 0
      %2850 = vmatpush1.bf16.msra.mxu0 0
      %2851 = vmatprep.subr.bf16.mxu0 0
      %2852 = vmatpush1.bf16.msra.mxu0 0
      %2853 = vmatprep.subr.bf16.mxu0 0
      %2854 = vmatpush1.bf16.msra.mxu0 0
      %2855 = vmatprep.subr.bf16.mxu0 0
      %2856 = vmatpush1.bf16.msra.mxu0 0
      %2857 = vmatprep.subr.bf16.mxu0 0
      %2858 = vmatpush1.bf16.msra.mxu0 0
      %2859 = vmatprep.subr.bf16.mxu0 0
      %2860 = vmatpush1.bf16.msra.mxu0 0
      %2861 = vmatprep.subr.bf16.mxu0 0
      %2862 = vmatpush1.bf16.msra.mxu0 0
      %2863 = vmatprep.subr.bf16.mxu0 0
      %2864 = vmatpush1.bf16.msra.mxu0 0
      %2865 = vmatprep.subr.bf16.mxu0 0
      %2866 = vmatpush1.bf16.msra.mxu0 0
      %2867 = vmatprep.subr.bf16.mxu0 0
      %2868 = vmatpush1.bf16.msra.mxu0 0
      %2869 = vmatprep.mubr.bf16.mxu0 0
      %2870 = vmatmul.mubr.bf16.gmra.mrb[0].mxu0 %v2766
      %v2871 = vpop.f32.mrb[0].mxu0
      %v2872 = vadd.f32 %v2752, %v2871
      %v2873 = vpop.f32.mrb[0].mxu0
      %v2874 = vpop.f32.mrb[0].mxu0
      %v2875 = vadd.f32 %v2752, %v2874
      %v2876 = vpop.f32.mrb[0].mxu0
      %2877 = vmatprep.mubr.bf16.mxu0 0
      %2878 = vmatmul.mubr.bf16.gmra.mrb[0].mxu0 %v2768
      %v2879 = vpop.f32.mrb[0].mxu0
      %v2880 = vadd.f32 %v2752, %v2879
      %v2881 = vpop.f32.mrb[0].mxu0
      %v2882 = vpop.f32.mrb[0].mxu0
      %v2883 = vadd.f32 %v2752, %v2882
      %v2884 = vpop.f32.mrb[0].mxu0
      %2885 = vmatprep.mubr.bf16.mxu0 0
      %2886 = vmatmul.mubr.bf16.gmra.mrb[0].mxu0 %v2770
      %v2887 = vpop.f32.mrb[0].mxu0
      %v2888 = vadd.f32 %v2752, %v2887
      %v2889 = vpop.f32.mrb[0].mxu0
      %v2890 = vpop.f32.mrb[0].mxu0
      %v2891 = vadd.f32 %v2752, %v2890
      %v2892 = vpop.f32.mrb[0].mxu0
      %2893 = vmatprep.mubr.bf16.mxu0 0
      %2894 = vmatmul.mubr.bf16.gmra.mrb[0].mxu0 %v2772
      %v2895 = vpop.f32.mrb[0].mxu0
      %v2896 = vadd.f32 %v2752, %v2895
      %v2897 = vpop.f32.mrb[0].mxu0
      %v2898 = vpop.f32.mrb[0].mxu0
      %v2899 = vadd.f32 %v2752, %v2898
      %v2900 = vpop.f32.mrb[0].mxu0
      %2901 = vmatprep.mubr.bf16.mxu0 0
      %2902 = vmatmul.mubr.bf16.gmra.mrb[0].mxu0 %v2774
      %v2903 = vpop.f32.mrb[0].mxu0
      %v2904 = vadd.f32 %v2752, %v2903
      %v2905 = vpop.f32.mrb[0].mxu0
      %v2906 = vpop.f32.mrb[0].mxu0
      %v2907 = vadd.f32 %v2752, %v2906
      %v2908 = vpop.f32.mrb[0].mxu0
      %2909 = vmatprep.mubr.bf16.mxu0 0
      %2910 = vmatmul.mubr.bf16.gmra.mrb[0].mxu0 %v2776
      %v2911 = vpop.f32.mrb[0].mxu0
      %v2912 = vadd.f32 %v2752, %v2911
      %v2913 = vpop.f32.mrb[0].mxu0
      %v2914 = vpop.f32.mrb[0].mxu0
      %v2915 = vadd.f32 %v2752, %v2914
      %v2916 = vpop.f32.mrb[0].mxu0
      %2917 = vmatprep.mubr.bf16.mxu0 0
      %2918 = vmatmul.mubr.bf16.gmra.mrb[0].mxu0 %v2778
      %v2919 = vpop.f32.mrb[0].mxu0
      %v2920 = vadd.f32 %v2752, %v2919
      %v2921 = vpop.f32.mrb[0].mxu0
      %v2922 = vpop.f32.mrb[0].mxu0
      %v2923 = vadd.f32 %v2752, %v2922
      %v2924 = vpop.f32.mrb[0].mxu0
      %2925 = vmatprep.mubr.bf16.mxu0 0
      %2926 = vmatmul.mubr.bf16.gmra.mrb[0].mxu0 %v2780
      %v2927 = vpop.f32.mrb[0].mxu0
      %v2928 = vadd.f32 %v2752, %v2927
      %v2929 = vpop.f32.mrb[0].mxu0
      %v2930 = vpop.f32.mrb[0].mxu0
      %v2931 = vadd.f32 %v2752, %v2930
      %v2932 = vpop.f32.mrb[0].mxu0
      %2933 = vmatprep.mubr.bf16.mxu0 0
      %2934 = vmatmul.mubr.bf16.gmra.mrb[0].mxu0 %v2782
      %v2935 = vpop.f32.mrb[0].mxu0
      %v2936 = vadd.f32 %v2752, %v2935
      %v2937 = vpop.f32.mrb[0].mxu0
      %v2938 = vpop.f32.mrb[0].mxu0
      %v2939 = vadd.f32 %v2752, %v2938
      %v2940 = vpop.f32.mrb[0].mxu0
      %2941 = vmatprep.mubr.bf16.mxu0 0
      %2942 = vmatmul.mubr.bf16.gmra.mrb[0].mxu0 %v2784
      %v2943 = vpop.f32.mrb[0].mxu0
      %v2944 = vadd.f32 %v2752, %v2943
      %v2945 = vpop.f32.mrb[0].mxu0
      %v2946 = vpop.f32.mrb[0].mxu0
      %v2947 = vadd.f32 %v2752, %v2946
      %v2948 = vpop.f32.mrb[0].mxu0
      %2949 = vmatprep.mubr.bf16.mxu0 0
      %2950 = vmatmul.mubr.bf16.gmra.mrb[0].mxu0 %v2786
      %v2951 = vpop.f32.mrb[0].mxu0
      %v2952 = vadd.f32 %v2752, %v2951
      %v2953 = vpop.f32.mrb[0].mxu0
      %v2954 = vpop.f32.mrb[0].mxu0
      %v2955 = vadd.f32 %v2752, %v2954
      %v2956 = vpop.f32.mrb[0].mxu0
      %2957 = vmatprep.mubr.bf16.mxu0 0
      %2958 = vmatmul.mubr.bf16.gmra.mrb[0].mxu0 %v2788
      %v2959 = vpop.f32.mrb[0].mxu0
      %v2960 = vadd.f32 %v2752, %v2959
      %v2961 = vpop.f32.mrb[0].mxu0
      %v2962 = vpop.f32.mrb[0].mxu0
      %v2963 = vadd.f32 %v2752, %v2962
      %v2964 = vpop.f32.mrb[0].mxu0
      %2965 = vmatprep.mubr.bf16.mxu0 0
      %2966 = vmatmul.mubr.bf16.gmra.mrb[0].mxu0 %v2790
      %v2967 = vpop.f32.mrb[0].mxu0
      %v2968 = vadd.f32 %v2752, %v2967
      %v2969 = vpop.f32.mrb[0].mxu0
      %v2970 = vpop.f32.mrb[0].mxu0
      %v2971 = vadd.f32 %v2752, %v2970
      %v2972 = vpop.f32.mrb[0].mxu0
      %2973 = vmatprep.mubr.bf16.mxu0 0
      %2974 = vmatmul.mubr.bf16.gmra.mrb[0].mxu0 %v2792
      %v2975 = vpop.f32.mrb[0].mxu0
      %v2976 = vadd.f32 %v2752, %v2975
      %v2977 = vpop.f32.mrb[0].mxu0
      %v2978 = vpop.f32.mrb[0].mxu0
      %v2979 = vadd.f32 %v2752, %v2978
      %v2980 = vpop.f32.mrb[0].mxu0
      %2981 = vmatprep.mubr.bf16.mxu0 0
      %2982 = vmatmul.mubr.bf16.gmra.mrb[0].mxu0 %v2794
      %v2983 = vpop.f32.mrb[0].mxu0
      %v2984 = vadd.f32 %v2752, %v2983
      %v2985 = vpop.f32.mrb[0].mxu0
      %v2986 = vpop.f32.mrb[0].mxu0
      %v2987 = vadd.f32 %v2752, %v2986
      %v2988 = vpop.f32.mrb[0].mxu0
      %2989 = vmatprep.mubr.bf16.mxu0 0
      %2990 = vmatmul.mubr.bf16.gmra.mrb[0].mxu0 %v2796
      %v2991 = vpop.f32.mrb[0].mxu0
      %v2992 = vadd.f32 %v2752, %v2991
      %v2993 = vpop.f32.mrb[0].mxu0
      %v2994 = vpop.f32.mrb[0].mxu0
      %v2995 = vadd.f32 %v2752, %v2994
      %v2996 = vpop.f32.mrb[0].mxu0
      %2997 = vmatprep.mubr.bf16.mxu0 0
      %2998 = vmatmul.mubr.bf16.gmra.mrb[0].mxu0 %v2798
      %v2999 = vpop.f32.mrb[0].mxu0
      %v3000 = vadd.f32 %v2752, %v2999
      %v3001 = vpop.f32.mrb[0].mxu0
      %v3002 = vpop.f32.mrb[0].mxu0
      %v3003 = vadd.f32 %v2752, %v3002
      %v3004 = vpop.f32.mrb[0].mxu0
      %3005 = vmatprep.mubr.bf16.mxu0 0
      %3006 = vmatmul.mubr.bf16.gmra.mrb[0].mxu0 %v2800
      %v3007 = vpop.f32.mrb[0].mxu0
      %v3008 = vadd.f32 %v2752, %v3007
      %v3009 = vpop.f32.mrb[0].mxu0
      %v3010 = vpop.f32.mrb[0].mxu0
      %v3011 = vadd.f32 %v2752, %v3010
      %v3012 = vpop.f32.mrb[0].mxu0
      %3013 = vmatprep.mubr.bf16.mxu0 0
      %3014 = vmatmul.mubr.bf16.gmra.mrb[0].mxu0 %v2802
      %v3015 = vpop.f32.mrb[0].mxu0
      %v3016 = vadd.f32 %v2752, %v3015
      %v3017 = vpop.f32.mrb[0].mxu0
      %v3018 = vpop.f32.mrb[0].mxu0
      %v3019 = vadd.f32 %v2752, %v3018
      %v3020 = vpop.f32.mrb[0].mxu0
      %3021 = vmatprep.mubr.bf16.mxu0 0
      %3022 = vmatmul.mubr.bf16.gmra.mrb[0].mxu0 %v2804
      %v3023 = vpop.f32.mrb[0].mxu0
      %v3024 = vadd.f32 %v2752, %v3023
      %v3025 = vpop.f32.mrb[0].mxu0
      %v3026 = vpop.f32.mrb[0].mxu0
      %v3027 = vadd.f32 %v2752, %v3026
      %v3028 = vpop.f32.mrb[0].mxu0
      %3029 = vmatprep.mubr.bf16.mxu0 0
      %3030 = vmatmul.mubr.bf16.gmra.mrb[0].mxu0 %v2806
      %v3031 = vpop.f32.mrb[0].mxu0
      %v3032 = vadd.f32 %v2752, %v3031
      %v3033 = vpop.f32.mrb[0].mxu0
      %v3034 = vpop.f32.mrb[0].mxu0
      %v3035 = vadd.f32 %v2752, %v3034
      %v3036 = vpop.f32.mrb[0].mxu0
      %3037 = vmatprep.mubr.bf16.mxu0 0
      %3038 = vmatmul.mubr.bf16.gmra.mrb[0].mxu0 %v2808
      %v3039 = vpop.f32.mrb[0].mxu0
      %v3040 = vadd.f32 %v2752, %v3039
      %v3041 = vpop.f32.mrb[0].mxu0
      %v3042 = vpop.f32.mrb[0].mxu0
      %v3043 = vadd.f32 %v2752, %v3042
      %v3044 = vpop.f32.mrb[0].mxu0
      %3045 = vmatprep.mubr.bf16.mxu0 0
      %3046 = vmatmul.mubr.bf16.gmra.mrb[0].mxu0 %v2810
      %v3047 = vpop.f32.mrb[0].mxu0
      %v3048 = vadd.f32 %v2752, %v3047
      %v3049 = vpop.f32.mrb[0].mxu0
      %v3050 = vpop.f32.mrb[0].mxu0
      %v3051 = vadd.f32 %v2752, %v3050
      %v3052 = vpop.f32.mrb[0].mxu0
      %3053 = vmatprep.mubr.bf16.mxu0 0
      %3054 = vmatmul.mubr.bf16.gmra.mrb[0].mxu0 %v2812
      %v3055 = vpop.f32.mrb[0].mxu0
      %v3056 = vadd.f32 %v2752, %v3055
      %v3057 = vpop.f32.mrb[0].mxu0
      %v3058 = vpop.f32.mrb[0].mxu0
      %v3059 = vadd.f32 %v2752, %v3058
      %v3060 = vpop.f32.mrb[0].mxu0
      %3061 = vmatprep.mubr.bf16.mxu0 0
      %3062 = vmatmul.mubr.bf16.gmra.mrb[0].mxu0 %v2814
      %v3063 = vpop.f32.mrb[0].mxu0
      %v3064 = vadd.f32 %v2752, %v3063
      %v3065 = vpop.f32.mrb[0].mxu0
      %v3066 = vpop.f32.mrb[0].mxu0
      %v3067 = vadd.f32 %v2752, %v3066
      %v3068 = vpop.f32.mrb[0].mxu0
      %3069 = vmatprep.mubr.bf16.mxu0 0
      %3070 = vmatmul.mubr.bf16.gmra.mrb[0].mxu0 %v2816
      %v3071 = vpop.f32.mrb[0].mxu0
      %v3072 = vadd.f32 %v2752, %v3071
      %v3073 = vpop.f32.mrb[0].mxu0
      %v3074 = vpop.f32.mrb[0].mxu0
      %v3075 = vadd.f32 %v2752, %v3074
      %v3076 = vpop.f32.mrb[0].mxu0
      %3077 = vmatprep.mubr.bf16.mxu0 0
      %3078 = vmatmul.mubr.bf16.gmra.mrb[0].mxu0 %v2818
      %v3079 = vpop.f32.mrb[0].mxu0
      %v3080 = vadd.f32 %v2752, %v3079
      %v3081 = vpop.f32.mrb[0].mxu0
      %v3082 = vpop.f32.mrb[0].mxu0
      %v3083 = vadd.f32 %v2752, %v3082
      %v3084 = vpop.f32.mrb[0].mxu0
      %3085 = vmatprep.mubr.bf16.mxu0 0
      %3086 = vmatmul.mubr.bf16.gmra.mrb[0].mxu0 %v2820
      %v3087 = vpop.f32.mrb[0].mxu0
      %v3088 = vadd.f32 %v2752, %v3087
      %v3089 = vpop.f32.mrb[0].mxu0
      %v3090 = vpop.f32.mrb[0].mxu0
      %v3091 = vadd.f32 %v2752, %v3090
      %v3092 = vpop.f32.mrb[0].mxu0
      %3093 = vmatprep.mubr.bf16.mxu0 0
      %3094 = vmatmul.mubr.bf16.gmra.mrb[0].mxu0 %v2822
      %v3095 = vpop.f32.mrb[0].mxu0
      %v3096 = vadd.f32 %v2752, %v3095
      %v3097 = vpop.f32.mrb[0].mxu0
      %v3098 = vpop.f32.mrb[0].mxu0
      %v3099 = vadd.f32 %v2752, %v3098
      %v3100 = vpop.f32.mrb[0].mxu0
      %3101 = vmatprep.mubr.bf16.mxu0 0
      %3102 = vmatmul.mubr.bf16.gmra.mrb[0].mxu0 %v2824
      %v3103 = vpop.f32.mrb[0].mxu0
      %v3104 = vadd.f32 %v2752, %v3103
      %v3105 = vpop.f32.mrb[0].mxu0
      %v3106 = vpop.f32.mrb[0].mxu0
      %v3107 = vadd.f32 %v2752, %v3106
      %v3108 = vpop.f32.mrb[0].mxu0
      %3109 = vmatprep.mubr.bf16.mxu0 0
      %3110 = vmatmul.mubr.bf16.gmra.mrb[0].mxu0 %v2826
      %v3111 = vpop.f32.mrb[0].mxu0
      %v3112 = vadd.f32 %v2752, %v3111
      %v3113 = vpop.f32.mrb[0].mxu0
      %v3114 = vpop.f32.mrb[0].mxu0
      %v3115 = vadd.f32 %v2752, %v3114
      %v3116 = vpop.f32.mrb[0].mxu0
      %3117 = vmatprep.mubr.bf16.mxu0 0
      %3118 = vmatmul.mubr.bf16.gmra.mrb[0].mxu0 %v2828
      %v3119 = vpop.f32.mrb[0].mxu0
      %v3120 = vadd.f32 %v2752, %v3119
      %v3121 = vpop.f32.mrb[0].mxu0
      %v3122 = vpop.f32.mrb[0].mxu0
      %v3123 = vadd.f32 %v2752, %v3122
      %v3124 = vpop.f32.mrb[0].mxu0
      %3125 = vdwg.mxu0
      %v3126 = vmax.f32 %v2872, 0.0
      %v3127 = vmax.f32 %v2875, 0.0
      %v3128 = vmax.f32 %v2880, 0.0
      %v3129 = vmax.f32 %v2883, 0.0
      %v3130 = vmax.f32 %v2888, 0.0
      %v3131 = vmax.f32 %v2891, 0.0
      %v3132 = vmax.f32 %v2896, 0.0
      %v3133 = vmax.f32 %v2899, 0.0
      %v3134 = vmax.f32 %v2904, 0.0
      %v3135 = vmax.f32 %v2907, 0.0
      %v3136 = vmax.f32 %v2912, 0.0
      %v3137 = vmax.f32 %v2915, 0.0
      %v3138 = vmax.f32 %v2920, 0.0
      %v3139 = vmax.f32 %v2923, 0.0
      %v3140 = vmax.f32 %v2928, 0.0
      %v3141 = vmax.f32 %v2931, 0.0
      %v3142 = vmax.f32 %v2936, 0.0
      %v3143 = vmax.f32 %v2939, 0.0
      %v3144 = vmax.f32 %v2944, 0.0
      %v3145 = vmax.f32 %v2947, 0.0
      %v3146 = vmax.f32 %v2952, 0.0
      %v3147 = vmax.f32 %v2955, 0.0
      %v3148 = vmax.f32 %v2960, 0.0
      %v3149 = vmax.f32 %v2963, 0.0
      %v3150 = vmax.f32 %v2968, 0.0
      %v3151 = vmax.f32 %v2971, 0.0
      %v3152 = vmax.f32 %v2976, 0.0
      %v3153 = vmax.f32 %v2979, 0.0
      %v3154 = vmax.f32 %v2984, 0.0
      %v3155 = vmax.f32 %v2987, 0.0
      %v3156 = vmax.f32 %v2992, 0.0
      %v3157 = vmax.f32 %v2995, 0.0
      %v3158 = vmax.f32 %v3000, 0.0
      %v3159 = vmax.f32 %v3003, 0.0
      %v3160 = vmax.f32 %v3008, 0.0
      %v3161 = vmax.f32 %v3011, 0.0
      %v3162 = vmax.f32 %v3016, 0.0
      %v3163 = vmax.f32 %v3019, 0.0
      %v3164 = vmax.f32 %v3024, 0.0
      %v3165 = vmax.f32 %v3027, 0.0
      %v3166 = vmax.f32 %v3032, 0.0
      %v3167 = vmax.f32 %v3035, 0.0
      %v3168 = vmax.f32 %v3040, 0.0
      %v3169 = vmax.f32 %v3043, 0.0
      %v3170 = vmax.f32 %v3048, 0.0
      %v3171 = vmax.f32 %v3051, 0.0
      %v3172 = vmax.f32 %v3056, 0.0
      %v3173 = vmax.f32 %v3059, 0.0
      %v3174 = vmax.f32 %v3064, 0.0
      %v3175 = vmax.f32 %v3067, 0.0
      %v3176 = vmax.f32 %v3072, 0.0
      %v3177 = vmax.f32 %v3075, 0.0
      %v3178 = vmax.f32 %v3080, 0.0
      %v3179 = vmax.f32 %v3083, 0.0
      %v3180 = vmax.f32 %v3088, 0.0
      %v3181 = vmax.f32 %v3091, 0.0
      %v3182 = vmax.f32 %v3096, 0.0
      %v3183 = vmax.f32 %v3099, 0.0
      %v3184 = vmax.f32 %v3104, 0.0
      %v3185 = vmax.f32 %v3107, 0.0
      %v3186 = vmax.f32 %v3112, 0.0
      %v3187 = vmax.f32 %v3115, 0.0
      %v3188 = vmax.f32 %v3120, 0.0
      %v3189 = vmax.f32 %v3123, 0.0
      %vm3190 = vcmask 261120
      %3191 = vst.msk [vmem:[#allocation3] sm:$0xff] %vm3190, 0.0
      %3192 = vst.msk [vmem:[#allocation3 + $0x8] sm:$0xff] %vm3190, 0.0
      %vm3193 = vcmask 254976
      %3194 = vst.msk [vmem:[#allocation3 + $0x10] sm:$0x3] %vm3193, 0.0
      %3195 = vst.msk [vmem:[#allocation3 + $0x1b0] sm:$0xff] %vm3190, 0.0
      %3196 = vst.msk [vmem:[#allocation3 + $0x1b8] sm:$0xff] %vm3190, 0.0
      %3197 = vst.msk [vmem:[#allocation3 + $0x1c0] sm:$0x3] %vm3193, 0.0
      %s3198 = scalar_lea.vmem [#allocation3], 408
      %3199 = vst.msk [vmem:[%s3198] sm:$0xff] %vm3190, 0.0
      %3200 = vst.msk [vmem:[%s3198 + $0x8] sm:$0xff] %vm3190, 0.0
      %3201 = vst.msk [vmem:[%s3198 + $0x10] sm:$0x3] %vm3193, 0.0
      %3202 = vst.msk [vmem:[%s3198 + $0x1b0] sm:$0xff] %vm3190, 0.0
      %3203 = vst.msk [vmem:[%s3198 + $0x1b8] sm:$0xff] %vm3190, 0.0
      %3204 = vst.msk [vmem:[%s3198 + $0x1c0] sm:$0x3] %vm3193, 0.0
      %vm3205 = vcmask 253952
      %3206 = vst.msk [vmem:[#allocation3] sm:$0x1] %vm3205, 0.0
      %3207 = vst.msk [vmem:[#allocation3 + $0x18] sm:$0x1] %vm3205, 0.0
      %3208 = vst.msk [vmem:[#allocation3 + $0x30] sm:$0x1] %vm3205, 0.0
      %3209 = vst.msk [vmem:[#allocation3 + $0x48] sm:$0x1] %vm3205, 0.0
      %3210 = vst.msk [vmem:[#allocation3 + $0x60] sm:$0x1] %vm3205, 0.0
      %3211 = vst.msk [vmem:[#allocation3 + $0x78] sm:$0x1] %vm3205, 0.0
      %3212 = vst.msk [vmem:[#allocation3 + $0x90] sm:$0x1] %vm3205, 0.0
      %3213 = vst.msk [vmem:[#allocation3 + $0xa8] sm:$0x1] %vm3205, 0.0
      %3214 = vst.msk [vmem:[#allocation3 + $0xc0] sm:$0x1] %vm3205, 0.0
      %3215 = vst.msk [vmem:[#allocation3 + $0xd8] sm:$0x1] %vm3205, 0.0
      %3216 = vst.msk [vmem:[#allocation3 + $0xf0] sm:$0x1] %vm3205, 0.0
      %3217 = vst.msk [vmem:[#allocation3 + $0x108] sm:$0x1] %vm3205, 0.0
      %3218 = vst.msk [vmem:[#allocation3 + $0x120] sm:$0x1] %vm3205, 0.0
      %3219 = vst.msk [vmem:[#allocation3 + $0x138] sm:$0x1] %vm3205, 0.0
      %3220 = vst.msk [vmem:[#allocation3 + $0x150] sm:$0x1] %vm3205, 0.0
      %3221 = vst.msk [vmem:[#allocation3 + $0x168] sm:$0x1] %vm3205, 0.0
      %3222 = vst.msk [vmem:[#allocation3 + $0x180] sm:$0x1] %vm3205, 0.0
      %3223 = vst.msk [vmem:[#allocation3 + $0x198] sm:$0x1] %vm3205, 0.0
      %3224 = vst.msk [vmem:[#allocation3 + $0x1b0] sm:$0x1] %vm3205, 0.0
      %3225 = vst.msk [vmem:[#allocation3 + $0x1c8] sm:$0x1] %vm3205, 0.0
      %3226 = vst.msk [vmem:[#allocation3 + $0x1e0] sm:$0x1] %vm3205, 0.0
      %3227 = vst.msk [vmem:[#allocation3 + $0x1f8] sm:$0x1] %vm3205, 0.0
      %3228 = vst.msk [vmem:[#allocation3 + $0x210] sm:$0x1] %vm3205, 0.0
      %3229 = vst.msk [vmem:[#allocation3 + $0x228] sm:$0x1] %vm3205, 0.0
      %3230 = vst.msk [vmem:[#allocation3 + $0x240] sm:$0x1] %vm3205, 0.0
      %3231 = vst.msk [vmem:[#allocation3 + $0x258] sm:$0x1] %vm3205, 0.0
      %3232 = vst.msk [vmem:[#allocation3 + $0x270] sm:$0x1] %vm3205, 0.0
      %3233 = vst.msk [vmem:[#allocation3 + $0x288] sm:$0x1] %vm3205, 0.0
      %3234 = vst.msk [vmem:[#allocation3 + $0x2a0] sm:$0x1] %vm3205, 0.0
      %3235 = vst.msk [vmem:[#allocation3 + $0x2b8] sm:$0x1] %vm3205, 0.0
      %3236 = vst.msk [vmem:[#allocation3 + $0x2d0] sm:$0x1] %vm3205, 0.0
      %3237 = vst.msk [vmem:[#allocation3 + $0x2e8] sm:$0x1] %vm3205, 0.0
      %3238 = vst.msk [vmem:[#allocation3 + $0x300] sm:$0x1] %vm3205, 0.0
      %3239 = vst.msk [vmem:[#allocation3 + $0x318] sm:$0x1] %vm3205, 0.0
      %3240 = vst.msk [vmem:[#allocation3 + $0x330] sm:$0x1] %vm3205, 0.0
      %3241 = vst.msk [vmem:[#allocation3 + $0x348] sm:$0x1] %vm3205, 0.0
      %3242 = vst.msk [vmem:[#allocation3 + $0x11] sm:$0x1] %vm3205, 0.0
      %3243 = vst.msk [vmem:[#allocation3 + $0x29] sm:$0x1] %vm3205, 0.0
      %3244 = vst.msk [vmem:[#allocation3 + $0x41] sm:$0x1] %vm3205, 0.0
      %3245 = vst.msk [vmem:[#allocation3 + $0x59] sm:$0x1] %vm3205, 0.0
      %3246 = vst.msk [vmem:[#allocation3 + $0x71] sm:$0x1] %vm3205, 0.0
      %3247 = vst.msk [vmem:[#allocation3 + $0x89] sm:$0x1] %vm3205, 0.0
      %3248 = vst.msk [vmem:[#allocation3 + $0xa1] sm:$0x1] %vm3205, 0.0
      %3249 = vst.msk [vmem:[#allocation3 + $0xb9] sm:$0x1] %vm3205, 0.0
      %3250 = vst.msk [vmem:[#allocation3 + $0xd1] sm:$0x1] %vm3205, 0.0
      %3251 = vst.msk [vmem:[#allocation3 + $0xe9] sm:$0x1] %vm3205, 0.0
      %3252 = vst.msk [vmem:[#allocation3 + $0x101] sm:$0x1] %vm3205, 0.0
      %3253 = vst.msk [vmem:[#allocation3 + $0x119] sm:$0x1] %vm3205, 0.0
      %3254 = vst.msk [vmem:[#allocation3 + $0x131] sm:$0x1] %vm3205, 0.0
      %3255 = vst.msk [vmem:[#allocation3 + $0x149] sm:$0x1] %vm3205, 0.0
      %3256 = vst.msk [vmem:[#allocation3 + $0x161] sm:$0x1] %vm3205, 0.0
      %3257 = vst.msk [vmem:[#allocation3 + $0x179] sm:$0x1] %vm3205, 0.0
      %3258 = vst.msk [vmem:[#allocation3 + $0x191] sm:$0x1] %vm3205, 0.0
      %3259 = vst.msk [vmem:[#allocation3 + $0x1a9] sm:$0x1] %vm3205, 0.0
      %3260 = vst.msk [vmem:[#allocation3 + $0x1c1] sm:$0x1] %vm3205, 0.0
      %3261 = vst.msk [vmem:[#allocation3 + $0x1d9] sm:$0x1] %vm3205, 0.0
      %3262 = vst.msk [vmem:[#allocation3 + $0x1f1] sm:$0x1] %vm3205, 0.0
      %3263 = vst.msk [vmem:[#allocation3 + $0x209] sm:$0x1] %vm3205, 0.0
      %3264 = vst.msk [vmem:[#allocation3 + $0x221] sm:$0x1] %vm3205, 0.0
      %3265 = vst.msk [vmem:[#allocation3 + $0x239] sm:$0x1] %vm3205, 0.0
      %3266 = vst.msk [vmem:[#allocation3 + $0x251] sm:$0x1] %vm3205, 0.0
      %3267 = vst.msk [vmem:[#allocation3 + $0x269] sm:$0x1] %vm3205, 0.0
      %3268 = vst.msk [vmem:[#allocation3 + $0x281] sm:$0x1] %vm3205, 0.0
      %3269 = vst.msk [vmem:[#allocation3 + $0x299] sm:$0x1] %vm3205, 0.0
      %3270 = vst.msk [vmem:[#allocation3 + $0x2b1] sm:$0x1] %vm3205, 0.0
      %3271 = vst.msk [vmem:[#allocation3 + $0x2c9] sm:$0x1] %vm3205, 0.0
      %3272 = vst.msk [vmem:[#allocation3 + $0x2e1] sm:$0x1] %vm3205, 0.0
      %3273 = vst.msk [vmem:[#allocation3 + $0x2f9] sm:$0x1] %vm3205, 0.0
      %3274 = vst.msk [vmem:[#allocation3 + $0x311] sm:$0x1] %vm3205, 0.0
      %3275 = vst.msk [vmem:[#allocation3 + $0x329] sm:$0x1] %vm3205, 0.0
      %3276 = vst.msk [vmem:[#allocation3 + $0x341] sm:$0x1] %vm3205, 0.0
      %3277 = vst.msk [vmem:[#allocation3 + $0x359] sm:$0x1] %vm3205, 0.0
      %s3278 = scalar_lea.vmem [#allocation3], 24
      %3279 = vst.msk [vmem:[%s3278 + $0x1] sm:$0xff] %vm3190, %v3126
      %3280 = vst.msk [vmem:[%s3278 + $0x9] sm:$0xff] %vm3190, %v3127
      %3281 = vst.msk [vmem:[%s3278 + $0x19] sm:$0xff] %vm3190, %v3128
      %3282 = vst.msk [vmem:[%s3278 + $0x21] sm:$0xff] %vm3190, %v3129
      %3283 = vst.msk [vmem:[%s3278 + $0x31] sm:$0xff] %vm3190, %v3130
      %3284 = vst.msk [vmem:[%s3278 + $0x39] sm:$0xff] %vm3190, %v3131
      %3285 = vst.msk [vmem:[%s3278 + $0x49] sm:$0xff] %vm3190, %v3132
      %3286 = vst.msk [vmem:[%s3278 + $0x51] sm:$0xff] %vm3190, %v3133
      %3287 = vst.msk [vmem:[%s3278 + $0x61] sm:$0xff] %vm3190, %v3134
      %3288 = vst.msk [vmem:[%s3278 + $0x69] sm:$0xff] %vm3190, %v3135
      %3289 = vst.msk [vmem:[%s3278 + $0x79] sm:$0xff] %vm3190, %v3136
      %3290 = vst.msk [vmem:[%s3278 + $0x81] sm:$0xff] %vm3190, %v3137
      %3291 = vst.msk [vmem:[%s3278 + $0x91] sm:$0xff] %vm3190, %v3138
      %3292 = vst.msk [vmem:[%s3278 + $0x99] sm:$0xff] %vm3190, %v3139
      %3293 = vst.msk [vmem:[%s3278 + $0xa9] sm:$0xff] %vm3190, %v3140
      %3294 = vst.msk [vmem:[%s3278 + $0xb1] sm:$0xff] %vm3190, %v3141
      %3295 = vst.msk [vmem:[%s3278 + $0xc1] sm:$0xff] %vm3190, %v3142
      %3296 = vst.msk [vmem:[%s3278 + $0xc9] sm:$0xff] %vm3190, %v3143
      %3297 = vst.msk [vmem:[%s3278 + $0xd9] sm:$0xff] %vm3190, %v3144
      %3298 = vst.msk [vmem:[%s3278 + $0xe1] sm:$0xff] %vm3190, %v3145
      %3299 = vst.msk [vmem:[%s3278 + $0xf1] sm:$0xff] %vm3190, %v3146
      %3300 = vst.msk [vmem:[%s3278 + $0xf9] sm:$0xff] %vm3190, %v3147
      %3301 = vst.msk [vmem:[%s3278 + $0x109] sm:$0xff] %vm3190, %v3148
      %3302 = vst.msk [vmem:[%s3278 + $0x111] sm:$0xff] %vm3190, %v3149
      %3303 = vst.msk [vmem:[%s3278 + $0x121] sm:$0xff] %vm3190, %v3150
      %3304 = vst.msk [vmem:[%s3278 + $0x129] sm:$0xff] %vm3190, %v3151
      %3305 = vst.msk [vmem:[%s3278 + $0x139] sm:$0xff] %vm3190, %v3152
      %3306 = vst.msk [vmem:[%s3278 + $0x141] sm:$0xff] %vm3190, %v3153
      %3307 = vst.msk [vmem:[%s3278 + $0x151] sm:$0xff] %vm3190, %v3154
      %3308 = vst.msk [vmem:[%s3278 + $0x159] sm:$0xff] %vm3190, %v3155
      %3309 = vst.msk [vmem:[%s3278 + $0x169] sm:$0xff] %vm3190, %v3156
      %3310 = vst.msk [vmem:[%s3278 + $0x171] sm:$0xff] %vm3190, %v3157
      %3311 = vst.msk [vmem:[%s3278 + $0x1b1] sm:$0xff] %vm3190, %v3158
      %3312 = vst.msk [vmem:[%s3278 + $0x1b9] sm:$0xff] %vm3190, %v3159
      %3313 = vst.msk [vmem:[%s3278 + $0x1c9] sm:$0xff] %vm3190, %v3160
      %3314 = vst.msk [vmem:[%s3278 + $0x1d1] sm:$0xff] %vm3190, %v3161
      %3315 = vst.msk [vmem:[%s3278 + $0x1e1] sm:$0xff] %vm3190, %v3162
      %3316 = vst.msk [vmem:[%s3278 + $0x1e9] sm:$0xff] %vm3190, %v3163
      %3317 = vst.msk [vmem:[%s3278 + $0x1f9] sm:$0xff] %vm3190, %v3164
      %3318 = vst.msk [vmem:[%s3278 + $0x201] sm:$0xff] %vm3190, %v3165
      %3319 = vst.msk [vmem:[%s3278 + $0x211] sm:$0xff] %vm3190, %v3166
      %3320 = vst.msk [vmem:[%s3278 + $0x219] sm:$0xff] %vm3190, %v3167
      %3321 = vst.msk [vmem:[%s3278 + $0x229] sm:$0xff] %vm3190, %v3168
      %3322 = vst.msk [vmem:[%s3278 + $0x231] sm:$0xff] %vm3190, %v3169
      %3323 = vst.msk [vmem:[%s3278 + $0x241] sm:$0xff] %vm3190, %v3170
      %3324 = vst.msk [vmem:[%s3278 + $0x249] sm:$0xff] %vm3190, %v3171
      %3325 = vst.msk [vmem:[%s3278 + $0x259] sm:$0xff] %vm3190, %v3172
      %3326 = vst.msk [vmem:[%s3278 + $0x261] sm:$0xff] %vm3190, %v3173
      %3327 = vst.msk [vmem:[%s3278 + $0x271] sm:$0xff] %vm3190, %v3174
      %3328 = vst.msk [vmem:[%s3278 + $0x279] sm:$0xff] %vm3190, %v3175
      %3329 = vst.msk [vmem:[%s3278 + $0x289] sm:$0xff] %vm3190, %v3176
      %3330 = vst.msk [vmem:[%s3278 + $0x291] sm:$0xff] %vm3190, %v3177
      %3331 = vst.msk [vmem:[%s3278 + $0x2a1] sm:$0xff] %vm3190, %v3178
      %3332 = vst.msk [vmem:[%s3278 + $0x2a9] sm:$0xff] %vm3190, %v3179
      %3333 = vst.msk [vmem:[%s3278 + $0x2b9] sm:$0xff] %vm3190, %v3180
      %3334 = vst.msk [vmem:[%s3278 + $0x2c1] sm:$0xff] %vm3190, %v3181
      %3335 = vst.msk [vmem:[%s3278 + $0x2d1] sm:$0xff] %vm3190, %v3182
      %3336 = vst.msk [vmem:[%s3278 + $0x2d9] sm:$0xff] %vm3190, %v3183
      %3337 = vst.msk [vmem:[%s3278 + $0x2e9] sm:$0xff] %vm3190, %v3184
      %3338 = vst.msk [vmem:[%s3278 + $0x2f1] sm:$0xff] %vm3190, %v3185
      %3339 = vst.msk [vmem:[%s3278 + $0x301] sm:$0xff] %vm3190, %v3186
      %3340 = vst.msk [vmem:[%s3278 + $0x309] sm:$0xff] %vm3190, %v3187
      %3341 = vst.msk [vmem:[%s3278 + $0x319] sm:$0xff] %vm3190, %v3188
      %3342 = vst.msk [vmem:[%s3278 + $0x321] sm:$0xff] %vm3190, %v3189
      %v3343 = vld [vmem:[#allocation3] sm:$0xff]
      %v3344 = vld [vmem:[#allocation3 + $0x8] sm:$0xff]
      %v3345 = vld [vmem:[#allocation3 + $0x18] sm:$0xff]
      %v3346 = vld [vmem:[#allocation3 + $0x20] sm:$0xff]
      %v3347 = vld [vmem:[#allocation3 + $0x30] sm:$0xff]
      %v3348 = vld [vmem:[#allocation3 + $0x38] sm:$0xff]
      %v3349 = vld [vmem:[#allocation3 + $0x48] sm:$0xff]
      %v3350 = vld [vmem:[#allocation3 + $0x50] sm:$0xff]
      %v3351 = vld [vmem:[#allocation3 + $0x60] sm:$0xff]
      %v3352 = vld [vmem:[#allocation3 + $0x68] sm:$0xff]
      %v3353 = vld [vmem:[#allocation3 + $0x78] sm:$0xff]
      %v3354 = vld [vmem:[#allocation3 + $0x80] sm:$0xff]
      %v3355 = vld [vmem:[#allocation3 + $0x90] sm:$0xff]
      %v3356 = vld [vmem:[#allocation3 + $0x98] sm:$0xff]
      %v3357 = vld [vmem:[#allocation3 + $0xa8] sm:$0xff]
      %v3358 = vld [vmem:[#allocation3 + $0xb0] sm:$0xff]
      %v3359 = vld [vmem:[#allocation3 + $0xc0] sm:$0xff]
      %v3360 = vld [vmem:[#allocation3 + $0xc8] sm:$0xff]
      %v3361 = vld [vmem:[#allocation3 + $0xd8] sm:$0xff]
      %v3362 = vld [vmem:[#allocation3 + $0xe0] sm:$0xff]
      %v3363 = vld [vmem:[#allocation3 + $0xf0] sm:$0xff]
      %v3364 = vld [vmem:[#allocation3 + $0xf8] sm:$0xff]
      %v3365 = vld [vmem:[#allocation3 + $0x108] sm:$0xff]
      %v3366 = vld [vmem:[#allocation3 + $0x110] sm:$0xff]
      %v3367 = vld [vmem:[#allocation3 + $0x120] sm:$0xff]
      %v3368 = vld [vmem:[#allocation3 + $0x128] sm:$0xff]
      %v3369 = vld [vmem:[#allocation3 + $0x138] sm:$0xff]
      %v3370 = vld [vmem:[#allocation3 + $0x140] sm:$0xff]
      %v3371 = vld [vmem:[#allocation3 + $0x150] sm:$0xff]
      %v3372 = vld [vmem:[#allocation3 + $0x158] sm:$0xff]
      %v3373 = vld [vmem:[#allocation3 + $0x168] sm:$0xff]
      %v3374 = vld [vmem:[#allocation3 + $0x170] sm:$0xff]
      %v3375 = vld [vmem:[#allocation3 + $0x1b0] sm:$0xff]
      %v3376 = vld [vmem:[#allocation3 + $0x1b8] sm:$0xff]
      %v3377 = vld [vmem:[#allocation3 + $0x1c8] sm:$0xff]
      %v3378 = vld [vmem:[#allocation3 + $0x1d0] sm:$0xff]
      %v3379 = vld [vmem:[#allocation3 + $0x1e0] sm:$0xff]
      %v3380 = vld [vmem:[#allocation3 + $0x1e8] sm:$0xff]
      %v3381 = vld [vmem:[#allocation3 + $0x1f8] sm:$0xff]
      %v3382 = vld [vmem:[#allocation3 + $0x200] sm:$0xff]
      %v3383 = vld [vmem:[#allocation3 + $0x210] sm:$0xff]
      %v3384 = vld [vmem:[#allocation3 + $0x218] sm:$0xff]
      %v3385 = vld [vmem:[#allocation3 + $0x228] sm:$0xff]
      %v3386 = vld [vmem:[#allocation3 + $0x230] sm:$0xff]
      %v3387 = vld [vmem:[#allocation3 + $0x240] sm:$0xff]
      %v3388 = vld [vmem:[#allocation3 + $0x248] sm:$0xff]
      %v3389 = vld [vmem:[#allocation3 + $0x258] sm:$0xff]
      %v3390 = vld [vmem:[#allocation3 + $0x260] sm:$0xff]
      %v3391 = vld [vmem:[#allocation3 + $0x270] sm:$0xff]
      %v3392 = vld [vmem:[#allocation3 + $0x278] sm:$0xff]
      %v3393 = vld [vmem:[#allocation3 + $0x288] sm:$0xff]
      %v3394 = vld [vmem:[#allocation3 + $0x290] sm:$0xff]
      %v3395 = vld [vmem:[#allocation3 + $0x2a0] sm:$0xff]
      %v3396 = vld [vmem:[#allocation3 + $0x2a8] sm:$0xff]
      %v3397 = vld [vmem:[#allocation3 + $0x2b8] sm:$0xff]
      %v3398 = vld [vmem:[#allocation3 + $0x2c0] sm:$0xff]
      %v3399 = vld [vmem:[#allocation3 + $0x2d0] sm:$0xff]
      %v3400 = vld [vmem:[#allocation3 + $0x2d8] sm:$0xff]
      %v3401 = vld [vmem:[#allocation3 + $0x2e8] sm:$0xff]
      %v3402 = vld [vmem:[#allocation3 + $0x2f0] sm:$0xff]
      %v3403 = vld [vmem:[#allocation3 + $0x300] sm:$0xff]
      %v3404 = vld [vmem:[#allocation3 + $0x308] sm:$0xff]
      %v3405 = vld [vmem:[#allocation3 + $0x318] sm:$0xff]
      %v3406 = vld [vmem:[#allocation3 + $0x320] sm:$0xff]
      %v3407 = vpack.c.bf16 %v3344, %v3343
      %v3408 = vpack.c.bf16 %v3346, %v3345
      %v3409 = vpack.c.bf16 %v3348, %v3347
      %v3410 = vpack.c.bf16 %v3350, %v3349
      %v3411 = vpack.c.bf16 %v3352, %v3351
      %v3412 = vpack.c.bf16 %v3354, %v3353
      %v3413 = vpack.c.bf16 %v3356, %v3355
      %v3414 = vpack.c.bf16 %v3358, %v3357
      %v3415 = vpack.c.bf16 %v3360, %v3359
      %v3416 = vpack.c.bf16 %v3362, %v3361
      %v3417 = vpack.c.bf16 %v3364, %v3363
      %v3418 = vpack.c.bf16 %v3366, %v3365
      %v3419 = vpack.c.bf16 %v3368, %v3367
      %v3420 = vpack.c.bf16 %v3370, %v3369
      %v3421 = vpack.c.bf16 %v3372, %v3371
      %v3422 = vpack.c.bf16 %v3374, %v3373
      %v3423 = vpack.c.bf16 %v3376, %v3375
      %v3424 = vpack.c.bf16 %v3378, %v3377
      %v3425 = vpack.c.bf16 %v3380, %v3379
      %v3426 = vpack.c.bf16 %v3382, %v3381
      %v3427 = vpack.c.bf16 %v3384, %v3383
      %v3428 = vpack.c.bf16 %v3386, %v3385
      %v3429 = vpack.c.bf16 %v3388, %v3387
      %v3430 = vpack.c.bf16 %v3390, %v3389
      %v3431 = vpack.c.bf16 %v3392, %v3391
      %v3432 = vpack.c.bf16 %v3394, %v3393
      %v3433 = vpack.c.bf16 %v3396, %v3395
      %v3434 = vpack.c.bf16 %v3398, %v3397
      %v3435 = vpack.c.bf16 %v3400, %v3399
      %v3436 = vpack.c.bf16 %v3402, %v3401
      %v3437 = vpack.c.bf16 %v3404, %v3403
      %v3438 = vpack.c.bf16 %v3406, %v3405
      %v3439 = vld [vmem:[#allocation3 + $0x1] sm:$0xff]
      %v3440 = vld [vmem:[#allocation3 + $0x9] sm:$0xff]
      %v3441 = vld [vmem:[#allocation3 + $0x19] sm:$0xff]
      %v3442 = vld [vmem:[#allocation3 + $0x21] sm:$0xff]
      %v3443 = vld [vmem:[#allocation3 + $0x31] sm:$0xff]
      %v3444 = vld [vmem:[#allocation3 + $0x39] sm:$0xff]
      %v3445 = vld [vmem:[#allocation3 + $0x49] sm:$0xff]
      %v3446 = vld [vmem:[#allocation3 + $0x51] sm:$0xff]
      %v3447 = vld [vmem:[#allocation3 + $0x61] sm:$0xff]
      %v3448 = vld [vmem:[#allocation3 + $0x69] sm:$0xff]
      %v3449 = vld [vmem:[#allocation3 + $0x79] sm:$0xff]
      %v3450 = vld [vmem:[#allocation3 + $0x81] sm:$0xff]
      %v3451 = vld [vmem:[#allocation3 + $0x91] sm:$0xff]
      %v3452 = vld [vmem:[#allocation3 + $0x99] sm:$0xff]
      %v3453 = vld [vmem:[#allocation3 + $0xa9] sm:$0xff]
      %v3454 = vld [vmem:[#allocation3 + $0xb1] sm:$0xff]
      %v3455 = vld [vmem:[#allocation3 + $0xc1] sm:$0xff]
      %v3456 = vld [vmem:[#allocation3 + $0xc9] sm:$0xff]
      %v3457 = vld [vmem:[#allocation3 + $0xd9] sm:$0xff]
      %v3458 = vld [vmem:[#allocation3 + $0xe1] sm:$0xff]
      %v3459 = vld [vmem:[#allocation3 + $0xf1] sm:$0xff]
      %v3460 = vld [vmem:[#allocation3 + $0xf9] sm:$0xff]
      %v3461 = vld [vmem:[#allocation3 + $0x109] sm:$0xff]
      %v3462 = vld [vmem:[#allocation3 + $0x111] sm:$0xff]
      %v3463 = vld [vmem:[#allocation3 + $0x121] sm:$0xff]
      %v3464 = vld [vmem:[#allocation3 + $0x129] sm:$0xff]
      %v3465 = vld [vmem:[#allocation3 + $0x139] sm:$0xff]
      %v3466 = vld [vmem:[#allocation3 + $0x141] sm:$0xff]
      %v3467 = vld [vmem:[#allocation3 + $0x151] sm:$0xff]
      %v3468 = vld [vmem:[#allocation3 + $0x159] sm:$0xff]
      %v3469 = vld [vmem:[#allocation3 + $0x169] sm:$0xff]
      %v3470 = vld [vmem:[#allocation3 + $0x171] sm:$0xff]
      %v3471 = vld [vmem:[#allocation3 + $0x1b1] sm:$0xff]
      %v3472 = vld [vmem:[#allocation3 + $0x1b9] sm:$0xff]
      %v3473 = vld [vmem:[#allocation3 + $0x1c9] sm:$0xff]
      %v3474 = vld [vmem:[#allocation3 + $0x1d1] sm:$0xff]
      %v3475 = vld [vmem:[#allocation3 + $0x1e1] sm:$0xff]
      %v3476 = vld [vmem:[#allocation3 + $0x1e9] sm:$0xff]
      %v3477 = vld [vmem:[#allocation3 + $0x1f9] sm:$0xff]
      %v3478 = vld [vmem:[#allocation3 + $0x201] sm:$0xff]
      %v3479 = vld [vmem:[#allocation3 + $0x211] sm:$0xff]
      %v3480 = vld [vmem:[#allocation3 + $0x219] sm:$0xff]
      %v3481 = vld [vmem:[#allocation3 + $0x229] sm:$0xff]
      %v3482 = vld [vmem:[#allocation3 + $0x231] sm:$0xff]
      %v3483 = vld [vmem:[#allocation3 + $0x241] sm:$0xff]
      %v3484 = vld [vmem:[#allocation3 + $0x249] sm:$0xff]
      %v3485 = vld [vmem:[#allocation3 + $0x259] sm:$0xff]
      %v3486 = vld [vmem:[#allocation3 + $0x261] sm:$0xff]
      %v3487 = vld [vmem:[#allocation3 + $0x271] sm:$0xff]
      %v3488 = vld [vmem:[#allocation3 + $0x279] sm:$0xff]
      %v3489 = vld [vmem:[#allocation3 + $0x289] sm:$0xff]
      %v3490 = vld [vmem:[#allocation3 + $0x291] sm:$0xff]
      %v3491 = vld [vmem:[#allocation3 + $0x2a1] sm:$0xff]
      %v3492 = vld [vmem:[#allocation3 + $0x2a9] sm:$0xff]
      %v3493 = vld [vmem:[#allocation3 + $0x2b9] sm:$0xff]
      %v3494 = vld [vmem:[#allocation3 + $0x2c1] sm:$0xff]
      %v3495 = vld [vmem:[#allocation3 + $0x2d1] sm:$0xff]
      %v3496 = vld [vmem:[#allocation3 + $0x2d9] sm:$0xff]
      %v3497 = vld [vmem:[#allocation3 + $0x2e9] sm:$0xff]
      %v3498 = vld [vmem:[#allocation3 + $0x2f1] sm:$0xff]
      %v3499 = vld [vmem:[#allocation3 + $0x301] sm:$0xff]
      %v3500 = vld [vmem:[#allocation3 + $0x309] sm:$0xff]
      %v3501 = vld [vmem:[#allocation3 + $0x319] sm:$0xff]
      %v3502 = vld [vmem:[#allocation3 + $0x321] sm:$0xff]
      %v3503 = vpack.c.bf16 %v3440, %v3439
      %v3504 = vpack.c.bf16 %v3442, %v3441
      %v3505 = vpack.c.bf16 %v3444, %v3443
      %v3506 = vpack.c.bf16 %v3446, %v3445
      %v3507 = vpack.c.bf16 %v3448, %v3447
      %v3508 = vpack.c.bf16 %v3450, %v3449
      %v3509 = vpack.c.bf16 %v3452, %v3451
      %v3510 = vpack.c.bf16 %v3454, %v3453
      %v3511 = vpack.c.bf16 %v3456, %v3455
      %v3512 = vpack.c.bf16 %v3458, %v3457
      %v3513 = vpack.c.bf16 %v3460, %v3459
      %v3514 = vpack.c.bf16 %v3462, %v3461
      %v3515 = vpack.c.bf16 %v3464, %v3463
      %v3516 = vpack.c.bf16 %v3466, %v3465
      %v3517 = vpack.c.bf16 %v3468, %v3467
      %v3518 = vpack.c.bf16 %v3470, %v3469
      %v3519 = vpack.c.bf16 %v3472, %v3471
      %v3520 = vpack.c.bf16 %v3474, %v3473
      %v3521 = vpack.c.bf16 %v3476, %v3475
      %v3522 = vpack.c.bf16 %v3478, %v3477
      %v3523 = vpack.c.bf16 %v3480, %v3479
      %v3524 = vpack.c.bf16 %v3482, %v3481
      %v3525 = vpack.c.bf16 %v3484, %v3483
      %v3526 = vpack.c.bf16 %v3486, %v3485
      %v3527 = vpack.c.bf16 %v3488, %v3487
      %v3528 = vpack.c.bf16 %v3490, %v3489
      %v3529 = vpack.c.bf16 %v3492, %v3491
      %v3530 = vpack.c.bf16 %v3494, %v3493
      %v3531 = vpack.c.bf16 %v3496, %v3495
      %v3532 = vpack.c.bf16 %v3498, %v3497
      %v3533 = vpack.c.bf16 %v3500, %v3499
      %v3534 = vpack.c.bf16 %v3502, %v3501
      %v3535 = vld [vmem:[#allocation3 + $0x2] sm:$0xff]
      %v3536 = vld [vmem:[#allocation3 + $0xa] sm:$0xff]
      %v3537 = vld [vmem:[#allocation3 + $0x1a] sm:$0xff]
      %v3538 = vld [vmem:[#allocation3 + $0x22] sm:$0xff]
      %v3539 = vld [vmem:[#allocation3 + $0x32] sm:$0xff]
      %v3540 = vld [vmem:[#allocation3 + $0x3a] sm:$0xff]
      %v3541 = vld [vmem:[#allocation3 + $0x4a] sm:$0xff]
      %v3542 = vld [vmem:[#allocation3 + $0x52] sm:$0xff]
      %v3543 = vld [vmem:[#allocation3 + $0x62] sm:$0xff]
      %v3544 = vld [vmem:[#allocation3 + $0x6a] sm:$0xff]
      %v3545 = vld [vmem:[#allocation3 + $0x7a] sm:$0xff]
      %v3546 = vld [vmem:[#allocation3 + $0x82] sm:$0xff]
      %v3547 = vld [vmem:[#allocation3 + $0x92] sm:$0xff]
      %v3548 = vld [vmem:[#allocation3 + $0x9a] sm:$0xff]
      %v3549 = vld [vmem:[#allocation3 + $0xaa] sm:$0xff]
      %v3550 = vld [vmem:[#allocation3 + $0xb2] sm:$0xff]
      %v3551 = vld [vmem:[#allocation3 + $0xc2] sm:$0xff]
      %v3552 = vld [vmem:[#allocation3 + $0xca] sm:$0xff]
      %v3553 = vld [vmem:[#allocation3 + $0xda] sm:$0xff]
      %v3554 = vld [vmem:[#allocation3 + $0xe2] sm:$0xff]
      %v3555 = vld [vmem:[#allocation3 + $0xf2] sm:$0xff]
      %v3556 = vld [vmem:[#allocation3 + $0xfa] sm:$0xff]
      %v3557 = vld [vmem:[#allocation3 + $0x10a] sm:$0xff]
      %v3558 = vld [vmem:[#allocation3 + $0x112] sm:$0xff]
      %v3559 = vld [vmem:[#allocation3 + $0x122] sm:$0xff]
      %v3560 = vld [vmem:[#allocation3 + $0x12a] sm:$0xff]
      %v3561 = vld [vmem:[#allocation3 + $0x13a] sm:$0xff]
      %v3562 = vld [vmem:[#allocation3 + $0x142] sm:$0xff]
      %v3563 = vld [vmem:[#allocation3 + $0x152] sm:$0xff]
      %v3564 = vld [vmem:[#allocation3 + $0x15a] sm:$0xff]
      %v3565 = vld [vmem:[#allocation3 + $0x16a] sm:$0xff]
      %v3566 = vld [vmem:[#allocation3 + $0x172] sm:$0xff]
      %v3567 = vld [vmem:[#allocation3 + $0x1b2] sm:$0xff]
      %v3568 = vld [vmem:[#allocation3 + $0x1ba] sm:$0xff]
      %v3569 = vld [vmem:[#allocation3 + $0x1ca] sm:$0xff]
      %v3570 = vld [vmem:[#allocation3 + $0x1d2] sm:$0xff]
      %v3571 = vld [vmem:[#allocation3 + $0x1e2] sm:$0xff]
      %v3572 = vld [vmem:[#allocation3 + $0x1ea] sm:$0xff]
      %v3573 = vld [vmem:[#allocation3 + $0x1fa] sm:$0xff]
      %v3574 = vld [vmem:[#allocation3 + $0x202] sm:$0xff]
      %v3575 = vld [vmem:[#allocation3 + $0x212] sm:$0xff]
      %v3576 = vld [vmem:[#allocation3 + $0x21a] sm:$0xff]
      %v3577 = vld [vmem:[#allocation3 + $0x22a] sm:$0xff]
      %v3578 = vld [vmem:[#allocation3 + $0x232] sm:$0xff]
      %v3579 = vld [vmem:[#allocation3 + $0x242] sm:$0xff]
      %v3580 = vld [vmem:[#allocation3 + $0x24a] sm:$0xff]
      %v3581 = vld [vmem:[#allocation3 + $0x25a] sm:$0xff]
      %v3582 = vld [vmem:[#allocation3 + $0x262] sm:$0xff]
      %v3583 = vld [vmem:[#allocation3 + $0x272] sm:$0xff]
      %v3584 = vld [vmem:[#allocation3 + $0x27a] sm:$0xff]
      %v3585 = vld [vmem:[#allocation3 + $0x28a] sm:$0xff]
      %v3586 = vld [vmem:[#allocation3 + $0x292] sm:$0xff]
      %v3587 = vld [vmem:[#allocation3 + $0x2a2] sm:$0xff]
      %v3588 = vld [vmem:[#allocation3 + $0x2aa] sm:$0xff]
      %v3589 = vld [vmem:[#allocation3 + $0x2ba] sm:$0xff]
      %v3590 = vld [vmem:[#allocation3 + $0x2c2] sm:$0xff]
      %v3591 = vld [vmem:[#allocation3 + $0x2d2] sm:$0xff]
      %v3592 = vld [vmem:[#allocation3 + $0x2da] sm:$0xff]
      %v3593 = vld [vmem:[#allocation3 + $0x2ea] sm:$0xff]
      %v3594 = vld [vmem:[#allocation3 + $0x2f2] sm:$0xff]
      %v3595 = vld [vmem:[#allocation3 + $0x302] sm:$0xff]
      %v3596 = vld [vmem:[#allocation3 + $0x30a] sm:$0xff]
      %v3597 = vld [vmem:[#allocation3 + $0x31a] sm:$0xff]
      %v3598 = vld [vmem:[#allocation3 + $0x322] sm:$0xff]
      %v3599 = vpack.c.bf16 %v3536, %v3535
      %v3600 = vpack.c.bf16 %v3538, %v3537
      %v3601 = vpack.c.bf16 %v3540, %v3539
      %v3602 = vpack.c.bf16 %v3542, %v3541
      %v3603 = vpack.c.bf16 %v3544, %v3543
      %v3604 = vpack.c.bf16 %v3546, %v3545
      %v3605 = vpack.c.bf16 %v3548, %v3547
      %v3606 = vpack.c.bf16 %v3550, %v3549
      %v3607 = vpack.c.bf16 %v3552, %v3551
      %v3608 = vpack.c.bf16 %v3554, %v3553
      %v3609 = vpack.c.bf16 %v3556, %v3555
      %v3610 = vpack.c.bf16 %v3558, %v3557
      %v3611 = vpack.c.bf16 %v3560, %v3559
      %v3612 = vpack.c.bf16 %v3562, %v3561
      %v3613 = vpack.c.bf16 %v3564, %v3563
      %v3614 = vpack.c.bf16 %v3566, %v3565
      %v3615 = vpack.c.bf16 %v3568, %v3567
      %v3616 = vpack.c.bf16 %v3570, %v3569
      %v3617 = vpack.c.bf16 %v3572, %v3571
      %v3618 = vpack.c.bf16 %v3574, %v3573
      %v3619 = vpack.c.bf16 %v3576, %v3575
      %v3620 = vpack.c.bf16 %v3578, %v3577
      %v3621 = vpack.c.bf16 %v3580, %v3579
      %v3622 = vpack.c.bf16 %v3582, %v3581
      %v3623 = vpack.c.bf16 %v3584, %v3583
      %v3624 = vpack.c.bf16 %v3586, %v3585
      %v3625 = vpack.c.bf16 %v3588, %v3587
      %v3626 = vpack.c.bf16 %v3590, %v3589
      %v3627 = vpack.c.bf16 %v3592, %v3591
      %v3628 = vpack.c.bf16 %v3594, %v3593
      %v3629 = vpack.c.bf16 %v3596, %v3595
      %v3630 = vpack.c.bf16 %v3598, %v3597
      %v3631 = vld [vmem:[%s3278] sm:$0xff]
      %v3632 = vld [vmem:[%s3278 + $0x8] sm:$0xff]
      %v3633 = vld [vmem:[%s3278 + $0x18] sm:$0xff]
      %v3634 = vld [vmem:[%s3278 + $0x20] sm:$0xff]
      %v3635 = vld [vmem:[%s3278 + $0x30] sm:$0xff]
      %v3636 = vld [vmem:[%s3278 + $0x38] sm:$0xff]
      %v3637 = vld [vmem:[%s3278 + $0x48] sm:$0xff]
      %v3638 = vld [vmem:[%s3278 + $0x50] sm:$0xff]
      %v3639 = vld [vmem:[%s3278 + $0x60] sm:$0xff]
      %v3640 = vld [vmem:[%s3278 + $0x68] sm:$0xff]
      %v3641 = vld [vmem:[%s3278 + $0x78] sm:$0xff]
      %v3642 = vld [vmem:[%s3278 + $0x80] sm:$0xff]
      %v3643 = vld [vmem:[%s3278 + $0x90] sm:$0xff]
      %v3644 = vld [vmem:[%s3278 + $0x98] sm:$0xff]
      %v3645 = vld [vmem:[%s3278 + $0xa8] sm:$0xff]
      %v3646 = vld [vmem:[%s3278 + $0xb0] sm:$0xff]
      %v3647 = vld [vmem:[%s3278 + $0xc0] sm:$0xff]
      %v3648 = vld [vmem:[%s3278 + $0xc8] sm:$0xff]
      %v3649 = vld [vmem:[%s3278 + $0xd8] sm:$0xff]
      %v3650 = vld [vmem:[%s3278 + $0xe0] sm:$0xff]
      %v3651 = vld [vmem:[%s3278 + $0xf0] sm:$0xff]
      %v3652 = vld [vmem:[%s3278 + $0xf8] sm:$0xff]
      %v3653 = vld [vmem:[%s3278 + $0x108] sm:$0xff]
      %v3654 = vld [vmem:[%s3278 + $0x110] sm:$0xff]
      %v3655 = vld [vmem:[%s3278 + $0x120] sm:$0xff]
      %v3656 = vld [vmem:[%s3278 + $0x128] sm:$0xff]
      %v3657 = vld [vmem:[%s3278 + $0x138] sm:$0xff]
      %v3658 = vld [vmem:[%s3278 + $0x140] sm:$0xff]
      %v3659 = vld [vmem:[%s3278 + $0x150] sm:$0xff]
      %v3660 = vld [vmem:[%s3278 + $0x158] sm:$0xff]
      %v3661 = vld [vmem:[%s3278 + $0x168] sm:$0xff]
      %v3662 = vld [vmem:[%s3278 + $0x170] sm:$0xff]
      %v3663 = vld [vmem:[%s3278 + $0x1b0] sm:$0xff]
      %v3664 = vld [vmem:[%s3278 + $0x1b8] sm:$0xff]
      %v3665 = vld [vmem:[%s3278 + $0x1c8] sm:$0xff]
      %v3666 = vld [vmem:[%s3278 + $0x1d0] sm:$0xff]
      %v3667 = vld [vmem:[%s3278 + $0x1e0] sm:$0xff]
      %v3668 = vld [vmem:[%s3278 + $0x1e8] sm:$0xff]
      %v3669 = vld [vmem:[%s3278 + $0x1f8] sm:$0xff]
      %v3670 = vld [vmem:[%s3278 + $0x200] sm:$0xff]
      %v3671 = vld [vmem:[%s3278 + $0x210] sm:$0xff]
      %v3672 = vld [vmem:[%s3278 + $0x218] sm:$0xff]
      %v3673 = vld [vmem:[%s3278 + $0x228] sm:$0xff]
      %v3674 = vld [vmem:[%s3278 + $0x230] sm:$0xff]
      %v3675 = vld [vmem:[%s3278 + $0x240] sm:$0xff]
      %v3676 = vld [vmem:[%s3278 + $0x248] sm:$0xff]
      %v3677 = vld [vmem:[%s3278 + $0x258] sm:$0xff]
      %v3678 = vld [vmem:[%s3278 + $0x260] sm:$0xff]
      %v3679 = vld [vmem:[%s3278 + $0x270] sm:$0xff]
      %v3680 = vld [vmem:[%s3278 + $0x278] sm:$0xff]
      %v3681 = vld [vmem:[%s3278 + $0x288] sm:$0xff]
      %v3682 = vld [vmem:[%s3278 + $0x290] sm:$0xff]
      %v3683 = vld [vmem:[%s3278 + $0x2a0] sm:$0xff]
      %v3684 = vld [vmem:[%s3278 + $0x2a8] sm:$0xff]
      %v3685 = vld [vmem:[%s3278 + $0x2b8] sm:$0xff]
      %v3686 = vld [vmem:[%s3278 + $0x2c0] sm:$0xff]
      %v3687 = vld [vmem:[%s3278 + $0x2d0] sm:$0xff]
      %v3688 = vld [vmem:[%s3278 + $0x2d8] sm:$0xff]
      %v3689 = vld [vmem:[%s3278 + $0x2e8] sm:$0xff]
      %v3690 = vld [vmem:[%s3278 + $0x2f0] sm:$0xff]
      %v3691 = vld [vmem:[%s3278 + $0x300] sm:$0xff]
      %v3692 = vld [vmem:[%s3278 + $0x308] sm:$0xff]
      %v3693 = vld [vmem:[%s3278 + $0x318] sm:$0xff]
      %v3694 = vld [vmem:[%s3278 + $0x320] sm:$0xff]
      %v3695 = vpack.c.bf16 %v3632, %v3631
      %v3696 = vpack.c.bf16 %v3634, %v3633
      %v3697 = vpack.c.bf16 %v3636, %v3635
      %v3698 = vpack.c.bf16 %v3638, %v3637
      %v3699 = vpack.c.bf16 %v3640, %v3639
      %v3700 = vpack.c.bf16 %v3642, %v3641
      %v3701 = vpack.c.bf16 %v3644, %v3643
      %v3702 = vpack.c.bf16 %v3646, %v3645
      %v3703 = vpack.c.bf16 %v3648, %v3647
      %v3704 = vpack.c.bf16 %v3650, %v3649
      %v3705 = vpack.c.bf16 %v3652, %v3651
      %v3706 = vpack.c.bf16 %v3654, %v3653
      %v3707 = vpack.c.bf16 %v3656, %v3655
      %v3708 = vpack.c.bf16 %v3658, %v3657
      %v3709 = vpack.c.bf16 %v3660, %v3659
      %v3710 = vpack.c.bf16 %v3662, %v3661
      %v3711 = vpack.c.bf16 %v3664, %v3663
      %v3712 = vpack.c.bf16 %v3666, %v3665
      %v3713 = vpack.c.bf16 %v3668, %v3667
      %v3714 = vpack.c.bf16 %v3670, %v3669
      %v3715 = vpack.c.bf16 %v3672, %v3671
      %v3716 = vpack.c.bf16 %v3674, %v3673
      %v3717 = vpack.c.bf16 %v3676, %v3675
      %v3718 = vpack.c.bf16 %v3678, %v3677
      %v3719 = vpack.c.bf16 %v3680, %v3679
      %v3720 = vpack.c.bf16 %v3682, %v3681
      %v3721 = vpack.c.bf16 %v3684, %v3683
      %v3722 = vpack.c.bf16 %v3686, %v3685
      %v3723 = vpack.c.bf16 %v3688, %v3687
      %v3724 = vpack.c.bf16 %v3690, %v3689
      %v3725 = vpack.c.bf16 %v3692, %v3691
      %v3726 = vpack.c.bf16 %v3694, %v3693
      %v3727 = vld [vmem:[%s3278 + $0x1] sm:$0xff]
      %v3728 = vld [vmem:[%s3278 + $0x9] sm:$0xff]
      %v3729 = vld [vmem:[%s3278 + $0x19] sm:$0xff]
      %v3730 = vld [vmem:[%s3278 + $0x21] sm:$0xff]
      %v3731 = vld [vmem:[%s3278 + $0x31] sm:$0xff]
      %v3732 = vld [vmem:[%s3278 + $0x39] sm:$0xff]
      %v3733 = vld [vmem:[%s3278 + $0x49] sm:$0xff]
      %v3734 = vld [vmem:[%s3278 + $0x51] sm:$0xff]
      %v3735 = vld [vmem:[%s3278 + $0x61] sm:$0xff]
      %v3736 = vld [vmem:[%s3278 + $0x69] sm:$0xff]
      %v3737 = vld [vmem:[%s3278 + $0x79] sm:$0xff]
      %v3738 = vld [vmem:[%s3278 + $0x81] sm:$0xff]
      %v3739 = vld [vmem:[%s3278 + $0x91] sm:$0xff]
      %v3740 = vld [vmem:[%s3278 + $0x99] sm:$0xff]
      %v3741 = vld [vmem:[%s3278 + $0xa9] sm:$0xff]
      %v3742 = vld [vmem:[%s3278 + $0xb1] sm:$0xff]
      %v3743 = vld [vmem:[%s3278 + $0xc1] sm:$0xff]
      %v3744 = vld [vmem:[%s3278 + $0xc9] sm:$0xff]
      %v3745 = vld [vmem:[%s3278 + $0xd9] sm:$0xff]
      %v3746 = vld [vmem:[%s3278 + $0xe1] sm:$0xff]
      %v3747 = vld [vmem:[%s3278 + $0xf1] sm:$0xff]
      %v3748 = vld [vmem:[%s3278 + $0xf9] sm:$0xff]
      %v3749 = vld [vmem:[%s3278 + $0x109] sm:$0xff]
      %v3750 = vld [vmem:[%s3278 + $0x111] sm:$0xff]
      %v3751 = vld [vmem:[%s3278 + $0x121] sm:$0xff]
      %v3752 = vld [vmem:[%s3278 + $0x129] sm:$0xff]
      %v3753 = vld [vmem:[%s3278 + $0x139] sm:$0xff]
      %v3754 = vld [vmem:[%s3278 + $0x141] sm:$0xff]
      %v3755 = vld [vmem:[%s3278 + $0x151] sm:$0xff]
      %v3756 = vld [vmem:[%s3278 + $0x159] sm:$0xff]
      %v3757 = vld [vmem:[%s3278 + $0x169] sm:$0xff]
      %v3758 = vld [vmem:[%s3278 + $0x171] sm:$0xff]
      %v3759 = vld [vmem:[%s3278 + $0x1b1] sm:$0xff]
      %v3760 = vld [vmem:[%s3278 + $0x1b9] sm:$0xff]
      %v3761 = vld [vmem:[%s3278 + $0x1c9] sm:$0xff]
      %v3762 = vld [vmem:[%s3278 + $0x1d1] sm:$0xff]
      %v3763 = vld [vmem:[%s3278 + $0x1e1] sm:$0xff]
      %v3764 = vld [vmem:[%s3278 + $0x1e9] sm:$0xff]
      %v3765 = vld [vmem:[%s3278 + $0x1f9] sm:$0xff]
      %v3766 = vld [vmem:[%s3278 + $0x201] sm:$0xff]
      %v3767 = vld [vmem:[%s3278 + $0x211] sm:$0xff]
      %v3768 = vld [vmem:[%s3278 + $0x219] sm:$0xff]
      %v3769 = vld [vmem:[%s3278 + $0x229] sm:$0xff]
      %v3770 = vld [vmem:[%s3278 + $0x231] sm:$0xff]
      %v3771 = vld [vmem:[%s3278 + $0x241] sm:$0xff]
      %v3772 = vld [vmem:[%s3278 + $0x249] sm:$0xff]
      %v3773 = vld [vmem:[%s3278 + $0x259] sm:$0xff]
      %v3774 = vld [vmem:[%s3278 + $0x261] sm:$0xff]
      %v3775 = vld [vmem:[%s3278 + $0x271] sm:$0xff]
      %v3776 = vld [vmem:[%s3278 + $0x279] sm:$0xff]
      %v3777 = vld [vmem:[%s3278 + $0x289] sm:$0xff]
      %v3778 = vld [vmem:[%s3278 + $0x291] sm:$0xff]
      %v3779 = vld [vmem:[%s3278 + $0x2a1] sm:$0xff]
      %v3780 = vld [vmem:[%s3278 + $0x2a9] sm:$0xff]
      %v3781 = vld [vmem:[%s3278 + $0x2b9] sm:$0xff]
      %v3782 = vld [vmem:[%s3278 + $0x2c1] sm:$0xff]
      %v3783 = vld [vmem:[%s3278 + $0x2d1] sm:$0xff]
      %v3784 = vld [vmem:[%s3278 + $0x2d9] sm:$0xff]
      %v3785 = vld [vmem:[%s3278 + $0x2e9] sm:$0xff]
      %v3786 = vld [vmem:[%s3278 + $0x2f1] sm:$0xff]
      %v3787 = vld [vmem:[%s3278 + $0x301] sm:$0xff]
      %v3788 = vld [vmem:[%s3278 + $0x309] sm:$0xff]
      %v3789 = vld [vmem:[%s3278 + $0x319] sm:$0xff]
      %v3790 = vld [vmem:[%s3278 + $0x321] sm:$0xff]
      %v3791 = vpack.c.bf16 %v3728, %v3727
      %v3792 = vpack.c.bf16 %v3730, %v3729
      %v3793 = vpack.c.bf16 %v3732, %v3731
      %v3794 = vpack.c.bf16 %v3734, %v3733
      %v3795 = vpack.c.bf16 %v3736, %v3735
      %v3796 = vpack.c.bf16 %v3738, %v3737
      %v3797 = vpack.c.bf16 %v3740, %v3739
      %v3798 = vpack.c.bf16 %v3742, %v3741
      %v3799 = vpack.c.bf16 %v3744, %v3743
      %v3800 = vpack.c.bf16 %v3746, %v3745
      %v3801 = vpack.c.bf16 %v3748, %v3747
      %v3802 = vpack.c.bf16 %v3750, %v3749
      %v3803 = vpack.c.bf16 %v3752, %v3751
      %v3804 = vpack.c.bf16 %v3754, %v3753
      %v3805 = vpack.c.bf16 %v3756, %v3755
      %v3806 = vpack.c.bf16 %v3758, %v3757
      %v3807 = vpack.c.bf16 %v3760, %v3759
      %v3808 = vpack.c.bf16 %v3762, %v3761
      %v3809 = vpack.c.bf16 %v3764, %v3763
      %v3810 = vpack.c.bf16 %v3766, %v3765
      %v3811 = vpack.c.bf16 %v3768, %v3767
      %v3812 = vpack.c.bf16 %v3770, %v3769
      %v3813 = vpack.c.bf16 %v3772, %v3771
      %v3814 = vpack.c.bf16 %v3774, %v3773
      %v3815 = vpack.c.bf16 %v3776, %v3775
      %v3816 = vpack.c.bf16 %v3778, %v3777
      %v3817 = vpack.c.bf16 %v3780, %v3779
      %v3818 = vpack.c.bf16 %v3782, %v3781
      %v3819 = vpack.c.bf16 %v3784, %v3783
      %v3820 = vpack.c.bf16 %v3786, %v3785
      %v3821 = vpack.c.bf16 %v3788, %v3787
      %v3822 = vpack.c.bf16 %v3790, %v3789
      %v3823 = vld [vmem:[%s3278 + $0x2] sm:$0xff]
      %v3824 = vld [vmem:[%s3278 + $0xa] sm:$0xff]
      %v3825 = vld [vmem:[%s3278 + $0x1a] sm:$0xff]
      %v3826 = vld [vmem:[%s3278 + $0x22] sm:$0xff]
      %v3827 = vld [vmem:[%s3278 + $0x32] sm:$0xff]
      %v3828 = vld [vmem:[%s3278 + $0x3a] sm:$0xff]
      %v3829 = vld [vmem:[%s3278 + $0x4a] sm:$0xff]
      %v3830 = vld [vmem:[%s3278 + $0x52] sm:$0xff]
      %v3831 = vld [vmem:[%s3278 + $0x62] sm:$0xff]
      %v3832 = vld [vmem:[%s3278 + $0x6a] sm:$0xff]
      %v3833 = vld [vmem:[%s3278 + $0x7a] sm:$0xff]
      %v3834 = vld [vmem:[%s3278 + $0x82] sm:$0xff]
      %v3835 = vld [vmem:[%s3278 + $0x92] sm:$0xff]
      %v3836 = vld [vmem:[%s3278 + $0x9a] sm:$0xff]
      %v3837 = vld [vmem:[%s3278 + $0xaa] sm:$0xff]
      %v3838 = vld [vmem:[%s3278 + $0xb2] sm:$0xff]
      %v3839 = vld [vmem:[%s3278 + $0xc2] sm:$0xff]
      %v3840 = vld [vmem:[%s3278 + $0xca] sm:$0xff]
      %v3841 = vld [vmem:[%s3278 + $0xda] sm:$0xff]
      %v3842 = vld [vmem:[%s3278 + $0xe2] sm:$0xff]
      %v3843 = vld [vmem:[%s3278 + $0xf2] sm:$0xff]
      %v3844 = vld [vmem:[%s3278 + $0xfa] sm:$0xff]
      %v3845 = vld [vmem:[%s3278 + $0x10a] sm:$0xff]
      %v3846 = vld [vmem:[%s3278 + $0x112] sm:$0xff]
      %v3847 = vld [vmem:[%s3278 + $0x122] sm:$0xff]
      %v3848 = vld [vmem:[%s3278 + $0x12a] sm:$0xff]
      %v3849 = vld [vmem:[%s3278 + $0x13a] sm:$0xff]
      %v3850 = vld [vmem:[%s3278 + $0x142] sm:$0xff]
      %v3851 = vld [vmem:[%s3278 + $0x152] sm:$0xff]
      %v3852 = vld [vmem:[%s3278 + $0x15a] sm:$0xff]
      %v3853 = vld [vmem:[%s3278 + $0x16a] sm:$0xff]
      %v3854 = vld [vmem:[%s3278 + $0x172] sm:$0xff]
      %v3855 = vld [vmem:[%s3278 + $0x1b2] sm:$0xff]
      %v3856 = vld [vmem:[%s3278 + $0x1ba] sm:$0xff]
      %v3857 = vld [vmem:[%s3278 + $0x1ca] sm:$0xff]
      %v3858 = vld [vmem:[%s3278 + $0x1d2] sm:$0xff]
      %v3859 = vld [vmem:[%s3278 + $0x1e2] sm:$0xff]
      %v3860 = vld [vmem:[%s3278 + $0x1ea] sm:$0xff]
      %v3861 = vld [vmem:[%s3278 + $0x1fa] sm:$0xff]
      %v3862 = vld [vmem:[%s3278 + $0x202] sm:$0xff]
      %v3863 = vld [vmem:[%s3278 + $0x212] sm:$0xff]
      %v3864 = vld [vmem:[%s3278 + $0x21a] sm:$0xff]
      %v3865 = vld [vmem:[%s3278 + $0x22a] sm:$0xff]
      %v3866 = vld [vmem:[%s3278 + $0x232] sm:$0xff]
      %v3867 = vld [vmem:[%s3278 + $0x242] sm:$0xff]
      %v3868 = vld [vmem:[%s3278 + $0x24a] sm:$0xff]
      %v3869 = vld [vmem:[%s3278 + $0x25a] sm:$0xff]
      %v3870 = vld [vmem:[%s3278 + $0x262] sm:$0xff]
      %v3871 = vld [vmem:[%s3278 + $0x272] sm:$0xff]
      %v3872 = vld [vmem:[%s3278 + $0x27a] sm:$0xff]
      %v3873 = vld [vmem:[%s3278 + $0x28a] sm:$0xff]
      %v3874 = vld [vmem:[%s3278 + $0x292] sm:$0xff]
      %v3875 = vld [vmem:[%s3278 + $0x2a2] sm:$0xff]
      %v3876 = vld [vmem:[%s3278 + $0x2aa] sm:$0xff]
      %v3877 = vld [vmem:[%s3278 + $0x2ba] sm:$0xff]
      %v3878 = vld [vmem:[%s3278 + $0x2c2] sm:$0xff]
      %v3879 = vld [vmem:[%s3278 + $0x2d2] sm:$0xff]
      %v3880 = vld [vmem:[%s3278 + $0x2da] sm:$0xff]
      %v3881 = vld [vmem:[%s3278 + $0x2ea] sm:$0xff]
      %v3882 = vld [vmem:[%s3278 + $0x2f2] sm:$0xff]
      %v3883 = vld [vmem:[%s3278 + $0x302] sm:$0xff]
      %v3884 = vld [vmem:[%s3278 + $0x30a] sm:$0xff]
      %v3885 = vld [vmem:[%s3278 + $0x31a] sm:$0xff]
      %v3886 = vld [vmem:[%s3278 + $0x322] sm:$0xff]
      %v3887 = vpack.c.bf16 %v3824, %v3823
      %v3888 = vpack.c.bf16 %v3826, %v3825
      %v3889 = vpack.c.bf16 %v3828, %v3827
      %v3890 = vpack.c.bf16 %v3830, %v3829
      %v3891 = vpack.c.bf16 %v3832, %v3831
      %v3892 = vpack.c.bf16 %v3834, %v3833
      %v3893 = vpack.c.bf16 %v3836, %v3835
      %v3894 = vpack.c.bf16 %v3838, %v3837
      %v3895 = vpack.c.bf16 %v3840, %v3839
      %v3896 = vpack.c.bf16 %v3842, %v3841
      %v3897 = vpack.c.bf16 %v3844, %v3843
      %v3898 = vpack.c.bf16 %v3846, %v3845
      %v3899 = vpack.c.bf16 %v3848, %v3847
      %v3900 = vpack.c.bf16 %v3850, %v3849
      %v3901 = vpack.c.bf16 %v3852, %v3851
      %v3902 = vpack.c.bf16 %v3854, %v3853
      %v3903 = vpack.c.bf16 %v3856, %v3855
      %v3904 = vpack.c.bf16 %v3858, %v3857
      %v3905 = vpack.c.bf16 %v3860, %v3859
      %v3906 = vpack.c.bf16 %v3862, %v3861
      %v3907 = vpack.c.bf16 %v3864, %v3863
      %v3908 = vpack.c.bf16 %v3866, %v3865
      %v3909 = vpack.c.bf16 %v3868, %v3867
      %v3910 = vpack.c.bf16 %v3870, %v3869
      %v3911 = vpack.c.bf16 %v3872, %v3871
      %v3912 = vpack.c.bf16 %v3874, %v3873
      %v3913 = vpack.c.bf16 %v3876, %v3875
      %v3914 = vpack.c.bf16 %v3878, %v3877
      %v3915 = vpack.c.bf16 %v3880, %v3879
      %v3916 = vpack.c.bf16 %v3882, %v3881
      %v3917 = vpack.c.bf16 %v3884, %v3883
      %v3918 = vpack.c.bf16 %v3886, %v3885
      %s3919 = scalar_lea.vmem [#allocation3], 48
      %v3920 = vld [vmem:[%s3919] sm:$0xff]
      %v3921 = vld [vmem:[%s3919 + $0x8] sm:$0xff]
      %v3922 = vld [vmem:[%s3919 + $0x18] sm:$0xff]
      %v3923 = vld [vmem:[%s3919 + $0x20] sm:$0xff]
      %v3924 = vld [vmem:[%s3919 + $0x30] sm:$0xff]
      %v3925 = vld [vmem:[%s3919 + $0x38] sm:$0xff]
      %v3926 = vld [vmem:[%s3919 + $0x48] sm:$0xff]
      %v3927 = vld [vmem:[%s3919 + $0x50] sm:$0xff]
      %v3928 = vld [vmem:[%s3919 + $0x60] sm:$0xff]
      %v3929 = vld [vmem:[%s3919 + $0x68] sm:$0xff]
      %v3930 = vld [vmem:[%s3919 + $0x78] sm:$0xff]
      %v3931 = vld [vmem:[%s3919 + $0x80] sm:$0xff]
      %v3932 = vld [vmem:[%s3919 + $0x90] sm:$0xff]
      %v3933 = vld [vmem:[%s3919 + $0x98] sm:$0xff]
      %v3934 = vld [vmem:[%s3919 + $0xa8] sm:$0xff]
      %v3935 = vld [vmem:[%s3919 + $0xb0] sm:$0xff]
      %v3936 = vld [vmem:[%s3919 + $0xc0] sm:$0xff]
      %v3937 = vld [vmem:[%s3919 + $0xc8] sm:$0xff]
      %v3938 = vld [vmem:[%s3919 + $0xd8] sm:$0xff]
      %v3939 = vld [vmem:[%s3919 + $0xe0] sm:$0xff]
      %v3940 = vld [vmem:[%s3919 + $0xf0] sm:$0xff]
      %v3941 = vld [vmem:[%s3919 + $0xf8] sm:$0xff]
      %v3942 = vld [vmem:[%s3919 + $0x108] sm:$0xff]
      %v3943 = vld [vmem:[%s3919 + $0x110] sm:$0xff]
      %v3944 = vld [vmem:[%s3919 + $0x120] sm:$0xff]
      %v3945 = vld [vmem:[%s3919 + $0x128] sm:$0xff]
      %v3946 = vld [vmem:[%s3919 + $0x138] sm:$0xff]
      %v3947 = vld [vmem:[%s3919 + $0x140] sm:$0xff]
      %v3948 = vld [vmem:[%s3919 + $0x150] sm:$0xff]
      %v3949 = vld [vmem:[%s3919 + $0x158] sm:$0xff]
      %v3950 = vld [vmem:[%s3919 + $0x168] sm:$0xff]
      %v3951 = vld [vmem:[%s3919 + $0x170] sm:$0xff]
      %v3952 = vld [vmem:[%s3919 + $0x1b0] sm:$0xff]
      %v3953 = vld [vmem:[%s3919 + $0x1b8] sm:$0xff]
      %v3954 = vld [vmem:[%s3919 + $0x1c8] sm:$0xff]
      %v3955 = vld [vmem:[%s3919 + $0x1d0] sm:$0xff]
      %v3956 = vld [vmem:[%s3919 + $0x1e0] sm:$0xff]
      %v3957 = vld [vmem:[%s3919 + $0x1e8] sm:$0xff]
      %v3958 = vld [vmem:[%s3919 + $0x1f8] sm:$0xff]
      %v3959 = vld [vmem:[%s3919 + $0x200] sm:$0xff]
      %v3960 = vld [vmem:[%s3919 + $0x210] sm:$0xff]
      %v3961 = vld [vmem:[%s3919 + $0x218] sm:$0xff]
      %v3962 = vld [vmem:[%s3919 + $0x228] sm:$0xff]
      %v3963 = vld [vmem:[%s3919 + $0x230] sm:$0xff]
      %v3964 = vld [vmem:[%s3919 + $0x240] sm:$0xff]
      %v3965 = vld [vmem:[%s3919 + $0x248] sm:$0xff]
      %v3966 = vld [vmem:[%s3919 + $0x258] sm:$0xff]
      %v3967 = vld [vmem:[%s3919 + $0x260] sm:$0xff]
      %v3968 = vld [vmem:[%s3919 + $0x270] sm:$0xff]
      %v3969 = vld [vmem:[%s3919 + $0x278] sm:$0xff]
      %v3970 = vld [vmem:[%s3919 + $0x288] sm:$0xff]
      %v3971 = vld [vmem:[%s3919 + $0x290] sm:$0xff]
      %v3972 = vld [vmem:[%s3919 + $0x2a0] sm:$0xff]
      %v3973 = vld [vmem:[%s3919 + $0x2a8] sm:$0xff]
      %v3974 = vld [vmem:[%s3919 + $0x2b8] sm:$0xff]
      %v3975 = vld [vmem:[%s3919 + $0x2c0] sm:$0xff]
      %v3976 = vld [vmem:[%s3919 + $0x2d0] sm:$0xff]
      %v3977 = vld [vmem:[%s3919 + $0x2d8] sm:$0xff]
      %v3978 = vld [vmem:[%s3919 + $0x2e8] sm:$0xff]
      %v3979 = vld [vmem:[%s3919 + $0x2f0] sm:$0xff]
      %v3980 = vld [vmem:[%s3919 + $0x300] sm:$0xff]
      %v3981 = vld [vmem:[%s3919 + $0x308] sm:$0xff]
      %v3982 = vld [vmem:[%s3919 + $0x318] sm:$0xff]
      %v3983 = vld [vmem:[%s3919 + $0x320] sm:$0xff]
      %v3984 = vpack.c.bf16 %v3921, %v3920
      %v3985 = vpack.c.bf16 %v3923, %v3922
      %v3986 = vpack.c.bf16 %v3925, %v3924
      %v3987 = vpack.c.bf16 %v3927, %v3926
      %v3988 = vpack.c.bf16 %v3929, %v3928
      %v3989 = vpack.c.bf16 %v3931, %v3930
      %v3990 = vpack.c.bf16 %v3933, %v3932
      %v3991 = vpack.c.bf16 %v3935, %v3934
      %v3992 = vpack.c.bf16 %v3937, %v3936
      %v3993 = vpack.c.bf16 %v3939, %v3938
      %v3994 = vpack.c.bf16 %v3941, %v3940
      %v3995 = vpack.c.bf16 %v3943, %v3942
      %v3996 = vpack.c.bf16 %v3945, %v3944
      %v3997 = vpack.c.bf16 %v3947, %v3946
      %v3998 = vpack.c.bf16 %v3949, %v3948
      %v3999 = vpack.c.bf16 %v3951, %v3950
      %v4000 = vpack.c.bf16 %v3953, %v3952
      %v4001 = vpack.c.bf16 %v3955, %v3954
      %v4002 = vpack.c.bf16 %v3957, %v3956
      %v4003 = vpack.c.bf16 %v3959, %v3958
      %v4004 = vpack.c.bf16 %v3961, %v3960
      %v4005 = vpack.c.bf16 %v3963, %v3962
      %v4006 = vpack.c.bf16 %v3965, %v3964
      %v4007 = vpack.c.bf16 %v3967, %v3966
      %v4008 = vpack.c.bf16 %v3969, %v3968
      %v4009 = vpack.c.bf16 %v3971, %v3970
      %v4010 = vpack.c.bf16 %v3973, %v3972
      %v4011 = vpack.c.bf16 %v3975, %v3974
      %v4012 = vpack.c.bf16 %v3977, %v3976
      %v4013 = vpack.c.bf16 %v3979, %v3978
      %v4014 = vpack.c.bf16 %v3981, %v3980
      %v4015 = vpack.c.bf16 %v3983, %v3982
      %v4016 = vld [vmem:[%s3919 + $0x1] sm:$0xff]
      %v4017 = vld [vmem:[%s3919 + $0x9] sm:$0xff]
      %v4018 = vld [vmem:[%s3919 + $0x19] sm:$0xff]
      %v4019 = vld [vmem:[%s3919 + $0x21] sm:$0xff]
      %v4020 = vld [vmem:[%s3919 + $0x31] sm:$0xff]
      %v4021 = vld [vmem:[%s3919 + $0x39] sm:$0xff]
      %v4022 = vld [vmem:[%s3919 + $0x49] sm:$0xff]
      %v4023 = vld [vmem:[%s3919 + $0x51] sm:$0xff]
      %v4024 = vld [vmem:[%s3919 + $0x61] sm:$0xff]
      %v4025 = vld [vmem:[%s3919 + $0x69] sm:$0xff]
      %v4026 = vld [vmem:[%s3919 + $0x79] sm:$0xff]
      %v4027 = vld [vmem:[%s3919 + $0x81] sm:$0xff]
      %v4028 = vld [vmem:[%s3919 + $0x91] sm:$0xff]
      %v4029 = vld [vmem:[%s3919 + $0x99] sm:$0xff]
      %v4030 = vld [vmem:[%s3919 + $0xa9] sm:$0xff]
      %v4031 = vld [vmem:[%s3919 + $0xb1] sm:$0xff]
      %v4032 = vld [vmem:[%s3919 + $0xc1] sm:$0xff]
      %v4033 = vld [vmem:[%s3919 + $0xc9] sm:$0xff]
      %v4034 = vld [vmem:[%s3919 + $0xd9] sm:$0xff]
      %v4035 = vld [vmem:[%s3919 + $0xe1] sm:$0xff]
      %v4036 = vld [vmem:[%s3919 + $0xf1] sm:$0xff]
      %v4037 = vld [vmem:[%s3919 + $0xf9] sm:$0xff]
      %v4038 = vld [vmem:[%s3919 + $0x109] sm:$0xff]
      %v4039 = vld [vmem:[%s3919 + $0x111] sm:$0xff]
      %v4040 = vld [vmem:[%s3919 + $0x121] sm:$0xff]
      %v4041 = vld [vmem:[%s3919 + $0x129] sm:$0xff]
      %v4042 = vld [vmem:[%s3919 + $0x139] sm:$0xff]
      %v4043 = vld [vmem:[%s3919 + $0x141] sm:$0xff]
      %v4044 = vld [vmem:[%s3919 + $0x151] sm:$0xff]
      %v4045 = vld [vmem:[%s3919 + $0x159] sm:$0xff]
      %v4046 = vld [vmem:[%s3919 + $0x169] sm:$0xff]
      %v4047 = vld [vmem:[%s3919 + $0x171] sm:$0xff]
      %v4048 = vld [vmem:[%s3919 + $0x1b1] sm:$0xff]
      %v4049 = vld [vmem:[%s3919 + $0x1b9] sm:$0xff]
      %v4050 = vld [vmem:[%s3919 + $0x1c9] sm:$0xff]
      %v4051 = vld [vmem:[%s3919 + $0x1d1] sm:$0xff]
      %v4052 = vld [vmem:[%s3919 + $0x1e1] sm:$0xff]
      %v4053 = vld [vmem:[%s3919 + $0x1e9] sm:$0xff]
      %v4054 = vld [vmem:[%s3919 + $0x1f9] sm:$0xff]
      %v4055 = vld [vmem:[%s3919 + $0x201] sm:$0xff]
      %v4056 = vld [vmem:[%s3919 + $0x211] sm:$0xff]
      %v4057 = vld [vmem:[%s3919 + $0x219] sm:$0xff]
      %v4058 = vld [vmem:[%s3919 + $0x229] sm:$0xff]
      %v4059 = vld [vmem:[%s3919 + $0x231] sm:$0xff]
      %v4060 = vld [vmem:[%s3919 + $0x241] sm:$0xff]
      %v4061 = vld [vmem:[%s3919 + $0x249] sm:$0xff]
      %v4062 = vld [vmem:[%s3919 + $0x259] sm:$0xff]
      %v4063 = vld [vmem:[%s3919 + $0x261] sm:$0xff]
      %v4064 = vld [vmem:[%s3919 + $0x271] sm:$0xff]
      %v4065 = vld [vmem:[%s3919 + $0x279] sm:$0xff]
      %v4066 = vld [vmem:[%s3919 + $0x289] sm:$0xff]
      %v4067 = vld [vmem:[%s3919 + $0x291] sm:$0xff]
      %v4068 = vld [vmem:[%s3919 + $0x2a1] sm:$0xff]
      %v4069 = vld [vmem:[%s3919 + $0x2a9] sm:$0xff]
      %v4070 = vld [vmem:[%s3919 + $0x2b9] sm:$0xff]
      %v4071 = vld [vmem:[%s3919 + $0x2c1] sm:$0xff]
      %v4072 = vld [vmem:[%s3919 + $0x2d1] sm:$0xff]
      %v4073 = vld [vmem:[%s3919 + $0x2d9] sm:$0xff]
      %v4074 = vld [vmem:[%s3919 + $0x2e9] sm:$0xff]
      %v4075 = vld [vmem:[%s3919 + $0x2f1] sm:$0xff]
      %v4076 = vld [vmem:[%s3919 + $0x301] sm:$0xff]
      %v4077 = vld [vmem:[%s3919 + $0x309] sm:$0xff]
      %v4078 = vld [vmem:[%s3919 + $0x319] sm:$0xff]
      %v4079 = vld [vmem:[%s3919 + $0x321] sm:$0xff]
      %v4080 = vpack.c.bf16 %v4017, %v4016
      %v4081 = vpack.c.bf16 %v4019, %v4018
      %v4082 = vpack.c.bf16 %v4021, %v4020
      %v4083 = vpack.c.bf16 %v4023, %v4022
      %v4084 = vpack.c.bf16 %v4025, %v4024
      %v4085 = vpack.c.bf16 %v4027, %v4026
      %v4086 = vpack.c.bf16 %v4029, %v4028
      %v4087 = vpack.c.bf16 %v4031, %v4030
      %v4088 = vpack.c.bf16 %v4033, %v4032
      %v4089 = vpack.c.bf16 %v4035, %v4034
      %v4090 = vpack.c.bf16 %v4037, %v4036
      %v4091 = vpack.c.bf16 %v4039, %v4038
      %v4092 = vpack.c.bf16 %v4041, %v4040
      %v4093 = vpack.c.bf16 %v4043, %v4042
      %v4094 = vpack.c.bf16 %v4045, %v4044
      %v4095 = vpack.c.bf16 %v4047, %v4046
      %v4096 = vpack.c.bf16 %v4049, %v4048
      %v4097 = vpack.c.bf16 %v4051, %v4050
      %v4098 = vpack.c.bf16 %v4053, %v4052
      %v4099 = vpack.c.bf16 %v4055, %v4054
      %v4100 = vpack.c.bf16 %v4057, %v4056
      %v4101 = vpack.c.bf16 %v4059, %v4058
      %v4102 = vpack.c.bf16 %v4061, %v4060
      %v4103 = vpack.c.bf16 %v4063, %v4062
      %v4104 = vpack.c.bf16 %v4065, %v4064
      %v4105 = vpack.c.bf16 %v4067, %v4066
      %v4106 = vpack.c.bf16 %v4069, %v4068
      %v4107 = vpack.c.bf16 %v4071, %v4070
      %v4108 = vpack.c.bf16 %v4073, %v4072
      %v4109 = vpack.c.bf16 %v4075, %v4074
      %v4110 = vpack.c.bf16 %v4077, %v4076
      %v4111 = vpack.c.bf16 %v4079, %v4078
      %v4112 = vld [vmem:[%s3919 + $0x2] sm:$0xff]
      %v4113 = vld [vmem:[%s3919 + $0xa] sm:$0xff]
      %v4114 = vld [vmem:[%s3919 + $0x1a] sm:$0xff]
      %v4115 = vld [vmem:[%s3919 + $0x22] sm:$0xff]
      %v4116 = vld [vmem:[%s3919 + $0x32] sm:$0xff]
      %v4117 = vld [vmem:[%s3919 + $0x3a] sm:$0xff]
      %v4118 = vld [vmem:[%s3919 + $0x4a] sm:$0xff]
      %v4119 = vld [vmem:[%s3919 + $0x52] sm:$0xff]
      %v4120 = vld [vmem:[%s3919 + $0x62] sm:$0xff]
      %v4121 = vld [vmem:[%s3919 + $0x6a] sm:$0xff]
      %v4122 = vld [vmem:[%s3919 + $0x7a] sm:$0xff]
      %v4123 = vld [vmem:[%s3919 + $0x82] sm:$0xff]
      %v4124 = vld [vmem:[%s3919 + $0x92] sm:$0xff]
      %v4125 = vld [vmem:[%s3919 + $0x9a] sm:$0xff]
      %v4126 = vld [vmem:[%s3919 + $0xaa] sm:$0xff]
      %v4127 = vld [vmem:[%s3919 + $0xb2] sm:$0xff]
      %v4128 = vld [vmem:[%s3919 + $0xc2] sm:$0xff]
      %v4129 = vld [vmem:[%s3919 + $0xca] sm:$0xff]
      %v4130 = vld [vmem:[%s3919 + $0xda] sm:$0xff]
      %v4131 = vld [vmem:[%s3919 + $0xe2] sm:$0xff]
      %v4132 = vld [vmem:[%s3919 + $0xf2] sm:$0xff]
      %v4133 = vld [vmem:[%s3919 + $0xfa] sm:$0xff]
      %v4134 = vld [vmem:[%s3919 + $0x10a] sm:$0xff]
      %v4135 = vld [vmem:[%s3919 + $0x112] sm:$0xff]
      %v4136 = vld [vmem:[%s3919 + $0x122] sm:$0xff]
      %v4137 = vld [vmem:[%s3919 + $0x12a] sm:$0xff]
      %v4138 = vld [vmem:[%s3919 + $0x13a] sm:$0xff]
      %v4139 = vld [vmem:[%s3919 + $0x142] sm:$0xff]
      %v4140 = vld [vmem:[%s3919 + $0x152] sm:$0xff]
      %v4141 = vld [vmem:[%s3919 + $0x15a] sm:$0xff]
      %v4142 = vld [vmem:[%s3919 + $0x16a] sm:$0xff]
      %v4143 = vld [vmem:[%s3919 + $0x172] sm:$0xff]
      %v4144 = vld [vmem:[%s3919 + $0x1b2] sm:$0xff]
      %v4145 = vld [vmem:[%s3919 + $0x1ba] sm:$0xff]
      %v4146 = vld [vmem:[%s3919 + $0x1ca] sm:$0xff]
      %v4147 = vld [vmem:[%s3919 + $0x1d2] sm:$0xff]
      %v4148 = vld [vmem:[%s3919 + $0x1e2] sm:$0xff]
      %v4149 = vld [vmem:[%s3919 + $0x1ea] sm:$0xff]
      %v4150 = vld [vmem:[%s3919 + $0x1fa] sm:$0xff]
      %v4151 = vld [vmem:[%s3919 + $0x202] sm:$0xff]
      %v4152 = vld [vmem:[%s3919 + $0x212] sm:$0xff]
      %v4153 = vld [vmem:[%s3919 + $0x21a] sm:$0xff]
      %v4154 = vld [vmem:[%s3919 + $0x22a] sm:$0xff]
      %v4155 = vld [vmem:[%s3919 + $0x232] sm:$0xff]
      %v4156 = vld [vmem:[%s3919 + $0x242] sm:$0xff]
      %v4157 = vld [vmem:[%s3919 + $0x24a] sm:$0xff]
      %v4158 = vld [vmem:[%s3919 + $0x25a] sm:$0xff]
      %v4159 = vld [vmem:[%s3919 + $0x262] sm:$0xff]
      %v4160 = vld [vmem:[%s3919 + $0x272] sm:$0xff]
      %v4161 = vld [vmem:[%s3919 + $0x27a] sm:$0xff]
      %v4162 = vld [vmem:[%s3919 + $0x28a] sm:$0xff]
      %v4163 = vld [vmem:[%s3919 + $0x292] sm:$0xff]
      %v4164 = vld [vmem:[%s3919 + $0x2a2] sm:$0xff]
      %v4165 = vld [vmem:[%s3919 + $0x2aa] sm:$0xff]
      %v4166 = vld [vmem:[%s3919 + $0x2ba] sm:$0xff]
      %v4167 = vld [vmem:[%s3919 + $0x2c2] sm:$0xff]
      %v4168 = vld [vmem:[%s3919 + $0x2d2] sm:$0xff]
      %v4169 = vld [vmem:[%s3919 + $0x2da] sm:$0xff]
      %v4170 = vld [vmem:[%s3919 + $0x2ea] sm:$0xff]
      %v4171 = vld [vmem:[%s3919 + $0x2f2] sm:$0xff]
      %v4172 = vld [vmem:[%s3919 + $0x302] sm:$0xff]
      %v4173 = vld [vmem:[%s3919 + $0x30a] sm:$0xff]
      %v4174 = vld [vmem:[%s3919 + $0x31a] sm:$0xff]
      %v4175 = vld [vmem:[%s3919 + $0x322] sm:$0xff]
      %v4176 = vpack.c.bf16 %v4113, %v4112
      %v4177 = vpack.c.bf16 %v4115, %v4114
      %v4178 = vpack.c.bf16 %v4117, %v4116
      %v4179 = vpack.c.bf16 %v4119, %v4118
      %v4180 = vpack.c.bf16 %v4121, %v4120
      %v4181 = vpack.c.bf16 %v4123, %v4122
      %v4182 = vpack.c.bf16 %v4125, %v4124
      %v4183 = vpack.c.bf16 %v4127, %v4126
      %v4184 = vpack.c.bf16 %v4129, %v4128
      %v4185 = vpack.c.bf16 %v4131, %v4130
      %v4186 = vpack.c.bf16 %v4133, %v4132
      %v4187 = vpack.c.bf16 %v4135, %v4134
      %v4188 = vpack.c.bf16 %v4137, %v4136
      %v4189 = vpack.c.bf16 %v4139, %v4138
      %v4190 = vpack.c.bf16 %v4141, %v4140
      %v4191 = vpack.c.bf16 %v4143, %v4142
      %v4192 = vpack.c.bf16 %v4145, %v4144
      %v4193 = vpack.c.bf16 %v4147, %v4146
      %v4194 = vpack.c.bf16 %v4149, %v4148
      %v4195 = vpack.c.bf16 %v4151, %v4150
      %v4196 = vpack.c.bf16 %v4153, %v4152
      %v4197 = vpack.c.bf16 %v4155, %v4154
      %v4198 = vpack.c.bf16 %v4157, %v4156
      %v4199 = vpack.c.bf16 %v4159, %v4158
      %v4200 = vpack.c.bf16 %v4161, %v4160
      %v4201 = vpack.c.bf16 %v4163, %v4162
      %v4202 = vpack.c.bf16 %v4165, %v4164
      %v4203 = vpack.c.bf16 %v4167, %v4166
      %v4204 = vpack.c.bf16 %v4169, %v4168
      %v4205 = vpack.c.bf16 %v4171, %v4170
      %v4206 = vpack.c.bf16 %v4173, %v4172
      %v4207 = vpack.c.bf16 %v4175, %v4174
      %4240 = vrot.lane.b32.xlu0 %v3503, 32
      %v4241 = vpop.permute.xlu0 %4240
      %4242 = vrot.lane.b32.xlu0 %v3504, 32
      %v4243 = vpop.permute.xlu0 %4242
      %4244 = vrot.lane.b32.xlu0 %v3505, 32
      %v4245 = vpop.permute.xlu0 %4244
      %4246 = vrot.lane.b32.xlu0 %v3506, 32
      %v4247 = vpop.permute.xlu0 %4246
      %4248 = vrot.lane.b32.xlu0 %v3507, 32
      %v4249 = vpop.permute.xlu0 %4248
      %4250 = vrot.lane.b32.xlu0 %v3508, 32
      %v4251 = vpop.permute.xlu0 %4250
      %4252 = vrot.lane.b32.xlu0 %v3509, 32
      %v4253 = vpop.permute.xlu0 %4252
      %4254 = vrot.lane.b32.xlu0 %v3510, 32
      %v4255 = vpop.permute.xlu0 %4254
      %4256 = vrot.lane.b32.xlu0 %v3511, 32
      %v4257 = vpop.permute.xlu0 %4256
      %4258 = vrot.lane.b32.xlu0 %v3512, 32
      %v4259 = vpop.permute.xlu0 %4258
      %4260 = vrot.lane.b32.xlu0 %v3513, 32
      %v4261 = vpop.permute.xlu0 %4260
      %4262 = vrot.lane.b32.xlu0 %v3514, 32
      %v4263 = vpop.permute.xlu0 %4262
      %4264 = vrot.lane.b32.xlu0 %v3515, 32
      %v4265 = vpop.permute.xlu0 %4264
      %4266 = vrot.lane.b32.xlu0 %v3516, 32
      %v4267 = vpop.permute.xlu0 %4266
      %4268 = vrot.lane.b32.xlu0 %v3517, 32
      %v4269 = vpop.permute.xlu0 %4268
      %4270 = vrot.lane.b32.xlu0 %v3518, 32
      %v4271 = vpop.permute.xlu0 %4270
      %4272 = vrot.lane.b32.xlu0 %v3519, 32
      %v4273 = vpop.permute.xlu0 %4272
      %4274 = vrot.lane.b32.xlu0 %v3520, 32
      %v4275 = vpop.permute.xlu0 %4274
      %4276 = vrot.lane.b32.xlu0 %v3521, 32
      %v4277 = vpop.permute.xlu0 %4276
      %4278 = vrot.lane.b32.xlu0 %v3522, 32
      %v4279 = vpop.permute.xlu0 %4278
      %4280 = vrot.lane.b32.xlu0 %v3523, 32
      %v4281 = vpop.permute.xlu0 %4280
      %4282 = vrot.lane.b32.xlu0 %v3524, 32
      %v4283 = vpop.permute.xlu0 %4282
      %4284 = vrot.lane.b32.xlu0 %v3525, 32
      %v4285 = vpop.permute.xlu0 %4284
      %4286 = vrot.lane.b32.xlu0 %v3526, 32
      %v4287 = vpop.permute.xlu0 %4286
      %4288 = vrot.lane.b32.xlu0 %v3527, 32
      %v4289 = vpop.permute.xlu0 %4288
      %4290 = vrot.lane.b32.xlu0 %v3528, 32
      %v4291 = vpop.permute.xlu0 %4290
      %4292 = vrot.lane.b32.xlu0 %v3529, 32
      %v4293 = vpop.permute.xlu0 %4292
      %4294 = vrot.lane.b32.xlu0 %v3530, 32
      %v4295 = vpop.permute.xlu0 %4294
      %4296 = vrot.lane.b32.xlu0 %v3531, 32
      %v4297 = vpop.permute.xlu0 %4296
      %4298 = vrot.lane.b32.xlu0 %v3532, 32
      %v4299 = vpop.permute.xlu0 %4298
      %4300 = vrot.lane.b32.xlu0 %v3533, 32
      %v4301 = vpop.permute.xlu0 %4300
      %4302 = vrot.lane.b32.xlu0 %v3534, 32
      %v4303 = vpop.permute.xlu0 %4302
      %4336 = vrot.lane.b32.xlu0 %v3599, 64
      %v4337 = vpop.permute.xlu0 %4336
      %4338 = vrot.lane.b32.xlu0 %v3600, 64
      %v4339 = vpop.permute.xlu0 %4338
      %4340 = vrot.lane.b32.xlu0 %v3601, 64
      %v4341 = vpop.permute.xlu0 %4340
      %4342 = vrot.lane.b32.xlu0 %v3602, 64
      %v4343 = vpop.permute.xlu0 %4342
      %4344 = vrot.lane.b32.xlu0 %v3603, 64
      %v4345 = vpop.permute.xlu0 %4344
      %4346 = vrot.lane.b32.xlu0 %v3604, 64
      %v4347 = vpop.permute.xlu0 %4346
      %4348 = vrot.lane.b32.xlu0 %v3605, 64
      %v4349 = vpop.permute.xlu0 %4348
      %4350 = vrot.lane.b32.xlu0 %v3606, 64
      %v4351 = vpop.permute.xlu0 %4350
      %4352 = vrot.lane.b32.xlu0 %v3607, 64
      %v4353 = vpop.permute.xlu0 %4352
      %4354 = vrot.lane.b32.xlu0 %v3608, 64
      %v4355 = vpop.permute.xlu0 %4354
      %4356 = vrot.lane.b32.xlu0 %v3609, 64
      %v4357 = vpop.permute.xlu0 %4356
      %4358 = vrot.lane.b32.xlu0 %v3610, 64
      %v4359 = vpop.permute.xlu0 %4358
      %4360 = vrot.lane.b32.xlu0 %v3611, 64
      %v4361 = vpop.permute.xlu0 %4360
      %4362 = vrot.lane.b32.xlu0 %v3612, 64
      %v4363 = vpop.permute.xlu0 %4362
      %4364 = vrot.lane.b32.xlu0 %v3613, 64
      %v4365 = vpop.permute.xlu0 %4364
      %4366 = vrot.lane.b32.xlu0 %v3614, 64
      %v4367 = vpop.permute.xlu0 %4366
      %4368 = vrot.lane.b32.xlu0 %v3615, 64
      %v4369 = vpop.permute.xlu0 %4368
      %4370 = vrot.lane.b32.xlu0 %v3616, 64
      %v4371 = vpop.permute.xlu0 %4370
      %4372 = vrot.lane.b32.xlu0 %v3617, 64
      %v4373 = vpop.permute.xlu0 %4372
      %4374 = vrot.lane.b32.xlu0 %v3618, 64
      %v4375 = vpop.permute.xlu0 %4374
      %4376 = vrot.lane.b32.xlu0 %v3619, 64
      %v4377 = vpop.permute.xlu0 %4376
      %4378 = vrot.lane.b32.xlu0 %v3620, 64
      %v4379 = vpop.permute.xlu0 %4378
      %4380 = vrot.lane.b32.xlu0 %v3621, 64
      %v4381 = vpop.permute.xlu0 %4380
      %4382 = vrot.lane.b32.xlu0 %v3622, 64
      %v4383 = vpop.permute.xlu0 %4382
      %4384 = vrot.lane.b32.xlu0 %v3623, 64
      %v4385 = vpop.permute.xlu0 %4384
      %4386 = vrot.lane.b32.xlu0 %v3624, 64
      %v4387 = vpop.permute.xlu0 %4386
      %4388 = vrot.lane.b32.xlu0 %v3625, 64
      %v4389 = vpop.permute.xlu0 %4388
      %4390 = vrot.lane.b32.xlu0 %v3626, 64
      %v4391 = vpop.permute.xlu0 %4390
      %4392 = vrot.lane.b32.xlu0 %v3627, 64
      %v4393 = vpop.permute.xlu0 %4392
      %4394 = vrot.lane.b32.xlu0 %v3628, 64
      %v4395 = vpop.permute.xlu0 %4394
      %4396 = vrot.lane.b32.xlu0 %v3629, 64
      %v4397 = vpop.permute.xlu0 %4396
      %4398 = vrot.lane.b32.xlu0 %v3630, 64
      %v4399 = vpop.permute.xlu0 %4398
      %4432 = vrot.lane.b32.xlu0 %v3695, 96
      %v4433 = vpop.permute.xlu0 %4432
      %4434 = vrot.lane.b32.xlu0 %v3696, 96
      %v4435 = vpop.permute.xlu0 %4434
      %4436 = vrot.lane.b32.xlu0 %v3697, 96
      %v4437 = vpop.permute.xlu0 %4436
      %4438 = vrot.lane.b32.xlu0 %v3698, 96
      %v4439 = vpop.permute.xlu0 %4438
      %4440 = vrot.lane.b32.xlu0 %v3699, 96
      %v4441 = vpop.permute.xlu0 %4440
      %4442 = vrot.lane.b32.xlu0 %v3700, 96
      %v4443 = vpop.permute.xlu0 %4442
      %4444 = vrot.lane.b32.xlu0 %v3701, 96
      %v4445 = vpop.permute.xlu0 %4444
      %4446 = vrot.lane.b32.xlu0 %v3702, 96
      %v4447 = vpop.permute.xlu0 %4446
      %4448 = vrot.lane.b32.xlu0 %v3703, 96
      %v4449 = vpop.permute.xlu0 %4448
      %4450 = vrot.lane.b32.xlu0 %v3704, 96
      %v4451 = vpop.permute.xlu0 %4450
      %4452 = vrot.lane.b32.xlu0 %v3705, 96
      %v4453 = vpop.permute.xlu0 %4452
      %4454 = vrot.lane.b32.xlu0 %v3706, 96
      %v4455 = vpop.permute.xlu0 %4454
      %4456 = vrot.lane.b32.xlu0 %v3707, 96
      %v4457 = vpop.permute.xlu0 %4456
      %4458 = vrot.lane.b32.xlu0 %v3708, 96
      %v4459 = vpop.permute.xlu0 %4458
      %4460 = vrot.lane.b32.xlu0 %v3709, 96
      %v4461 = vpop.permute.xlu0 %4460
      %4462 = vrot.lane.b32.xlu0 %v3710, 96
      %v4463 = vpop.permute.xlu0 %4462
      %4464 = vrot.lane.b32.xlu0 %v3711, 96
      %v4465 = vpop.permute.xlu0 %4464
      %4466 = vrot.lane.b32.xlu0 %v3712, 96
      %v4467 = vpop.permute.xlu0 %4466
      %4468 = vrot.lane.b32.xlu0 %v3713, 96
      %v4469 = vpop.permute.xlu0 %4468
      %4470 = vrot.lane.b32.xlu0 %v3714, 96
      %v4471 = vpop.permute.xlu0 %4470
      %4472 = vrot.lane.b32.xlu0 %v3715, 96
      %v4473 = vpop.permute.xlu0 %4472
      %4474 = vrot.lane.b32.xlu0 %v3716, 96
      %v4475 = vpop.permute.xlu0 %4474
      %4476 = vrot.lane.b32.xlu0 %v3717, 96
      %v4477 = vpop.permute.xlu0 %4476
      %4478 = vrot.lane.b32.xlu0 %v3718, 96
      %v4479 = vpop.permute.xlu0 %4478
      %4480 = vrot.lane.b32.xlu0 %v3719, 96
      %v4481 = vpop.permute.xlu0 %4480
      %4482 = vrot.lane.b32.xlu0 %v3720, 96
      %v4483 = vpop.permute.xlu0 %4482
      %4484 = vrot.lane.b32.xlu0 %v3721, 96
      %v4485 = vpop.permute.xlu0 %4484
      %4486 = vrot.lane.b32.xlu0 %v3722, 96
      %v4487 = vpop.permute.xlu0 %4486
      %4488 = vrot.lane.b32.xlu0 %v3723, 96
      %v4489 = vpop.permute.xlu0 %4488
      %4490 = vrot.lane.b32.xlu0 %v3724, 96
      %v4491 = vpop.permute.xlu0 %4490
      %4492 = vrot.lane.b32.xlu0 %v3725, 96
      %v4493 = vpop.permute.xlu0 %4492
      %4494 = vrot.lane.b32.xlu0 %v3726, 96
      %v4495 = vpop.permute.xlu0 %4494
      %4528 = vrot.lane.b32.xlu0 %v3887, 32
      %v4529 = vpop.permute.xlu0 %4528
      %4530 = vrot.lane.b32.xlu0 %v3888, 32
      %v4531 = vpop.permute.xlu0 %4530
      %4532 = vrot.lane.b32.xlu0 %v3889, 32
      %v4533 = vpop.permute.xlu0 %4532
      %4534 = vrot.lane.b32.xlu0 %v3890, 32
      %v4535 = vpop.permute.xlu0 %4534
      %4536 = vrot.lane.b32.xlu0 %v3891, 32
      %v4537 = vpop.permute.xlu0 %4536
      %4538 = vrot.lane.b32.xlu0 %v3892, 32
      %v4539 = vpop.permute.xlu0 %4538
      %4540 = vrot.lane.b32.xlu0 %v3893, 32
      %v4541 = vpop.permute.xlu0 %4540
      %4542 = vrot.lane.b32.xlu0 %v3894, 32
      %v4543 = vpop.permute.xlu0 %4542
      %4544 = vrot.lane.b32.xlu0 %v3895, 32
      %v4545 = vpop.permute.xlu0 %4544
      %4546 = vrot.lane.b32.xlu0 %v3896, 32
      %v4547 = vpop.permute.xlu0 %4546
      %4548 = vrot.lane.b32.xlu0 %v3897, 32
      %v4549 = vpop.permute.xlu0 %4548
      %4550 = vrot.lane.b32.xlu0 %v3898, 32
      %v4551 = vpop.permute.xlu0 %4550
      %4552 = vrot.lane.b32.xlu0 %v3899, 32
      %v4553 = vpop.permute.xlu0 %4552
      %4554 = vrot.lane.b32.xlu0 %v3900, 32
      %v4555 = vpop.permute.xlu0 %4554
      %4556 = vrot.lane.b32.xlu0 %v3901, 32
      %v4557 = vpop.permute.xlu0 %4556
      %4558 = vrot.lane.b32.xlu0 %v3902, 32
      %v4559 = vpop.permute.xlu0 %4558
      %4560 = vrot.lane.b32.xlu0 %v3903, 32
      %v4561 = vpop.permute.xlu0 %4560
      %4562 = vrot.lane.b32.xlu0 %v3904, 32
      %v4563 = vpop.permute.xlu0 %4562
      %4564 = vrot.lane.b32.xlu0 %v3905, 32
      %v4565 = vpop.permute.xlu0 %4564
      %4566 = vrot.lane.b32.xlu0 %v3906, 32
      %v4567 = vpop.permute.xlu0 %4566
      %4568 = vrot.lane.b32.xlu0 %v3907, 32
      %v4569 = vpop.permute.xlu0 %4568
      %4570 = vrot.lane.b32.xlu0 %v3908, 32
      %v4571 = vpop.permute.xlu0 %4570
      %4572 = vrot.lane.b32.xlu0 %v3909, 32
      %v4573 = vpop.permute.xlu0 %4572
      %4574 = vrot.lane.b32.xlu0 %v3910, 32
      %v4575 = vpop.permute.xlu0 %4574
      %4576 = vrot.lane.b32.xlu0 %v3911, 32
      %v4577 = vpop.permute.xlu0 %4576
      %4578 = vrot.lane.b32.xlu0 %v3912, 32
      %v4579 = vpop.permute.xlu0 %4578
      %4580 = vrot.lane.b32.xlu0 %v3913, 32
      %v4581 = vpop.permute.xlu0 %4580
      %4582 = vrot.lane.b32.xlu0 %v3914, 32
      %v4583 = vpop.permute.xlu0 %4582
      %4584 = vrot.lane.b32.xlu0 %v3915, 32
      %v4585 = vpop.permute.xlu0 %4584
      %4586 = vrot.lane.b32.xlu0 %v3916, 32
      %v4587 = vpop.permute.xlu0 %4586
      %4588 = vrot.lane.b32.xlu0 %v3917, 32
      %v4589 = vpop.permute.xlu0 %4588
      %4590 = vrot.lane.b32.xlu0 %v3918, 32
      %v4591 = vpop.permute.xlu0 %4590
      %4624 = vrot.lane.b32.xlu0 %v3984, 64
      %v4625 = vpop.permute.xlu0 %4624
      %4626 = vrot.lane.b32.xlu0 %v3985, 64
      %v4627 = vpop.permute.xlu0 %4626
      %4628 = vrot.lane.b32.xlu0 %v3986, 64
      %v4629 = vpop.permute.xlu0 %4628
      %4630 = vrot.lane.b32.xlu0 %v3987, 64
      %v4631 = vpop.permute.xlu0 %4630
      %4632 = vrot.lane.b32.xlu0 %v3988, 64
      %v4633 = vpop.permute.xlu0 %4632
      %4634 = vrot.lane.b32.xlu0 %v3989, 64
      %v4635 = vpop.permute.xlu0 %4634
      %4636 = vrot.lane.b32.xlu0 %v3990, 64
      %v4637 = vpop.permute.xlu0 %4636
      %4638 = vrot.lane.b32.xlu0 %v3991, 64
      %v4639 = vpop.permute.xlu0 %4638
      %4640 = vrot.lane.b32.xlu0 %v3992, 64
      %v4641 = vpop.permute.xlu0 %4640
      %4642 = vrot.lane.b32.xlu0 %v3993, 64
      %v4643 = vpop.permute.xlu0 %4642
      %4644 = vrot.lane.b32.xlu0 %v3994, 64
      %v4645 = vpop.permute.xlu0 %4644
      %4646 = vrot.lane.b32.xlu0 %v3995, 64
      %v4647 = vpop.permute.xlu0 %4646
      %4648 = vrot.lane.b32.xlu0 %v3996, 64
      %v4649 = vpop.permute.xlu0 %4648
      %4650 = vrot.lane.b32.xlu0 %v3997, 64
      %v4651 = vpop.permute.xlu0 %4650
      %4652 = vrot.lane.b32.xlu0 %v3998, 64
      %v4653 = vpop.permute.xlu0 %4652
      %4654 = vrot.lane.b32.xlu0 %v3999, 64
      %v4655 = vpop.permute.xlu0 %4654
      %4656 = vrot.lane.b32.xlu0 %v4000, 64
      %v4657 = vpop.permute.xlu0 %4656
      %4658 = vrot.lane.b32.xlu0 %v4001, 64
      %v4659 = vpop.permute.xlu0 %4658
      %4660 = vrot.lane.b32.xlu0 %v4002, 64
      %v4661 = vpop.permute.xlu0 %4660
      %4662 = vrot.lane.b32.xlu0 %v4003, 64
      %v4663 = vpop.permute.xlu0 %4662
      %4664 = vrot.lane.b32.xlu0 %v4004, 64
      %v4665 = vpop.permute.xlu0 %4664
      %4666 = vrot.lane.b32.xlu0 %v4005, 64
      %v4667 = vpop.permute.xlu0 %4666
      %4668 = vrot.lane.b32.xlu0 %v4006, 64
      %v4669 = vpop.permute.xlu0 %4668
      %4670 = vrot.lane.b32.xlu0 %v4007, 64
      %v4671 = vpop.permute.xlu0 %4670
      %4672 = vrot.lane.b32.xlu0 %v4008, 64
      %v4673 = vpop.permute.xlu0 %4672
      %4674 = vrot.lane.b32.xlu0 %v4009, 64
      %v4675 = vpop.permute.xlu0 %4674
      %4676 = vrot.lane.b32.xlu0 %v4010, 64
      %v4677 = vpop.permute.xlu0 %4676
      %4678 = vrot.lane.b32.xlu0 %v4011, 64
      %v4679 = vpop.permute.xlu0 %4678
      %4680 = vrot.lane.b32.xlu0 %v4012, 64
      %v4681 = vpop.permute.xlu0 %4680
      %4682 = vrot.lane.b32.xlu0 %v4013, 64
      %v4683 = vpop.permute.xlu0 %4682
      %4684 = vrot.lane.b32.xlu0 %v4014, 64
      %v4685 = vpop.permute.xlu0 %4684
      %4686 = vrot.lane.b32.xlu0 %v4015, 64
      %v4687 = vpop.permute.xlu0 %4686
      %4720 = vrot.lane.b32.xlu0 %v4080, 96
      %v4721 = vpop.permute.xlu0 %4720
      %4722 = vrot.lane.b32.xlu0 %v4081, 96
      %v4723 = vpop.permute.xlu0 %4722
      %4724 = vrot.lane.b32.xlu0 %v4082, 96
      %v4725 = vpop.permute.xlu0 %4724
      %4726 = vrot.lane.b32.xlu0 %v4083, 96
      %v4727 = vpop.permute.xlu0 %4726
      %4728 = vrot.lane.b32.xlu0 %v4084, 96
      %v4729 = vpop.permute.xlu0 %4728
      %4730 = vrot.lane.b32.xlu0 %v4085, 96
      %v4731 = vpop.permute.xlu0 %4730
      %4732 = vrot.lane.b32.xlu0 %v4086, 96
      %v4733 = vpop.permute.xlu0 %4732
      %4734 = vrot.lane.b32.xlu0 %v4087, 96
      %v4735 = vpop.permute.xlu0 %4734
      %4736 = vrot.lane.b32.xlu0 %v4088, 96
      %v4737 = vpop.permute.xlu0 %4736
      %4738 = vrot.lane.b32.xlu0 %v4089, 96
      %v4739 = vpop.permute.xlu0 %4738
      %4740 = vrot.lane.b32.xlu0 %v4090, 96
      %v4741 = vpop.permute.xlu0 %4740
      %4742 = vrot.lane.b32.xlu0 %v4091, 96
      %v4743 = vpop.permute.xlu0 %4742
      %4744 = vrot.lane.b32.xlu0 %v4092, 96
      %v4745 = vpop.permute.xlu0 %4744
      %4746 = vrot.lane.b32.xlu0 %v4093, 96
      %v4747 = vpop.permute.xlu0 %4746
      %4748 = vrot.lane.b32.xlu0 %v4094, 96
      %v4749 = vpop.permute.xlu0 %4748
      %4750 = vrot.lane.b32.xlu0 %v4095, 96
      %v4751 = vpop.permute.xlu0 %4750
      %4752 = vrot.lane.b32.xlu0 %v4096, 96
      %v4753 = vpop.permute.xlu0 %4752
      %4754 = vrot.lane.b32.xlu0 %v4097, 96
      %v4755 = vpop.permute.xlu0 %4754
      %4756 = vrot.lane.b32.xlu0 %v4098, 96
      %v4757 = vpop.permute.xlu0 %4756
      %4758 = vrot.lane.b32.xlu0 %v4099, 96
      %v4759 = vpop.permute.xlu0 %4758
      %4760 = vrot.lane.b32.xlu0 %v4100, 96
      %v4761 = vpop.permute.xlu0 %4760
      %4762 = vrot.lane.b32.xlu0 %v4101, 96
      %v4763 = vpop.permute.xlu0 %4762
      %4764 = vrot.lane.b32.xlu0 %v4102, 96
      %v4765 = vpop.permute.xlu0 %4764
      %4766 = vrot.lane.b32.xlu0 %v4103, 96
      %v4767 = vpop.permute.xlu0 %4766
      %4768 = vrot.lane.b32.xlu0 %v4104, 96
      %v4769 = vpop.permute.xlu0 %4768
      %4770 = vrot.lane.b32.xlu0 %v4105, 96
      %v4771 = vpop.permute.xlu0 %4770
      %4772 = vrot.lane.b32.xlu0 %v4106, 96
      %v4773 = vpop.permute.xlu0 %4772
      %4774 = vrot.lane.b32.xlu0 %v4107, 96
      %v4775 = vpop.permute.xlu0 %4774
      %4776 = vrot.lane.b32.xlu0 %v4108, 96
      %v4777 = vpop.permute.xlu0 %4776
      %4778 = vrot.lane.b32.xlu0 %v4109, 96
      %v4779 = vpop.permute.xlu0 %4778
      %4780 = vrot.lane.b32.xlu0 %v4110, 96
      %v4781 = vpop.permute.xlu0 %4780
      %4782 = vrot.lane.b32.xlu0 %v4111, 96
      %v4783 = vpop.permute.xlu0 %4782
      %v4786 = vsel %vm3190, %v3407, %v4241
      %v4789 = vsel %vm3190, %v3408, %v4243
      %v4792 = vsel %vm3190, %v3409, %v4245
      %v4795 = vsel %vm3190, %v3410, %v4247
      %v4798 = vsel %vm3190, %v3411, %v4249
      %v4801 = vsel %vm3190, %v3412, %v4251
      %v4804 = vsel %vm3190, %v3413, %v4253
      %v4807 = vsel %vm3190, %v3414, %v4255
      %v4810 = vsel %vm3190, %v3415, %v4257
      %v4813 = vsel %vm3190, %v3416, %v4259
      %v4816 = vsel %vm3190, %v3417, %v4261
      %v4819 = vsel %vm3190, %v3418, %v4263
      %v4822 = vsel %vm3190, %v3419, %v4265
      %v4825 = vsel %vm3190, %v3420, %v4267
      %v4828 = vsel %vm3190, %v3421, %v4269
      %v4831 = vsel %vm3190, %v3422, %v4271
      %v4834 = vsel %vm3190, %v3423, %v4273
      %v4837 = vsel %vm3190, %v3424, %v4275
      %v4840 = vsel %vm3190, %v3425, %v4277
      %v4843 = vsel %vm3190, %v3426, %v4279
      %v4846 = vsel %vm3190, %v3427, %v4281
      %v4849 = vsel %vm3190, %v3428, %v4283
      %v4852 = vsel %vm3190, %v3429, %v4285
      %v4855 = vsel %vm3190, %v3430, %v4287
      %v4858 = vsel %vm3190, %v3431, %v4289
      %v4861 = vsel %vm3190, %v3432, %v4291
      %v4864 = vsel %vm3190, %v3433, %v4293
      %v4867 = vsel %vm3190, %v3434, %v4295
      %v4870 = vsel %vm3190, %v3435, %v4297
      %v4873 = vsel %vm3190, %v3436, %v4299
      %v4876 = vsel %vm3190, %v3437, %v4301
      %v4879 = vsel %vm3190, %v3438, %v4303
      %vm4880 = vcmask 523264
      %v4882 = vsel %vm4880, %v4786, %v4337
      %v4884 = vsel %vm4880, %v4789, %v4339
      %v4886 = vsel %vm4880, %v4792, %v4341
      %v4888 = vsel %vm4880, %v4795, %v4343
      %v4890 = vsel %vm4880, %v4798, %v4345
      %v4892 = vsel %vm4880, %v4801, %v4347
      %v4894 = vsel %vm4880, %v4804, %v4349
      %v4896 = vsel %vm4880, %v4807, %v4351
      %v4898 = vsel %vm4880, %v4810, %v4353
      %v4900 = vsel %vm4880, %v4813, %v4355
      %v4902 = vsel %vm4880, %v4816, %v4357
      %v4904 = vsel %vm4880, %v4819, %v4359
      %v4906 = vsel %vm4880, %v4822, %v4361
      %v4908 = vsel %vm4880, %v4825, %v4363
      %v4910 = vsel %vm4880, %v4828, %v4365
      %v4912 = vsel %vm4880, %v4831, %v4367
      %v4914 = vsel %vm4880, %v4834, %v4369
      %v4916 = vsel %vm4880, %v4837, %v4371
      %v4918 = vsel %vm4880, %v4840, %v4373
      %v4920 = vsel %vm4880, %v4843, %v4375
      %v4922 = vsel %vm4880, %v4846, %v4377
      %v4924 = vsel %vm4880, %v4849, %v4379
      %v4926 = vsel %vm4880, %v4852, %v4381
      %v4928 = vsel %vm4880, %v4855, %v4383
      %v4930 = vsel %vm4880, %v4858, %v4385
      %v4932 = vsel %vm4880, %v4861, %v4387
      %v4934 = vsel %vm4880, %v4864, %v4389
      %v4936 = vsel %vm4880, %v4867, %v4391
      %v4938 = vsel %vm4880, %v4870, %v4393
      %v4940 = vsel %vm4880, %v4873, %v4395
      %v4942 = vsel %vm4880, %v4876, %v4397
      %v4944 = vsel %vm4880, %v4879, %v4399
      %vm4945 = vcmask 785408
      %v4947 = vsel %vm4945, %v4882, %v4433
      %v4950 = vsel %vm4945, %v4884, %v4435
      %v4953 = vsel %vm4945, %v4886, %v4437
      %v4956 = vsel %vm4945, %v4888, %v4439
      %v4959 = vsel %vm4945, %v4890, %v4441
      %v4962 = vsel %vm4945, %v4892, %v4443
      %v4965 = vsel %vm4945, %v4894, %v4445
      %v4968 = vsel %vm4945, %v4896, %v4447
      %v4971 = vsel %vm4945, %v4898, %v4449
      %v4974 = vsel %vm4945, %v4900, %v4451
      %v4977 = vsel %vm4945, %v4902, %v4453
      %v4980 = vsel %vm4945, %v4904, %v4455
      %v4983 = vsel %vm4945, %v4906, %v4457
      %v4986 = vsel %vm4945, %v4908, %v4459
      %v4989 = vsel %vm4945, %v4910, %v4461
      %v4992 = vsel %vm4945, %v4912, %v4463
      %v4995 = vsel %vm4945, %v4914, %v4465
      %v4998 = vsel %vm4945, %v4916, %v4467
      %v5001 = vsel %vm4945, %v4918, %v4469
      %v5004 = vsel %vm4945, %v4920, %v4471
      %v5007 = vsel %vm4945, %v4922, %v4473
      %v5010 = vsel %vm4945, %v4924, %v4475
      %v5013 = vsel %vm4945, %v4926, %v4477
      %v5016 = vsel %vm4945, %v4928, %v4479
      %v5019 = vsel %vm4945, %v4930, %v4481
      %v5022 = vsel %vm4945, %v4932, %v4483
      %v5025 = vsel %vm4945, %v4934, %v4485
      %v5028 = vsel %vm4945, %v4936, %v4487
      %v5031 = vsel %vm4945, %v4938, %v4489
      %v5034 = vsel %vm4945, %v4940, %v4491
      %v5037 = vsel %vm4945, %v4942, %v4493
      %v5040 = vsel %vm4945, %v4944, %v4495
      %v5044 = vsel %vm3190, %v3791, %v4529
      %v5047 = vsel %vm3190, %v3792, %v4531
      %v5050 = vsel %vm3190, %v3793, %v4533
      %v5053 = vsel %vm3190, %v3794, %v4535
      %v5056 = vsel %vm3190, %v3795, %v4537
      %v5059 = vsel %vm3190, %v3796, %v4539
      %v5062 = vsel %vm3190, %v3797, %v4541
      %v5065 = vsel %vm3190, %v3798, %v4543
      %v5068 = vsel %vm3190, %v3799, %v4545
      %v5071 = vsel %vm3190, %v3800, %v4547
      %v5074 = vsel %vm3190, %v3801, %v4549
      %v5077 = vsel %vm3190, %v3802, %v4551
      %v5080 = vsel %vm3190, %v3803, %v4553
      %v5083 = vsel %vm3190, %v3804, %v4555
      %v5086 = vsel %vm3190, %v3805, %v4557
      %v5089 = vsel %vm3190, %v3806, %v4559
      %v5092 = vsel %vm3190, %v3807, %v4561
      %v5095 = vsel %vm3190, %v3808, %v4563
      %v5098 = vsel %vm3190, %v3809, %v4565
      %v5101 = vsel %vm3190, %v3810, %v4567
      %v5104 = vsel %vm3190, %v3811, %v4569
      %v5107 = vsel %vm3190, %v3812, %v4571
      %v5110 = vsel %vm3190, %v3813, %v4573
      %v5113 = vsel %vm3190, %v3814, %v4575
      %v5116 = vsel %vm3190, %v3815, %v4577
      %v5119 = vsel %vm3190, %v3816, %v4579
      %v5122 = vsel %vm3190, %v3817, %v4581
      %v5125 = vsel %vm3190, %v3818, %v4583
      %v5128 = vsel %vm3190, %v3819, %v4585
      %v5131 = vsel %vm3190, %v3820, %v4587
      %v5134 = vsel %vm3190, %v3821, %v4589
      %v5137 = vsel %vm3190, %v3822, %v4591
      %v5139 = vsel %vm4880, %v5044, %v4625
      %v5141 = vsel %vm4880, %v5047, %v4627
      %v5143 = vsel %vm4880, %v5050, %v4629
      %v5145 = vsel %vm4880, %v5053, %v4631
      %v5147 = vsel %vm4880, %v5056, %v4633
      %v5149 = vsel %vm4880, %v5059, %v4635
      %v5151 = vsel %vm4880, %v5062, %v4637
      %v5153 = vsel %vm4880, %v5065, %v4639
      %v5155 = vsel %vm4880, %v5068, %v4641
      %v5157 = vsel %vm4880, %v5071, %v4643
      %v5159 = vsel %vm4880, %v5074, %v4645
      %v5161 = vsel %vm4880, %v5077, %v4647
      %v5163 = vsel %vm4880, %v5080, %v4649
      %v5165 = vsel %vm4880, %v5083, %v4651
      %v5167 = vsel %vm4880, %v5086, %v4653
      %v5169 = vsel %vm4880, %v5089, %v4655
      %v5171 = vsel %vm4880, %v5092, %v4657
      %v5173 = vsel %vm4880, %v5095, %v4659
      %v5175 = vsel %vm4880, %v5098, %v4661
      %v5177 = vsel %vm4880, %v5101, %v4663
      %v5179 = vsel %vm4880, %v5104, %v4665
      %v5181 = vsel %vm4880, %v5107, %v4667
      %v5183 = vsel %vm4880, %v5110, %v4669
      %v5185 = vsel %vm4880, %v5113, %v4671
      %v5187 = vsel %vm4880, %v5116, %v4673
      %v5189 = vsel %vm4880, %v5119, %v4675
      %v5191 = vsel %vm4880, %v5122, %v4677
      %v5193 = vsel %vm4880, %v5125, %v4679
      %v5195 = vsel %vm4880, %v5128, %v4681
      %v5197 = vsel %vm4880, %v5131, %v4683
      %v5199 = vsel %vm4880, %v5134, %v4685
      %v5201 = vsel %vm4880, %v5137, %v4687
      %v5203 = vsel %vm4945, %v5139, %v4721
      %v5206 = vsel %vm4945, %v5141, %v4723
      %v5209 = vsel %vm4945, %v5143, %v4725
      %v5212 = vsel %vm4945, %v5145, %v4727
      %v5215 = vsel %vm4945, %v5147, %v4729
      %v5218 = vsel %vm4945, %v5149, %v4731
      %v5221 = vsel %vm4945, %v5151, %v4733
      %v5224 = vsel %vm4945, %v5153, %v4735
      %v5227 = vsel %vm4945, %v5155, %v4737
      %v5230 = vsel %vm4945, %v5157, %v4739
      %v5233 = vsel %vm4945, %v5159, %v4741
      %v5236 = vsel %vm4945, %v5161, %v4743
      %v5239 = vsel %vm4945, %v5163, %v4745
      %v5242 = vsel %vm4945, %v5165, %v4747
      %v5245 = vsel %vm4945, %v5167, %v4749
      %v5248 = vsel %vm4945, %v5169, %v4751
      %v5251 = vsel %vm4945, %v5171, %v4753
      %v5254 = vsel %vm4945, %v5173, %v4755
      %v5257 = vsel %vm4945, %v5175, %v4757
      %v5260 = vsel %vm4945, %v5177, %v4759
      %v5263 = vsel %vm4945, %v5179, %v4761
      %v5266 = vsel %vm4945, %v5181, %v4763
      %v5269 = vsel %vm4945, %v5183, %v4765
      %v5272 = vsel %vm4945, %v5185, %v4767
      %v5275 = vsel %vm4945, %v5187, %v4769
      %v5278 = vsel %vm4945, %v5189, %v4771
      %v5281 = vsel %vm4945, %v5191, %v4773
      %v5284 = vsel %vm4945, %v5193, %v4775
      %v5287 = vsel %vm4945, %v5195, %v4777
      %v5290 = vsel %vm4945, %v5197, %v4779
      %v5293 = vsel %vm4945, %v5199, %v4781
      %v5296 = vsel %vm4945, %v5201, %v4783
      %v5298 = vld [vmem:[%s3] sm:$0xf]
      %v5299 = vld [vmem:[%s3 + $0x4] sm:$0xf]
      %v5300 = vld [vmem:[%s3 + $0x8] sm:$0xf]
      %v5301 = vld [vmem:[%s3 + $0xc] sm:$0xf]
      %v5302 = vld [vmem:[%s3 + $0x10] sm:$0xf]
      %v5303 = vld [vmem:[%s3 + $0x14] sm:$0xf]
      %v5304 = vld [vmem:[%s3 + $0x18] sm:$0xf]
      %v5305 = vld [vmem:[%s3 + $0x1c] sm:$0xf]
      %v5306 = vld [vmem:[%s3 + $0x20] sm:$0xf]
      %v5307 = vld [vmem:[%s3 + $0x24] sm:$0xf]
      %v5308 = vld [vmem:[%s3 + $0x28] sm:$0xf]
      %v5309 = vld [vmem:[%s3 + $0x2c] sm:$0xf]
      %v5310 = vld [vmem:[%s3 + $0x30] sm:$0xf]
      %v5311 = vld [vmem:[%s3 + $0x34] sm:$0xf]
      %v5312 = vld [vmem:[%s3 + $0x38] sm:$0xf]
      %v5313 = vld [vmem:[%s3 + $0x3c] sm:$0xf]
      %v5314 = vld [vmem:[%s3 + $0x40] sm:$0xf]
      %v5315 = vld [vmem:[%s3 + $0x44] sm:$0xf]
      %v5316 = vld [vmem:[%s3 + $0x48] sm:$0xf]
      %v5317 = vld [vmem:[%s3 + $0x4c] sm:$0xf]
      %v5318 = vld [vmem:[%s3 + $0x50] sm:$0xf]
      %v5319 = vld [vmem:[%s3 + $0x54] sm:$0xf]
      %v5320 = vld [vmem:[%s3 + $0x58] sm:$0xf]
      %v5321 = vld [vmem:[%s3 + $0x5c] sm:$0xf]
      %v5322 = vld [vmem:[%s3 + $0x60] sm:$0xf]
      %v5323 = vld [vmem:[%s3 + $0x64] sm:$0xf]
      %v5324 = vld [vmem:[%s3 + $0x68] sm:$0xf]
      %v5325 = vld [vmem:[%s3 + $0x6c] sm:$0xf]
      %v5326 = vld [vmem:[%s3 + $0x70] sm:$0xf]
      %v5327 = vld [vmem:[%s3 + $0x74] sm:$0xf]
      %v5328 = vld [vmem:[%s3 + $0x78] sm:$0xf]
      %v5329 = vld [vmem:[%s3 + $0x7c] sm:$0xf]
      %v5330 = vld [vmem:[%s3 + $0x80] sm:$0xf]
      %v5331 = vld [vmem:[%s3 + $0x84] sm:$0xf]
      %v5332 = vld [vmem:[%s3 + $0x88] sm:$0xf]
      %v5333 = vld [vmem:[%s3 + $0x8c] sm:$0xf]
      %v5334 = vld [vmem:[%s4] sm:$0x1]
      %v5336 = vlaneseq
      %v5337 = vshrl.u32 %v5336, 7
      %v5338 = vsub.s32 0, %v5337
      %v5339 = vrot.slane %v5334, %v5338
      %v5377 = vunpack.c.l.b16 %v5298
      %v5378 = vunpack.c.l.b16 %v5299
      %v5379 = vunpack.c.l.b16 %v5300
      %v5380 = vunpack.c.l.b16 %v5301
      %v5381 = vunpack.c.l.b16 %v5302
      %v5382 = vunpack.c.l.b16 %v5303
      %v5383 = vunpack.c.l.b16 %v5304
      %v5384 = vunpack.c.l.b16 %v5305
      %v5385 = vunpack.c.l.b16 %v5306
      %v5386 = vunpack.c.l.b16 %v5307
      %v5387 = vunpack.c.l.b16 %v5308
      %v5388 = vunpack.c.l.b16 %v5309
      %v5389 = vunpack.c.l.b16 %v5310
      %v5390 = vunpack.c.l.b16 %v5311
      %v5391 = vunpack.c.l.b16 %v5312
      %v5392 = vunpack.c.l.b16 %v5313
      %v5393 = vunpack.c.l.b16 %v5314
      %v5394 = vunpack.c.l.b16 %v5315
      %v5395 = vunpack.c.l.b16 %v5316
      %v5396 = vunpack.c.l.b16 %v5317
      %v5397 = vunpack.c.l.b16 %v5318
      %v5398 = vunpack.c.l.b16 %v5319
      %v5399 = vunpack.c.l.b16 %v5320
      %v5400 = vunpack.c.l.b16 %v5321
      %v5401 = vunpack.c.l.b16 %v5322
      %v5402 = vunpack.c.l.b16 %v5323
      %v5403 = vunpack.c.l.b16 %v5324
      %v5404 = vunpack.c.l.b16 %v5325
      %v5405 = vunpack.c.l.b16 %v5326
      %v5406 = vunpack.c.l.b16 %v5327
      %v5407 = vunpack.c.l.b16 %v5328
      %v5408 = vunpack.c.l.b16 %v5329
      %v5409 = vunpack.c.l.b16 %v5330
      %v5410 = vunpack.c.l.b16 %v5331
      %v5411 = vunpack.c.l.b16 %v5332
      %v5412 = vunpack.c.l.b16 %v5333
      %v5413 = vpack.c.b16 %v5378, %v5377
      %v5414 = vpack.c.b16 %v5380, %v5379
      %v5415 = vpack.c.b16 %v5382, %v5381
      %v5416 = vpack.c.b16 %v5384, %v5383
      %v5417 = vpack.c.b16 %v5386, %v5385
      %v5418 = vpack.c.b16 %v5388, %v5387
      %v5419 = vpack.c.b16 %v5390, %v5389
      %v5420 = vpack.c.b16 %v5392, %v5391
      %v5421 = vpack.c.b16 %v5394, %v5393
      %v5422 = vpack.c.b16 %v5396, %v5395
      %v5423 = vpack.c.b16 %v5398, %v5397
      %v5424 = vpack.c.b16 %v5400, %v5399
      %v5425 = vpack.c.b16 %v5402, %v5401
      %v5426 = vpack.c.b16 %v5404, %v5403
      %v5427 = vpack.c.b16 %v5406, %v5405
      %v5428 = vpack.c.b16 %v5408, %v5407
      %v5429 = vpack.c.b16 %v5410, %v5409
      %v5430 = vpack.c.b16 %v5412, %v5411
      %v5450 = vsel %vm3190, %v4176, 0
      %v5453 = vsel %vm3190, %v4177, 0
      %v5456 = vsel %vm3190, %v4178, 0
      %v5459 = vsel %vm3190, %v4179, 0
      %v5462 = vsel %vm3190, %v4180, 0
      %v5465 = vsel %vm3190, %v4181, 0
      %v5468 = vsel %vm3190, %v4182, 0
      %v5471 = vsel %vm3190, %v4183, 0
      %v5474 = vsel %vm3190, %v4184, 0
      %v5477 = vsel %vm3190, %v4185, 0
      %v5480 = vsel %vm3190, %v4186, 0
      %v5483 = vsel %vm3190, %v4187, 0
      %v5486 = vsel %vm3190, %v4188, 0
      %v5489 = vsel %vm3190, %v4189, 0
      %v5492 = vsel %vm3190, %v4190, 0
      %v5495 = vsel %vm3190, %v4191, 0
      %v5498 = vsel %vm3190, %v4192, 0
      %v5501 = vsel %vm3190, %v4193, 0
      %v5504 = vsel %vm3190, %v4194, 0
      %v5507 = vsel %vm3190, %v4195, 0
      %v5510 = vsel %vm3190, %v4196, 0
      %v5513 = vsel %vm3190, %v4197, 0
      %v5516 = vsel %vm3190, %v4198, 0
      %v5519 = vsel %vm3190, %v4199, 0
      %v5522 = vsel %vm3190, %v4200, 0
      %v5525 = vsel %vm3190, %v4201, 0
      %v5528 = vsel %vm3190, %v4202, 0
      %v5531 = vsel %vm3190, %v4203, 0
      %v5534 = vsel %vm3190, %v4204, 0
      %v5537 = vsel %vm3190, %v4205, 0
      %v5540 = vsel %vm3190, %v4206, 0
      %v5543 = vsel %vm3190, %v4207, 0
      %5545 = vmatprep.subr.bf16.mxu0 0
      %5546 = vmatpush1.bf16.msra.mxu0 %v5413
      %5547 = vmatprep.subr.bf16.mxu0 0
      %5548 = vmatpush1.bf16.msra.mxu0 %v5414
      %5549 = vmatprep.subr.bf16.mxu0 0
      %5550 = vmatpush1.bf16.msra.mxu0 %v5415
      %5551 = vmatprep.subr.bf16.mxu0 0
      %5552 = vmatpush1.bf16.msra.mxu0 %v5416
      %5553 = vmatprep.subr.bf16.mxu0 0
      %5554 = vmatpush1.bf16.msra.mxu0 %v5417
      %5555 = vmatprep.subr.bf16.mxu0 0
      %5556 = vmatpush1.bf16.msra.mxu0 %v5418
      %5557 = vmatprep.subr.bf16.mxu0 0
      %5558 = vmatpush1.bf16.msra.mxu0 %v5419
      %5559 = vmatprep.subr.bf16.mxu0 0
      %5560 = vmatpush1.bf16.msra.mxu0 %v5420
      %5561 = vmatprep.subr.bf16.mxu0 0
      %5562 = vmatpush1.bf16.msra.mxu0 %v5421
      %5563 = vmatprep.subr.bf16.mxu0 0
      %5564 = vmatpush1.bf16.msra.mxu0 %v5422
      %5565 = vmatprep.subr.bf16.mxu0 0
      %5566 = vmatpush1.bf16.msra.mxu0 %v5423
      %5567 = vmatprep.subr.bf16.mxu0 0
      %5568 = vmatpush1.bf16.msra.mxu0 %v5424
      %5569 = vmatprep.subr.bf16.mxu0 0
      %5570 = vmatpush1.bf16.msra.mxu0 %v5425
      %5571 = vmatprep.subr.bf16.mxu0 0
      %5572 = vmatpush1.bf16.msra.mxu0 %v5426
      %5573 = vmatprep.subr.bf16.mxu0 0
      %5574 = vmatpush1.bf16.msra.mxu0 %v5427
      %5575 = vmatprep.subr.bf16.mxu0 0
      %5576 = vmatpush1.bf16.msra.mxu0 %v5428
      %5577 = vmatprep.mubr.bf16.mxu0 %v5203
      %5578 = vmatmul.mubr.bf16.gmra.mrb[0].mxu0 %v4947
      %v5579 = vpop.f32.mrb[0].mxu0
      %v5580 = vadd.f32 %v5339, %v5579
      %v5581 = vpop.f32.mrb[0].mxu0
      %v5582 = vpop.f32.mrb[0].mxu0
      %v5583 = vadd.f32 %v5339, %v5582
      %v5584 = vpop.f32.mrb[0].mxu0
      %5585 = vmatprep.mubr.bf16.mxu0 %v5206
      %5586 = vmatmul.mubr.bf16.gmra.mrb[0].mxu0 %v4950
      %v5587 = vpop.f32.mrb[0].mxu0
      %v5588 = vadd.f32 %v5339, %v5587
      %v5589 = vpop.f32.mrb[0].mxu0
      %v5590 = vpop.f32.mrb[0].mxu0
      %v5591 = vadd.f32 %v5339, %v5590
      %v5592 = vpop.f32.mrb[0].mxu0
      %5593 = vmatprep.mubr.bf16.mxu0 %v5209
      %5594 = vmatmul.mubr.bf16.gmra.mrb[0].mxu0 %v4953
      %v5595 = vpop.f32.mrb[0].mxu0
      %v5596 = vadd.f32 %v5339, %v5595
      %v5597 = vpop.f32.mrb[0].mxu0
      %v5598 = vpop.f32.mrb[0].mxu0
      %v5599 = vadd.f32 %v5339, %v5598
      %v5600 = vpop.f32.mrb[0].mxu0
      %5601 = vmatprep.mubr.bf16.mxu0 %v5212
      %5602 = vmatmul.mubr.bf16.gmra.mrb[0].mxu0 %v4956
      %v5603 = vpop.f32.mrb[0].mxu0
      %v5604 = vadd.f32 %v5339, %v5603
      %v5605 = vpop.f32.mrb[0].mxu0
      %v5606 = vpop.f32.mrb[0].mxu0
      %v5607 = vadd.f32 %v5339, %v5606
      %v5608 = vpop.f32.mrb[0].mxu0
      %5609 = vmatprep.mubr.bf16.mxu0 %v5215
      %5610 = vmatmul.mubr.bf16.gmra.mrb[0].mxu0 %v4959
      %v5611 = vpop.f32.mrb[0].mxu0
      %v5612 = vadd.f32 %v5339, %v5611
      %v5613 = vpop.f32.mrb[0].mxu0
      %v5614 = vpop.f32.mrb[0].mxu0
      %v5615 = vadd.f32 %v5339, %v5614
      %v5616 = vpop.f32.mrb[0].mxu0
      %5617 = vmatprep.mubr.bf16.mxu0 %v5218
      %5618 = vmatmul.mubr.bf16.gmra.mrb[0].mxu0 %v4962
      %v5619 = vpop.f32.mrb[0].mxu0
      %v5620 = vadd.f32 %v5339, %v5619
      %v5621 = vpop.f32.mrb[0].mxu0
      %v5622 = vpop.f32.mrb[0].mxu0
      %v5623 = vadd.f32 %v5339, %v5622
      %v5624 = vpop.f32.mrb[0].mxu0
      %5625 = vmatprep.mubr.bf16.mxu0 %v5221
      %5626 = vmatmul.mubr.bf16.gmra.mrb[0].mxu0 %v4965
      %v5627 = vpop.f32.mrb[0].mxu0
      %v5628 = vadd.f32 %v5339, %v5627
      %v5629 = vpop.f32.mrb[0].mxu0
      %v5630 = vpop.f32.mrb[0].mxu0
      %v5631 = vadd.f32 %v5339, %v5630
      %v5632 = vpop.f32.mrb[0].mxu0
      %5633 = vmatprep.mubr.bf16.mxu0 %v5224
      %5634 = vmatmul.mubr.bf16.gmra.mrb[0].mxu0 %v4968
      %v5635 = vpop.f32.mrb[0].mxu0
      %v5636 = vadd.f32 %v5339, %v5635
      %v5637 = vpop.f32.mrb[0].mxu0
      %v5638 = vpop.f32.mrb[0].mxu0
      %v5639 = vadd.f32 %v5339, %v5638
      %v5640 = vpop.f32.mrb[0].mxu0
      %5641 = vmatprep.mubr.bf16.mxu0 %v5227
      %5642 = vmatmul.mubr.bf16.gmra.mrb[0].mxu0 %v4971
      %v5643 = vpop.f32.mrb[0].mxu0
      %v5644 = vadd.f32 %v5339, %v5643
      %v5645 = vpop.f32.mrb[0].mxu0
      %v5646 = vpop.f32.mrb[0].mxu0
      %v5647 = vadd.f32 %v5339, %v5646
      %v5648 = vpop.f32.mrb[0].mxu0
      %5649 = vmatprep.mubr.bf16.mxu0 %v5230
      %5650 = vmatmul.mubr.bf16.gmra.mrb[0].mxu0 %v4974
      %v5651 = vpop.f32.mrb[0].mxu0
      %v5652 = vadd.f32 %v5339, %v5651
      %v5653 = vpop.f32.mrb[0].mxu0
      %v5654 = vpop.f32.mrb[0].mxu0
      %v5655 = vadd.f32 %v5339, %v5654
      %v5656 = vpop.f32.mrb[0].mxu0
      %5657 = vmatprep.mubr.bf16.mxu0 %v5233
      %5658 = vmatmul.mubr.bf16.gmra.mrb[0].mxu0 %v4977
      %v5659 = vpop.f32.mrb[0].mxu0
      %v5660 = vadd.f32 %v5339, %v5659
      %v5661 = vpop.f32.mrb[0].mxu0
      %v5662 = vpop.f32.mrb[0].mxu0
      %v5663 = vadd.f32 %v5339, %v5662
      %v5664 = vpop.f32.mrb[0].mxu0
      %5665 = vmatprep.mubr.bf16.mxu0 %v5236
      %5666 = vmatmul.mubr.bf16.gmra.mrb[0].mxu0 %v4980
      %v5667 = vpop.f32.mrb[0].mxu0
      %v5668 = vadd.f32 %v5339, %v5667
      %v5669 = vpop.f32.mrb[0].mxu0
      %v5670 = vpop.f32.mrb[0].mxu0
      %v5671 = vadd.f32 %v5339, %v5670
      %v5672 = vpop.f32.mrb[0].mxu0
      %5673 = vmatprep.mubr.bf16.mxu0 %v5239
      %5674 = vmatmul.mubr.bf16.gmra.mrb[0].mxu0 %v4983
      %v5675 = vpop.f32.mrb[0].mxu0
      %v5676 = vadd.f32 %v5339, %v5675
      %v5677 = vpop.f32.mrb[0].mxu0
      %v5678 = vpop.f32.mrb[0].mxu0
      %v5679 = vadd.f32 %v5339, %v5678
      %v5680 = vpop.f32.mrb[0].mxu0
      %5681 = vmatprep.mubr.bf16.mxu0 %v5242
      %5682 = vmatmul.mubr.bf16.gmra.mrb[0].mxu0 %v4986
      %v5683 = vpop.f32.mrb[0].mxu0
      %v5684 = vadd.f32 %v5339, %v5683
      %v5685 = vpop.f32.mrb[0].mxu0
      %v5686 = vpop.f32.mrb[0].mxu0
      %v5687 = vadd.f32 %v5339, %v5686
      %v5688 = vpop.f32.mrb[0].mxu0
      %5689 = vmatprep.mubr.bf16.mxu0 %v5245
      %5690 = vmatmul.mubr.bf16.gmra.mrb[0].mxu0 %v4989
      %v5691 = vpop.f32.mrb[0].mxu0
      %v5692 = vadd.f32 %v5339, %v5691
      %v5693 = vpop.f32.mrb[0].mxu0
      %v5694 = vpop.f32.mrb[0].mxu0
      %v5695 = vadd.f32 %v5339, %v5694
      %v5696 = vpop.f32.mrb[0].mxu0
      %5697 = vmatprep.mubr.bf16.mxu0 %v5248
      %5698 = vmatmul.mubr.bf16.gmra.mrb[0].mxu0 %v4992
      %v5699 = vpop.f32.mrb[0].mxu0
      %v5700 = vadd.f32 %v5339, %v5699
      %v5701 = vpop.f32.mrb[0].mxu0
      %v5702 = vpop.f32.mrb[0].mxu0
      %v5703 = vadd.f32 %v5339, %v5702
      %v5704 = vpop.f32.mrb[0].mxu0
      %5705 = vmatprep.mubr.bf16.mxu0 %v5251
      %5706 = vmatmul.mubr.bf16.gmra.mrb[0].mxu0 %v4995
      %v5707 = vpop.f32.mrb[0].mxu0
      %v5708 = vadd.f32 %v5339, %v5707
      %v5709 = vpop.f32.mrb[0].mxu0
      %v5710 = vpop.f32.mrb[0].mxu0
      %v5711 = vadd.f32 %v5339, %v5710
      %v5712 = vpop.f32.mrb[0].mxu0
      %5713 = vmatprep.mubr.bf16.mxu0 %v5254
      %5714 = vmatmul.mubr.bf16.gmra.mrb[0].mxu0 %v4998
      %v5715 = vpop.f32.mrb[0].mxu0
      %v5716 = vadd.f32 %v5339, %v5715
      %v5717 = vpop.f32.mrb[0].mxu0
      %v5718 = vpop.f32.mrb[0].mxu0
      %v5719 = vadd.f32 %v5339, %v5718
      %v5720 = vpop.f32.mrb[0].mxu0
      %5721 = vmatprep.mubr.bf16.mxu0 %v5257
      %5722 = vmatmul.mubr.bf16.gmra.mrb[0].mxu0 %v5001
      %v5723 = vpop.f32.mrb[0].mxu0
      %v5724 = vadd.f32 %v5339, %v5723
      %v5725 = vpop.f32.mrb[0].mxu0
      %v5726 = vpop.f32.mrb[0].mxu0
      %v5727 = vadd.f32 %v5339, %v5726
      %v5728 = vpop.f32.mrb[0].mxu0
      %5729 = vmatprep.mubr.bf16.mxu0 %v5260
      %5730 = vmatmul.mubr.bf16.gmra.mrb[0].mxu0 %v5004
      %v5731 = vpop.f32.mrb[0].mxu0
      %v5732 = vadd.f32 %v5339, %v5731
      %v5733 = vpop.f32.mrb[0].mxu0
      %v5734 = vpop.f32.mrb[0].mxu0
      %v5735 = vadd.f32 %v5339, %v5734
      %v5736 = vpop.f32.mrb[0].mxu0
      %5737 = vmatprep.mubr.bf16.mxu0 %v5263
      %5738 = vmatmul.mubr.bf16.gmra.mrb[0].mxu0 %v5007
      %v5739 = vpop.f32.mrb[0].mxu0
      %v5740 = vadd.f32 %v5339, %v5739
      %v5741 = vpop.f32.mrb[0].mxu0
      %v5742 = vpop.f32.mrb[0].mxu0
      %v5743 = vadd.f32 %v5339, %v5742
      %v5744 = vpop.f32.mrb[0].mxu0
      %5745 = vmatprep.mubr.bf16.mxu0 %v5266
      %5746 = vmatmul.mubr.bf16.gmra.mrb[0].mxu0 %v5010
      %v5747 = vpop.f32.mrb[0].mxu0
      %v5748 = vadd.f32 %v5339, %v5747
      %v5749 = vpop.f32.mrb[0].mxu0
      %v5750 = vpop.f32.mrb[0].mxu0
      %v5751 = vadd.f32 %v5339, %v5750
      %v5752 = vpop.f32.mrb[0].mxu0
      %5753 = vmatprep.mubr.bf16.mxu0 %v5269
      %5754 = vmatmul.mubr.bf16.gmra.mrb[0].mxu0 %v5013
      %v5755 = vpop.f32.mrb[0].mxu0
      %v5756 = vadd.f32 %v5339, %v5755
      %v5757 = vpop.f32.mrb[0].mxu0
      %v5758 = vpop.f32.mrb[0].mxu0
      %v5759 = vadd.f32 %v5339, %v5758
      %v5760 = vpop.f32.mrb[0].mxu0
      %5761 = vmatprep.mubr.bf16.mxu0 %v5272
      %5762 = vmatmul.mubr.bf16.gmra.mrb[0].mxu0 %v5016
      %v5763 = vpop.f32.mrb[0].mxu0
      %v5764 = vadd.f32 %v5339, %v5763
      %v5765 = vpop.f32.mrb[0].mxu0
      %v5766 = vpop.f32.mrb[0].mxu0
      %v5767 = vadd.f32 %v5339, %v5766
      %v5768 = vpop.f32.mrb[0].mxu0
      %5769 = vmatprep.mubr.bf16.mxu0 %v5275
      %5770 = vmatmul.mubr.bf16.gmra.mrb[0].mxu0 %v5019
      %v5771 = vpop.f32.mrb[0].mxu0
      %v5772 = vadd.f32 %v5339, %v5771
      %v5773 = vpop.f32.mrb[0].mxu0
      %v5774 = vpop.f32.mrb[0].mxu0
      %v5775 = vadd.f32 %v5339, %v5774
      %v5776 = vpop.f32.mrb[0].mxu0
      %5777 = vmatprep.mubr.bf16.mxu0 %v5278
      %5778 = vmatmul.mubr.bf16.gmra.mrb[0].mxu0 %v5022
      %v5779 = vpop.f32.mrb[0].mxu0
      %v5780 = vadd.f32 %v5339, %v5779
      %v5781 = vpop.f32.mrb[0].mxu0
      %v5782 = vpop.f32.mrb[0].mxu0
      %v5783 = vadd.f32 %v5339, %v5782
      %v5784 = vpop.f32.mrb[0].mxu0
      %5785 = vmatprep.mubr.bf16.mxu0 %v5281
      %5786 = vmatmul.mubr.bf16.gmra.mrb[0].mxu0 %v5025
      %v5787 = vpop.f32.mrb[0].mxu0
      %v5788 = vadd.f32 %v5339, %v5787
      %v5789 = vpop.f32.mrb[0].mxu0
      %v5790 = vpop.f32.mrb[0].mxu0
      %v5791 = vadd.f32 %v5339, %v5790
      %v5792 = vpop.f32.mrb[0].mxu0
      %5793 = vmatprep.mubr.bf16.mxu0 %v5284
      %5794 = vmatmul.mubr.bf16.gmra.mrb[0].mxu0 %v5028
      %v5795 = vpop.f32.mrb[0].mxu0
      %v5796 = vadd.f32 %v5339, %v5795
      %v5797 = vpop.f32.mrb[0].mxu0
      %v5798 = vpop.f32.mrb[0].mxu0
      %v5799 = vadd.f32 %v5339, %v5798
      %v5800 = vpop.f32.mrb[0].mxu0
      %5801 = vmatprep.mubr.bf16.mxu0 %v5287
      %5802 = vmatmul.mubr.bf16.gmra.mrb[0].mxu0 %v5031
      %v5803 = vpop.f32.mrb[0].mxu0
      %v5804 = vadd.f32 %v5339, %v5803
      %v5805 = vpop.f32.mrb[0].mxu0
      %v5806 = vpop.f32.mrb[0].mxu0
      %v5807 = vadd.f32 %v5339, %v5806
      %v5808 = vpop.f32.mrb[0].mxu0
      %5809 = vmatprep.mubr.bf16.mxu0 %v5290
      %5810 = vmatmul.mubr.bf16.gmra.mrb[0].mxu0 %v5034
      %v5811 = vpop.f32.mrb[0].mxu0
      %v5812 = vadd.f32 %v5339, %v5811
      %v5813 = vpop.f32.mrb[0].mxu0
      %v5814 = vpop.f32.mrb[0].mxu0
      %v5815 = vadd.f32 %v5339, %v5814
      %v5816 = vpop.f32.mrb[0].mxu0
      %5817 = vmatprep.mubr.bf16.mxu0 %v5293
      %5818 = vmatmul.mubr.bf16.gmra.mrb[0].mxu0 %v5037
      %v5819 = vpop.f32.mrb[0].mxu0
      %v5820 = vadd.f32 %v5339, %v5819
      %v5821 = vpop.f32.mrb[0].mxu0
      %v5822 = vpop.f32.mrb[0].mxu0
      %v5823 = vadd.f32 %v5339, %v5822
      %v5824 = vpop.f32.mrb[0].mxu0
      %5825 = vmatprep.mubr.bf16.mxu0 %v5296
      %5826 = vmatmul.mubr.bf16.gmra.mrb[0].mxu0 %v5040
      %v5827 = vpop.f32.mrb[0].mxu0
      %v5828 = vadd.f32 %v5339, %v5827
      %v5829 = vpop.f32.mrb[0].mxu0
      %v5830 = vpop.f32.mrb[0].mxu0
      %v5831 = vadd.f32 %v5339, %v5830
      %v5832 = vpop.f32.mrb[0].mxu0
      %5833 = vdwg.mxu0
      %5834 = vmatprep.subr.bf16.mxu0 0
      %5835 = vmatpush1.bf16.msra.mxu0 %v5429
      %5836 = vmatprep.subr.bf16.mxu0 0
      %5837 = vmatpush1.bf16.msra.mxu0 %v5430
      %5838 = vmatprep.subr.bf16.mxu0 0
      %5839 = vmatpush1.bf16.msra.mxu0 0
      %5840 = vmatprep.subr.bf16.mxu0 0
      %5841 = vmatpush1.bf16.msra.mxu0 0
      %5842 = vmatprep.subr.bf16.mxu0 0
      %5843 = vmatpush1.bf16.msra.mxu0 0
      %5844 = vmatprep.subr.bf16.mxu0 0
      %5845 = vmatpush1.bf16.msra.mxu0 0
      %5846 = vmatprep.subr.bf16.mxu0 0
      %5847 = vmatpush1.bf16.msra.mxu0 0
      %5848 = vmatprep.subr.bf16.mxu0 0
      %5849 = vmatpush1.bf16.msra.mxu0 0
      %5850 = vmatprep.subr.bf16.mxu0 0
      %5851 = vmatpush1.bf16.msra.mxu0 0
      %5852 = vmatprep.subr.bf16.mxu0 0
      %5853 = vmatpush1.bf16.msra.mxu0 0
      %5854 = vmatprep.subr.bf16.mxu0 0
      %5855 = vmatpush1.bf16.msra.mxu0 0
      %5856 = vmatprep.subr.bf16.mxu0 0
      %5857 = vmatpush1.bf16.msra.mxu0 0
      %5858 = vmatprep.subr.bf16.mxu0 0
      %5859 = vmatpush1.bf16.msra.mxu0 0
      %5860 = vmatprep.subr.bf16.mxu0 0
      %5861 = vmatpush1.bf16.msra.mxu0 0
      %5862 = vmatprep.subr.bf16.mxu0 0
      %5863 = vmatpush1.bf16.msra.mxu0 0
      %5864 = vmatprep.subr.bf16.mxu0 0
      %5865 = vmatpush1.bf16.msra.mxu0 0
      %5866 = vmatprep.mubr.bf16.mxu0 0
      %5867 = vmatmul.mubr.bf16.gmra.mrb[0].mxu0 %v5450
      %v5868 = vpop.f32.mrb[0].mxu0
      %v5869 = vadd.f32 %v5580, %v5868
      %v5870 = vpop.f32.mrb[0].mxu0
      %v5871 = vpop.f32.mrb[0].mxu0
      %v5872 = vadd.f32 %v5583, %v5871
      %v5873 = vpop.f32.mrb[0].mxu0
      %5874 = vmatprep.mubr.bf16.mxu0 0
      %5875 = vmatmul.mubr.bf16.gmra.mrb[0].mxu0 %v5453
      %v5876 = vpop.f32.mrb[0].mxu0
      %v5877 = vadd.f32 %v5588, %v5876
      %v5878 = vpop.f32.mrb[0].mxu0
      %v5879 = vpop.f32.mrb[0].mxu0
      %v5880 = vadd.f32 %v5591, %v5879
      %v5881 = vpop.f32.mrb[0].mxu0
      %5882 = vmatprep.mubr.bf16.mxu0 0
      %5883 = vmatmul.mubr.bf16.gmra.mrb[0].mxu0 %v5456
      %v5884 = vpop.f32.mrb[0].mxu0
      %v5885 = vadd.f32 %v5596, %v5884
      %v5886 = vpop.f32.mrb[0].mxu0
      %v5887 = vpop.f32.mrb[0].mxu0
      %v5888 = vadd.f32 %v5599, %v5887
      %v5889 = vpop.f32.mrb[0].mxu0
      %5890 = vmatprep.mubr.bf16.mxu0 0
      %5891 = vmatmul.mubr.bf16.gmra.mrb[0].mxu0 %v5459
      %v5892 = vpop.f32.mrb[0].mxu0
      %v5893 = vadd.f32 %v5604, %v5892
      %v5894 = vpop.f32.mrb[0].mxu0
      %v5895 = vpop.f32.mrb[0].mxu0
      %v5896 = vadd.f32 %v5607, %v5895
      %v5897 = vpop.f32.mrb[0].mxu0
      %5898 = vmatprep.mubr.bf16.mxu0 0
      %5899 = vmatmul.mubr.bf16.gmra.mrb[0].mxu0 %v5462
      %v5900 = vpop.f32.mrb[0].mxu0
      %v5901 = vadd.f32 %v5612, %v5900
      %v5902 = vpop.f32.mrb[0].mxu0
      %v5903 = vpop.f32.mrb[0].mxu0
      %v5904 = vadd.f32 %v5615, %v5903
      %v5905 = vpop.f32.mrb[0].mxu0
      %5906 = vmatprep.mubr.bf16.mxu0 0
      %5907 = vmatmul.mubr.bf16.gmra.mrb[0].mxu0 %v5465
      %v5908 = vpop.f32.mrb[0].mxu0
      %v5909 = vadd.f32 %v5620, %v5908
      %v5910 = vpop.f32.mrb[0].mxu0
      %v5911 = vpop.f32.mrb[0].mxu0
      %v5912 = vadd.f32 %v5623, %v5911
      %v5913 = vpop.f32.mrb[0].mxu0
      %5914 = vmatprep.mubr.bf16.mxu0 0
      %5915 = vmatmul.mubr.bf16.gmra.mrb[0].mxu0 %v5468
      %v5916 = vpop.f32.mrb[0].mxu0
      %v5917 = vadd.f32 %v5628, %v5916
      %v5918 = vpop.f32.mrb[0].mxu0
      %v5919 = vpop.f32.mrb[0].mxu0
      %v5920 = vadd.f32 %v5631, %v5919
      %v5921 = vpop.f32.mrb[0].mxu0
      %5922 = vmatprep.mubr.bf16.mxu0 0
      %5923 = vmatmul.mubr.bf16.gmra.mrb[0].mxu0 %v5471
      %v5924 = vpop.f32.mrb[0].mxu0
      %v5925 = vadd.f32 %v5636, %v5924
      %v5926 = vpop.f32.mrb[0].mxu0
      %v5927 = vpop.f32.mrb[0].mxu0
      %v5928 = vadd.f32 %v5639, %v5927
      %v5929 = vpop.f32.mrb[0].mxu0
      %5930 = vmatprep.mubr.bf16.mxu0 0
      %5931 = vmatmul.mubr.bf16.gmra.mrb[0].mxu0 %v5474
      %v5932 = vpop.f32.mrb[0].mxu0
      %v5933 = vadd.f32 %v5644, %v5932
      %v5934 = vpop.f32.mrb[0].mxu0
      %v5935 = vpop.f32.mrb[0].mxu0
      %v5936 = vadd.f32 %v5647, %v5935
      %v5937 = vpop.f32.mrb[0].mxu0
      %5938 = vmatprep.mubr.bf16.mxu0 0
      %5939 = vmatmul.mubr.bf16.gmra.mrb[0].mxu0 %v5477
      %v5940 = vpop.f32.mrb[0].mxu0
      %v5941 = vadd.f32 %v5652, %v5940
      %v5942 = vpop.f32.mrb[0].mxu0
      %v5943 = vpop.f32.mrb[0].mxu0
      %v5944 = vadd.f32 %v5655, %v5943
      %v5945 = vpop.f32.mrb[0].mxu0
      %5946 = vmatprep.mubr.bf16.mxu0 0
      %5947 = vmatmul.mubr.bf16.gmra.mrb[0].mxu0 %v5480
      %v5948 = vpop.f32.mrb[0].mxu0
      %v5949 = vadd.f32 %v5660, %v5948
      %v5950 = vpop.f32.mrb[0].mxu0
      %v5951 = vpop.f32.mrb[0].mxu0
      %v5952 = vadd.f32 %v5663, %v5951
      %v5953 = vpop.f32.mrb[0].mxu0
      %5954 = vmatprep.mubr.bf16.mxu0 0
      %5955 = vmatmul.mubr.bf16.gmra.mrb[0].mxu0 %v5483
      %v5956 = vpop.f32.mrb[0].mxu0
      %v5957 = vadd.f32 %v5668, %v5956
      %v5958 = vpop.f32.mrb[0].mxu0
      %v5959 = vpop.f32.mrb[0].mxu0
      %v5960 = vadd.f32 %v5671, %v5959
      %v5961 = vpop.f32.mrb[0].mxu0
      %5962 = vmatprep.mubr.bf16.mxu0 0
      %5963 = vmatmul.mubr.bf16.gmra.mrb[0].mxu0 %v5486
      %v5964 = vpop.f32.mrb[0].mxu0
      %v5965 = vadd.f32 %v5676, %v5964
      %v5966 = vpop.f32.mrb[0].mxu0
      %v5967 = vpop.f32.mrb[0].mxu0
      %v5968 = vadd.f32 %v5679, %v5967
      %v5969 = vpop.f32.mrb[0].mxu0
      %5970 = vmatprep.mubr.bf16.mxu0 0
      %5971 = vmatmul.mubr.bf16.gmra.mrb[0].mxu0 %v5489
      %v5972 = vpop.f32.mrb[0].mxu0
      %v5973 = vadd.f32 %v5684, %v5972
      %v5974 = vpop.f32.mrb[0].mxu0
      %v5975 = vpop.f32.mrb[0].mxu0
      %v5976 = vadd.f32 %v5687, %v5975
      %v5977 = vpop.f32.mrb[0].mxu0
      %5978 = vmatprep.mubr.bf16.mxu0 0
      %5979 = vmatmul.mubr.bf16.gmra.mrb[0].mxu0 %v5492
      %v5980 = vpop.f32.mrb[0].mxu0
      %v5981 = vadd.f32 %v5692, %v5980
      %v5982 = vpop.f32.mrb[0].mxu0
      %v5983 = vpop.f32.mrb[0].mxu0
      %v5984 = vadd.f32 %v5695, %v5983
      %v5985 = vpop.f32.mrb[0].mxu0
      %5986 = vmatprep.mubr.bf16.mxu0 0
      %5987 = vmatmul.mubr.bf16.gmra.mrb[0].mxu0 %v5495
      %v5988 = vpop.f32.mrb[0].mxu0
      %v5989 = vadd.f32 %v5700, %v5988
      %v5990 = vpop.f32.mrb[0].mxu0
      %v5991 = vpop.f32.mrb[0].mxu0
      %v5992 = vadd.f32 %v5703, %v5991
      %v5993 = vpop.f32.mrb[0].mxu0
      %5994 = vmatprep.mubr.bf16.mxu0 0
      %5995 = vmatmul.mubr.bf16.gmra.mrb[0].mxu0 %v5498
      %v5996 = vpop.f32.mrb[0].mxu0
      %v5997 = vadd.f32 %v5708, %v5996
      %v5998 = vpop.f32.mrb[0].mxu0
      %v5999 = vpop.f32.mrb[0].mxu0
      %v6000 = vadd.f32 %v5711, %v5999
      %v6001 = vpop.f32.mrb[0].mxu0
      %6002 = vmatprep.mubr.bf16.mxu0 0
      %6003 = vmatmul.mubr.bf16.gmra.mrb[0].mxu0 %v5501
      %v6004 = vpop.f32.mrb[0].mxu0
      %v6005 = vadd.f32 %v5716, %v6004
      %v6006 = vpop.f32.mrb[0].mxu0
      %v6007 = vpop.f32.mrb[0].mxu0
      %v6008 = vadd.f32 %v5719, %v6007
      %v6009 = vpop.f32.mrb[0].mxu0
      %6010 = vmatprep.mubr.bf16.mxu0 0
      %6011 = vmatmul.mubr.bf16.gmra.mrb[0].mxu0 %v5504
      %v6012 = vpop.f32.mrb[0].mxu0
      %v6013 = vadd.f32 %v5724, %v6012
      %v6014 = vpop.f32.mrb[0].mxu0
      %v6015 = vpop.f32.mrb[0].mxu0
      %v6016 = vadd.f32 %v5727, %v6015
      %v6017 = vpop.f32.mrb[0].mxu0
      %6018 = vmatprep.mubr.bf16.mxu0 0
      %6019 = vmatmul.mubr.bf16.gmra.mrb[0].mxu0 %v5507
      %v6020 = vpop.f32.mrb[0].mxu0
      %v6021 = vadd.f32 %v5732, %v6020
      %v6022 = vpop.f32.mrb[0].mxu0
      %v6023 = vpop.f32.mrb[0].mxu0
      %v6024 = vadd.f32 %v5735, %v6023
      %v6025 = vpop.f32.mrb[0].mxu0
      %6026 = vmatprep.mubr.bf16.mxu0 0
      %6027 = vmatmul.mubr.bf16.gmra.mrb[0].mxu0 %v5510
      %v6028 = vpop.f32.mrb[0].mxu0
      %v6029 = vadd.f32 %v5740, %v6028
      %v6030 = vpop.f32.mrb[0].mxu0
      %v6031 = vpop.f32.mrb[0].mxu0
      %v6032 = vadd.f32 %v5743, %v6031
      %v6033 = vpop.f32.mrb[0].mxu0
      %6034 = vmatprep.mubr.bf16.mxu0 0
      %6035 = vmatmul.mubr.bf16.gmra.mrb[0].mxu0 %v5513
      %v6036 = vpop.f32.mrb[0].mxu0
      %v6037 = vadd.f32 %v5748, %v6036
      %v6038 = vpop.f32.mrb[0].mxu0
      %v6039 = vpop.f32.mrb[0].mxu0
      %v6040 = vadd.f32 %v5751, %v6039
      %v6041 = vpop.f32.mrb[0].mxu0
      %6042 = vmatprep.mubr.bf16.mxu0 0
      %6043 = vmatmul.mubr.bf16.gmra.mrb[0].mxu0 %v5516
      %v6044 = vpop.f32.mrb[0].mxu0
      %v6045 = vadd.f32 %v5756, %v6044
      %v6046 = vpop.f32.mrb[0].mxu0
      %v6047 = vpop.f32.mrb[0].mxu0
      %v6048 = vadd.f32 %v5759, %v6047
      %v6049 = vpop.f32.mrb[0].mxu0
      %6050 = vmatprep.mubr.bf16.mxu0 0
      %6051 = vmatmul.mubr.bf16.gmra.mrb[0].mxu0 %v5519
      %v6052 = vpop.f32.mrb[0].mxu0
      %v6053 = vadd.f32 %v5764, %v6052
      %v6054 = vpop.f32.mrb[0].mxu0
      %v6055 = vpop.f32.mrb[0].mxu0
      %v6056 = vadd.f32 %v5767, %v6055
      %v6057 = vpop.f32.mrb[0].mxu0
      %6058 = vmatprep.mubr.bf16.mxu0 0
      %6059 = vmatmul.mubr.bf16.gmra.mrb[0].mxu0 %v5522
      %v6060 = vpop.f32.mrb[0].mxu0
      %v6061 = vadd.f32 %v5772, %v6060
      %v6062 = vpop.f32.mrb[0].mxu0
      %v6063 = vpop.f32.mrb[0].mxu0
      %v6064 = vadd.f32 %v5775, %v6063
      %v6065 = vpop.f32.mrb[0].mxu0
      %6066 = vmatprep.mubr.bf16.mxu0 0
      %6067 = vmatmul.mubr.bf16.gmra.mrb[0].mxu0 %v5525
      %v6068 = vpop.f32.mrb[0].mxu0
      %v6069 = vadd.f32 %v5780, %v6068
      %v6070 = vpop.f32.mrb[0].mxu0
      %v6071 = vpop.f32.mrb[0].mxu0
      %v6072 = vadd.f32 %v5783, %v6071
      %v6073 = vpop.f32.mrb[0].mxu0
      %6074 = vmatprep.mubr.bf16.mxu0 0
      %6075 = vmatmul.mubr.bf16.gmra.mrb[0].mxu0 %v5528
      %v6076 = vpop.f32.mrb[0].mxu0
      %v6077 = vadd.f32 %v5788, %v6076
      %v6078 = vpop.f32.mrb[0].mxu0
      %v6079 = vpop.f32.mrb[0].mxu0
      %v6080 = vadd.f32 %v5791, %v6079
      %v6081 = vpop.f32.mrb[0].mxu0
      %6082 = vmatprep.mubr.bf16.mxu0 0
      %6083 = vmatmul.mubr.bf16.gmra.mrb[0].mxu0 %v5531
      %v6084 = vpop.f32.mrb[0].mxu0
      %v6085 = vadd.f32 %v5796, %v6084
      %v6086 = vpop.f32.mrb[0].mxu0
      %v6087 = vpop.f32.mrb[0].mxu0
      %v6088 = vadd.f32 %v5799, %v6087
      %v6089 = vpop.f32.mrb[0].mxu0
      %6090 = vmatprep.mubr.bf16.mxu0 0
      %6091 = vmatmul.mubr.bf16.gmra.mrb[0].mxu0 %v5534
      %v6092 = vpop.f32.mrb[0].mxu0
      %v6093 = vadd.f32 %v5804, %v6092
      %v6094 = vpop.f32.mrb[0].mxu0
      %v6095 = vpop.f32.mrb[0].mxu0
      %v6096 = vadd.f32 %v5807, %v6095
      %v6097 = vpop.f32.mrb[0].mxu0
      %6098 = vmatprep.mubr.bf16.mxu0 0
      %6099 = vmatmul.mubr.bf16.gmra.mrb[0].mxu0 %v5537
      %v6100 = vpop.f32.mrb[0].mxu0
      %v6101 = vadd.f32 %v5812, %v6100
      %v6102 = vpop.f32.mrb[0].mxu0
      %v6103 = vpop.f32.mrb[0].mxu0
      %v6104 = vadd.f32 %v5815, %v6103
      %v6105 = vpop.f32.mrb[0].mxu0
      %6106 = vmatprep.mubr.bf16.mxu0 0
      %6107 = vmatmul.mubr.bf16.gmra.mrb[0].mxu0 %v5540
      %v6108 = vpop.f32.mrb[0].mxu0
      %v6109 = vadd.f32 %v5820, %v6108
      %v6110 = vpop.f32.mrb[0].mxu0
      %v6111 = vpop.f32.mrb[0].mxu0
      %v6112 = vadd.f32 %v5823, %v6111
      %v6113 = vpop.f32.mrb[0].mxu0
      %6114 = vmatprep.mubr.bf16.mxu0 0
      %6115 = vmatmul.mubr.bf16.gmra.mrb[0].mxu0 %v5543
      %v6116 = vpop.f32.mrb[0].mxu0
      %v6117 = vadd.f32 %v5828, %v6116
      %v6118 = vpop.f32.mrb[0].mxu0
      %v6119 = vpop.f32.mrb[0].mxu0
      %v6120 = vadd.f32 %v5831, %v6119
      %v6121 = vpop.f32.mrb[0].mxu0
      %6122 = vdwg.mxu0
      %v6123 = vmax.f32 %v5869, 0.0
      %v6124 = vmax.f32 %v5872, 0.0
      %v6125 = vmax.f32 %v5877, 0.0
      %v6126 = vmax.f32 %v5880, 0.0
      %v6127 = vmax.f32 %v5885, 0.0
      %v6128 = vmax.f32 %v5888, 0.0
      %v6129 = vmax.f32 %v5893, 0.0
      %v6130 = vmax.f32 %v5896, 0.0
      %v6131 = vmax.f32 %v5901, 0.0
      %v6132 = vmax.f32 %v5904, 0.0
      %v6133 = vmax.f32 %v5909, 0.0
      %v6134 = vmax.f32 %v5912, 0.0
      %v6135 = vmax.f32 %v5917, 0.0
      %v6136 = vmax.f32 %v5920, 0.0
      %v6137 = vmax.f32 %v5925, 0.0
      %v6138 = vmax.f32 %v5928, 0.0
      %v6139 = vmax.f32 %v5933, 0.0
      %v6140 = vmax.f32 %v5936, 0.0
      %v6141 = vmax.f32 %v5941, 0.0
      %v6142 = vmax.f32 %v5944, 0.0
      %v6143 = vmax.f32 %v5949, 0.0
      %v6144 = vmax.f32 %v5952, 0.0
      %v6145 = vmax.f32 %v5957, 0.0
      %v6146 = vmax.f32 %v5960, 0.0
      %v6147 = vmax.f32 %v5965, 0.0
      %v6148 = vmax.f32 %v5968, 0.0
      %v6149 = vmax.f32 %v5973, 0.0
      %v6150 = vmax.f32 %v5976, 0.0
      %v6151 = vmax.f32 %v5981, 0.0
      %v6152 = vmax.f32 %v5984, 0.0
      %v6153 = vmax.f32 %v5989, 0.0
      %v6154 = vmax.f32 %v5992, 0.0
      %v6155 = vmax.f32 %v5997, 0.0
      %v6156 = vmax.f32 %v6000, 0.0
      %v6157 = vmax.f32 %v6005, 0.0
      %v6158 = vmax.f32 %v6008, 0.0
      %v6159 = vmax.f32 %v6013, 0.0
      %v6160 = vmax.f32 %v6016, 0.0
      %v6161 = vmax.f32 %v6021, 0.0
      %v6162 = vmax.f32 %v6024, 0.0
      %v6163 = vmax.f32 %v6029, 0.0
      %v6164 = vmax.f32 %v6032, 0.0
      %v6165 = vmax.f32 %v6037, 0.0
      %v6166 = vmax.f32 %v6040, 0.0
      %v6167 = vmax.f32 %v6045, 0.0
      %v6168 = vmax.f32 %v6048, 0.0
      %v6169 = vmax.f32 %v6053, 0.0
      %v6170 = vmax.f32 %v6056, 0.0
      %v6171 = vmax.f32 %v6061, 0.0
      %v6172 = vmax.f32 %v6064, 0.0
      %v6173 = vmax.f32 %v6069, 0.0
      %v6174 = vmax.f32 %v6072, 0.0
      %v6175 = vmax.f32 %v6077, 0.0
      %v6176 = vmax.f32 %v6080, 0.0
      %v6177 = vmax.f32 %v6085, 0.0
      %v6178 = vmax.f32 %v6088, 0.0
      %v6179 = vmax.f32 %v6093, 0.0
      %v6180 = vmax.f32 %v6096, 0.0
      %v6181 = vmax.f32 %v6101, 0.0
      %v6182 = vmax.f32 %v6104, 0.0
      %v6183 = vmax.f32 %v6109, 0.0
      %v6184 = vmax.f32 %v6112, 0.0
      %v6185 = vmax.f32 %v6117, 0.0
      %v6186 = vmax.f32 %v6120, 0.0
      %v6187 = vsel %vm3190, %v6123, -inf
      %v6188 = vsel %vm3190, %v6125, -inf
      %v6189 = vmax.f32 %v6187, %v6188
      %v6190 = vsel %vm3190, %v6124, -inf
      %v6191 = vsel %vm3190, %v6126, -inf
      %v6192 = vmax.f32 %v6190, %v6191
      %v6193 = vsel %vm3190, %v6127, -inf
      %v6194 = vsel %vm3190, %v6129, -inf
      %v6195 = vmax.f32 %v6193, %v6194
      %v6196 = vsel %vm3190, %v6128, -inf
      %v6197 = vsel %vm3190, %v6130, -inf
      %v6198 = vmax.f32 %v6196, %v6197
      %v6199 = vsel %vm3190, %v6131, -inf
      %v6200 = vsel %vm3190, %v6133, -inf
      %v6201 = vmax.f32 %v6199, %v6200
      %v6202 = vsel %vm3190, %v6132, -inf
      %v6203 = vsel %vm3190, %v6134, -inf
      %v6204 = vmax.f32 %v6202, %v6203
      %v6205 = vsel %vm3190, %v6135, -inf
      %v6206 = vsel %vm3190, %v6137, -inf
      %v6207 = vmax.f32 %v6205, %v6206
      %v6208 = vsel %vm3190, %v6136, -inf
      %v6209 = vsel %vm3190, %v6138, -inf
      %v6210 = vmax.f32 %v6208, %v6209
      %v6211 = vsel %vm3190, %v6139, -inf
      %v6212 = vsel %vm3190, %v6141, -inf
      %v6213 = vmax.f32 %v6211, %v6212
      %v6214 = vsel %vm3190, %v6140, -inf
      %v6215 = vsel %vm3190, %v6142, -inf
      %v6216 = vmax.f32 %v6214, %v6215
      %v6217 = vsel %vm3190, %v6143, -inf
      %v6218 = vsel %vm3190, %v6145, -inf
      %v6219 = vmax.f32 %v6217, %v6218
      %v6220 = vsel %vm3190, %v6144, -inf
      %v6221 = vsel %vm3190, %v6146, -inf
      %v6222 = vmax.f32 %v6220, %v6221
      %v6223 = vsel %vm3190, %v6147, -inf
      %v6224 = vsel %vm3190, %v6149, -inf
      %v6225 = vmax.f32 %v6223, %v6224
      %v6226 = vsel %vm3190, %v6148, -inf
      %v6227 = vsel %vm3190, %v6150, -inf
      %v6228 = vmax.f32 %v6226, %v6227
      %v6229 = vsel %vm3190, %v6151, -inf
      %v6230 = vsel %vm3190, %v6153, -inf
      %v6231 = vmax.f32 %v6229, %v6230
      %v6232 = vsel %vm3190, %v6152, -inf
      %v6233 = vsel %vm3190, %v6154, -inf
      %v6234 = vmax.f32 %v6232, %v6233
      %v6235 = vsel %vm3190, %v6155, -inf
      %v6236 = vsel %vm3190, %v6157, -inf
      %v6237 = vmax.f32 %v6235, %v6236
      %v6238 = vsel %vm3190, %v6156, -inf
      %v6239 = vsel %vm3190, %v6158, -inf
      %v6240 = vmax.f32 %v6238, %v6239
      %v6241 = vsel %vm3190, %v6159, -inf
      %v6242 = vsel %vm3190, %v6161, -inf
      %v6243 = vmax.f32 %v6241, %v6242
      %v6244 = vsel %vm3190, %v6160, -inf
      %v6245 = vsel %vm3190, %v6162, -inf
      %v6246 = vmax.f32 %v6244, %v6245
      %v6247 = vsel %vm3190, %v6163, -inf
      %v6248 = vsel %vm3190, %v6165, -inf
      %v6249 = vmax.f32 %v6247, %v6248
      %v6250 = vsel %vm3190, %v6164, -inf
      %v6251 = vsel %vm3190, %v6166, -inf
      %v6252 = vmax.f32 %v6250, %v6251
      %v6253 = vsel %vm3190, %v6167, -inf
      %v6254 = vsel %vm3190, %v6169, -inf
      %v6255 = vmax.f32 %v6253, %v6254
      %v6256 = vsel %vm3190, %v6168, -inf
      %v6257 = vsel %vm3190, %v6170, -inf
      %v6258 = vmax.f32 %v6256, %v6257
      %v6259 = vsel %vm3190, %v6171, -inf
      %v6260 = vsel %vm3190, %v6173, -inf
      %v6261 = vmax.f32 %v6259, %v6260
      %v6262 = vsel %vm3190, %v6172, -inf
      %v6263 = vsel %vm3190, %v6174, -inf
      %v6264 = vmax.f32 %v6262, %v6263
      %v6265 = vsel %vm3190, %v6175, -inf
      %v6266 = vsel %vm3190, %v6177, -inf
      %v6267 = vmax.f32 %v6265, %v6266
      %v6268 = vsel %vm3190, %v6176, -inf
      %v6269 = vsel %vm3190, %v6178, -inf
      %v6270 = vmax.f32 %v6268, %v6269
      %v6271 = vsel %vm3190, %v6179, -inf
      %v6272 = vsel %vm3190, %v6181, -inf
      %v6273 = vmax.f32 %v6271, %v6272
      %v6274 = vsel %vm3190, %v6180, -inf
      %v6275 = vsel %vm3190, %v6182, -inf
      %v6276 = vmax.f32 %v6274, %v6275
      %v6277 = vsel %vm3190, %v6183, -inf
      %v6278 = vsel %vm3190, %v6185, -inf
      %v6279 = vmax.f32 %v6277, %v6278
      %v6280 = vsel %vm3190, %v6184, -inf
      %v6281 = vsel %vm3190, %v6186, -inf
      %v6282 = vmax.f32 %v6280, %v6281
      %v6315 = vcombine.high %v6189, %v6189
      %v6317 = vunpack.c.l.s4 1983009808
      %v6318 = vunpack.c.0.s8 %v6317
      %v6319 = vlaneseq
      %v6320 = vshrl.u32 %v6319, 7
      %v6321 = vsub.s32 %v6318, %v6320
      %v6322 = vrot.slane %v6189, %v6321
      %v6324 = vunpack.c.l.s4 1983009808
      %v6325 = vunpack.c.0.s8 %v6324
      %v6326 = vlaneseq
      %v6327 = vshrl.u32 %v6326, 7
      %v6328 = vsub.s32 %v6325, %v6327
      %v6329 = vrot.slane %v6315, %v6328
      %v6330 = vcombine.high %v6322, %v6322
      %v6331 = vcombine.high %v6329, %v6329
      %v6332 = vcombine.high %v6192, %v6192
      %v6334 = vunpack.c.l.s4 1983009808
      %v6335 = vunpack.c.0.s8 %v6334
      %v6336 = vlaneseq
      %v6337 = vshrl.u32 %v6336, 7
      %v6338 = vsub.s32 %v6335, %v6337
      %v6339 = vrot.slane %v6192, %v6338
      %v6341 = vunpack.c.l.s4 1983009808
      %v6342 = vunpack.c.0.s8 %v6341
      %v6343 = vlaneseq
      %v6344 = vshrl.u32 %v6343, 7
      %v6345 = vsub.s32 %v6342, %v6344
      %v6346 = vrot.slane %v6332, %v6345
      %v6347 = vcombine.high %v6339, %v6339
      %v6348 = vcombine.high %v6346, %v6346
      %v6349 = vcombine.high %v6195, %v6195
      %v6351 = vunpack.c.l.s4 1983009808
      %v6352 = vunpack.c.0.s8 %v6351
      %v6353 = vlaneseq
      %v6354 = vshrl.u32 %v6353, 7
      %v6355 = vsub.s32 %v6352, %v6354
      %v6356 = vrot.slane %v6195, %v6355
      %v6358 = vunpack.c.l.s4 1983009808
      %v6359 = vunpack.c.0.s8 %v6358
      %v6360 = vlaneseq
      %v6361 = vshrl.u32 %v6360, 7
      %v6362 = vsub.s32 %v6359, %v6361
      %v6363 = vrot.slane %v6349, %v6362
      %v6364 = vcombine.high %v6356, %v6356
      %v6365 = vcombine.high %v6363, %v6363
      %v6366 = vcombine.high %v6198, %v6198
      %v6368 = vunpack.c.l.s4 1983009808
      %v6369 = vunpack.c.0.s8 %v6368
      %v6370 = vlaneseq
      %v6371 = vshrl.u32 %v6370, 7
      %v6372 = vsub.s32 %v6369, %v6371
      %v6373 = vrot.slane %v6198, %v6372
      %v6375 = vunpack.c.l.s4 1983009808
      %v6376 = vunpack.c.0.s8 %v6375
      %v6377 = vlaneseq
      %v6378 = vshrl.u32 %v6377, 7
      %v6379 = vsub.s32 %v6376, %v6378
      %v6380 = vrot.slane %v6366, %v6379
      %v6381 = vcombine.high %v6373, %v6373
      %v6382 = vcombine.high %v6380, %v6380
      %v6383 = vcombine.high %v6201, %v6201
      %v6385 = vunpack.c.l.s4 1983009808
      %v6386 = vunpack.c.0.s8 %v6385
      %v6387 = vlaneseq
      %v6388 = vshrl.u32 %v6387, 7
      %v6389 = vsub.s32 %v6386, %v6388
      %v6390 = vrot.slane %v6201, %v6389
      %v6392 = vunpack.c.l.s4 1983009808
      %v6393 = vunpack.c.0.s8 %v6392
      %v6394 = vlaneseq
      %v6395 = vshrl.u32 %v6394, 7
      %v6396 = vsub.s32 %v6393, %v6395
      %v6397 = vrot.slane %v6383, %v6396
      %v6398 = vcombine.high %v6390, %v6390
      %v6399 = vcombine.high %v6397, %v6397
      %v6400 = vcombine.high %v6204, %v6204
      %v6402 = vunpack.c.l.s4 1983009808
      %v6403 = vunpack.c.0.s8 %v6402
      %v6404 = vlaneseq
      %v6405 = vshrl.u32 %v6404, 7
      %v6406 = vsub.s32 %v6403, %v6405
      %v6407 = vrot.slane %v6204, %v6406
      %v6409 = vunpack.c.l.s4 1983009808
      %v6410 = vunpack.c.0.s8 %v6409
      %v6411 = vlaneseq
      %v6412 = vshrl.u32 %v6411, 7
      %v6413 = vsub.s32 %v6410, %v6412
      %v6414 = vrot.slane %v6400, %v6413
      %v6415 = vcombine.high %v6407, %v6407
      %v6416 = vcombine.high %v6414, %v6414
      %v6417 = vcombine.high %v6207, %v6207
      %v6419 = vunpack.c.l.s4 1983009808
      %v6420 = vunpack.c.0.s8 %v6419
      %v6421 = vlaneseq
      %v6422 = vshrl.u32 %v6421, 7
      %v6423 = vsub.s32 %v6420, %v6422
      %v6424 = vrot.slane %v6207, %v6423
      %v6426 = vunpack.c.l.s4 1983009808
      %v6427 = vunpack.c.0.s8 %v6426
      %v6428 = vlaneseq
      %v6429 = vshrl.u32 %v6428, 7
      %v6430 = vsub.s32 %v6427, %v6429
      %v6431 = vrot.slane %v6417, %v6430
      %v6432 = vcombine.high %v6424, %v6424
      %v6433 = vcombine.high %v6431, %v6431
      %v6434 = vcombine.high %v6210, %v6210
      %v6436 = vunpack.c.l.s4 1983009808
      %v6437 = vunpack.c.0.s8 %v6436
      %v6438 = vlaneseq
      %v6439 = vshrl.u32 %v6438, 7
      %v6440 = vsub.s32 %v6437, %v6439
      %v6441 = vrot.slane %v6210, %v6440
      %v6443 = vunpack.c.l.s4 1983009808
      %v6444 = vunpack.c.0.s8 %v6443
      %v6445 = vlaneseq
      %v6446 = vshrl.u32 %v6445, 7
      %v6447 = vsub.s32 %v6444, %v6446
      %v6448 = vrot.slane %v6434, %v6447
      %v6449 = vcombine.high %v6441, %v6441
      %v6450 = vcombine.high %v6448, %v6448
      %v6451 = vcombine.high %v6213, %v6213
      %v6453 = vunpack.c.l.s4 1983009808
      %v6454 = vunpack.c.0.s8 %v6453
      %v6455 = vlaneseq
      %v6456 = vshrl.u32 %v6455, 7
      %v6457 = vsub.s32 %v6454, %v6456
      %v6458 = vrot.slane %v6213, %v6457
      %v6460 = vunpack.c.l.s4 1983009808
      %v6461 = vunpack.c.0.s8 %v6460
      %v6462 = vlaneseq
      %v6463 = vshrl.u32 %v6462, 7
      %v6464 = vsub.s32 %v6461, %v6463
      %v6465 = vrot.slane %v6451, %v6464
      %v6466 = vcombine.high %v6458, %v6458
      %v6467 = vcombine.high %v6465, %v6465
      %v6468 = vcombine.high %v6216, %v6216
      %v6470 = vunpack.c.l.s4 1983009808
      %v6471 = vunpack.c.0.s8 %v6470
      %v6472 = vlaneseq
      %v6473 = vshrl.u32 %v6472, 7
      %v6474 = vsub.s32 %v6471, %v6473
      %v6475 = vrot.slane %v6216, %v6474
      %v6477 = vunpack.c.l.s4 1983009808
      %v6478 = vunpack.c.0.s8 %v6477
      %v6479 = vlaneseq
      %v6480 = vshrl.u32 %v6479, 7
      %v6481 = vsub.s32 %v6478, %v6480
      %v6482 = vrot.slane %v6468, %v6481
      %v6483 = vcombine.high %v6475, %v6475
      %v6484 = vcombine.high %v6482, %v6482
      %v6485 = vcombine.high %v6219, %v6219
      %v6487 = vunpack.c.l.s4 1983009808
      %v6488 = vunpack.c.0.s8 %v6487
      %v6489 = vlaneseq
      %v6490 = vshrl.u32 %v6489, 7
      %v6491 = vsub.s32 %v6488, %v6490
      %v6492 = vrot.slane %v6219, %v6491
      %v6494 = vunpack.c.l.s4 1983009808
      %v6495 = vunpack.c.0.s8 %v6494
      %v6496 = vlaneseq
      %v6497 = vshrl.u32 %v6496, 7
      %v6498 = vsub.s32 %v6495, %v6497
      %v6499 = vrot.slane %v6485, %v6498
      %v6500 = vcombine.high %v6492, %v6492
      %v6501 = vcombine.high %v6499, %v6499
      %v6502 = vcombine.high %v6222, %v6222
      %v6504 = vunpack.c.l.s4 1983009808
      %v6505 = vunpack.c.0.s8 %v6504
      %v6506 = vlaneseq
      %v6507 = vshrl.u32 %v6506, 7
      %v6508 = vsub.s32 %v6505, %v6507
      %v6509 = vrot.slane %v6222, %v6508
      %v6511 = vunpack.c.l.s4 1983009808
      %v6512 = vunpack.c.0.s8 %v6511
      %v6513 = vlaneseq
      %v6514 = vshrl.u32 %v6513, 7
      %v6515 = vsub.s32 %v6512, %v6514
      %v6516 = vrot.slane %v6502, %v6515
      %v6517 = vcombine.high %v6509, %v6509
      %v6518 = vcombine.high %v6516, %v6516
      %v6519 = vcombine.high %v6225, %v6225
      %v6521 = vunpack.c.l.s4 1983009808
      %v6522 = vunpack.c.0.s8 %v6521
      %v6523 = vlaneseq
      %v6524 = vshrl.u32 %v6523, 7
      %v6525 = vsub.s32 %v6522, %v6524
      %v6526 = vrot.slane %v6225, %v6525
      %v6528 = vunpack.c.l.s4 1983009808
      %v6529 = vunpack.c.0.s8 %v6528
      %v6530 = vlaneseq
      %v6531 = vshrl.u32 %v6530, 7
      %v6532 = vsub.s32 %v6529, %v6531
      %v6533 = vrot.slane %v6519, %v6532
      %v6534 = vcombine.high %v6526, %v6526
      %v6535 = vcombine.high %v6533, %v6533
      %v6536 = vcombine.high %v6228, %v6228
      %v6538 = vunpack.c.l.s4 1983009808
      %v6539 = vunpack.c.0.s8 %v6538
      %v6540 = vlaneseq
      %v6541 = vshrl.u32 %v6540, 7
      %v6542 = vsub.s32 %v6539, %v6541
      %v6543 = vrot.slane %v6228, %v6542
      %v6545 = vunpack.c.l.s4 1983009808
      %v6546 = vunpack.c.0.s8 %v6545
      %v6547 = vlaneseq
      %v6548 = vshrl.u32 %v6547, 7
      %v6549 = vsub.s32 %v6546, %v6548
      %v6550 = vrot.slane %v6536, %v6549
      %v6551 = vcombine.high %v6543, %v6543
      %v6552 = vcombine.high %v6550, %v6550
      %v6553 = vcombine.high %v6231, %v6231
      %v6555 = vunpack.c.l.s4 1983009808
      %v6556 = vunpack.c.0.s8 %v6555
      %v6557 = vlaneseq
      %v6558 = vshrl.u32 %v6557, 7
      %v6559 = vsub.s32 %v6556, %v6558
      %v6560 = vrot.slane %v6231, %v6559
      %v6562 = vunpack.c.l.s4 1983009808
      %v6563 = vunpack.c.0.s8 %v6562
      %v6564 = vlaneseq
      %v6565 = vshrl.u32 %v6564, 7
      %v6566 = vsub.s32 %v6563, %v6565
      %v6567 = vrot.slane %v6553, %v6566
      %v6568 = vcombine.high %v6560, %v6560
      %v6569 = vcombine.high %v6567, %v6567
      %v6570 = vcombine.high %v6234, %v6234
      %v6572 = vunpack.c.l.s4 1983009808
      %v6573 = vunpack.c.0.s8 %v6572
      %v6574 = vlaneseq
      %v6575 = vshrl.u32 %v6574, 7
      %v6576 = vsub.s32 %v6573, %v6575
      %v6577 = vrot.slane %v6234, %v6576
      %v6579 = vunpack.c.l.s4 1983009808
      %v6580 = vunpack.c.0.s8 %v6579
      %v6581 = vlaneseq
      %v6582 = vshrl.u32 %v6581, 7
      %v6583 = vsub.s32 %v6580, %v6582
      %v6584 = vrot.slane %v6570, %v6583
      %v6585 = vcombine.high %v6577, %v6577
      %v6586 = vcombine.high %v6584, %v6584
      %v6587 = vcombine.high %v6237, %v6237
      %v6589 = vunpack.c.l.s4 1983009808
      %v6590 = vunpack.c.0.s8 %v6589
      %v6591 = vlaneseq
      %v6592 = vshrl.u32 %v6591, 7
      %v6593 = vsub.s32 %v6590, %v6592
      %v6594 = vrot.slane %v6237, %v6593
      %v6596 = vunpack.c.l.s4 1983009808
      %v6597 = vunpack.c.0.s8 %v6596
      %v6598 = vlaneseq
      %v6599 = vshrl.u32 %v6598, 7
      %v6600 = vsub.s32 %v6597, %v6599
      %v6601 = vrot.slane %v6587, %v6600
      %v6602 = vcombine.high %v6594, %v6594
      %v6603 = vcombine.high %v6601, %v6601
      %v6604 = vcombine.high %v6240, %v6240
      %v6606 = vunpack.c.l.s4 1983009808
      %v6607 = vunpack.c.0.s8 %v6606
      %v6608 = vlaneseq
      %v6609 = vshrl.u32 %v6608, 7
      %v6610 = vsub.s32 %v6607, %v6609
      %v6611 = vrot.slane %v6240, %v6610
      %v6613 = vunpack.c.l.s4 1983009808
      %v6614 = vunpack.c.0.s8 %v6613
      %v6615 = vlaneseq
      %v6616 = vshrl.u32 %v6615, 7
      %v6617 = vsub.s32 %v6614, %v6616
      %v6618 = vrot.slane %v6604, %v6617
      %v6619 = vcombine.high %v6611, %v6611
      %v6620 = vcombine.high %v6618, %v6618
      %v6621 = vcombine.high %v6243, %v6243
      %v6623 = vunpack.c.l.s4 1983009808
      %v6624 = vunpack.c.0.s8 %v6623
      %v6625 = vlaneseq
      %v6626 = vshrl.u32 %v6625, 7
      %v6627 = vsub.s32 %v6624, %v6626
      %v6628 = vrot.slane %v6243, %v6627
      %v6630 = vunpack.c.l.s4 1983009808
      %v6631 = vunpack.c.0.s8 %v6630
      %v6632 = vlaneseq
      %v6633 = vshrl.u32 %v6632, 7
      %v6634 = vsub.s32 %v6631, %v6633
      %v6635 = vrot.slane %v6621, %v6634
      %v6636 = vcombine.high %v6628, %v6628
      %v6637 = vcombine.high %v6635, %v6635
      %v6638 = vcombine.high %v6246, %v6246
      %v6640 = vunpack.c.l.s4 1983009808
      %v6641 = vunpack.c.0.s8 %v6640
      %v6642 = vlaneseq
      %v6643 = vshrl.u32 %v6642, 7
      %v6644 = vsub.s32 %v6641, %v6643
      %v6645 = vrot.slane %v6246, %v6644
      %v6647 = vunpack.c.l.s4 1983009808
      %v6648 = vunpack.c.0.s8 %v6647
      %v6649 = vlaneseq
      %v6650 = vshrl.u32 %v6649, 7
      %v6651 = vsub.s32 %v6648, %v6650
      %v6652 = vrot.slane %v6638, %v6651
      %v6653 = vcombine.high %v6645, %v6645
      %v6654 = vcombine.high %v6652, %v6652
      %v6655 = vcombine.high %v6249, %v6249
      %v6657 = vunpack.c.l.s4 1983009808
      %v6658 = vunpack.c.0.s8 %v6657
      %v6659 = vlaneseq
      %v6660 = vshrl.u32 %v6659, 7
      %v6661 = vsub.s32 %v6658, %v6660
      %v6662 = vrot.slane %v6249, %v6661
      %v6664 = vunpack.c.l.s4 1983009808
      %v6665 = vunpack.c.0.s8 %v6664
      %v6666 = vlaneseq
      %v6667 = vshrl.u32 %v6666, 7
      %v6668 = vsub.s32 %v6665, %v6667
      %v6669 = vrot.slane %v6655, %v6668
      %v6670 = vcombine.high %v6662, %v6662
      %v6671 = vcombine.high %v6669, %v6669
      %v6672 = vcombine.high %v6252, %v6252
      %v6674 = vunpack.c.l.s4 1983009808
      %v6675 = vunpack.c.0.s8 %v6674
      %v6676 = vlaneseq
      %v6677 = vshrl.u32 %v6676, 7
      %v6678 = vsub.s32 %v6675, %v6677
      %v6679 = vrot.slane %v6252, %v6678
      %v6681 = vunpack.c.l.s4 1983009808
      %v6682 = vunpack.c.0.s8 %v6681
      %v6683 = vlaneseq
      %v6684 = vshrl.u32 %v6683, 7
      %v6685 = vsub.s32 %v6682, %v6684
      %v6686 = vrot.slane %v6672, %v6685
      %v6687 = vcombine.high %v6679, %v6679
      %v6688 = vcombine.high %v6686, %v6686
      %v6689 = vcombine.high %v6255, %v6255
      %v6691 = vunpack.c.l.s4 1983009808
      %v6692 = vunpack.c.0.s8 %v6691
      %v6693 = vlaneseq
      %v6694 = vshrl.u32 %v6693, 7
      %v6695 = vsub.s32 %v6692, %v6694
      %v6696 = vrot.slane %v6255, %v6695
      %v6698 = vunpack.c.l.s4 1983009808
      %v6699 = vunpack.c.0.s8 %v6698
      %v6700 = vlaneseq
      %v6701 = vshrl.u32 %v6700, 7
      %v6702 = vsub.s32 %v6699, %v6701
      %v6703 = vrot.slane %v6689, %v6702
      %v6704 = vcombine.high %v6696, %v6696
      %v6705 = vcombine.high %v6703, %v6703
      %v6706 = vcombine.high %v6258, %v6258
      %v6708 = vunpack.c.l.s4 1983009808
      %v6709 = vunpack.c.0.s8 %v6708
      %v6710 = vlaneseq
      %v6711 = vshrl.u32 %v6710, 7
      %v6712 = vsub.s32 %v6709, %v6711
      %v6713 = vrot.slane %v6258, %v6712
      %v6715 = vunpack.c.l.s4 1983009808
      %v6716 = vunpack.c.0.s8 %v6715
      %v6717 = vlaneseq
      %v6718 = vshrl.u32 %v6717, 7
      %v6719 = vsub.s32 %v6716, %v6718
      %v6720 = vrot.slane %v6706, %v6719
      %v6721 = vcombine.high %v6713, %v6713
      %v6722 = vcombine.high %v6720, %v6720
      %v6723 = vcombine.high %v6261, %v6261
      %v6725 = vunpack.c.l.s4 1983009808
      %v6726 = vunpack.c.0.s8 %v6725
      %v6727 = vlaneseq
      %v6728 = vshrl.u32 %v6727, 7
      %v6729 = vsub.s32 %v6726, %v6728
      %v6730 = vrot.slane %v6261, %v6729
      %v6732 = vunpack.c.l.s4 1983009808
      %v6733 = vunpack.c.0.s8 %v6732
      %v6734 = vlaneseq
      %v6735 = vshrl.u32 %v6734, 7
      %v6736 = vsub.s32 %v6733, %v6735
      %v6737 = vrot.slane %v6723, %v6736
      %v6738 = vcombine.high %v6730, %v6730
      %v6739 = vcombine.high %v6737, %v6737
      %v6740 = vcombine.high %v6264, %v6264
      %v6742 = vunpack.c.l.s4 1983009808
      %v6743 = vunpack.c.0.s8 %v6742
      %v6744 = vlaneseq
      %v6745 = vshrl.u32 %v6744, 7
      %v6746 = vsub.s32 %v6743, %v6745
      %v6747 = vrot.slane %v6264, %v6746
      %v6749 = vunpack.c.l.s4 1983009808
      %v6750 = vunpack.c.0.s8 %v6749
      %v6751 = vlaneseq
      %v6752 = vshrl.u32 %v6751, 7
      %v6753 = vsub.s32 %v6750, %v6752
      %v6754 = vrot.slane %v6740, %v6753
      %v6755 = vcombine.high %v6747, %v6747
      %v6756 = vcombine.high %v6754, %v6754
      %v6757 = vcombine.high %v6267, %v6267
      %v6759 = vunpack.c.l.s4 1983009808
      %v6760 = vunpack.c.0.s8 %v6759
      %v6761 = vlaneseq
      %v6762 = vshrl.u32 %v6761, 7
      %v6763 = vsub.s32 %v6760, %v6762
      %v6764 = vrot.slane %v6267, %v6763
      %v6766 = vunpack.c.l.s4 1983009808
      %v6767 = vunpack.c.0.s8 %v6766
      %v6768 = vlaneseq
      %v6769 = vshrl.u32 %v6768, 7
      %v6770 = vsub.s32 %v6767, %v6769
      %v6771 = vrot.slane %v6757, %v6770
      %v6772 = vcombine.high %v6764, %v6764
      %v6773 = vcombine.high %v6771, %v6771
      %v6774 = vcombine.high %v6270, %v6270
      %v6776 = vunpack.c.l.s4 1983009808
      %v6777 = vunpack.c.0.s8 %v6776
      %v6778 = vlaneseq
      %v6779 = vshrl.u32 %v6778, 7
      %v6780 = vsub.s32 %v6777, %v6779
      %v6781 = vrot.slane %v6270, %v6780
      %v6783 = vunpack.c.l.s4 1983009808
      %v6784 = vunpack.c.0.s8 %v6783
      %v6785 = vlaneseq
      %v6786 = vshrl.u32 %v6785, 7
      %v6787 = vsub.s32 %v6784, %v6786
      %v6788 = vrot.slane %v6774, %v6787
      %v6789 = vcombine.high %v6781, %v6781
      %v6790 = vcombine.high %v6788, %v6788
      %v6791 = vcombine.high %v6273, %v6273
      %v6793 = vunpack.c.l.s4 1983009808
      %v6794 = vunpack.c.0.s8 %v6793
      %v6795 = vlaneseq
      %v6796 = vshrl.u32 %v6795, 7
      %v6797 = vsub.s32 %v6794, %v6796
      %v6798 = vrot.slane %v6273, %v6797
      %v6800 = vunpack.c.l.s4 1983009808
      %v6801 = vunpack.c.0.s8 %v6800
      %v6802 = vlaneseq
      %v6803 = vshrl.u32 %v6802, 7
      %v6804 = vsub.s32 %v6801, %v6803
      %v6805 = vrot.slane %v6791, %v6804
      %v6806 = vcombine.high %v6798, %v6798
      %v6807 = vcombine.high %v6805, %v6805
      %v6808 = vcombine.high %v6276, %v6276
      %v6810 = vunpack.c.l.s4 1983009808
      %v6811 = vunpack.c.0.s8 %v6810
      %v6812 = vlaneseq
      %v6813 = vshrl.u32 %v6812, 7
      %v6814 = vsub.s32 %v6811, %v6813
      %v6815 = vrot.slane %v6276, %v6814
      %v6817 = vunpack.c.l.s4 1983009808
      %v6818 = vunpack.c.0.s8 %v6817
      %v6819 = vlaneseq
      %v6820 = vshrl.u32 %v6819, 7
      %v6821 = vsub.s32 %v6818, %v6820
      %v6822 = vrot.slane %v6808, %v6821
      %v6823 = vcombine.high %v6815, %v6815
      %v6824 = vcombine.high %v6822, %v6822
      %v6825 = vcombine.high %v6279, %v6279
      %v6827 = vunpack.c.l.s4 1983009808
      %v6828 = vunpack.c.0.s8 %v6827
      %v6829 = vlaneseq
      %v6830 = vshrl.u32 %v6829, 7
      %v6831 = vsub.s32 %v6828, %v6830
      %v6832 = vrot.slane %v6279, %v6831
      %v6834 = vunpack.c.l.s4 1983009808
      %v6835 = vunpack.c.0.s8 %v6834
      %v6836 = vlaneseq
      %v6837 = vshrl.u32 %v6836, 7
      %v6838 = vsub.s32 %v6835, %v6837
      %v6839 = vrot.slane %v6825, %v6838
      %v6840 = vcombine.high %v6832, %v6832
      %v6841 = vcombine.high %v6839, %v6839
      %v6842 = vcombine.high %v6282, %v6282
      %v6844 = vunpack.c.l.s4 1983009808
      %v6845 = vunpack.c.0.s8 %v6844
      %v6846 = vlaneseq
      %v6847 = vshrl.u32 %v6846, 7
      %v6848 = vsub.s32 %v6845, %v6847
      %v6849 = vrot.slane %v6282, %v6848
      %v6851 = vunpack.c.l.s4 1983009808
      %v6852 = vunpack.c.0.s8 %v6851
      %v6853 = vlaneseq
      %v6854 = vshrl.u32 %v6853, 7
      %v6855 = vsub.s32 %v6852, %v6854
      %v6856 = vrot.slane %v6842, %v6855
      %v6857 = vcombine.high %v6849, %v6849
      %v6858 = vcombine.high %v6856, %v6856
      %v6987 = vsel %vm3193, %v6322, -inf
      %v6988 = vrot.slane %v6987, 4
      %v6989 = vmax.f32 %v6987, %v6988
      %v6990 = vrot.slane %v6989, 2
      %v6991 = vmax.f32 %v6989, %v6990
      %v6992 = vrot.slane %v6991, 1
      %v6993 = vmax.f32 %v6991, %v6992
      %v6994 = vsel %vm3193, %v6330, -inf
      %v6995 = vrot.slane %v6994, 4
      %v6996 = vmax.f32 %v6994, %v6995
      %v6997 = vrot.slane %v6996, 2
      %v6998 = vmax.f32 %v6996, %v6997
      %v6999 = vrot.slane %v6998, 1
      %v7000 = vmax.f32 %v6998, %v6999
      %v7001 = vsel %vm3193, %v6329, -inf
      %v7002 = vrot.slane %v7001, 4
      %v7003 = vmax.f32 %v7001, %v7002
      %v7004 = vrot.slane %v7003, 2
      %v7005 = vmax.f32 %v7003, %v7004
      %v7006 = vrot.slane %v7005, 1
      %v7007 = vmax.f32 %v7005, %v7006
      %v7008 = vsel %vm3193, %v6331, -inf
      %v7009 = vrot.slane %v7008, 4
      %v7010 = vmax.f32 %v7008, %v7009
      %v7011 = vrot.slane %v7010, 2
      %v7012 = vmax.f32 %v7010, %v7011
      %v7013 = vrot.slane %v7012, 1
      %v7014 = vmax.f32 %v7012, %v7013
      %v7015 = vsel %vm3193, %v6339, -inf
      %v7016 = vrot.slane %v7015, 4
      %v7017 = vmax.f32 %v7015, %v7016
      %v7018 = vrot.slane %v7017, 2
      %v7019 = vmax.f32 %v7017, %v7018
      %v7020 = vrot.slane %v7019, 1
      %v7021 = vmax.f32 %v7019, %v7020
      %v7022 = vsel %vm3193, %v6347, -inf
      %v7023 = vrot.slane %v7022, 4
      %v7024 = vmax.f32 %v7022, %v7023
      %v7025 = vrot.slane %v7024, 2
      %v7026 = vmax.f32 %v7024, %v7025
      %v7027 = vrot.slane %v7026, 1
      %v7028 = vmax.f32 %v7026, %v7027
      %v7029 = vsel %vm3193, %v6346, -inf
      %v7030 = vrot.slane %v7029, 4
      %v7031 = vmax.f32 %v7029, %v7030
      %v7032 = vrot.slane %v7031, 2
      %v7033 = vmax.f32 %v7031, %v7032
      %v7034 = vrot.slane %v7033, 1
      %v7035 = vmax.f32 %v7033, %v7034
      %v7036 = vsel %vm3193, %v6348, -inf
      %v7037 = vrot.slane %v7036, 4
      %v7038 = vmax.f32 %v7036, %v7037
      %v7039 = vrot.slane %v7038, 2
      %v7040 = vmax.f32 %v7038, %v7039
      %v7041 = vrot.slane %v7040, 1
      %v7042 = vmax.f32 %v7040, %v7041
      %v7043 = vsel %vm3193, %v6356, -inf
      %v7044 = vrot.slane %v7043, 4
      %v7045 = vmax.f32 %v7043, %v7044
      %v7046 = vrot.slane %v7045, 2
      %v7047 = vmax.f32 %v7045, %v7046
      %v7048 = vrot.slane %v7047, 1
      %v7049 = vmax.f32 %v7047, %v7048
      %v7050 = vsel %vm3193, %v6364, -inf
      %v7051 = vrot.slane %v7050, 4
      %v7052 = vmax.f32 %v7050, %v7051
      %v7053 = vrot.slane %v7052, 2
      %v7054 = vmax.f32 %v7052, %v7053
      %v7055 = vrot.slane %v7054, 1
      %v7056 = vmax.f32 %v7054, %v7055
      %v7057 = vsel %vm3193, %v6363, -inf
      %v7058 = vrot.slane %v7057, 4
      %v7059 = vmax.f32 %v7057, %v7058
      %v7060 = vrot.slane %v7059, 2
      %v7061 = vmax.f32 %v7059, %v7060
      %v7062 = vrot.slane %v7061, 1
      %v7063 = vmax.f32 %v7061, %v7062
      %v7064 = vsel %vm3193, %v6365, -inf
      %v7065 = vrot.slane %v7064, 4
      %v7066 = vmax.f32 %v7064, %v7065
      %v7067 = vrot.slane %v7066, 2
      %v7068 = vmax.f32 %v7066, %v7067
      %v7069 = vrot.slane %v7068, 1
      %v7070 = vmax.f32 %v7068, %v7069
      %v7071 = vsel %vm3193, %v6373, -inf
      %v7072 = vrot.slane %v7071, 4
      %v7073 = vmax.f32 %v7071, %v7072
      %v7074 = vrot.slane %v7073, 2
      %v7075 = vmax.f32 %v7073, %v7074
      %v7076 = vrot.slane %v7075, 1
      %v7077 = vmax.f32 %v7075, %v7076
      %v7078 = vsel %vm3193, %v6381, -inf
      %v7079 = vrot.slane %v7078, 4
      %v7080 = vmax.f32 %v7078, %v7079
      %v7081 = vrot.slane %v7080, 2
      %v7082 = vmax.f32 %v7080, %v7081
      %v7083 = vrot.slane %v7082, 1
      %v7084 = vmax.f32 %v7082, %v7083
      %v7085 = vsel %vm3193, %v6380, -inf
      %v7086 = vrot.slane %v7085, 4
      %v7087 = vmax.f32 %v7085, %v7086
      %v7088 = vrot.slane %v7087, 2
      %v7089 = vmax.f32 %v7087, %v7088
      %v7090 = vrot.slane %v7089, 1
      %v7091 = vmax.f32 %v7089, %v7090
      %v7092 = vsel %vm3193, %v6382, -inf
      %v7093 = vrot.slane %v7092, 4
      %v7094 = vmax.f32 %v7092, %v7093
      %v7095 = vrot.slane %v7094, 2
      %v7096 = vmax.f32 %v7094, %v7095
      %v7097 = vrot.slane %v7096, 1
      %v7098 = vmax.f32 %v7096, %v7097
      %v7099 = vsel %vm3193, %v6390, -inf
      %v7100 = vrot.slane %v7099, 4
      %v7101 = vmax.f32 %v7099, %v7100
      %v7102 = vrot.slane %v7101, 2
      %v7103 = vmax.f32 %v7101, %v7102
      %v7104 = vrot.slane %v7103, 1
      %v7105 = vmax.f32 %v7103, %v7104
      %v7106 = vsel %vm3193, %v6398, -inf
      %v7107 = vrot.slane %v7106, 4
      %v7108 = vmax.f32 %v7106, %v7107
      %v7109 = vrot.slane %v7108, 2
      %v7110 = vmax.f32 %v7108, %v7109
      %v7111 = vrot.slane %v7110, 1
      %v7112 = vmax.f32 %v7110, %v7111
      %v7113 = vsel %vm3193, %v6397, -inf
      %v7114 = vrot.slane %v7113, 4
      %v7115 = vmax.f32 %v7113, %v7114
      %v7116 = vrot.slane %v7115, 2
      %v7117 = vmax.f32 %v7115, %v7116
      %v7118 = vrot.slane %v7117, 1
      %v7119 = vmax.f32 %v7117, %v7118
      %v7120 = vsel %vm3193, %v6399, -inf
      %v7121 = vrot.slane %v7120, 4
      %v7122 = vmax.f32 %v7120, %v7121
      %v7123 = vrot.slane %v7122, 2
      %v7124 = vmax.f32 %v7122, %v7123
      %v7125 = vrot.slane %v7124, 1
      %v7126 = vmax.f32 %v7124, %v7125
      %v7127 = vsel %vm3193, %v6407, -inf
      %v7128 = vrot.slane %v7127, 4
      %v7129 = vmax.f32 %v7127, %v7128
      %v7130 = vrot.slane %v7129, 2
      %v7131 = vmax.f32 %v7129, %v7130
      %v7132 = vrot.slane %v7131, 1
      %v7133 = vmax.f32 %v7131, %v7132
      %v7134 = vsel %vm3193, %v6415, -inf
      %v7135 = vrot.slane %v7134, 4
      %v7136 = vmax.f32 %v7134, %v7135
      %v7137 = vrot.slane %v7136, 2
      %v7138 = vmax.f32 %v7136, %v7137
      %v7139 = vrot.slane %v7138, 1
      %v7140 = vmax.f32 %v7138, %v7139
      %v7141 = vsel %vm3193, %v6414, -inf
      %v7142 = vrot.slane %v7141, 4
      %v7143 = vmax.f32 %v7141, %v7142
      %v7144 = vrot.slane %v7143, 2
      %v7145 = vmax.f32 %v7143, %v7144
      %v7146 = vrot.slane %v7145, 1
      %v7147 = vmax.f32 %v7145, %v7146
      %v7148 = vsel %vm3193, %v6416, -inf
      %v7149 = vrot.slane %v7148, 4
      %v7150 = vmax.f32 %v7148, %v7149
      %v7151 = vrot.slane %v7150, 2
      %v7152 = vmax.f32 %v7150, %v7151
      %v7153 = vrot.slane %v7152, 1
      %v7154 = vmax.f32 %v7152, %v7153
      %v7155 = vsel %vm3193, %v6424, -inf
      %v7156 = vrot.slane %v7155, 4
      %v7157 = vmax.f32 %v7155, %v7156
      %v7158 = vrot.slane %v7157, 2
      %v7159 = vmax.f32 %v7157, %v7158
      %v7160 = vrot.slane %v7159, 1
      %v7161 = vmax.f32 %v7159, %v7160
      %v7162 = vsel %vm3193, %v6432, -inf
      %v7163 = vrot.slane %v7162, 4
      %v7164 = vmax.f32 %v7162, %v7163
      %v7165 = vrot.slane %v7164, 2
      %v7166 = vmax.f32 %v7164, %v7165
      %v7167 = vrot.slane %v7166, 1
      %v7168 = vmax.f32 %v7166, %v7167
      %v7169 = vsel %vm3193, %v6431, -inf
      %v7170 = vrot.slane %v7169, 4
      %v7171 = vmax.f32 %v7169, %v7170
      %v7172 = vrot.slane %v7171, 2
      %v7173 = vmax.f32 %v7171, %v7172
      %v7174 = vrot.slane %v7173, 1
      %v7175 = vmax.f32 %v7173, %v7174
      %v7176 = vsel %vm3193, %v6433, -inf
      %v7177 = vrot.slane %v7176, 4
      %v7178 = vmax.f32 %v7176, %v7177
      %v7179 = vrot.slane %v7178, 2
      %v7180 = vmax.f32 %v7178, %v7179
      %v7181 = vrot.slane %v7180, 1
      %v7182 = vmax.f32 %v7180, %v7181
      %v7183 = vsel %vm3193, %v6441, -inf
      %v7184 = vrot.slane %v7183, 4
      %v7185 = vmax.f32 %v7183, %v7184
      %v7186 = vrot.slane %v7185, 2
      %v7187 = vmax.f32 %v7185, %v7186
      %v7188 = vrot.slane %v7187, 1
      %v7189 = vmax.f32 %v7187, %v7188
      %v7190 = vsel %vm3193, %v6449, -inf
      %v7191 = vrot.slane %v7190, 4
      %v7192 = vmax.f32 %v7190, %v7191
      %v7193 = vrot.slane %v7192, 2
      %v7194 = vmax.f32 %v7192, %v7193
      %v7195 = vrot.slane %v7194, 1
      %v7196 = vmax.f32 %v7194, %v7195
      %v7197 = vsel %vm3193, %v6448, -inf
      %v7198 = vrot.slane %v7197, 4
      %v7199 = vmax.f32 %v7197, %v7198
      %v7200 = vrot.slane %v7199, 2
      %v7201 = vmax.f32 %v7199, %v7200
      %v7202 = vrot.slane %v7201, 1
      %v7203 = vmax.f32 %v7201, %v7202
      %v7204 = vsel %vm3193, %v6450, -inf
      %v7205 = vrot.slane %v7204, 4
      %v7206 = vmax.f32 %v7204, %v7205
      %v7207 = vrot.slane %v7206, 2
      %v7208 = vmax.f32 %v7206, %v7207
      %v7209 = vrot.slane %v7208, 1
      %v7210 = vmax.f32 %v7208, %v7209
      %v7211 = vsel %vm3193, %v6458, -inf
      %v7212 = vrot.slane %v7211, 4
      %v7213 = vmax.f32 %v7211, %v7212
      %v7214 = vrot.slane %v7213, 2
      %v7215 = vmax.f32 %v7213, %v7214
      %v7216 = vrot.slane %v7215, 1
      %v7217 = vmax.f32 %v7215, %v7216
      %v7218 = vsel %vm3193, %v6466, -inf
      %v7219 = vrot.slane %v7218, 4
      %v7220 = vmax.f32 %v7218, %v7219
      %v7221 = vrot.slane %v7220, 2
      %v7222 = vmax.f32 %v7220, %v7221
      %v7223 = vrot.slane %v7222, 1
      %v7224 = vmax.f32 %v7222, %v7223
      %v7225 = vsel %vm3193, %v6465, -inf
      %v7226 = vrot.slane %v7225, 4
      %v7227 = vmax.f32 %v7225, %v7226
      %v7228 = vrot.slane %v7227, 2
      %v7229 = vmax.f32 %v7227, %v7228
      %v7230 = vrot.slane %v7229, 1
      %v7231 = vmax.f32 %v7229, %v7230
      %v7232 = vsel %vm3193, %v6467, -inf
      %v7233 = vrot.slane %v7232, 4
      %v7234 = vmax.f32 %v7232, %v7233
      %v7235 = vrot.slane %v7234, 2
      %v7236 = vmax.f32 %v7234, %v7235
      %v7237 = vrot.slane %v7236, 1
      %v7238 = vmax.f32 %v7236, %v7237
      %v7239 = vsel %vm3193, %v6475, -inf
      %v7240 = vrot.slane %v7239, 4
      %v7241 = vmax.f32 %v7239, %v7240
      %v7242 = vrot.slane %v7241, 2
      %v7243 = vmax.f32 %v7241, %v7242
      %v7244 = vrot.slane %v7243, 1
      %v7245 = vmax.f32 %v7243, %v7244
      %v7246 = vsel %vm3193, %v6483, -inf
      %v7247 = vrot.slane %v7246, 4
      %v7248 = vmax.f32 %v7246, %v7247
      %v7249 = vrot.slane %v7248, 2
      %v7250 = vmax.f32 %v7248, %v7249
      %v7251 = vrot.slane %v7250, 1
      %v7252 = vmax.f32 %v7250, %v7251
      %v7253 = vsel %vm3193, %v6482, -inf
      %v7254 = vrot.slane %v7253, 4
      %v7255 = vmax.f32 %v7253, %v7254
      %v7256 = vrot.slane %v7255, 2
      %v7257 = vmax.f32 %v7255, %v7256
      %v7258 = vrot.slane %v7257, 1
      %v7259 = vmax.f32 %v7257, %v7258
      %v7260 = vsel %vm3193, %v6484, -inf
      %v7261 = vrot.slane %v7260, 4
      %v7262 = vmax.f32 %v7260, %v7261
      %v7263 = vrot.slane %v7262, 2
      %v7264 = vmax.f32 %v7262, %v7263
      %v7265 = vrot.slane %v7264, 1
      %v7266 = vmax.f32 %v7264, %v7265
      %v7267 = vsel %vm3193, %v6492, -inf
      %v7268 = vrot.slane %v7267, 4
      %v7269 = vmax.f32 %v7267, %v7268
      %v7270 = vrot.slane %v7269, 2
      %v7271 = vmax.f32 %v7269, %v7270
      %v7272 = vrot.slane %v7271, 1
      %v7273 = vmax.f32 %v7271, %v7272
      %v7274 = vsel %vm3193, %v6500, -inf
      %v7275 = vrot.slane %v7274, 4
      %v7276 = vmax.f32 %v7274, %v7275
      %v7277 = vrot.slane %v7276, 2
      %v7278 = vmax.f32 %v7276, %v7277
      %v7279 = vrot.slane %v7278, 1
      %v7280 = vmax.f32 %v7278, %v7279
      %v7281 = vsel %vm3193, %v6499, -inf
      %v7282 = vrot.slane %v7281, 4
      %v7283 = vmax.f32 %v7281, %v7282
      %v7284 = vrot.slane %v7283, 2
      %v7285 = vmax.f32 %v7283, %v7284
      %v7286 = vrot.slane %v7285, 1
      %v7287 = vmax.f32 %v7285, %v7286
      %v7288 = vsel %vm3193, %v6501, -inf
      %v7289 = vrot.slane %v7288, 4
      %v7290 = vmax.f32 %v7288, %v7289
      %v7291 = vrot.slane %v7290, 2
      %v7292 = vmax.f32 %v7290, %v7291
      %v7293 = vrot.slane %v7292, 1
      %v7294 = vmax.f32 %v7292, %v7293
      %v7295 = vsel %vm3193, %v6509, -inf
      %v7296 = vrot.slane %v7295, 4
      %v7297 = vmax.f32 %v7295, %v7296
      %v7298 = vrot.slane %v7297, 2
      %v7299 = vmax.f32 %v7297, %v7298
      %v7300 = vrot.slane %v7299, 1
      %v7301 = vmax.f32 %v7299, %v7300
      %v7302 = vsel %vm3193, %v6517, -inf
      %v7303 = vrot.slane %v7302, 4
      %v7304 = vmax.f32 %v7302, %v7303
      %v7305 = vrot.slane %v7304, 2
      %v7306 = vmax.f32 %v7304, %v7305
      %v7307 = vrot.slane %v7306, 1
      %v7308 = vmax.f32 %v7306, %v7307
      %v7309 = vsel %vm3193, %v6516, -inf
      %v7310 = vrot.slane %v7309, 4
      %v7311 = vmax.f32 %v7309, %v7310
      %v7312 = vrot.slane %v7311, 2
      %v7313 = vmax.f32 %v7311, %v7312
      %v7314 = vrot.slane %v7313, 1
      %v7315 = vmax.f32 %v7313, %v7314
      %v7316 = vsel %vm3193, %v6518, -inf
      %v7317 = vrot.slane %v7316, 4
      %v7318 = vmax.f32 %v7316, %v7317
      %v7319 = vrot.slane %v7318, 2
      %v7320 = vmax.f32 %v7318, %v7319
      %v7321 = vrot.slane %v7320, 1
      %v7322 = vmax.f32 %v7320, %v7321
      %v7323 = vsel %vm3193, %v6526, -inf
      %v7324 = vrot.slane %v7323, 4
      %v7325 = vmax.f32 %v7323, %v7324
      %v7326 = vrot.slane %v7325, 2
      %v7327 = vmax.f32 %v7325, %v7326
      %v7328 = vrot.slane %v7327, 1
      %v7329 = vmax.f32 %v7327, %v7328
      %v7330 = vsel %vm3193, %v6534, -inf
      %v7331 = vrot.slane %v7330, 4
      %v7332 = vmax.f32 %v7330, %v7331
      %v7333 = vrot.slane %v7332, 2
      %v7334 = vmax.f32 %v7332, %v7333
      %v7335 = vrot.slane %v7334, 1
      %v7336 = vmax.f32 %v7334, %v7335
      %v7337 = vsel %vm3193, %v6533, -inf
      %v7338 = vrot.slane %v7337, 4
      %v7339 = vmax.f32 %v7337, %v7338
      %v7340 = vrot.slane %v7339, 2
      %v7341 = vmax.f32 %v7339, %v7340
      %v7342 = vrot.slane %v7341, 1
      %v7343 = vmax.f32 %v7341, %v7342
      %v7344 = vsel %vm3193, %v6535, -inf
      %v7345 = vrot.slane %v7344, 4
      %v7346 = vmax.f32 %v7344, %v7345
      %v7347 = vrot.slane %v7346, 2
      %v7348 = vmax.f32 %v7346, %v7347
      %v7349 = vrot.slane %v7348, 1
      %v7350 = vmax.f32 %v7348, %v7349
      %v7351 = vsel %vm3193, %v6543, -inf
      %v7352 = vrot.slane %v7351, 4
      %v7353 = vmax.f32 %v7351, %v7352
      %v7354 = vrot.slane %v7353, 2
      %v7355 = vmax.f32 %v7353, %v7354
      %v7356 = vrot.slane %v7355, 1
      %v7357 = vmax.f32 %v7355, %v7356
      %v7358 = vsel %vm3193, %v6551, -inf
      %v7359 = vrot.slane %v7358, 4
      %v7360 = vmax.f32 %v7358, %v7359
      %v7361 = vrot.slane %v7360, 2
      %v7362 = vmax.f32 %v7360, %v7361
      %v7363 = vrot.slane %v7362, 1
      %v7364 = vmax.f32 %v7362, %v7363
      %v7365 = vsel %vm3193, %v6550, -inf
      %v7366 = vrot.slane %v7365, 4
      %v7367 = vmax.f32 %v7365, %v7366
      %v7368 = vrot.slane %v7367, 2
      %v7369 = vmax.f32 %v7367, %v7368
      %v7370 = vrot.slane %v7369, 1
      %v7371 = vmax.f32 %v7369, %v7370
      %v7372 = vsel %vm3193, %v6552, -inf
      %v7373 = vrot.slane %v7372, 4
      %v7374 = vmax.f32 %v7372, %v7373
      %v7375 = vrot.slane %v7374, 2
      %v7376 = vmax.f32 %v7374, %v7375
      %v7377 = vrot.slane %v7376, 1
      %v7378 = vmax.f32 %v7376, %v7377
      %v7379 = vsel %vm3193, %v6560, -inf
      %v7380 = vrot.slane %v7379, 4
      %v7381 = vmax.f32 %v7379, %v7380
      %v7382 = vrot.slane %v7381, 2
      %v7383 = vmax.f32 %v7381, %v7382
      %v7384 = vrot.slane %v7383, 1
      %v7385 = vmax.f32 %v7383, %v7384
      %v7386 = vsel %vm3193, %v6568, -inf
      %v7387 = vrot.slane %v7386, 4
      %v7388 = vmax.f32 %v7386, %v7387
      %v7389 = vrot.slane %v7388, 2
      %v7390 = vmax.f32 %v7388, %v7389
      %v7391 = vrot.slane %v7390, 1
      %v7392 = vmax.f32 %v7390, %v7391
      %v7393 = vsel %vm3193, %v6567, -inf
      %v7394 = vrot.slane %v7393, 4
      %v7395 = vmax.f32 %v7393, %v7394
      %v7396 = vrot.slane %v7395, 2
      %v7397 = vmax.f32 %v7395, %v7396
      %v7398 = vrot.slane %v7397, 1
      %v7399 = vmax.f32 %v7397, %v7398
      %v7400 = vsel %vm3193, %v6569, -inf
      %v7401 = vrot.slane %v7400, 4
      %v7402 = vmax.f32 %v7400, %v7401
      %v7403 = vrot.slane %v7402, 2
      %v7404 = vmax.f32 %v7402, %v7403
      %v7405 = vrot.slane %v7404, 1
      %v7406 = vmax.f32 %v7404, %v7405
      %v7407 = vsel %vm3193, %v6577, -inf
      %v7408 = vrot.slane %v7407, 4
      %v7409 = vmax.f32 %v7407, %v7408
      %v7410 = vrot.slane %v7409, 2
      %v7411 = vmax.f32 %v7409, %v7410
      %v7412 = vrot.slane %v7411, 1
      %v7413 = vmax.f32 %v7411, %v7412
      %v7414 = vsel %vm3193, %v6585, -inf
      %v7415 = vrot.slane %v7414, 4
      %v7416 = vmax.f32 %v7414, %v7415
      %v7417 = vrot.slane %v7416, 2
      %v7418 = vmax.f32 %v7416, %v7417
      %v7419 = vrot.slane %v7418, 1
      %v7420 = vmax.f32 %v7418, %v7419
      %v7421 = vsel %vm3193, %v6584, -inf
      %v7422 = vrot.slane %v7421, 4
      %v7423 = vmax.f32 %v7421, %v7422
      %v7424 = vrot.slane %v7423, 2
      %v7425 = vmax.f32 %v7423, %v7424
      %v7426 = vrot.slane %v7425, 1
      %v7427 = vmax.f32 %v7425, %v7426
      %v7428 = vsel %vm3193, %v6586, -inf
      %v7429 = vrot.slane %v7428, 4
      %v7430 = vmax.f32 %v7428, %v7429
      %v7431 = vrot.slane %v7430, 2
      %v7432 = vmax.f32 %v7430, %v7431
      %v7433 = vrot.slane %v7432, 1
      %v7434 = vmax.f32 %v7432, %v7433
      %v7435 = vsel %vm3193, %v6594, -inf
      %v7436 = vrot.slane %v7435, 4
      %v7437 = vmax.f32 %v7435, %v7436
      %v7438 = vrot.slane %v7437, 2
      %v7439 = vmax.f32 %v7437, %v7438
      %v7440 = vrot.slane %v7439, 1
      %v7441 = vmax.f32 %v7439, %v7440
      %v7442 = vsel %vm3193, %v6602, -inf
      %v7443 = vrot.slane %v7442, 4
      %v7444 = vmax.f32 %v7442, %v7443
      %v7445 = vrot.slane %v7444, 2
      %v7446 = vmax.f32 %v7444, %v7445
      %v7447 = vrot.slane %v7446, 1
      %v7448 = vmax.f32 %v7446, %v7447
      %v7449 = vsel %vm3193, %v6601, -inf
      %v7450 = vrot.slane %v7449, 4
      %v7451 = vmax.f32 %v7449, %v7450
      %v7452 = vrot.slane %v7451, 2
      %v7453 = vmax.f32 %v7451, %v7452
      %v7454 = vrot.slane %v7453, 1
      %v7455 = vmax.f32 %v7453, %v7454
      %v7456 = vsel %vm3193, %v6603, -inf
      %v7457 = vrot.slane %v7456, 4
      %v7458 = vmax.f32 %v7456, %v7457
      %v7459 = vrot.slane %v7458, 2
      %v7460 = vmax.f32 %v7458, %v7459
      %v7461 = vrot.slane %v7460, 1
      %v7462 = vmax.f32 %v7460, %v7461
      %v7463 = vsel %vm3193, %v6611, -inf
      %v7464 = vrot.slane %v7463, 4
      %v7465 = vmax.f32 %v7463, %v7464
      %v7466 = vrot.slane %v7465, 2
      %v7467 = vmax.f32 %v7465, %v7466
      %v7468 = vrot.slane %v7467, 1
      %v7469 = vmax.f32 %v7467, %v7468
      %v7470 = vsel %vm3193, %v6619, -inf
      %v7471 = vrot.slane %v7470, 4
      %v7472 = vmax.f32 %v7470, %v7471
      %v7473 = vrot.slane %v7472, 2
      %v7474 = vmax.f32 %v7472, %v7473
      %v7475 = vrot.slane %v7474, 1
      %v7476 = vmax.f32 %v7474, %v7475
      %v7477 = vsel %vm3193, %v6618, -inf
      %v7478 = vrot.slane %v7477, 4
      %v7479 = vmax.f32 %v7477, %v7478
      %v7480 = vrot.slane %v7479, 2
      %v7481 = vmax.f32 %v7479, %v7480
      %v7482 = vrot.slane %v7481, 1
      %v7483 = vmax.f32 %v7481, %v7482
      %v7484 = vsel %vm3193, %v6620, -inf
      %v7485 = vrot.slane %v7484, 4
      %v7486 = vmax.f32 %v7484, %v7485
      %v7487 = vrot.slane %v7486, 2
      %v7488 = vmax.f32 %v7486, %v7487
      %v7489 = vrot.slane %v7488, 1
      %v7490 = vmax.f32 %v7488, %v7489
      %v7491 = vsel %vm3193, %v6628, -inf
      %v7492 = vrot.slane %v7491, 4
      %v7493 = vmax.f32 %v7491, %v7492
      %v7494 = vrot.slane %v7493, 2
      %v7495 = vmax.f32 %v7493, %v7494
      %v7496 = vrot.slane %v7495, 1
      %v7497 = vmax.f32 %v7495, %v7496
      %v7498 = vsel %vm3193, %v6636, -inf
      %v7499 = vrot.slane %v7498, 4
      %v7500 = vmax.f32 %v7498, %v7499
      %v7501 = vrot.slane %v7500, 2
      %v7502 = vmax.f32 %v7500, %v7501
      %v7503 = vrot.slane %v7502, 1
      %v7504 = vmax.f32 %v7502, %v7503
      %v7505 = vsel %vm3193, %v6635, -inf
      %v7506 = vrot.slane %v7505, 4
      %v7507 = vmax.f32 %v7505, %v7506
      %v7508 = vrot.slane %v7507, 2
      %v7509 = vmax.f32 %v7507, %v7508
      %v7510 = vrot.slane %v7509, 1
      %v7511 = vmax.f32 %v7509, %v7510
      %v7512 = vsel %vm3193, %v6637, -inf
      %v7513 = vrot.slane %v7512, 4
      %v7514 = vmax.f32 %v7512, %v7513
      %v7515 = vrot.slane %v7514, 2
      %v7516 = vmax.f32 %v7514, %v7515
      %v7517 = vrot.slane %v7516, 1
      %v7518 = vmax.f32 %v7516, %v7517
      %v7519 = vsel %vm3193, %v6645, -inf
      %v7520 = vrot.slane %v7519, 4
      %v7521 = vmax.f32 %v7519, %v7520
      %v7522 = vrot.slane %v7521, 2
      %v7523 = vmax.f32 %v7521, %v7522
      %v7524 = vrot.slane %v7523, 1
      %v7525 = vmax.f32 %v7523, %v7524
      %v7526 = vsel %vm3193, %v6653, -inf
      %v7527 = vrot.slane %v7526, 4
      %v7528 = vmax.f32 %v7526, %v7527
      %v7529 = vrot.slane %v7528, 2
      %v7530 = vmax.f32 %v7528, %v7529
      %v7531 = vrot.slane %v7530, 1
      %v7532 = vmax.f32 %v7530, %v7531
      %v7533 = vsel %vm3193, %v6652, -inf
      %v7534 = vrot.slane %v7533, 4
      %v7535 = vmax.f32 %v7533, %v7534
      %v7536 = vrot.slane %v7535, 2
      %v7537 = vmax.f32 %v7535, %v7536
      %v7538 = vrot.slane %v7537, 1
      %v7539 = vmax.f32 %v7537, %v7538
      %v7540 = vsel %vm3193, %v6654, -inf
      %v7541 = vrot.slane %v7540, 4
      %v7542 = vmax.f32 %v7540, %v7541
      %v7543 = vrot.slane %v7542, 2
      %v7544 = vmax.f32 %v7542, %v7543
      %v7545 = vrot.slane %v7544, 1
      %v7546 = vmax.f32 %v7544, %v7545
      %v7547 = vsel %vm3193, %v6662, -inf
      %v7548 = vrot.slane %v7547, 4
      %v7549 = vmax.f32 %v7547, %v7548
      %v7550 = vrot.slane %v7549, 2
      %v7551 = vmax.f32 %v7549, %v7550
      %v7552 = vrot.slane %v7551, 1
      %v7553 = vmax.f32 %v7551, %v7552
      %v7554 = vsel %vm3193, %v6670, -inf
      %v7555 = vrot.slane %v7554, 4
      %v7556 = vmax.f32 %v7554, %v7555
      %v7557 = vrot.slane %v7556, 2
      %v7558 = vmax.f32 %v7556, %v7557
      %v7559 = vrot.slane %v7558, 1
      %v7560 = vmax.f32 %v7558, %v7559
      %v7561 = vsel %vm3193, %v6669, -inf
      %v7562 = vrot.slane %v7561, 4
      %v7563 = vmax.f32 %v7561, %v7562
      %v7564 = vrot.slane %v7563, 2
      %v7565 = vmax.f32 %v7563, %v7564
      %v7566 = vrot.slane %v7565, 1
      %v7567 = vmax.f32 %v7565, %v7566
      %v7568 = vsel %vm3193, %v6671, -inf
      %v7569 = vrot.slane %v7568, 4
      %v7570 = vmax.f32 %v7568, %v7569
      %v7571 = vrot.slane %v7570, 2
      %v7572 = vmax.f32 %v7570, %v7571
      %v7573 = vrot.slane %v7572, 1
      %v7574 = vmax.f32 %v7572, %v7573
      %v7575 = vsel %vm3193, %v6679, -inf
      %v7576 = vrot.slane %v7575, 4
      %v7577 = vmax.f32 %v7575, %v7576
      %v7578 = vrot.slane %v7577, 2
      %v7579 = vmax.f32 %v7577, %v7578
      %v7580 = vrot.slane %v7579, 1
      %v7581 = vmax.f32 %v7579, %v7580
      %v7582 = vsel %vm3193, %v6687, -inf
      %v7583 = vrot.slane %v7582, 4
      %v7584 = vmax.f32 %v7582, %v7583
      %v7585 = vrot.slane %v7584, 2
      %v7586 = vmax.f32 %v7584, %v7585
      %v7587 = vrot.slane %v7586, 1
      %v7588 = vmax.f32 %v7586, %v7587
      %v7589 = vsel %vm3193, %v6686, -inf
      %v7590 = vrot.slane %v7589, 4
      %v7591 = vmax.f32 %v7589, %v7590
      %v7592 = vrot.slane %v7591, 2
      %v7593 = vmax.f32 %v7591, %v7592
      %v7594 = vrot.slane %v7593, 1
      %v7595 = vmax.f32 %v7593, %v7594
      %v7596 = vsel %vm3193, %v6688, -inf
      %v7597 = vrot.slane %v7596, 4
      %v7598 = vmax.f32 %v7596, %v7597
      %v7599 = vrot.slane %v7598, 2
      %v7600 = vmax.f32 %v7598, %v7599
      %v7601 = vrot.slane %v7600, 1
      %v7602 = vmax.f32 %v7600, %v7601
      %v7603 = vsel %vm3193, %v6696, -inf
      %v7604 = vrot.slane %v7603, 4
      %v7605 = vmax.f32 %v7603, %v7604
      %v7606 = vrot.slane %v7605, 2
      %v7607 = vmax.f32 %v7605, %v7606
      %v7608 = vrot.slane %v7607, 1
      %v7609 = vmax.f32 %v7607, %v7608
      %v7610 = vsel %vm3193, %v6704, -inf
      %v7611 = vrot.slane %v7610, 4
      %v7612 = vmax.f32 %v7610, %v7611
      %v7613 = vrot.slane %v7612, 2
      %v7614 = vmax.f32 %v7612, %v7613
      %v7615 = vrot.slane %v7614, 1
      %v7616 = vmax.f32 %v7614, %v7615
      %v7617 = vsel %vm3193, %v6703, -inf
      %v7618 = vrot.slane %v7617, 4
      %v7619 = vmax.f32 %v7617, %v7618
      %v7620 = vrot.slane %v7619, 2
      %v7621 = vmax.f32 %v7619, %v7620
      %v7622 = vrot.slane %v7621, 1
      %v7623 = vmax.f32 %v7621, %v7622
      %v7624 = vsel %vm3193, %v6705, -inf
      %v7625 = vrot.slane %v7624, 4
      %v7626 = vmax.f32 %v7624, %v7625
      %v7627 = vrot.slane %v7626, 2
      %v7628 = vmax.f32 %v7626, %v7627
      %v7629 = vrot.slane %v7628, 1
      %v7630 = vmax.f32 %v7628, %v7629
      %v7631 = vsel %vm3193, %v6713, -inf
      %v7632 = vrot.slane %v7631, 4
      %v7633 = vmax.f32 %v7631, %v7632
      %v7634 = vrot.slane %v7633, 2
      %v7635 = vmax.f32 %v7633, %v7634
      %v7636 = vrot.slane %v7635, 1
      %v7637 = vmax.f32 %v7635, %v7636
      %v7638 = vsel %vm3193, %v6721, -inf
      %v7639 = vrot.slane %v7638, 4
      %v7640 = vmax.f32 %v7638, %v7639
      %v7641 = vrot.slane %v7640, 2
      %v7642 = vmax.f32 %v7640, %v7641
      %v7643 = vrot.slane %v7642, 1
      %v7644 = vmax.f32 %v7642, %v7643
      %v7645 = vsel %vm3193, %v6720, -inf
      %v7646 = vrot.slane %v7645, 4
      %v7647 = vmax.f32 %v7645, %v7646
      %v7648 = vrot.slane %v7647, 2
      %v7649 = vmax.f32 %v7647, %v7648
      %v7650 = vrot.slane %v7649, 1
      %v7651 = vmax.f32 %v7649, %v7650
      %v7652 = vsel %vm3193, %v6722, -inf
      %v7653 = vrot.slane %v7652, 4
      %v7654 = vmax.f32 %v7652, %v7653
      %v7655 = vrot.slane %v7654, 2
      %v7656 = vmax.f32 %v7654, %v7655
      %v7657 = vrot.slane %v7656, 1
      %v7658 = vmax.f32 %v7656, %v7657
      %v7659 = vsel %vm3193, %v6730, -inf
      %v7660 = vrot.slane %v7659, 4
      %v7661 = vmax.f32 %v7659, %v7660
      %v7662 = vrot.slane %v7661, 2
      %v7663 = vmax.f32 %v7661, %v7662
      %v7664 = vrot.slane %v7663, 1
      %v7665 = vmax.f32 %v7663, %v7664
      %v7666 = vsel %vm3193, %v6738, -inf
      %v7667 = vrot.slane %v7666, 4
      %v7668 = vmax.f32 %v7666, %v7667
      %v7669 = vrot.slane %v7668, 2
      %v7670 = vmax.f32 %v7668, %v7669
      %v7671 = vrot.slane %v7670, 1
      %v7672 = vmax.f32 %v7670, %v7671
      %v7673 = vsel %vm3193, %v6737, -inf
      %v7674 = vrot.slane %v7673, 4
      %v7675 = vmax.f32 %v7673, %v7674
      %v7676 = vrot.slane %v7675, 2
      %v7677 = vmax.f32 %v7675, %v7676
      %v7678 = vrot.slane %v7677, 1
      %v7679 = vmax.f32 %v7677, %v7678
      %v7680 = vsel %vm3193, %v6739, -inf
      %v7681 = vrot.slane %v7680, 4
      %v7682 = vmax.f32 %v7680, %v7681
      %v7683 = vrot.slane %v7682, 2
      %v7684 = vmax.f32 %v7682, %v7683
      %v7685 = vrot.slane %v7684, 1
      %v7686 = vmax.f32 %v7684, %v7685
      %v7687 = vsel %vm3193, %v6747, -inf
      %v7688 = vrot.slane %v7687, 4
      %v7689 = vmax.f32 %v7687, %v7688
      %v7690 = vrot.slane %v7689, 2
      %v7691 = vmax.f32 %v7689, %v7690
      %v7692 = vrot.slane %v7691, 1
      %v7693 = vmax.f32 %v7691, %v7692
      %v7694 = vsel %vm3193, %v6755, -inf
      %v7695 = vrot.slane %v7694, 4
      %v7696 = vmax.f32 %v7694, %v7695
      %v7697 = vrot.slane %v7696, 2
      %v7698 = vmax.f32 %v7696, %v7697
      %v7699 = vrot.slane %v7698, 1
      %v7700 = vmax.f32 %v7698, %v7699
      %v7701 = vsel %vm3193, %v6754, -inf
      %v7702 = vrot.slane %v7701, 4
      %v7703 = vmax.f32 %v7701, %v7702
      %v7704 = vrot.slane %v7703, 2
      %v7705 = vmax.f32 %v7703, %v7704
      %v7706 = vrot.slane %v7705, 1
      %v7707 = vmax.f32 %v7705, %v7706
      %v7708 = vsel %vm3193, %v6756, -inf
      %v7709 = vrot.slane %v7708, 4
      %v7710 = vmax.f32 %v7708, %v7709
      %v7711 = vrot.slane %v7710, 2
      %v7712 = vmax.f32 %v7710, %v7711
      %v7713 = vrot.slane %v7712, 1
      %v7714 = vmax.f32 %v7712, %v7713
      %v7715 = vsel %vm3193, %v6764, -inf
      %v7716 = vrot.slane %v7715, 4
      %v7717 = vmax.f32 %v7715, %v7716
      %v7718 = vrot.slane %v7717, 2
      %v7719 = vmax.f32 %v7717, %v7718
      %v7720 = vrot.slane %v7719, 1
      %v7721 = vmax.f32 %v7719, %v7720
      %v7722 = vsel %vm3193, %v6772, -inf
      %v7723 = vrot.slane %v7722, 4
      %v7724 = vmax.f32 %v7722, %v7723
      %v7725 = vrot.slane %v7724, 2
      %v7726 = vmax.f32 %v7724, %v7725
      %v7727 = vrot.slane %v7726, 1
      %v7728 = vmax.f32 %v7726, %v7727
      %v7729 = vsel %vm3193, %v6771, -inf
      %v7730 = vrot.slane %v7729, 4
      %v7731 = vmax.f32 %v7729, %v7730
      %v7732 = vrot.slane %v7731, 2
      %v7733 = vmax.f32 %v7731, %v7732
      %v7734 = vrot.slane %v7733, 1
      %v7735 = vmax.f32 %v7733, %v7734
      %v7736 = vsel %vm3193, %v6773, -inf
      %v7737 = vrot.slane %v7736, 4
      %v7738 = vmax.f32 %v7736, %v7737
      %v7739 = vrot.slane %v7738, 2
      %v7740 = vmax.f32 %v7738, %v7739
      %v7741 = vrot.slane %v7740, 1
      %v7742 = vmax.f32 %v7740, %v7741
      %v7743 = vsel %vm3193, %v6781, -inf
      %v7744 = vrot.slane %v7743, 4
      %v7745 = vmax.f32 %v7743, %v7744
      %v7746 = vrot.slane %v7745, 2
      %v7747 = vmax.f32 %v7745, %v7746
      %v7748 = vrot.slane %v7747, 1
      %v7749 = vmax.f32 %v7747, %v7748
      %v7750 = vsel %vm3193, %v6789, -inf
      %v7751 = vrot.slane %v7750, 4
      %v7752 = vmax.f32 %v7750, %v7751
      %v7753 = vrot.slane %v7752, 2
      %v7754 = vmax.f32 %v7752, %v7753
      %v7755 = vrot.slane %v7754, 1
      %v7756 = vmax.f32 %v7754, %v7755
      %v7757 = vsel %vm3193, %v6788, -inf
      %v7758 = vrot.slane %v7757, 4
      %v7759 = vmax.f32 %v7757, %v7758
      %v7760 = vrot.slane %v7759, 2
      %v7761 = vmax.f32 %v7759, %v7760
      %v7762 = vrot.slane %v7761, 1
      %v7763 = vmax.f32 %v7761, %v7762
      %v7764 = vsel %vm3193, %v6790, -inf
      %v7765 = vrot.slane %v7764, 4
      %v7766 = vmax.f32 %v7764, %v7765
      %v7767 = vrot.slane %v7766, 2
      %v7768 = vmax.f32 %v7766, %v7767
      %v7769 = vrot.slane %v7768, 1
      %v7770 = vmax.f32 %v7768, %v7769
      %v7771 = vsel %vm3193, %v6798, -inf
      %v7772 = vrot.slane %v7771, 4
      %v7773 = vmax.f32 %v7771, %v7772
      %v7774 = vrot.slane %v7773, 2
      %v7775 = vmax.f32 %v7773, %v7774
      %v7776 = vrot.slane %v7775, 1
      %v7777 = vmax.f32 %v7775, %v7776
      %v7778 = vsel %vm3193, %v6806, -inf
      %v7779 = vrot.slane %v7778, 4
      %v7780 = vmax.f32 %v7778, %v7779
      %v7781 = vrot.slane %v7780, 2
      %v7782 = vmax.f32 %v7780, %v7781
      %v7783 = vrot.slane %v7782, 1
      %v7784 = vmax.f32 %v7782, %v7783
      %v7785 = vsel %vm3193, %v6805, -inf
      %v7786 = vrot.slane %v7785, 4
      %v7787 = vmax.f32 %v7785, %v7786
      %v7788 = vrot.slane %v7787, 2
      %v7789 = vmax.f32 %v7787, %v7788
      %v7790 = vrot.slane %v7789, 1
      %v7791 = vmax.f32 %v7789, %v7790
      %v7792 = vsel %vm3193, %v6807, -inf
      %v7793 = vrot.slane %v7792, 4
      %v7794 = vmax.f32 %v7792, %v7793
      %v7795 = vrot.slane %v7794, 2
      %v7796 = vmax.f32 %v7794, %v7795
      %v7797 = vrot.slane %v7796, 1
      %v7798 = vmax.f32 %v7796, %v7797
      %v7799 = vsel %vm3193, %v6815, -inf
      %v7800 = vrot.slane %v7799, 4
      %v7801 = vmax.f32 %v7799, %v7800
      %v7802 = vrot.slane %v7801, 2
      %v7803 = vmax.f32 %v7801, %v7802
      %v7804 = vrot.slane %v7803, 1
      %v7805 = vmax.f32 %v7803, %v7804
      %v7806 = vsel %vm3193, %v6823, -inf
      %v7807 = vrot.slane %v7806, 4
      %v7808 = vmax.f32 %v7806, %v7807
      %v7809 = vrot.slane %v7808, 2
      %v7810 = vmax.f32 %v7808, %v7809
      %v7811 = vrot.slane %v7810, 1
      %v7812 = vmax.f32 %v7810, %v7811
      %v7813 = vsel %vm3193, %v6822, -inf
      %v7814 = vrot.slane %v7813, 4
      %v7815 = vmax.f32 %v7813, %v7814
      %v7816 = vrot.slane %v7815, 2
      %v7817 = vmax.f32 %v7815, %v7816
      %v7818 = vrot.slane %v7817, 1
      %v7819 = vmax.f32 %v7817, %v7818
      %v7820 = vsel %vm3193, %v6824, -inf
      %v7821 = vrot.slane %v7820, 4
      %v7822 = vmax.f32 %v7820, %v7821
      %v7823 = vrot.slane %v7822, 2
      %v7824 = vmax.f32 %v7822, %v7823
      %v7825 = vrot.slane %v7824, 1
      %v7826 = vmax.f32 %v7824, %v7825
      %v7827 = vsel %vm3193, %v6832, -inf
      %v7828 = vrot.slane %v7827, 4
      %v7829 = vmax.f32 %v7827, %v7828
      %v7830 = vrot.slane %v7829, 2
      %v7831 = vmax.f32 %v7829, %v7830
      %v7832 = vrot.slane %v7831, 1
      %v7833 = vmax.f32 %v7831, %v7832
      %v7834 = vsel %vm3193, %v6840, -inf
      %v7835 = vrot.slane %v7834, 4
      %v7836 = vmax.f32 %v7834, %v7835
      %v7837 = vrot.slane %v7836, 2
      %v7838 = vmax.f32 %v7836, %v7837
      %v7839 = vrot.slane %v7838, 1
      %v7840 = vmax.f32 %v7838, %v7839
      %v7841 = vsel %vm3193, %v6839, -inf
      %v7842 = vrot.slane %v7841, 4
      %v7843 = vmax.f32 %v7841, %v7842
      %v7844 = vrot.slane %v7843, 2
      %v7845 = vmax.f32 %v7843, %v7844
      %v7846 = vrot.slane %v7845, 1
      %v7847 = vmax.f32 %v7845, %v7846
      %v7848 = vsel %vm3193, %v6841, -inf
      %v7849 = vrot.slane %v7848, 4
      %v7850 = vmax.f32 %v7848, %v7849
      %v7851 = vrot.slane %v7850, 2
      %v7852 = vmax.f32 %v7850, %v7851
      %v7853 = vrot.slane %v7852, 1
      %v7854 = vmax.f32 %v7852, %v7853
      %v7855 = vsel %vm3193, %v6849, -inf
      %v7856 = vrot.slane %v7855, 4
      %v7857 = vmax.f32 %v7855, %v7856
      %v7858 = vrot.slane %v7857, 2
      %v7859 = vmax.f32 %v7857, %v7858
      %v7860 = vrot.slane %v7859, 1
      %v7861 = vmax.f32 %v7859, %v7860
      %v7862 = vsel %vm3193, %v6857, -inf
      %v7863 = vrot.slane %v7862, 4
      %v7864 = vmax.f32 %v7862, %v7863
      %v7865 = vrot.slane %v7864, 2
      %v7866 = vmax.f32 %v7864, %v7865
      %v7867 = vrot.slane %v7866, 1
      %v7868 = vmax.f32 %v7866, %v7867
      %v7869 = vsel %vm3193, %v6856, -inf
      %v7870 = vrot.slane %v7869, 4
      %v7871 = vmax.f32 %v7869, %v7870
      %v7872 = vrot.slane %v7871, 2
      %v7873 = vmax.f32 %v7871, %v7872
      %v7874 = vrot.slane %v7873, 1
      %v7875 = vmax.f32 %v7873, %v7874
      %v7876 = vsel %vm3193, %v6858, -inf
      %v7877 = vrot.slane %v7876, 4
      %v7878 = vmax.f32 %v7876, %v7877
      %v7879 = vrot.slane %v7878, 2
      %v7880 = vmax.f32 %v7878, %v7879
      %v7881 = vrot.slane %v7880, 1
      %v7882 = vmax.f32 %v7880, %v7881
      %7883 = vst.msk [vmem:[#allocation4] sm:$0xff] %vm3190, 0.0
      %7884 = vst.msk [vmem:[#allocation4 + $0x8] sm:$0x3] %vm3193, 0.0
      %7885 = vst.msk [vmem:[#allocation4 + $0xa0] sm:$0xff] %vm3190, 0.0
      %7886 = vst.msk [vmem:[#allocation4 + $0xa8] sm:$0x3] %vm3193, 0.0
      %s7887 = scalar_lea.vmem [#allocation4], 144
      %7888 = vst.msk [vmem:[%s7887] sm:$0xff] %vm3190, 0.0
      %7889 = vst.msk [vmem:[%s7887 + $0x8] sm:$0x3] %vm3193, 0.0
      %7890 = vst.msk [vmem:[%s7887 + $0xa0] sm:$0xff] %vm3190, 0.0
      %7891 = vst.msk [vmem:[%s7887 + $0xa8] sm:$0x3] %vm3193, 0.0
      %7892 = vst.msk [vmem:[#allocation4] sm:$0x1] %vm3205, 0.0
      %7893 = vst.msk [vmem:[#allocation4 + $0x10] sm:$0x1] %vm3205, 0.0
      %7894 = vst.msk [vmem:[#allocation4 + $0x20] sm:$0x1] %vm3205, 0.0
      %7895 = vst.msk [vmem:[#allocation4 + $0x30] sm:$0x1] %vm3205, 0.0
      %7896 = vst.msk [vmem:[#allocation4 + $0x40] sm:$0x1] %vm3205, 0.0
      %7897 = vst.msk [vmem:[#allocation4 + $0x50] sm:$0x1] %vm3205, 0.0
      %7898 = vst.msk [vmem:[#allocation4 + $0x60] sm:$0x1] %vm3205, 0.0
      %7899 = vst.msk [vmem:[#allocation4 + $0x70] sm:$0x1] %vm3205, 0.0
      %7900 = vst.msk [vmem:[#allocation4 + $0x80] sm:$0x1] %vm3205, 0.0
      %7901 = vst.msk [vmem:[#allocation4 + $0x90] sm:$0x1] %vm3205, 0.0
      %7902 = vst.msk [vmem:[#allocation4 + $0xa0] sm:$0x1] %vm3205, 0.0
      %7903 = vst.msk [vmem:[#allocation4 + $0xb0] sm:$0x1] %vm3205, 0.0
      %7904 = vst.msk [vmem:[#allocation4 + $0xc0] sm:$0x1] %vm3205, 0.0
      %7905 = vst.msk [vmem:[#allocation4 + $0xd0] sm:$0x1] %vm3205, 0.0
      %7906 = vst.msk [vmem:[#allocation4 + $0xe0] sm:$0x1] %vm3205, 0.0
      %7907 = vst.msk [vmem:[#allocation4 + $0xf0] sm:$0x1] %vm3205, 0.0
      %7908 = vst.msk [vmem:[#allocation4 + $0x100] sm:$0x1] %vm3205, 0.0
      %7909 = vst.msk [vmem:[#allocation4 + $0x110] sm:$0x1] %vm3205, 0.0
      %7910 = vst.msk [vmem:[#allocation4 + $0x120] sm:$0x1] %vm3205, 0.0
      %7911 = vst.msk [vmem:[#allocation4 + $0x130] sm:$0x1] %vm3205, 0.0
      %7912 = vst.msk [vmem:[#allocation4 + $0x9] sm:$0x1] %vm3205, 0.0
      %7913 = vst.msk [vmem:[#allocation4 + $0x19] sm:$0x1] %vm3205, 0.0
      %7914 = vst.msk [vmem:[#allocation4 + $0x29] sm:$0x1] %vm3205, 0.0
      %7915 = vst.msk [vmem:[#allocation4 + $0x39] sm:$0x1] %vm3205, 0.0
      %7916 = vst.msk [vmem:[#allocation4 + $0x49] sm:$0x1] %vm3205, 0.0
      %7917 = vst.msk [vmem:[#allocation4 + $0x59] sm:$0x1] %vm3205, 0.0
      %7918 = vst.msk [vmem:[#allocation4 + $0x69] sm:$0x1] %vm3205, 0.0
      %7919 = vst.msk [vmem:[#allocation4 + $0x79] sm:$0x1] %vm3205, 0.0
      %7920 = vst.msk [vmem:[#allocation4 + $0x89] sm:$0x1] %vm3205, 0.0
      %7921 = vst.msk [vmem:[#allocation4 + $0x99] sm:$0x1] %vm3205, 0.0
      %7922 = vst.msk [vmem:[#allocation4 + $0xa9] sm:$0x1] %vm3205, 0.0
      %7923 = vst.msk [vmem:[#allocation4 + $0xb9] sm:$0x1] %vm3205, 0.0
      %7924 = vst.msk [vmem:[#allocation4 + $0xc9] sm:$0x1] %vm3205, 0.0
      %7925 = vst.msk [vmem:[#allocation4 + $0xd9] sm:$0x1] %vm3205, 0.0
      %7926 = vst.msk [vmem:[#allocation4 + $0xe9] sm:$0x1] %vm3205, 0.0
      %7927 = vst.msk [vmem:[#allocation4 + $0xf9] sm:$0x1] %vm3205, 0.0
      %7928 = vst.msk [vmem:[#allocation4 + $0x109] sm:$0x1] %vm3205, 0.0
      %7929 = vst.msk [vmem:[#allocation4 + $0x119] sm:$0x1] %vm3205, 0.0
      %7930 = vst.msk [vmem:[#allocation4 + $0x129] sm:$0x1] %vm3205, 0.0
      %7931 = vst.msk [vmem:[#allocation4 + $0x139] sm:$0x1] %vm3205, 0.0
      %vm8060 = vcmask 1041409
      %v8061 = vsel %vm8060, %v7000, %v6993
      %vm8062 = vcmask 1042434
      %v8063 = vsel %vm8062, %v7007, %v8061
      %vm8064 = vcmask 1043459
      %v8065 = vsel %vm8064, %v7014, %v8063
      %vm8066 = vcmask 1044484
      %v8067 = vsel %vm8066, %v7021, %v8065
      %vm8068 = vcmask 1045509
      %v8069 = vsel %vm8068, %v7028, %v8067
      %vm8070 = vcmask 1046534
      %v8071 = vsel %vm8070, %v7035, %v8069
      %vm8072 = vcmask 1047559
      %v8073 = vsel %vm8072, %v7042, %v8071
      %v8074 = vsel %vm8060, %v7056, %v7049
      %v8075 = vsel %vm8062, %v7063, %v8074
      %v8076 = vsel %vm8064, %v7070, %v8075
      %v8077 = vsel %vm8066, %v7077, %v8076
      %v8078 = vsel %vm8068, %v7084, %v8077
      %v8079 = vsel %vm8070, %v7091, %v8078
      %v8080 = vsel %vm8072, %v7098, %v8079
      %v8081 = vsel %vm8060, %v7112, %v7105
      %v8082 = vsel %vm8062, %v7119, %v8081
      %v8083 = vsel %vm8064, %v7126, %v8082
      %v8084 = vsel %vm8066, %v7133, %v8083
      %v8085 = vsel %vm8068, %v7140, %v8084
      %v8086 = vsel %vm8070, %v7147, %v8085
      %v8087 = vsel %vm8072, %v7154, %v8086
      %v8088 = vsel %vm8060, %v7168, %v7161
      %v8089 = vsel %vm8062, %v7175, %v8088
      %v8090 = vsel %vm8064, %v7182, %v8089
      %v8091 = vsel %vm8066, %v7189, %v8090
      %v8092 = vsel %vm8068, %v7196, %v8091
      %v8093 = vsel %vm8070, %v7203, %v8092
      %v8094 = vsel %vm8072, %v7210, %v8093
      %v8095 = vsel %vm8060, %v7224, %v7217
      %v8096 = vsel %vm8062, %v7231, %v8095
      %v8097 = vsel %vm8064, %v7238, %v8096
      %v8098 = vsel %vm8066, %v7245, %v8097
      %v8099 = vsel %vm8068, %v7252, %v8098
      %v8100 = vsel %vm8070, %v7259, %v8099
      %v8101 = vsel %vm8072, %v7266, %v8100
      %v8102 = vsel %vm8060, %v7280, %v7273
      %v8103 = vsel %vm8062, %v7287, %v8102
      %v8104 = vsel %vm8064, %v7294, %v8103
      %v8105 = vsel %vm8066, %v7301, %v8104
      %v8106 = vsel %vm8068, %v7308, %v8105
      %v8107 = vsel %vm8070, %v7315, %v8106
      %v8108 = vsel %vm8072, %v7322, %v8107
      %v8109 = vsel %vm8060, %v7336, %v7329
      %v8110 = vsel %vm8062, %v7343, %v8109
      %v8111 = vsel %vm8064, %v7350, %v8110
      %v8112 = vsel %vm8066, %v7357, %v8111
      %v8113 = vsel %vm8068, %v7364, %v8112
      %v8114 = vsel %vm8070, %v7371, %v8113
      %v8115 = vsel %vm8072, %v7378, %v8114
      %v8116 = vsel %vm8060, %v7392, %v7385
      %v8117 = vsel %vm8062, %v7399, %v8116
      %v8118 = vsel %vm8064, %v7406, %v8117
      %v8119 = vsel %vm8066, %v7413, %v8118
      %v8120 = vsel %vm8068, %v7420, %v8119
      %v8121 = vsel %vm8070, %v7427, %v8120
      %v8122 = vsel %vm8072, %v7434, %v8121
      %v8123 = vsel %vm8060, %v7448, %v7441
      %v8124 = vsel %vm8062, %v7455, %v8123
      %v8125 = vsel %vm8064, %v7462, %v8124
      %v8126 = vsel %vm8066, %v7469, %v8125
      %v8127 = vsel %vm8068, %v7476, %v8126
      %v8128 = vsel %vm8070, %v7483, %v8127
      %v8129 = vsel %vm8072, %v7490, %v8128
      %v8130 = vsel %vm8060, %v7504, %v7497
      %v8131 = vsel %vm8062, %v7511, %v8130
      %v8132 = vsel %vm8064, %v7518, %v8131
      %v8133 = vsel %vm8066, %v7525, %v8132
      %v8134 = vsel %vm8068, %v7532, %v8133
      %v8135 = vsel %vm8070, %v7539, %v8134
      %v8136 = vsel %vm8072, %v7546, %v8135
      %v8137 = vsel %vm8060, %v7560, %v7553
      %v8138 = vsel %vm8062, %v7567, %v8137
      %v8139 = vsel %vm8064, %v7574, %v8138
      %v8140 = vsel %vm8066, %v7581, %v8139
      %v8141 = vsel %vm8068, %v7588, %v8140
      %v8142 = vsel %vm8070, %v7595, %v8141
      %v8143 = vsel %vm8072, %v7602, %v8142
      %v8144 = vsel %vm8060, %v7616, %v7609
      %v8145 = vsel %vm8062, %v7623, %v8144
      %v8146 = vsel %vm8064, %v7630, %v8145
      %v8147 = vsel %vm8066, %v7637, %v8146
      %v8148 = vsel %vm8068, %v7644, %v8147
      %v8149 = vsel %vm8070, %v7651, %v8148
      %v8150 = vsel %vm8072, %v7658, %v8149
      %v8151 = vsel %vm8060, %v7672, %v7665
      %v8152 = vsel %vm8062, %v7679, %v8151
      %v8153 = vsel %vm8064, %v7686, %v8152
      %v8154 = vsel %vm8066, %v7693, %v8153
      %v8155 = vsel %vm8068, %v7700, %v8154
      %v8156 = vsel %vm8070, %v7707, %v8155
      %v8157 = vsel %vm8072, %v7714, %v8156
      %v8158 = vsel %vm8060, %v7728, %v7721
      %v8159 = vsel %vm8062, %v7735, %v8158
      %v8160 = vsel %vm8064, %v7742, %v8159
      %v8161 = vsel %vm8066, %v7749, %v8160
      %v8162 = vsel %vm8068, %v7756, %v8161
      %v8163 = vsel %vm8070, %v7763, %v8162
      %v8164 = vsel %vm8072, %v7770, %v8163
      %v8165 = vsel %vm8060, %v7784, %v7777
      %v8166 = vsel %vm8062, %v7791, %v8165
      %v8167 = vsel %vm8064, %v7798, %v8166
      %v8168 = vsel %vm8066, %v7805, %v8167
      %v8169 = vsel %vm8068, %v7812, %v8168
      %v8170 = vsel %vm8070, %v7819, %v8169
      %v8171 = vsel %vm8072, %v7826, %v8170
      %v8172 = vsel %vm8060, %v7840, %v7833
      %v8173 = vsel %vm8062, %v7847, %v8172
      %v8174 = vsel %vm8064, %v7854, %v8173
      %v8175 = vsel %vm8066, %v7861, %v8174
      %v8176 = vsel %vm8068, %v7868, %v8175
      %v8177 = vsel %vm8070, %v7875, %v8176
      %v8178 = vsel %vm8072, %v7882, %v8177
      %s8195 = scalar_lea.vmem [#allocation4], 16
      %8196 = vst.msk [vmem:[%s8195 + $0x1] sm:$0xff] %vm3190, %v8073
      %8197 = vst.msk [vmem:[%s8195 + $0x11] sm:$0xff] %vm3190, %v8080
      %8198 = vst.msk [vmem:[%s8195 + $0x21] sm:$0xff] %vm3190, %v8087
      %8199 = vst.msk [vmem:[%s8195 + $0x31] sm:$0xff] %vm3190, %v8094
      %8200 = vst.msk [vmem:[%s8195 + $0x41] sm:$0xff] %vm3190, %v8101
      %8201 = vst.msk [vmem:[%s8195 + $0x51] sm:$0xff] %vm3190, %v8108
      %8202 = vst.msk [vmem:[%s8195 + $0x61] sm:$0xff] %vm3190, %v8115
      %8203 = vst.msk [vmem:[%s8195 + $0x71] sm:$0xff] %vm3190, %v8122
      %8204 = vst.msk [vmem:[%s8195 + $0xa1] sm:$0xff] %vm3190, %v8129
      %8205 = vst.msk [vmem:[%s8195 + $0xb1] sm:$0xff] %vm3190, %v8136
      %8206 = vst.msk [vmem:[%s8195 + $0xc1] sm:$0xff] %vm3190, %v8143
      %8207 = vst.msk [vmem:[%s8195 + $0xd1] sm:$0xff] %vm3190, %v8150
      %8208 = vst.msk [vmem:[%s8195 + $0xe1] sm:$0xff] %vm3190, %v8157
      %8209 = vst.msk [vmem:[%s8195 + $0xf1] sm:$0xff] %vm3190, %v8164
      %8210 = vst.msk [vmem:[%s8195 + $0x101] sm:$0xff] %vm3190, %v8171
      %8211 = vst.msk [vmem:[%s8195 + $0x111] sm:$0xff] %vm3190, %v8178
      %v8212 = vld [vmem:[#allocation4] sm:$0xff]
      %v8213 = vld [vmem:[#allocation4 + $0x10] sm:$0xff]
      %v8214 = vld [vmem:[#allocation4 + $0x20] sm:$0xff]
      %v8215 = vld [vmem:[#allocation4 + $0x30] sm:$0xff]
      %v8216 = vld [vmem:[#allocation4 + $0x40] sm:$0xff]
      %v8217 = vld [vmem:[#allocation4 + $0x50] sm:$0xff]
      %v8218 = vld [vmem:[#allocation4 + $0x60] sm:$0xff]
      %v8219 = vld [vmem:[#allocation4 + $0x70] sm:$0xff]
      %v8220 = vld [vmem:[#allocation4 + $0xa0] sm:$0xff]
      %v8221 = vld [vmem:[#allocation4 + $0xb0] sm:$0xff]
      %v8222 = vld [vmem:[#allocation4 + $0xc0] sm:$0xff]
      %v8223 = vld [vmem:[#allocation4 + $0xd0] sm:$0xff]
      %v8224 = vld [vmem:[#allocation4 + $0xe0] sm:$0xff]
      %v8225 = vld [vmem:[#allocation4 + $0xf0] sm:$0xff]
      %v8226 = vld [vmem:[#allocation4 + $0x100] sm:$0xff]
      %v8227 = vld [vmem:[#allocation4 + $0x110] sm:$0xff]
      %v8228 = vpack.c.bf16 %v8212, %v8212
      %v8229 = vpack.c.bf16 %v8213, %v8213
      %v8230 = vpack.c.bf16 %v8214, %v8214
      %v8231 = vpack.c.bf16 %v8215, %v8215
      %v8232 = vpack.c.bf16 %v8216, %v8216
      %v8233 = vpack.c.bf16 %v8217, %v8217
      %v8234 = vpack.c.bf16 %v8218, %v8218
      %v8235 = vpack.c.bf16 %v8219, %v8219
      %v8236 = vpack.c.bf16 %v8220, %v8220
      %v8237 = vpack.c.bf16 %v8221, %v8221
      %v8238 = vpack.c.bf16 %v8222, %v8222
      %v8239 = vpack.c.bf16 %v8223, %v8223
      %v8240 = vpack.c.bf16 %v8224, %v8224
      %v8241 = vpack.c.bf16 %v8225, %v8225
      %v8242 = vpack.c.bf16 %v8226, %v8226
      %v8243 = vpack.c.bf16 %v8227, %v8227
      %v8244 = vld [vmem:[#allocation4 + $0x1] sm:$0xff]
      %v8245 = vld [vmem:[#allocation4 + $0x11] sm:$0xff]
      %v8246 = vld [vmem:[#allocation4 + $0x21] sm:$0xff]
      %v8247 = vld [vmem:[#allocation4 + $0x31] sm:$0xff]
      %v8248 = vld [vmem:[#allocation4 + $0x41] sm:$0xff]
      %v8249 = vld [vmem:[#allocation4 + $0x51] sm:$0xff]
      %v8250 = vld [vmem:[#allocation4 + $0x61] sm:$0xff]
      %v8251 = vld [vmem:[#allocation4 + $0x71] sm:$0xff]
      %v8252 = vld [vmem:[#allocation4 + $0xa1] sm:$0xff]
      %v8253 = vld [vmem:[#allocation4 + $0xb1] sm:$0xff]
      %v8254 = vld [vmem:[#allocation4 + $0xc1] sm:$0xff]
      %v8255 = vld [vmem:[#allocation4 + $0xd1] sm:$0xff]
      %v8256 = vld [vmem:[#allocation4 + $0xe1] sm:$0xff]
      %v8257 = vld [vmem:[#allocation4 + $0xf1] sm:$0xff]
      %v8258 = vld [vmem:[#allocation4 + $0x101] sm:$0xff]
      %v8259 = vld [vmem:[#allocation4 + $0x111] sm:$0xff]
      %v8260 = vpack.c.bf16 %v8244, %v8244
      %v8261 = vpack.c.bf16 %v8245, %v8245
      %v8262 = vpack.c.bf16 %v8246, %v8246
      %v8263 = vpack.c.bf16 %v8247, %v8247
      %v8264 = vpack.c.bf16 %v8248, %v8248
      %v8265 = vpack.c.bf16 %v8249, %v8249
      %v8266 = vpack.c.bf16 %v8250, %v8250
      %v8267 = vpack.c.bf16 %v8251, %v8251
      %v8268 = vpack.c.bf16 %v8252, %v8252
      %v8269 = vpack.c.bf16 %v8253, %v8253
      %v8270 = vpack.c.bf16 %v8254, %v8254
      %v8271 = vpack.c.bf16 %v8255, %v8255
      %v8272 = vpack.c.bf16 %v8256, %v8256
      %v8273 = vpack.c.bf16 %v8257, %v8257
      %v8274 = vpack.c.bf16 %v8258, %v8258
      %v8275 = vpack.c.bf16 %v8259, %v8259
      %v8276 = vld [vmem:[#allocation4 + $0x2] sm:$0xff]
      %v8277 = vld [vmem:[#allocation4 + $0x12] sm:$0xff]
      %v8278 = vld [vmem:[#allocation4 + $0x22] sm:$0xff]
      %v8279 = vld [vmem:[#allocation4 + $0x32] sm:$0xff]
      %v8280 = vld [vmem:[#allocation4 + $0x42] sm:$0xff]
      %v8281 = vld [vmem:[#allocation4 + $0x52] sm:$0xff]
      %v8282 = vld [vmem:[#allocation4 + $0x62] sm:$0xff]
      %v8283 = vld [vmem:[#allocation4 + $0x72] sm:$0xff]
      %v8284 = vld [vmem:[#allocation4 + $0xa2] sm:$0xff]
      %v8285 = vld [vmem:[#allocation4 + $0xb2] sm:$0xff]
      %v8286 = vld [vmem:[#allocation4 + $0xc2] sm:$0xff]
      %v8287 = vld [vmem:[#allocation4 + $0xd2] sm:$0xff]
      %v8288 = vld [vmem:[#allocation4 + $0xe2] sm:$0xff]
      %v8289 = vld [vmem:[#allocation4 + $0xf2] sm:$0xff]
      %v8290 = vld [vmem:[#allocation4 + $0x102] sm:$0xff]
      %v8291 = vld [vmem:[#allocation4 + $0x112] sm:$0xff]
      %v8292 = vpack.c.bf16 %v8276, %v8276
      %v8293 = vpack.c.bf16 %v8277, %v8277
      %v8294 = vpack.c.bf16 %v8278, %v8278
      %v8295 = vpack.c.bf16 %v8279, %v8279
      %v8296 = vpack.c.bf16 %v8280, %v8280
      %v8297 = vpack.c.bf16 %v8281, %v8281
      %v8298 = vpack.c.bf16 %v8282, %v8282
      %v8299 = vpack.c.bf16 %v8283, %v8283
      %v8300 = vpack.c.bf16 %v8284, %v8284
      %v8301 = vpack.c.bf16 %v8285, %v8285
      %v8302 = vpack.c.bf16 %v8286, %v8286
      %v8303 = vpack.c.bf16 %v8287, %v8287
      %v8304 = vpack.c.bf16 %v8288, %v8288
      %v8305 = vpack.c.bf16 %v8289, %v8289
      %v8306 = vpack.c.bf16 %v8290, %v8290
      %v8307 = vpack.c.bf16 %v8291, %v8291
      %v8308 = vld [vmem:[%s8195] sm:$0xff]
      %v8309 = vld [vmem:[%s8195 + $0x10] sm:$0xff]
      %v8310 = vld [vmem:[%s8195 + $0x20] sm:$0xff]
      %v8311 = vld [vmem:[%s8195 + $0x30] sm:$0xff]
      %v8312 = vld [vmem:[%s8195 + $0x40] sm:$0xff]
      %v8313 = vld [vmem:[%s8195 + $0x50] sm:$0xff]
      %v8314 = vld [vmem:[%s8195 + $0x60] sm:$0xff]
      %v8315 = vld [vmem:[%s8195 + $0x70] sm:$0xff]
      %v8316 = vld [vmem:[%s8195 + $0xa0] sm:$0xff]
      %v8317 = vld [vmem:[%s8195 + $0xb0] sm:$0xff]
      %v8318 = vld [vmem:[%s8195 + $0xc0] sm:$0xff]
      %v8319 = vld [vmem:[%s8195 + $0xd0] sm:$0xff]
      %v8320 = vld [vmem:[%s8195 + $0xe0] sm:$0xff]
      %v8321 = vld [vmem:[%s8195 + $0xf0] sm:$0xff]
      %v8322 = vld [vmem:[%s8195 + $0x100] sm:$0xff]
      %v8323 = vld [vmem:[%s8195 + $0x110] sm:$0xff]
      %v8324 = vpack.c.bf16 %v8308, %v8308
      %v8325 = vpack.c.bf16 %v8309, %v8309
      %v8326 = vpack.c.bf16 %v8310, %v8310
      %v8327 = vpack.c.bf16 %v8311, %v8311
      %v8328 = vpack.c.bf16 %v8312, %v8312
      %v8329 = vpack.c.bf16 %v8313, %v8313
      %v8330 = vpack.c.bf16 %v8314, %v8314
      %v8331 = vpack.c.bf16 %v8315, %v8315
      %v8332 = vpack.c.bf16 %v8316, %v8316
      %v8333 = vpack.c.bf16 %v8317, %v8317
      %v8334 = vpack.c.bf16 %v8318, %v8318
      %v8335 = vpack.c.bf16 %v8319, %v8319
      %v8336 = vpack.c.bf16 %v8320, %v8320
      %v8337 = vpack.c.bf16 %v8321, %v8321
      %v8338 = vpack.c.bf16 %v8322, %v8322
      %v8339 = vpack.c.bf16 %v8323, %v8323
      %v8340 = vld [vmem:[%s8195 + $0x1] sm:$0xff]
      %v8341 = vld [vmem:[%s8195 + $0x11] sm:$0xff]
      %v8342 = vld [vmem:[%s8195 + $0x21] sm:$0xff]
      %v8343 = vld [vmem:[%s8195 + $0x31] sm:$0xff]
      %v8344 = vld [vmem:[%s8195 + $0x41] sm:$0xff]
      %v8345 = vld [vmem:[%s8195 + $0x51] sm:$0xff]
      %v8346 = vld [vmem:[%s8195 + $0x61] sm:$0xff]
      %v8347 = vld [vmem:[%s8195 + $0x71] sm:$0xff]
      %v8348 = vld [vmem:[%s8195 + $0xa1] sm:$0xff]
      %v8349 = vld [vmem:[%s8195 + $0xb1] sm:$0xff]
      %v8350 = vld [vmem:[%s8195 + $0xc1] sm:$0xff]
      %v8351 = vld [vmem:[%s8195 + $0xd1] sm:$0xff]
      %v8352 = vld [vmem:[%s8195 + $0xe1] sm:$0xff]
      %v8353 = vld [vmem:[%s8195 + $0xf1] sm:$0xff]
      %v8354 = vld [vmem:[%s8195 + $0x101] sm:$0xff]
      %v8355 = vld [vmem:[%s8195 + $0x111] sm:$0xff]
      %v8356 = vpack.c.bf16 %v8340, %v8340
      %v8357 = vpack.c.bf16 %v8341, %v8341
      %v8358 = vpack.c.bf16 %v8342, %v8342
      %v8359 = vpack.c.bf16 %v8343, %v8343
      %v8360 = vpack.c.bf16 %v8344, %v8344
      %v8361 = vpack.c.bf16 %v8345, %v8345
      %v8362 = vpack.c.bf16 %v8346, %v8346
      %v8363 = vpack.c.bf16 %v8347, %v8347
      %v8364 = vpack.c.bf16 %v8348, %v8348
      %v8365 = vpack.c.bf16 %v8349, %v8349
      %v8366 = vpack.c.bf16 %v8350, %v8350
      %v8367 = vpack.c.bf16 %v8351, %v8351
      %v8368 = vpack.c.bf16 %v8352, %v8352
      %v8369 = vpack.c.bf16 %v8353, %v8353
      %v8370 = vpack.c.bf16 %v8354, %v8354
      %v8371 = vpack.c.bf16 %v8355, %v8355
      %v8372 = vld [vmem:[%s8195 + $0x2] sm:$0xff]
      %v8373 = vld [vmem:[%s8195 + $0x12] sm:$0xff]
      %v8374 = vld [vmem:[%s8195 + $0x22] sm:$0xff]
      %v8375 = vld [vmem:[%s8195 + $0x32] sm:$0xff]
      %v8376 = vld [vmem:[%s8195 + $0x42] sm:$0xff]
      %v8377 = vld [vmem:[%s8195 + $0x52] sm:$0xff]
      %v8378 = vld [vmem:[%s8195 + $0x62] sm:$0xff]
      %v8379 = vld [vmem:[%s8195 + $0x72] sm:$0xff]
      %v8380 = vld [vmem:[%s8195 + $0xa2] sm:$0xff]
      %v8381 = vld [vmem:[%s8195 + $0xb2] sm:$0xff]
      %v8382 = vld [vmem:[%s8195 + $0xc2] sm:$0xff]
      %v8383 = vld [vmem:[%s8195 + $0xd2] sm:$0xff]
      %v8384 = vld [vmem:[%s8195 + $0xe2] sm:$0xff]
      %v8385 = vld [vmem:[%s8195 + $0xf2] sm:$0xff]
      %v8386 = vld [vmem:[%s8195 + $0x102] sm:$0xff]
      %v8387 = vld [vmem:[%s8195 + $0x112] sm:$0xff]
      %v8388 = vpack.c.bf16 %v8372, %v8372
      %v8389 = vpack.c.bf16 %v8373, %v8373
      %v8390 = vpack.c.bf16 %v8374, %v8374
      %v8391 = vpack.c.bf16 %v8375, %v8375
      %v8392 = vpack.c.bf16 %v8376, %v8376
      %v8393 = vpack.c.bf16 %v8377, %v8377
      %v8394 = vpack.c.bf16 %v8378, %v8378
      %v8395 = vpack.c.bf16 %v8379, %v8379
      %v8396 = vpack.c.bf16 %v8380, %v8380
      %v8397 = vpack.c.bf16 %v8381, %v8381
      %v8398 = vpack.c.bf16 %v8382, %v8382
      %v8399 = vpack.c.bf16 %v8383, %v8383
      %v8400 = vpack.c.bf16 %v8384, %v8384
      %v8401 = vpack.c.bf16 %v8385, %v8385
      %v8402 = vpack.c.bf16 %v8386, %v8386
      %v8403 = vpack.c.bf16 %v8387, %v8387
      %s8404 = scalar_lea.vmem [#allocation4], 32
      %v8405 = vld [vmem:[%s8404] sm:$0xff]
      %v8406 = vld [vmem:[%s8404 + $0x10] sm:$0xff]
      %v8407 = vld [vmem:[%s8404 + $0x20] sm:$0xff]
      %v8408 = vld [vmem:[%s8404 + $0x30] sm:$0xff]
      %v8409 = vld [vmem:[%s8404 + $0x40] sm:$0xff]
      %v8410 = vld [vmem:[%s8404 + $0x50] sm:$0xff]
      %v8411 = vld [vmem:[%s8404 + $0x60] sm:$0xff]
      %v8412 = vld [vmem:[%s8404 + $0x70] sm:$0xff]
      %v8413 = vld [vmem:[%s8404 + $0xa0] sm:$0xff]
      %v8414 = vld [vmem:[%s8404 + $0xb0] sm:$0xff]
      %v8415 = vld [vmem:[%s8404 + $0xc0] sm:$0xff]
      %v8416 = vld [vmem:[%s8404 + $0xd0] sm:$0xff]
      %v8417 = vld [vmem:[%s8404 + $0xe0] sm:$0xff]
      %v8418 = vld [vmem:[%s8404 + $0xf0] sm:$0xff]
      %v8419 = vld [vmem:[%s8404 + $0x100] sm:$0xff]
      %v8420 = vld [vmem:[%s8404 + $0x110] sm:$0xff]
      %v8421 = vpack.c.bf16 %v8405, %v8405
      %v8422 = vpack.c.bf16 %v8406, %v8406
      %v8423 = vpack.c.bf16 %v8407, %v8407
      %v8424 = vpack.c.bf16 %v8408, %v8408
      %v8425 = vpack.c.bf16 %v8409, %v8409
      %v8426 = vpack.c.bf16 %v8410, %v8410
      %v8427 = vpack.c.bf16 %v8411, %v8411
      %v8428 = vpack.c.bf16 %v8412, %v8412
      %v8429 = vpack.c.bf16 %v8413, %v8413
      %v8430 = vpack.c.bf16 %v8414, %v8414
      %v8431 = vpack.c.bf16 %v8415, %v8415
      %v8432 = vpack.c.bf16 %v8416, %v8416
      %v8433 = vpack.c.bf16 %v8417, %v8417
      %v8434 = vpack.c.bf16 %v8418, %v8418
      %v8435 = vpack.c.bf16 %v8419, %v8419
      %v8436 = vpack.c.bf16 %v8420, %v8420
      %v8437 = vld [vmem:[%s8404 + $0x1] sm:$0xff]
      %v8438 = vld [vmem:[%s8404 + $0x11] sm:$0xff]
      %v8439 = vld [vmem:[%s8404 + $0x21] sm:$0xff]
      %v8440 = vld [vmem:[%s8404 + $0x31] sm:$0xff]
      %v8441 = vld [vmem:[%s8404 + $0x41] sm:$0xff]
      %v8442 = vld [vmem:[%s8404 + $0x51] sm:$0xff]
      %v8443 = vld [vmem:[%s8404 + $0x61] sm:$0xff]
      %v8444 = vld [vmem:[%s8404 + $0x71] sm:$0xff]
      %v8445 = vld [vmem:[%s8404 + $0xa1] sm:$0xff]
      %v8446 = vld [vmem:[%s8404 + $0xb1] sm:$0xff]
      %v8447 = vld [vmem:[%s8404 + $0xc1] sm:$0xff]
      %v8448 = vld [vmem:[%s8404 + $0xd1] sm:$0xff]
      %v8449 = vld [vmem:[%s8404 + $0xe1] sm:$0xff]
      %v8450 = vld [vmem:[%s8404 + $0xf1] sm:$0xff]
      %v8451 = vld [vmem:[%s8404 + $0x101] sm:$0xff]
      %v8452 = vld [vmem:[%s8404 + $0x111] sm:$0xff]
      %v8453 = vpack.c.bf16 %v8437, %v8437
      %v8454 = vpack.c.bf16 %v8438, %v8438
      %v8455 = vpack.c.bf16 %v8439, %v8439
      %v8456 = vpack.c.bf16 %v8440, %v8440
      %v8457 = vpack.c.bf16 %v8441, %v8441
      %v8458 = vpack.c.bf16 %v8442, %v8442
      %v8459 = vpack.c.bf16 %v8443, %v8443
      %v8460 = vpack.c.bf16 %v8444, %v8444
      %v8461 = vpack.c.bf16 %v8445, %v8445
      %v8462 = vpack.c.bf16 %v8446, %v8446
      %v8463 = vpack.c.bf16 %v8447, %v8447
      %v8464 = vpack.c.bf16 %v8448, %v8448
      %v8465 = vpack.c.bf16 %v8449, %v8449
      %v8466 = vpack.c.bf16 %v8450, %v8450
      %v8467 = vpack.c.bf16 %v8451, %v8451
      %v8468 = vpack.c.bf16 %v8452, %v8452
      %v8469 = vld [vmem:[%s8404 + $0x2] sm:$0xff]
      %v8470 = vld [vmem:[%s8404 + $0x12] sm:$0xff]
      %v8471 = vld [vmem:[%s8404 + $0x22] sm:$0xff]
      %v8472 = vld [vmem:[%s8404 + $0x32] sm:$0xff]
      %v8473 = vld [vmem:[%s8404 + $0x42] sm:$0xff]
      %v8474 = vld [vmem:[%s8404 + $0x52] sm:$0xff]
      %v8475 = vld [vmem:[%s8404 + $0x62] sm:$0xff]
      %v8476 = vld [vmem:[%s8404 + $0x72] sm:$0xff]
      %v8477 = vld [vmem:[%s8404 + $0xa2] sm:$0xff]
      %v8478 = vld [vmem:[%s8404 + $0xb2] sm:$0xff]
      %v8479 = vld [vmem:[%s8404 + $0xc2] sm:$0xff]
      %v8480 = vld [vmem:[%s8404 + $0xd2] sm:$0xff]
      %v8481 = vld [vmem:[%s8404 + $0xe2] sm:$0xff]
      %v8482 = vld [vmem:[%s8404 + $0xf2] sm:$0xff]
      %v8483 = vld [vmem:[%s8404 + $0x102] sm:$0xff]
      %v8484 = vld [vmem:[%s8404 + $0x112] sm:$0xff]
      %v8485 = vpack.c.bf16 %v8469, %v8469
      %v8486 = vpack.c.bf16 %v8470, %v8470
      %v8487 = vpack.c.bf16 %v8471, %v8471
      %v8488 = vpack.c.bf16 %v8472, %v8472
      %v8489 = vpack.c.bf16 %v8473, %v8473
      %v8490 = vpack.c.bf16 %v8474, %v8474
      %v8491 = vpack.c.bf16 %v8475, %v8475
      %v8492 = vpack.c.bf16 %v8476, %v8476
      %v8493 = vpack.c.bf16 %v8477, %v8477
      %v8494 = vpack.c.bf16 %v8478, %v8478
      %v8495 = vpack.c.bf16 %v8479, %v8479
      %v8496 = vpack.c.bf16 %v8480, %v8480
      %v8497 = vpack.c.bf16 %v8481, %v8481
      %v8498 = vpack.c.bf16 %v8482, %v8482
      %v8499 = vpack.c.bf16 %v8483, %v8483
      %v8500 = vpack.c.bf16 %v8484, %v8484
      %8517 = vrot.lane.b32.xlu0 %v8260, 32
      %v8518 = vpop.permute.xlu0 %8517
      %8519 = vrot.lane.b32.xlu0 %v8261, 32
      %v8520 = vpop.permute.xlu0 %8519
      %8521 = vrot.lane.b32.xlu0 %v8262, 32
      %v8522 = vpop.permute.xlu0 %8521
      %8523 = vrot.lane.b32.xlu0 %v8263, 32
      %v8524 = vpop.permute.xlu0 %8523
      %8525 = vrot.lane.b32.xlu0 %v8264, 32
      %v8526 = vpop.permute.xlu0 %8525
      %8527 = vrot.lane.b32.xlu0 %v8265, 32
      %v8528 = vpop.permute.xlu0 %8527
      %8529 = vrot.lane.b32.xlu0 %v8266, 32
      %v8530 = vpop.permute.xlu0 %8529
      %8531 = vrot.lane.b32.xlu0 %v8267, 32
      %v8532 = vpop.permute.xlu0 %8531
      %8533 = vrot.lane.b32.xlu0 %v8268, 32
      %v8534 = vpop.permute.xlu0 %8533
      %8535 = vrot.lane.b32.xlu0 %v8269, 32
      %v8536 = vpop.permute.xlu0 %8535
      %8537 = vrot.lane.b32.xlu0 %v8270, 32
      %v8538 = vpop.permute.xlu0 %8537
      %8539 = vrot.lane.b32.xlu0 %v8271, 32
      %v8540 = vpop.permute.xlu0 %8539
      %8541 = vrot.lane.b32.xlu0 %v8272, 32
      %v8542 = vpop.permute.xlu0 %8541
      %8543 = vrot.lane.b32.xlu0 %v8273, 32
      %v8544 = vpop.permute.xlu0 %8543
      %8545 = vrot.lane.b32.xlu0 %v8274, 32
      %v8546 = vpop.permute.xlu0 %8545
      %8547 = vrot.lane.b32.xlu0 %v8275, 32
      %v8548 = vpop.permute.xlu0 %8547
      %8565 = vrot.lane.b32.xlu0 %v8292, 64
      %v8566 = vpop.permute.xlu0 %8565
      %8567 = vrot.lane.b32.xlu0 %v8293, 64
      %v8568 = vpop.permute.xlu0 %8567
      %8569 = vrot.lane.b32.xlu0 %v8294, 64
      %v8570 = vpop.permute.xlu0 %8569
      %8571 = vrot.lane.b32.xlu0 %v8295, 64
      %v8572 = vpop.permute.xlu0 %8571
      %8573 = vrot.lane.b32.xlu0 %v8296, 64
      %v8574 = vpop.permute.xlu0 %8573
      %8575 = vrot.lane.b32.xlu0 %v8297, 64
      %v8576 = vpop.permute.xlu0 %8575
      %8577 = vrot.lane.b32.xlu0 %v8298, 64
      %v8578 = vpop.permute.xlu0 %8577
      %8579 = vrot.lane.b32.xlu0 %v8299, 64
      %v8580 = vpop.permute.xlu0 %8579
      %8581 = vrot.lane.b32.xlu0 %v8300, 64
      %v8582 = vpop.permute.xlu0 %8581
      %8583 = vrot.lane.b32.xlu0 %v8301, 64
      %v8584 = vpop.permute.xlu0 %8583
      %8585 = vrot.lane.b32.xlu0 %v8302, 64
      %v8586 = vpop.permute.xlu0 %8585
      %8587 = vrot.lane.b32.xlu0 %v8303, 64
      %v8588 = vpop.permute.xlu0 %8587
      %8589 = vrot.lane.b32.xlu0 %v8304, 64
      %v8590 = vpop.permute.xlu0 %8589
      %8591 = vrot.lane.b32.xlu0 %v8305, 64
      %v8592 = vpop.permute.xlu0 %8591
      %8593 = vrot.lane.b32.xlu0 %v8306, 64
      %v8594 = vpop.permute.xlu0 %8593
      %8595 = vrot.lane.b32.xlu0 %v8307, 64
      %v8596 = vpop.permute.xlu0 %8595
      %8613 = vrot.lane.b32.xlu0 %v8324, 96
      %v8614 = vpop.permute.xlu0 %8613
      %8615 = vrot.lane.b32.xlu0 %v8325, 96
      %v8616 = vpop.permute.xlu0 %8615
      %8617 = vrot.lane.b32.xlu0 %v8326, 96
      %v8618 = vpop.permute.xlu0 %8617
      %8619 = vrot.lane.b32.xlu0 %v8327, 96
      %v8620 = vpop.permute.xlu0 %8619
      %8621 = vrot.lane.b32.xlu0 %v8328, 96
      %v8622 = vpop.permute.xlu0 %8621
      %8623 = vrot.lane.b32.xlu0 %v8329, 96
      %v8624 = vpop.permute.xlu0 %8623
      %8625 = vrot.lane.b32.xlu0 %v8330, 96
      %v8626 = vpop.permute.xlu0 %8625
      %8627 = vrot.lane.b32.xlu0 %v8331, 96
      %v8628 = vpop.permute.xlu0 %8627
      %8629 = vrot.lane.b32.xlu0 %v8332, 96
      %v8630 = vpop.permute.xlu0 %8629
      %8631 = vrot.lane.b32.xlu0 %v8333, 96
      %v8632 = vpop.permute.xlu0 %8631
      %8633 = vrot.lane.b32.xlu0 %v8334, 96
      %v8634 = vpop.permute.xlu0 %8633
      %8635 = vrot.lane.b32.xlu0 %v8335, 96
      %v8636 = vpop.permute.xlu0 %8635
      %8637 = vrot.lane.b32.xlu0 %v8336, 96
      %v8638 = vpop.permute.xlu0 %8637
      %8639 = vrot.lane.b32.xlu0 %v8337, 96
      %v8640 = vpop.permute.xlu0 %8639
      %8641 = vrot.lane.b32.xlu0 %v8338, 96
      %v8642 = vpop.permute.xlu0 %8641
      %8643 = vrot.lane.b32.xlu0 %v8339, 96
      %v8644 = vpop.permute.xlu0 %8643
      %8661 = vrot.lane.b32.xlu0 %v8388, 32
      %v8662 = vpop.permute.xlu0 %8661
      %8663 = vrot.lane.b32.xlu0 %v8389, 32
      %v8664 = vpop.permute.xlu0 %8663
      %8665 = vrot.lane.b32.xlu0 %v8390, 32
      %v8666 = vpop.permute.xlu0 %8665
      %8667 = vrot.lane.b32.xlu0 %v8391, 32
      %v8668 = vpop.permute.xlu0 %8667
      %8669 = vrot.lane.b32.xlu0 %v8392, 32
      %v8670 = vpop.permute.xlu0 %8669
      %8671 = vrot.lane.b32.xlu0 %v8393, 32
      %v8672 = vpop.permute.xlu0 %8671
      %8673 = vrot.lane.b32.xlu0 %v8394, 32
      %v8674 = vpop.permute.xlu0 %8673
      %8675 = vrot.lane.b32.xlu0 %v8395, 32
      %v8676 = vpop.permute.xlu0 %8675
      %8677 = vrot.lane.b32.xlu0 %v8396, 32
      %v8678 = vpop.permute.xlu0 %8677
      %8679 = vrot.lane.b32.xlu0 %v8397, 32
      %v8680 = vpop.permute.xlu0 %8679
      %8681 = vrot.lane.b32.xlu0 %v8398, 32
      %v8682 = vpop.permute.xlu0 %8681
      %8683 = vrot.lane.b32.xlu0 %v8399, 32
      %v8684 = vpop.permute.xlu0 %8683
      %8685 = vrot.lane.b32.xlu0 %v8400, 32
      %v8686 = vpop.permute.xlu0 %8685
      %8687 = vrot.lane.b32.xlu0 %v8401, 32
      %v8688 = vpop.permute.xlu0 %8687
      %8689 = vrot.lane.b32.xlu0 %v8402, 32
      %v8690 = vpop.permute.xlu0 %8689
      %8691 = vrot.lane.b32.xlu0 %v8403, 32
      %v8692 = vpop.permute.xlu0 %8691
      %8709 = vrot.lane.b32.xlu0 %v8421, 64
      %v8710 = vpop.permute.xlu0 %8709
      %8711 = vrot.lane.b32.xlu0 %v8422, 64
      %v8712 = vpop.permute.xlu0 %8711
      %8713 = vrot.lane.b32.xlu0 %v8423, 64
      %v8714 = vpop.permute.xlu0 %8713
      %8715 = vrot.lane.b32.xlu0 %v8424, 64
      %v8716 = vpop.permute.xlu0 %8715
      %8717 = vrot.lane.b32.xlu0 %v8425, 64
      %v8718 = vpop.permute.xlu0 %8717
      %8719 = vrot.lane.b32.xlu0 %v8426, 64
      %v8720 = vpop.permute.xlu0 %8719
      %8721 = vrot.lane.b32.xlu0 %v8427, 64
      %v8722 = vpop.permute.xlu0 %8721
      %8723 = vrot.lane.b32.xlu0 %v8428, 64
      %v8724 = vpop.permute.xlu0 %8723
      %8725 = vrot.lane.b32.xlu0 %v8429, 64
      %v8726 = vpop.permute.xlu0 %8725
      %8727 = vrot.lane.b32.xlu0 %v8430, 64
      %v8728 = vpop.permute.xlu0 %8727
      %8729 = vrot.lane.b32.xlu0 %v8431, 64
      %v8730 = vpop.permute.xlu0 %8729
      %8731 = vrot.lane.b32.xlu0 %v8432, 64
      %v8732 = vpop.permute.xlu0 %8731
      %8733 = vrot.lane.b32.xlu0 %v8433, 64
      %v8734 = vpop.permute.xlu0 %8733
      %8735 = vrot.lane.b32.xlu0 %v8434, 64
      %v8736 = vpop.permute.xlu0 %8735
      %8737 = vrot.lane.b32.xlu0 %v8435, 64
      %v8738 = vpop.permute.xlu0 %8737
      %8739 = vrot.lane.b32.xlu0 %v8436, 64
      %v8740 = vpop.permute.xlu0 %8739
      %8757 = vrot.lane.b32.xlu0 %v8453, 96
      %v8758 = vpop.permute.xlu0 %8757
      %8759 = vrot.lane.b32.xlu0 %v8454, 96
      %v8760 = vpop.permute.xlu0 %8759
      %8761 = vrot.lane.b32.xlu0 %v8455, 96
      %v8762 = vpop.permute.xlu0 %8761
      %8763 = vrot.lane.b32.xlu0 %v8456, 96
      %v8764 = vpop.permute.xlu0 %8763
      %8765 = vrot.lane.b32.xlu0 %v8457, 96
      %v8766 = vpop.permute.xlu0 %8765
      %8767 = vrot.lane.b32.xlu0 %v8458, 96
      %v8768 = vpop.permute.xlu0 %8767
      %8769 = vrot.lane.b32.xlu0 %v8459, 96
      %v8770 = vpop.permute.xlu0 %8769
      %8771 = vrot.lane.b32.xlu0 %v8460, 96
      %v8772 = vpop.permute.xlu0 %8771
      %8773 = vrot.lane.b32.xlu0 %v8461, 96
      %v8774 = vpop.permute.xlu0 %8773
      %8775 = vrot.lane.b32.xlu0 %v8462, 96
      %v8776 = vpop.permute.xlu0 %8775
      %8777 = vrot.lane.b32.xlu0 %v8463, 96
      %v8778 = vpop.permute.xlu0 %8777
      %8779 = vrot.lane.b32.xlu0 %v8464, 96
      %v8780 = vpop.permute.xlu0 %8779
      %8781 = vrot.lane.b32.xlu0 %v8465, 96
      %v8782 = vpop.permute.xlu0 %8781
      %8783 = vrot.lane.b32.xlu0 %v8466, 96
      %v8784 = vpop.permute.xlu0 %8783
      %8785 = vrot.lane.b32.xlu0 %v8467, 96
      %v8786 = vpop.permute.xlu0 %8785
      %8787 = vrot.lane.b32.xlu0 %v8468, 96
      %v8788 = vpop.permute.xlu0 %8787
      %v8791 = vsel %vm3190, %v8228, %v8518
      %v8794 = vsel %vm3190, %v8229, %v8520
      %v8797 = vsel %vm3190, %v8230, %v8522
      %v8800 = vsel %vm3190, %v8231, %v8524
      %v8803 = vsel %vm3190, %v8232, %v8526
      %v8806 = vsel %vm3190, %v8233, %v8528
      %v8809 = vsel %vm3190, %v8234, %v8530
      %v8812 = vsel %vm3190, %v8235, %v8532
      %v8815 = vsel %vm3190, %v8236, %v8534
      %v8818 = vsel %vm3190, %v8237, %v8536
      %v8821 = vsel %vm3190, %v8238, %v8538
      %v8824 = vsel %vm3190, %v8239, %v8540
      %v8827 = vsel %vm3190, %v8240, %v8542
      %v8830 = vsel %vm3190, %v8241, %v8544
      %v8833 = vsel %vm3190, %v8242, %v8546
      %v8836 = vsel %vm3190, %v8243, %v8548
      %v8838 = vsel %vm4880, %v8791, %v8566
      %v8840 = vsel %vm4880, %v8794, %v8568
      %v8842 = vsel %vm4880, %v8797, %v8570
      %v8844 = vsel %vm4880, %v8800, %v8572
      %v8846 = vsel %vm4880, %v8803, %v8574
      %v8848 = vsel %vm4880, %v8806, %v8576
      %v8850 = vsel %vm4880, %v8809, %v8578
      %v8852 = vsel %vm4880, %v8812, %v8580
      %v8854 = vsel %vm4880, %v8815, %v8582
      %v8856 = vsel %vm4880, %v8818, %v8584
      %v8858 = vsel %vm4880, %v8821, %v8586
      %v8860 = vsel %vm4880, %v8824, %v8588
      %v8862 = vsel %vm4880, %v8827, %v8590
      %v8864 = vsel %vm4880, %v8830, %v8592
      %v8866 = vsel %vm4880, %v8833, %v8594
      %v8868 = vsel %vm4880, %v8836, %v8596
      %v8870 = vsel %vm4945, %v8838, %v8614
      %v8872 = vsel %vm4945, %v8840, %v8616
      %v8874 = vsel %vm4945, %v8842, %v8618
      %v8876 = vsel %vm4945, %v8844, %v8620
      %v8878 = vsel %vm4945, %v8846, %v8622
      %v8880 = vsel %vm4945, %v8848, %v8624
      %v8882 = vsel %vm4945, %v8850, %v8626
      %v8884 = vsel %vm4945, %v8852, %v8628
      %v8886 = vsel %vm4945, %v8854, %v8630
      %v8888 = vsel %vm4945, %v8856, %v8632
      %v8890 = vsel %vm4945, %v8858, %v8634
      %v8892 = vsel %vm4945, %v8860, %v8636
      %v8894 = vsel %vm4945, %v8862, %v8638
      %v8896 = vsel %vm4945, %v8864, %v8640
      %v8898 = vsel %vm4945, %v8866, %v8642
      %v8900 = vsel %vm4945, %v8868, %v8644
      %v8903 = vsel %vm3190, %v8356, %v8662
      %v8906 = vsel %vm3190, %v8357, %v8664
      %v8909 = vsel %vm3190, %v8358, %v8666
      %v8912 = vsel %vm3190, %v8359, %v8668
      %v8915 = vsel %vm3190, %v8360, %v8670
      %v8918 = vsel %vm3190, %v8361, %v8672
      %v8921 = vsel %vm3190, %v8362, %v8674
      %v8924 = vsel %vm3190, %v8363, %v8676
      %v8927 = vsel %vm3190, %v8364, %v8678
      %v8930 = vsel %vm3190, %v8365, %v8680
      %v8933 = vsel %vm3190, %v8366, %v8682
      %v8936 = vsel %vm3190, %v8367, %v8684
      %v8939 = vsel %vm3190, %v8368, %v8686
      %v8942 = vsel %vm3190, %v8369, %v8688
      %v8945 = vsel %vm3190, %v8370, %v8690
      %v8948 = vsel %vm3190, %v8371, %v8692
      %v8950 = vsel %vm4880, %v8903, %v8710
      %v8952 = vsel %vm4880, %v8906, %v8712
      %v8954 = vsel %vm4880, %v8909, %v8714
      %v8956 = vsel %vm4880, %v8912, %v8716
      %v8958 = vsel %vm4880, %v8915, %v8718
      %v8960 = vsel %vm4880, %v8918, %v8720
      %v8962 = vsel %vm4880, %v8921, %v8722
      %v8964 = vsel %vm4880, %v8924, %v8724
      %v8966 = vsel %vm4880, %v8927, %v8726
      %v8968 = vsel %vm4880, %v8930, %v8728
      %v8970 = vsel %vm4880, %v8933, %v8730
      %v8972 = vsel %vm4880, %v8936, %v8732
      %v8974 = vsel %vm4880, %v8939, %v8734
      %v8976 = vsel %vm4880, %v8942, %v8736
      %v8978 = vsel %vm4880, %v8945, %v8738
      %v8980 = vsel %vm4880, %v8948, %v8740
      %v8982 = vsel %vm4945, %v8950, %v8758
      %v8984 = vsel %vm4945, %v8952, %v8760
      %v8986 = vsel %vm4945, %v8954, %v8762
      %v8988 = vsel %vm4945, %v8956, %v8764
      %v8990 = vsel %vm4945, %v8958, %v8766
      %v8992 = vsel %vm4945, %v8960, %v8768
      %v8994 = vsel %vm4945, %v8962, %v8770
      %v8996 = vsel %vm4945, %v8964, %v8772
      %v8998 = vsel %vm4945, %v8966, %v8774
      %v9000 = vsel %vm4945, %v8968, %v8776
      %v9002 = vsel %vm4945, %v8970, %v8778
      %v9004 = vsel %vm4945, %v8972, %v8780
      %v9006 = vsel %vm4945, %v8974, %v8782
      %v9008 = vsel %vm4945, %v8976, %v8784
      %v9010 = vsel %vm4945, %v8978, %v8786
      %v9012 = vsel %vm4945, %v8980, %v8788
      %v9061 = vunpack.c.l.b16 %v8870
      %v9062 = vunpack.c.l.b16 %v8982
      %v9063 = vunpack.c.l.b16 %v8485
      %v9064 = vunpack.c.l.b16 %v8872
      %v9065 = vunpack.c.l.b16 %v8984
      %v9066 = vunpack.c.l.b16 %v8486
      %v9067 = vunpack.c.l.b16 %v8874
      %v9068 = vunpack.c.l.b16 %v8986
      %v9069 = vunpack.c.l.b16 %v8487
      %v9070 = vunpack.c.l.b16 %v8876
      %v9071 = vunpack.c.l.b16 %v8988
      %v9072 = vunpack.c.l.b16 %v8488
      %v9073 = vunpack.c.l.b16 %v8878
      %v9074 = vunpack.c.l.b16 %v8990
      %v9075 = vunpack.c.l.b16 %v8489
      %v9076 = vunpack.c.l.b16 %v8880
      %v9077 = vunpack.c.l.b16 %v8992
      %v9078 = vunpack.c.l.b16 %v8490
      %v9079 = vunpack.c.l.b16 %v8882
      %v9080 = vunpack.c.l.b16 %v8994
      %v9081 = vunpack.c.l.b16 %v8491
      %v9082 = vunpack.c.l.b16 %v8884
      %v9083 = vunpack.c.l.b16 %v8996
      %v9084 = vunpack.c.l.b16 %v8492
      %v9085 = vunpack.c.l.b16 %v8886
      %v9086 = vunpack.c.l.b16 %v8998
      %v9087 = vunpack.c.l.b16 %v8493
      %v9088 = vunpack.c.l.b16 %v8888
      %v9089 = vunpack.c.l.b16 %v9000
      %v9090 = vunpack.c.l.b16 %v8494
      %v9091 = vunpack.c.l.b16 %v8890
      %v9092 = vunpack.c.l.b16 %v9002
      %v9093 = vunpack.c.l.b16 %v8495
      %v9094 = vunpack.c.l.b16 %v8892
      %v9095 = vunpack.c.l.b16 %v9004
      %v9096 = vunpack.c.l.b16 %v8496
      %v9097 = vunpack.c.l.b16 %v8894
      %v9098 = vunpack.c.l.b16 %v9006
      %v9099 = vunpack.c.l.b16 %v8497
      %v9100 = vunpack.c.l.b16 %v8896
      %v9101 = vunpack.c.l.b16 %v9008
      %v9102 = vunpack.c.l.b16 %v8498
      %v9103 = vunpack.c.l.b16 %v8898
      %v9104 = vunpack.c.l.b16 %v9010
      %v9105 = vunpack.c.l.b16 %v8499
      %v9106 = vunpack.c.l.b16 %v8900
      %v9107 = vunpack.c.l.b16 %v9012
      %v9108 = vunpack.c.l.b16 %v8500
      %v9109 = vld [vmem:[%s5] sm:$0xf]
      %v9110 = vld [vmem:[%s5 + $0x4] sm:$0xf]
      %v9111 = vld [vmem:[%s5 + $0x8] sm:$0xf]
      %v9112 = vld [vmem:[%s5 + $0xc] sm:$0xf]
      %v9113 = vld [vmem:[%s5 + $0x10] sm:$0xf]
      %v9114 = vld [vmem:[%s5 + $0x14] sm:$0xf]
      %v9115 = vld [vmem:[%s5 + $0x18] sm:$0xf]
      %v9116 = vld [vmem:[%s5 + $0x1c] sm:$0xf]
      %v9117 = vld [vmem:[%s5 + $0x20] sm:$0xf]
      %v9118 = vld [vmem:[%s5 + $0x24] sm:$0xf]
      %v9119 = vld [vmem:[%s5 + $0x28] sm:$0xf]
      %v9120 = vld [vmem:[%s5 + $0x2c] sm:$0xf]
      %v9121 = vld [vmem:[%s5 + $0x30] sm:$0xf]
      %v9122 = vld [vmem:[%s5 + $0x34] sm:$0xf]
      %v9123 = vld [vmem:[%s5 + $0x38] sm:$0xf]
      %v9124 = vld [vmem:[%s5 + $0x3c] sm:$0xf]
      %v9125 = vld [vmem:[%s5 + $0x40] sm:$0xf]
      %v9126 = vld [vmem:[%s5 + $0x44] sm:$0xf]
      %v9127 = vld [vmem:[%s5 + $0x48] sm:$0xf]
      %v9128 = vld [vmem:[%s5 + $0x4c] sm:$0xf]
      %v9129 = vld [vmem:[%s5 + $0x50] sm:$0xf]
      %v9130 = vld [vmem:[%s5 + $0x54] sm:$0xf]
      %v9131 = vld [vmem:[%s5 + $0x58] sm:$0xf]
      %v9132 = vld [vmem:[%s5 + $0x5c] sm:$0xf]
      %v9133 = vld [vmem:[%s5 + $0x60] sm:$0xf]
      %v9134 = vld [vmem:[%s5 + $0x64] sm:$0xf]
      %v9135 = vld [vmem:[%s5 + $0x68] sm:$0xf]
      %v9136 = vld [vmem:[%s5 + $0x6c] sm:$0xf]
      %v9137 = vld [vmem:[%s5 + $0x70] sm:$0xf]
      %v9138 = vld [vmem:[%s5 + $0x74] sm:$0xf]
      %v9139 = vld [vmem:[%s5 + $0x78] sm:$0xf]
      %v9140 = vld [vmem:[%s5 + $0x7c] sm:$0xf]
      %v9141 = vld [vmem:[%s5 + $0x80] sm:$0xf]
      %v9142 = vld [vmem:[%s5 + $0x84] sm:$0xf]
      %v9143 = vld [vmem:[%s5 + $0x88] sm:$0xf]
      %v9144 = vld [vmem:[%s5 + $0x8c] sm:$0xf]
      %v9145 = vld [vmem:[%s6] sm:$0x1]
      %v9147 = vlaneseq
      %v9148 = vshrl.u32 %v9147, 7
      %v9149 = vsub.s32 0, %v9148
      %v9150 = vrot.slane %v9145, %v9149
      %v9152 = vpack.c.b16 %v9064, %v9061
      %v9153 = vpack.c.b16 %v9065, %v9062
      %v9154 = vpack.c.b16 %v9066, %v9063
      %v9155 = vpack.c.b16 %v9070, %v9067
      %v9156 = vpack.c.b16 %v9071, %v9068
      %v9157 = vpack.c.b16 %v9072, %v9069
      %v9158 = vpack.c.b16 %v9076, %v9073
      %v9159 = vpack.c.b16 %v9077, %v9074
      %v9160 = vpack.c.b16 %v9078, %v9075
      %v9161 = vpack.c.b16 %v9082, %v9079
      %v9162 = vpack.c.b16 %v9083, %v9080
      %v9163 = vpack.c.b16 %v9084, %v9081
      %v9164 = vpack.c.b16 %v9088, %v9085
      %v9165 = vpack.c.b16 %v9089, %v9086
      %v9166 = vpack.c.b16 %v9090, %v9087
      %v9167 = vpack.c.b16 %v9094, %v9091
      %v9168 = vpack.c.b16 %v9095, %v9092
      %v9169 = vpack.c.b16 %v9096, %v9093
      %v9170 = vpack.c.b16 %v9100, %v9097
      %v9171 = vpack.c.b16 %v9101, %v9098
      %v9172 = vpack.c.b16 %v9102, %v9099
      %v9173 = vpack.c.b16 %v9106, %v9103
      %v9174 = vpack.c.b16 %v9107, %v9104
      %v9175 = vpack.c.b16 %v9108, %v9105
      %v9228 = vunpack.c.l.b16 %v9109
      %v9229 = vunpack.c.l.b16 %v9110
      %v9230 = vunpack.c.l.b16 %v9111
      %v9231 = vunpack.c.l.b16 %v9112
      %v9232 = vunpack.c.l.b16 %v9113
      %v9233 = vunpack.c.l.b16 %v9114
      %v9234 = vunpack.c.l.b16 %v9115
      %v9235 = vunpack.c.l.b16 %v9116
      %v9236 = vunpack.c.l.b16 %v9117
      %v9237 = vunpack.c.l.b16 %v9118
      %v9238 = vunpack.c.l.b16 %v9119
      %v9239 = vunpack.c.l.b16 %v9120
      %v9240 = vunpack.c.l.b16 %v9121
      %v9241 = vunpack.c.l.b16 %v9122
      %v9242 = vunpack.c.l.b16 %v9123
      %v9243 = vunpack.c.l.b16 %v9124
      %v9244 = vunpack.c.l.b16 %v9125
      %v9245 = vunpack.c.l.b16 %v9126
      %v9246 = vunpack.c.l.b16 %v9127
      %v9247 = vunpack.c.l.b16 %v9128
      %v9248 = vunpack.c.l.b16 %v9129
      %v9249 = vunpack.c.l.b16 %v9130
      %v9250 = vunpack.c.l.b16 %v9131
      %v9251 = vunpack.c.l.b16 %v9132
      %v9252 = vunpack.c.l.b16 %v9133
      %v9253 = vunpack.c.l.b16 %v9134
      %v9254 = vunpack.c.l.b16 %v9135
      %v9255 = vunpack.c.l.b16 %v9136
      %v9256 = vunpack.c.l.b16 %v9137
      %v9257 = vunpack.c.l.b16 %v9138
      %v9258 = vunpack.c.l.b16 %v9139
      %v9259 = vunpack.c.l.b16 %v9140
      %v9260 = vunpack.c.l.b16 %v9141
      %v9261 = vunpack.c.l.b16 %v9142
      %v9262 = vunpack.c.l.b16 %v9143
      %v9263 = vunpack.c.l.b16 %v9144
      %v9264 = vpack.c.b16 %v9229, %v9228
      %v9265 = vpack.c.b16 %v9231, %v9230
      %v9266 = vpack.c.b16 %v9233, %v9232
      %v9267 = vpack.c.b16 %v9235, %v9234
      %v9268 = vpack.c.b16 %v9237, %v9236
      %v9269 = vpack.c.b16 %v9239, %v9238
      %v9270 = vpack.c.b16 %v9241, %v9240
      %v9271 = vpack.c.b16 %v9243, %v9242
      %v9272 = vpack.c.b16 %v9245, %v9244
      %v9273 = vpack.c.b16 %v9247, %v9246
      %v9274 = vpack.c.b16 %v9249, %v9248
      %v9275 = vpack.c.b16 %v9251, %v9250
      %v9276 = vpack.c.b16 %v9253, %v9252
      %v9277 = vpack.c.b16 %v9255, %v9254
      %v9278 = vpack.c.b16 %v9257, %v9256
      %v9279 = vpack.c.b16 %v9259, %v9258
      %v9280 = vpack.c.b16 %v9261, %v9260
      %v9281 = vpack.c.b16 %v9263, %v9262
      %v9301 = vsel %vm3190, %v9154, 0
      %v9304 = vsel %vm3190, %v9157, 0
      %v9307 = vsel %vm3190, %v9160, 0
      %v9310 = vsel %vm3190, %v9163, 0
      %v9313 = vsel %vm3190, %v9166, 0
      %v9316 = vsel %vm3190, %v9169, 0
      %v9319 = vsel %vm3190, %v9172, 0
      %v9322 = vsel %vm3190, %v9175, 0
      %9324 = vmatprep.subr.bf16.mxu0 0
      %9325 = vmatpush1.bf16.msra.mxu0 %v9264
      %9326 = vmatprep.subr.bf16.mxu0 0
      %9327 = vmatpush1.bf16.msra.mxu0 %v9265
      %9328 = vmatprep.subr.bf16.mxu0 0
      %9329 = vmatpush1.bf16.msra.mxu0 %v9266
      %9330 = vmatprep.subr.bf16.mxu0 0
      %9331 = vmatpush1.bf16.msra.mxu0 %v9267
      %9332 = vmatprep.subr.bf16.mxu0 0
      %9333 = vmatpush1.bf16.msra.mxu0 %v9268
      %9334 = vmatprep.subr.bf16.mxu0 0
      %9335 = vmatpush1.bf16.msra.mxu0 %v9269
      %9336 = vmatprep.subr.bf16.mxu0 0
      %9337 = vmatpush1.bf16.msra.mxu0 %v9270
      %9338 = vmatprep.subr.bf16.mxu0 0
      %9339 = vmatpush1.bf16.msra.mxu0 %v9271
      %9340 = vmatprep.subr.bf16.mxu0 0
      %9341 = vmatpush1.bf16.msra.mxu0 %v9272
      %9342 = vmatprep.subr.bf16.mxu0 0
      %9343 = vmatpush1.bf16.msra.mxu0 %v9273
      %9344 = vmatprep.subr.bf16.mxu0 0
      %9345 = vmatpush1.bf16.msra.mxu0 %v9274
      %9346 = vmatprep.subr.bf16.mxu0 0
      %9347 = vmatpush1.bf16.msra.mxu0 %v9275
      %9348 = vmatprep.subr.bf16.mxu0 0
      %9349 = vmatpush1.bf16.msra.mxu0 %v9276
      %9350 = vmatprep.subr.bf16.mxu0 0
      %9351 = vmatpush1.bf16.msra.mxu0 %v9277
      %9352 = vmatprep.subr.bf16.mxu0 0
      %9353 = vmatpush1.bf16.msra.mxu0 %v9278
      %9354 = vmatprep.subr.bf16.mxu0 0
      %9355 = vmatpush1.bf16.msra.mxu0 %v9279
      %9356 = vmatprep.mubr.bf16.mxu0 %v9153
      %9357 = vmatmul.mubr.bf16.gmra.mrb[0].mxu0 %v9152
      %v9358 = vpop.f32.mrb[0].mxu0
      %v9359 = vadd.f32 %v9150, %v9358
      %v9360 = vpop.f32.mrb[0].mxu0
      %v9361 = vpop.f32.mrb[0].mxu0
      %v9362 = vadd.f32 %v9150, %v9361
      %v9363 = vpop.f32.mrb[0].mxu0
      %9364 = vmatprep.mubr.bf16.mxu0 %v9156
      %9365 = vmatmul.mubr.bf16.gmra.mrb[0].mxu0 %v9155
      %v9366 = vpop.f32.mrb[0].mxu0
      %v9367 = vadd.f32 %v9150, %v9366
      %v9368 = vpop.f32.mrb[0].mxu0
      %v9369 = vpop.f32.mrb[0].mxu0
      %v9370 = vadd.f32 %v9150, %v9369
      %v9371 = vpop.f32.mrb[0].mxu0
      %9372 = vmatprep.mubr.bf16.mxu0 %v9159
      %9373 = vmatmul.mubr.bf16.gmra.mrb[0].mxu0 %v9158
      %v9374 = vpop.f32.mrb[0].mxu0
      %v9375 = vadd.f32 %v9150, %v9374
      %v9376 = vpop.f32.mrb[0].mxu0
      %v9377 = vpop.f32.mrb[0].mxu0
      %v9378 = vadd.f32 %v9150, %v9377
      %v9379 = vpop.f32.mrb[0].mxu0
      %9380 = vmatprep.mubr.bf16.mxu0 %v9162
      %9381 = vmatmul.mubr.bf16.gmra.mrb[0].mxu0 %v9161
      %v9382 = vpop.f32.mrb[0].mxu0
      %v9383 = vadd.f32 %v9150, %v9382
      %v9384 = vpop.f32.mrb[0].mxu0
      %v9385 = vpop.f32.mrb[0].mxu0
      %v9386 = vadd.f32 %v9150, %v9385
      %v9387 = vpop.f32.mrb[0].mxu0
      %9388 = vmatprep.mubr.bf16.mxu0 %v9165
      %9389 = vmatmul.mubr.bf16.gmra.mrb[0].mxu0 %v9164
      %v9390 = vpop.f32.mrb[0].mxu0
      %v9391 = vadd.f32 %v9150, %v9390
      %v9392 = vpop.f32.mrb[0].mxu0
      %v9393 = vpop.f32.mrb[0].mxu0
      %v9394 = vadd.f32 %v9150, %v9393
      %v9395 = vpop.f32.mrb[0].mxu0
      %9396 = vmatprep.mubr.bf16.mxu0 %v9168
      %9397 = vmatmul.mubr.bf16.gmra.mrb[0].mxu0 %v9167
      %v9398 = vpop.f32.mrb[0].mxu0
      %v9399 = vadd.f32 %v9150, %v9398
      %v9400 = vpop.f32.mrb[0].mxu0
      %v9401 = vpop.f32.mrb[0].mxu0
      %v9402 = vadd.f32 %v9150, %v9401
      %v9403 = vpop.f32.mrb[0].mxu0
      %9404 = vmatprep.mubr.bf16.mxu0 %v9171
      %9405 = vmatmul.mubr.bf16.gmra.mrb[0].mxu0 %v9170
      %v9406 = vpop.f32.mrb[0].mxu0
      %v9407 = vadd.f32 %v9150, %v9406
      %v9408 = vpop.f32.mrb[0].mxu0
      %v9409 = vpop.f32.mrb[0].mxu0
      %v9410 = vadd.f32 %v9150, %v9409
      %v9411 = vpop.f32.mrb[0].mxu0
      %9412 = vmatprep.mubr.bf16.mxu0 %v9174
      %9413 = vmatmul.mubr.bf16.gmra.mrb[0].mxu0 %v9173
      %v9414 = vpop.f32.mrb[0].mxu0
      %v9415 = vadd.f32 %v9150, %v9414
      %v9416 = vpop.f32.mrb[0].mxu0
      %v9417 = vpop.f32.mrb[0].mxu0
      %v9418 = vadd.f32 %v9150, %v9417
      %v9419 = vpop.f32.mrb[0].mxu0
      %9420 = vdwg.mxu0
      %9421 = vmatprep.subr.bf16.mxu0 0
      %9422 = vmatpush1.bf16.msra.mxu0 %v9280
      %9423 = vmatprep.subr.bf16.mxu0 0
      %9424 = vmatpush1.bf16.msra.mxu0 %v9281
      %9425 = vmatprep.subr.bf16.mxu0 0
      %9426 = vmatpush1.bf16.msra.mxu0 0
      %9427 = vmatprep.subr.bf16.mxu0 0
      %9428 = vmatpush1.bf16.msra.mxu0 0
      %9429 = vmatprep.subr.bf16.mxu0 0
      %9430 = vmatpush1.bf16.msra.mxu0 0
      %9431 = vmatprep.subr.bf16.mxu0 0
      %9432 = vmatpush1.bf16.msra.mxu0 0
      %9433 = vmatprep.subr.bf16.mxu0 0
      %9434 = vmatpush1.bf16.msra.mxu0 0
      %9435 = vmatprep.subr.bf16.mxu0 0
      %9436 = vmatpush1.bf16.msra.mxu0 0
      %9437 = vmatprep.subr.bf16.mxu0 0
      %9438 = vmatpush1.bf16.msra.mxu0 0
      %9439 = vmatprep.subr.bf16.mxu0 0
      %9440 = vmatpush1.bf16.msra.mxu0 0
      %9441 = vmatprep.subr.bf16.mxu0 0
      %9442 = vmatpush1.bf16.msra.mxu0 0
      %9443 = vmatprep.subr.bf16.mxu0 0
      %9444 = vmatpush1.bf16.msra.mxu0 0
      %9445 = vmatprep.subr.bf16.mxu0 0
      %9446 = vmatpush1.bf16.msra.mxu0 0
      %9447 = vmatprep.subr.bf16.mxu0 0
      %9448 = vmatpush1.bf16.msra.mxu0 0
      %9449 = vmatprep.subr.bf16.mxu0 0
      %9450 = vmatpush1.bf16.msra.mxu0 0
      %9451 = vmatprep.subr.bf16.mxu0 0
      %9452 = vmatpush1.bf16.msra.mxu0 0
      %9453 = vmatprep.mubr.bf16.mxu0 0
      %9454 = vmatmul.mubr.bf16.gmra.mrb[0].mxu0 %v9301
      %v9455 = vpop.f32.mrb[0].mxu0
      %v9456 = vadd.f32 %v9359, %v9455
      %v9457 = vpop.f32.mrb[0].mxu0
      %v9458 = vpop.f32.mrb[0].mxu0
      %v9459 = vadd.f32 %v9362, %v9458
      %v9460 = vpop.f32.mrb[0].mxu0
      %9461 = vmatprep.mubr.bf16.mxu0 0
      %9462 = vmatmul.mubr.bf16.gmra.mrb[0].mxu0 %v9304
      %v9463 = vpop.f32.mrb[0].mxu0
      %v9464 = vadd.f32 %v9367, %v9463
      %v9465 = vpop.f32.mrb[0].mxu0
      %v9466 = vpop.f32.mrb[0].mxu0
      %v9467 = vadd.f32 %v9370, %v9466
      %v9468 = vpop.f32.mrb[0].mxu0
      %9469 = vmatprep.mubr.bf16.mxu0 0
      %9470 = vmatmul.mubr.bf16.gmra.mrb[0].mxu0 %v9307
      %v9471 = vpop.f32.mrb[0].mxu0
      %v9472 = vadd.f32 %v9375, %v9471
      %v9473 = vpop.f32.mrb[0].mxu0
      %v9474 = vpop.f32.mrb[0].mxu0
      %v9475 = vadd.f32 %v9378, %v9474
      %v9476 = vpop.f32.mrb[0].mxu0
      %9477 = vmatprep.mubr.bf16.mxu0 0
      %9478 = vmatmul.mubr.bf16.gmra.mrb[0].mxu0 %v9310
      %v9479 = vpop.f32.mrb[0].mxu0
      %v9480 = vadd.f32 %v9383, %v9479
      %v9481 = vpop.f32.mrb[0].mxu0
      %v9482 = vpop.f32.mrb[0].mxu0
      %v9483 = vadd.f32 %v9386, %v9482
      %v9484 = vpop.f32.mrb[0].mxu0
      %9485 = vmatprep.mubr.bf16.mxu0 0
      %9486 = vmatmul.mubr.bf16.gmra.mrb[0].mxu0 %v9313
      %v9487 = vpop.f32.mrb[0].mxu0
      %v9488 = vadd.f32 %v9391, %v9487
      %v9489 = vpop.f32.mrb[0].mxu0
      %v9490 = vpop.f32.mrb[0].mxu0
      %v9491 = vadd.f32 %v9394, %v9490
      %v9492 = vpop.f32.mrb[0].mxu0
      %9493 = vmatprep.mubr.bf16.mxu0 0
      %9494 = vmatmul.mubr.bf16.gmra.mrb[0].mxu0 %v9316
      %v9495 = vpop.f32.mrb[0].mxu0
      %v9496 = vadd.f32 %v9399, %v9495
      %v9497 = vpop.f32.mrb[0].mxu0
      %v9498 = vpop.f32.mrb[0].mxu0
      %v9499 = vadd.f32 %v9402, %v9498
      %v9500 = vpop.f32.mrb[0].mxu0
      %9501 = vmatprep.mubr.bf16.mxu0 0
      %9502 = vmatmul.mubr.bf16.gmra.mrb[0].mxu0 %v9319
      %v9503 = vpop.f32.mrb[0].mxu0
      %v9504 = vadd.f32 %v9407, %v9503
      %v9505 = vpop.f32.mrb[0].mxu0
      %v9506 = vpop.f32.mrb[0].mxu0
      %v9507 = vadd.f32 %v9410, %v9506
      %v9508 = vpop.f32.mrb[0].mxu0
      %9509 = vmatprep.mubr.bf16.mxu0 0
      %9510 = vmatmul.mubr.bf16.gmra.mrb[0].mxu0 %v9322
      %v9511 = vpop.f32.mrb[0].mxu0
      %v9512 = vadd.f32 %v9415, %v9511
      %v9513 = vpop.f32.mrb[0].mxu0
      %v9514 = vpop.f32.mrb[0].mxu0
      %v9515 = vadd.f32 %v9418, %v9514
      %v9516 = vpop.f32.mrb[0].mxu0
      %9517 = vdwg.mxu0
      %v9518 = vmax.f32 %v9456, 0.0
      %v9519 = vmax.f32 %v9459, 0.0
      %v9520 = vmax.f32 %v9464, 0.0
      %v9521 = vmax.f32 %v9467, 0.0
      %v9522 = vmax.f32 %v9472, 0.0
      %v9523 = vmax.f32 %v9475, 0.0
      %v9524 = vmax.f32 %v9480, 0.0
      %v9525 = vmax.f32 %v9483, 0.0
      %v9526 = vmax.f32 %v9488, 0.0
      %v9527 = vmax.f32 %v9491, 0.0
      %v9528 = vmax.f32 %v9496, 0.0
      %v9529 = vmax.f32 %v9499, 0.0
      %v9530 = vmax.f32 %v9504, 0.0
      %v9531 = vmax.f32 %v9507, 0.0
      %v9532 = vmax.f32 %v9512, 0.0
      %v9533 = vmax.f32 %v9515, 0.0
      %9534 = vst.msk [vmem:[#allocation5] sm:$0xff] %vm4880, 0.0
      %vm9535 = vcmask 517120
      %9536 = vst.msk [vmem:[#allocation5 + $0x8] sm:$0x3] %vm9535, 0.0
      %9537 = vst.msk [vmem:[#allocation5 + $0xa0] sm:$0xff] %vm4880, 0.0
      %9538 = vst.msk [vmem:[#allocation5 + $0xa8] sm:$0x3] %vm9535, 0.0
      %s9539 = scalar_lea.vmem [#allocation5], 144
      %9540 = vst.msk [vmem:[%s9539] sm:$0xff] %vm4880, 0.0
      %9541 = vst.msk [vmem:[%s9539 + $0x8] sm:$0x3] %vm9535, 0.0
      %9542 = vst.msk [vmem:[%s9539 + $0xa0] sm:$0xff] %vm4880, 0.0
      %9543 = vst.msk [vmem:[%s9539 + $0xa8] sm:$0x3] %vm9535, 0.0
      %vm9544 = vcmask 516096
      %9545 = vst.msk [vmem:[#allocation5] sm:$0x1] %vm9544, 0.0
      %9546 = vst.msk [vmem:[#allocation5 + $0x10] sm:$0x1] %vm9544, 0.0
      %9547 = vst.msk [vmem:[#allocation5 + $0x20] sm:$0x1] %vm9544, 0.0
      %9548 = vst.msk [vmem:[#allocation5 + $0x30] sm:$0x1] %vm9544, 0.0
      %9549 = vst.msk [vmem:[#allocation5 + $0x40] sm:$0x1] %vm9544, 0.0
      %9550 = vst.msk [vmem:[#allocation5 + $0x50] sm:$0x1] %vm9544, 0.0
      %9551 = vst.msk [vmem:[#allocation5 + $0x60] sm:$0x1] %vm9544, 0.0
      %9552 = vst.msk [vmem:[#allocation5 + $0x70] sm:$0x1] %vm9544, 0.0
      %9553 = vst.msk [vmem:[#allocation5 + $0x80] sm:$0x1] %vm9544, 0.0
      %9554 = vst.msk [vmem:[#allocation5 + $0x90] sm:$0x1] %vm9544, 0.0
      %9555 = vst.msk [vmem:[#allocation5 + $0xa0] sm:$0x1] %vm9544, 0.0
      %9556 = vst.msk [vmem:[#allocation5 + $0xb0] sm:$0x1] %vm9544, 0.0
      %9557 = vst.msk [vmem:[#allocation5 + $0xc0] sm:$0x1] %vm9544, 0.0
      %9558 = vst.msk [vmem:[#allocation5 + $0xd0] sm:$0x1] %vm9544, 0.0
      %9559 = vst.msk [vmem:[#allocation5 + $0xe0] sm:$0x1] %vm9544, 0.0
      %9560 = vst.msk [vmem:[#allocation5 + $0xf0] sm:$0x1] %vm9544, 0.0
      %9561 = vst.msk [vmem:[#allocation5 + $0x100] sm:$0x1] %vm9544, 0.0
      %9562 = vst.msk [vmem:[#allocation5 + $0x110] sm:$0x1] %vm9544, 0.0
      %9563 = vst.msk [vmem:[#allocation5 + $0x120] sm:$0x1] %vm9544, 0.0
      %9564 = vst.msk [vmem:[#allocation5 + $0x130] sm:$0x1] %vm9544, 0.0
      %9565 = vst.msk [vmem:[#allocation5 + $0x9] sm:$0x1] %vm9544, 0.0
      %9566 = vst.msk [vmem:[#allocation5 + $0x19] sm:$0x1] %vm9544, 0.0
      %9567 = vst.msk [vmem:[#allocation5 + $0x29] sm:$0x1] %vm9544, 0.0
      %9568 = vst.msk [vmem:[#allocation5 + $0x39] sm:$0x1] %vm9544, 0.0
      %9569 = vst.msk [vmem:[#allocation5 + $0x49] sm:$0x1] %vm9544, 0.0
      %9570 = vst.msk [vmem:[#allocation5 + $0x59] sm:$0x1] %vm9544, 0.0
      %9571 = vst.msk [vmem:[#allocation5 + $0x69] sm:$0x1] %vm9544, 0.0
      %9572 = vst.msk [vmem:[#allocation5 + $0x79] sm:$0x1] %vm9544, 0.0
      %9573 = vst.msk [vmem:[#allocation5 + $0x89] sm:$0x1] %vm9544, 0.0
      %9574 = vst.msk [vmem:[#allocation5 + $0x99] sm:$0x1] %vm9544, 0.0
      %9575 = vst.msk [vmem:[#allocation5 + $0xa9] sm:$0x1] %vm9544, 0.0
      %9576 = vst.msk [vmem:[#allocation5 + $0xb9] sm:$0x1] %vm9544, 0.0
      %9577 = vst.msk [vmem:[#allocation5 + $0xc9] sm:$0x1] %vm9544, 0.0
      %9578 = vst.msk [vmem:[#allocation5 + $0xd9] sm:$0x1] %vm9544, 0.0
      %9579 = vst.msk [vmem:[#allocation5 + $0xe9] sm:$0x1] %vm9544, 0.0
      %9580 = vst.msk [vmem:[#allocation5 + $0xf9] sm:$0x1] %vm9544, 0.0
      %9581 = vst.msk [vmem:[#allocation5 + $0x109] sm:$0x1] %vm9544, 0.0
      %9582 = vst.msk [vmem:[#allocation5 + $0x119] sm:$0x1] %vm9544, 0.0
      %9583 = vst.msk [vmem:[#allocation5 + $0x129] sm:$0x1] %vm9544, 0.0
      %9584 = vst.msk [vmem:[#allocation5 + $0x139] sm:$0x1] %vm9544, 0.0
      %s9585 = scalar_lea.vmem [#allocation5], 16
      %9586 = vst.msk [vmem:[%s9585 + $0x1] sm:$0xff] %vm4880, %v9518
      %9587 = vst.msk [vmem:[%s9585 + $0x11] sm:$0xff] %vm4880, %v9519
      %9588 = vst.msk [vmem:[%s9585 + $0x21] sm:$0xff] %vm4880, %v9520
      %9589 = vst.msk [vmem:[%s9585 + $0x31] sm:$0xff] %vm4880, %v9521
      %9590 = vst.msk [vmem:[%s9585 + $0x41] sm:$0xff] %vm4880, %v9522
      %9591 = vst.msk [vmem:[%s9585 + $0x51] sm:$0xff] %vm4880, %v9523
      %9592 = vst.msk [vmem:[%s9585 + $0x61] sm:$0xff] %vm4880, %v9524
      %9593 = vst.msk [vmem:[%s9585 + $0x71] sm:$0xff] %vm4880, %v9525
      %9594 = vst.msk [vmem:[%s9585 + $0xa1] sm:$0xff] %vm4880, %v9526
      %9595 = vst.msk [vmem:[%s9585 + $0xb1] sm:$0xff] %vm4880, %v9527
      %9596 = vst.msk [vmem:[%s9585 + $0xc1] sm:$0xff] %vm4880, %v9528
      %9597 = vst.msk [vmem:[%s9585 + $0xd1] sm:$0xff] %vm4880, %v9529
      %9598 = vst.msk [vmem:[%s9585 + $0xe1] sm:$0xff] %vm4880, %v9530
      %9599 = vst.msk [vmem:[%s9585 + $0xf1] sm:$0xff] %vm4880, %v9531
      %9600 = vst.msk [vmem:[%s9585 + $0x101] sm:$0xff] %vm4880, %v9532
      %9601 = vst.msk [vmem:[%s9585 + $0x111] sm:$0xff] %vm4880, %v9533
      %v9602 = vld [vmem:[#allocation5] sm:$0xff]
      %v9603 = vld [vmem:[#allocation5 + $0x10] sm:$0xff]
      %v9604 = vld [vmem:[#allocation5 + $0x20] sm:$0xff]
      %v9605 = vld [vmem:[#allocation5 + $0x30] sm:$0xff]
      %v9606 = vld [vmem:[#allocation5 + $0x40] sm:$0xff]
      %v9607 = vld [vmem:[#allocation5 + $0x50] sm:$0xff]
      %v9608 = vld [vmem:[#allocation5 + $0x60] sm:$0xff]
      %v9609 = vld [vmem:[#allocation5 + $0x70] sm:$0xff]
      %v9610 = vld [vmem:[#allocation5 + $0xa0] sm:$0xff]
      %v9611 = vld [vmem:[#allocation5 + $0xb0] sm:$0xff]
      %v9612 = vld [vmem:[#allocation5 + $0xc0] sm:$0xff]
      %v9613 = vld [vmem:[#allocation5 + $0xd0] sm:$0xff]
      %v9614 = vld [vmem:[#allocation5 + $0xe0] sm:$0xff]
      %v9615 = vld [vmem:[#allocation5 + $0xf0] sm:$0xff]
      %v9616 = vld [vmem:[#allocation5 + $0x100] sm:$0xff]
      %v9617 = vld [vmem:[#allocation5 + $0x110] sm:$0xff]
      %v9618 = vpack.c.bf16 %v9602, %v9602
      %v9619 = vpack.c.bf16 %v9603, %v9603
      %v9620 = vpack.c.bf16 %v9604, %v9604
      %v9621 = vpack.c.bf16 %v9605, %v9605
      %v9622 = vpack.c.bf16 %v9606, %v9606
      %v9623 = vpack.c.bf16 %v9607, %v9607
      %v9624 = vpack.c.bf16 %v9608, %v9608
      %v9625 = vpack.c.bf16 %v9609, %v9609
      %v9626 = vpack.c.bf16 %v9610, %v9610
      %v9627 = vpack.c.bf16 %v9611, %v9611
      %v9628 = vpack.c.bf16 %v9612, %v9612
      %v9629 = vpack.c.bf16 %v9613, %v9613
      %v9630 = vpack.c.bf16 %v9614, %v9614
      %v9631 = vpack.c.bf16 %v9615, %v9615
      %v9632 = vpack.c.bf16 %v9616, %v9616
      %v9633 = vpack.c.bf16 %v9617, %v9617
      %v9634 = vld [vmem:[#allocation5 + $0x1] sm:$0xff]
      %v9635 = vld [vmem:[#allocation5 + $0x11] sm:$0xff]
      %v9636 = vld [vmem:[#allocation5 + $0x21] sm:$0xff]
      %v9637 = vld [vmem:[#allocation5 + $0x31] sm:$0xff]
      %v9638 = vld [vmem:[#allocation5 + $0x41] sm:$0xff]
      %v9639 = vld [vmem:[#allocation5 + $0x51] sm:$0xff]
      %v9640 = vld [vmem:[#allocation5 + $0x61] sm:$0xff]
      %v9641 = vld [vmem:[#allocation5 + $0x71] sm:$0xff]
      %v9642 = vld [vmem:[#allocation5 + $0xa1] sm:$0xff]
      %v9643 = vld [vmem:[#allocation5 + $0xb1] sm:$0xff]
      %v9644 = vld [vmem:[#allocation5 + $0xc1] sm:$0xff]
      %v9645 = vld [vmem:[#allocation5 + $0xd1] sm:$0xff]
      %v9646 = vld [vmem:[#allocation5 + $0xe1] sm:$0xff]
      %v9647 = vld [vmem:[#allocation5 + $0xf1] sm:$0xff]
      %v9648 = vld [vmem:[#allocation5 + $0x101] sm:$0xff]
      %v9649 = vld [vmem:[#allocation5 + $0x111] sm:$0xff]
      %v9650 = vpack.c.bf16 %v9634, %v9634
      %v9651 = vpack.c.bf16 %v9635, %v9635
      %v9652 = vpack.c.bf16 %v9636, %v9636
      %v9653 = vpack.c.bf16 %v9637, %v9637
      %v9654 = vpack.c.bf16 %v9638, %v9638
      %v9655 = vpack.c.bf16 %v9639, %v9639
      %v9656 = vpack.c.bf16 %v9640, %v9640
      %v9657 = vpack.c.bf16 %v9641, %v9641
      %v9658 = vpack.c.bf16 %v9642, %v9642
      %v9659 = vpack.c.bf16 %v9643, %v9643
      %v9660 = vpack.c.bf16 %v9644, %v9644
      %v9661 = vpack.c.bf16 %v9645, %v9645
      %v9662 = vpack.c.bf16 %v9646, %v9646
      %v9663 = vpack.c.bf16 %v9647, %v9647
      %v9664 = vpack.c.bf16 %v9648, %v9648
      %v9665 = vpack.c.bf16 %v9649, %v9649
      %v9666 = vld [vmem:[#allocation5 + $0x2] sm:$0xff]
      %v9667 = vld [vmem:[#allocation5 + $0x12] sm:$0xff]
      %v9668 = vld [vmem:[#allocation5 + $0x22] sm:$0xff]
      %v9669 = vld [vmem:[#allocation5 + $0x32] sm:$0xff]
      %v9670 = vld [vmem:[#allocation5 + $0x42] sm:$0xff]
      %v9671 = vld [vmem:[#allocation5 + $0x52] sm:$0xff]
      %v9672 = vld [vmem:[#allocation5 + $0x62] sm:$0xff]
      %v9673 = vld [vmem:[#allocation5 + $0x72] sm:$0xff]
      %v9674 = vld [vmem:[#allocation5 + $0xa2] sm:$0xff]
      %v9675 = vld [vmem:[#allocation5 + $0xb2] sm:$0xff]
      %v9676 = vld [vmem:[#allocation5 + $0xc2] sm:$0xff]
      %v9677 = vld [vmem:[#allocation5 + $0xd2] sm:$0xff]
      %v9678 = vld [vmem:[#allocation5 + $0xe2] sm:$0xff]
      %v9679 = vld [vmem:[#allocation5 + $0xf2] sm:$0xff]
      %v9680 = vld [vmem:[#allocation5 + $0x102] sm:$0xff]
      %v9681 = vld [vmem:[#allocation5 + $0x112] sm:$0xff]
      %v9682 = vpack.c.bf16 %v9666, %v9666
      %v9683 = vpack.c.bf16 %v9667, %v9667
      %v9684 = vpack.c.bf16 %v9668, %v9668
      %v9685 = vpack.c.bf16 %v9669, %v9669
      %v9686 = vpack.c.bf16 %v9670, %v9670
      %v9687 = vpack.c.bf16 %v9671, %v9671
      %v9688 = vpack.c.bf16 %v9672, %v9672
      %v9689 = vpack.c.bf16 %v9673, %v9673
      %v9690 = vpack.c.bf16 %v9674, %v9674
      %v9691 = vpack.c.bf16 %v9675, %v9675
      %v9692 = vpack.c.bf16 %v9676, %v9676
      %v9693 = vpack.c.bf16 %v9677, %v9677
      %v9694 = vpack.c.bf16 %v9678, %v9678
      %v9695 = vpack.c.bf16 %v9679, %v9679
      %v9696 = vpack.c.bf16 %v9680, %v9680
      %v9697 = vpack.c.bf16 %v9681, %v9681
      %v9698 = vld [vmem:[%s9585] sm:$0xff]
      %v9699 = vld [vmem:[%s9585 + $0x10] sm:$0xff]
      %v9700 = vld [vmem:[%s9585 + $0x20] sm:$0xff]
      %v9701 = vld [vmem:[%s9585 + $0x30] sm:$0xff]
      %v9702 = vld [vmem:[%s9585 + $0x40] sm:$0xff]
      %v9703 = vld [vmem:[%s9585 + $0x50] sm:$0xff]
      %v9704 = vld [vmem:[%s9585 + $0x60] sm:$0xff]
      %v9705 = vld [vmem:[%s9585 + $0x70] sm:$0xff]
      %v9706 = vld [vmem:[%s9585 + $0xa0] sm:$0xff]
      %v9707 = vld [vmem:[%s9585 + $0xb0] sm:$0xff]
      %v9708 = vld [vmem:[%s9585 + $0xc0] sm:$0xff]
      %v9709 = vld [vmem:[%s9585 + $0xd0] sm:$0xff]
      %v9710 = vld [vmem:[%s9585 + $0xe0] sm:$0xff]
      %v9711 = vld [vmem:[%s9585 + $0xf0] sm:$0xff]
      %v9712 = vld [vmem:[%s9585 + $0x100] sm:$0xff]
      %v9713 = vld [vmem:[%s9585 + $0x110] sm:$0xff]
      %v9714 = vpack.c.bf16 %v9698, %v9698
      %v9715 = vpack.c.bf16 %v9699, %v9699
      %v9716 = vpack.c.bf16 %v9700, %v9700
      %v9717 = vpack.c.bf16 %v9701, %v9701
      %v9718 = vpack.c.bf16 %v9702, %v9702
      %v9719 = vpack.c.bf16 %v9703, %v9703
      %v9720 = vpack.c.bf16 %v9704, %v9704
      %v9721 = vpack.c.bf16 %v9705, %v9705
      %v9722 = vpack.c.bf16 %v9706, %v9706
      %v9723 = vpack.c.bf16 %v9707, %v9707
      %v9724 = vpack.c.bf16 %v9708, %v9708
      %v9725 = vpack.c.bf16 %v9709, %v9709
      %v9726 = vpack.c.bf16 %v9710, %v9710
      %v9727 = vpack.c.bf16 %v9711, %v9711
      %v9728 = vpack.c.bf16 %v9712, %v9712
      %v9729 = vpack.c.bf16 %v9713, %v9713
      %v9730 = vld [vmem:[%s9585 + $0x1] sm:$0xff]
      %v9731 = vld [vmem:[%s9585 + $0x11] sm:$0xff]
      %v9732 = vld [vmem:[%s9585 + $0x21] sm:$0xff]
      %v9733 = vld [vmem:[%s9585 + $0x31] sm:$0xff]
      %v9734 = vld [vmem:[%s9585 + $0x41] sm:$0xff]
      %v9735 = vld [vmem:[%s9585 + $0x51] sm:$0xff]
      %v9736 = vld [vmem:[%s9585 + $0x61] sm:$0xff]
      %v9737 = vld [vmem:[%s9585 + $0x71] sm:$0xff]
      %v9738 = vld [vmem:[%s9585 + $0xa1] sm:$0xff]
      %v9739 = vld [vmem:[%s9585 + $0xb1] sm:$0xff]
      %v9740 = vld [vmem:[%s9585 + $0xc1] sm:$0xff]
      %v9741 = vld [vmem:[%s9585 + $0xd1] sm:$0xff]
      %v9742 = vld [vmem:[%s9585 + $0xe1] sm:$0xff]
      %v9743 = vld [vmem:[%s9585 + $0xf1] sm:$0xff]
      %v9744 = vld [vmem:[%s9585 + $0x101] sm:$0xff]
      %v9745 = vld [vmem:[%s9585 + $0x111] sm:$0xff]
      %v9746 = vpack.c.bf16 %v9730, %v9730
      %v9747 = vpack.c.bf16 %v9731, %v9731
      %v9748 = vpack.c.bf16 %v9732, %v9732
      %v9749 = vpack.c.bf16 %v9733, %v9733
      %v9750 = vpack.c.bf16 %v9734, %v9734
      %v9751 = vpack.c.bf16 %v9735, %v9735
      %v9752 = vpack.c.bf16 %v9736, %v9736
      %v9753 = vpack.c.bf16 %v9737, %v9737
      %v9754 = vpack.c.bf16 %v9738, %v9738
      %v9755 = vpack.c.bf16 %v9739, %v9739
      %v9756 = vpack.c.bf16 %v9740, %v9740
      %v9757 = vpack.c.bf16 %v9741, %v9741
      %v9758 = vpack.c.bf16 %v9742, %v9742
      %v9759 = vpack.c.bf16 %v9743, %v9743
      %v9760 = vpack.c.bf16 %v9744, %v9744
      %v9761 = vpack.c.bf16 %v9745, %v9745
      %v9762 = vld [vmem:[%s9585 + $0x2] sm:$0xff]
      %v9763 = vld [vmem:[%s9585 + $0x12] sm:$0xff]
      %v9764 = vld [vmem:[%s9585 + $0x22] sm:$0xff]
      %v9765 = vld [vmem:[%s9585 + $0x32] sm:$0xff]
      %v9766 = vld [vmem:[%s9585 + $0x42] sm:$0xff]
      %v9767 = vld [vmem:[%s9585 + $0x52] sm:$0xff]
      %v9768 = vld [vmem:[%s9585 + $0x62] sm:$0xff]
      %v9769 = vld [vmem:[%s9585 + $0x72] sm:$0xff]
      %v9770 = vld [vmem:[%s9585 + $0xa2] sm:$0xff]
      %v9771 = vld [vmem:[%s9585 + $0xb2] sm:$0xff]
      %v9772 = vld [vmem:[%s9585 + $0xc2] sm:$0xff]
      %v9773 = vld [vmem:[%s9585 + $0xd2] sm:$0xff]
      %v9774 = vld [vmem:[%s9585 + $0xe2] sm:$0xff]
      %v9775 = vld [vmem:[%s9585 + $0xf2] sm:$0xff]
      %v9776 = vld [vmem:[%s9585 + $0x102] sm:$0xff]
      %v9777 = vld [vmem:[%s9585 + $0x112] sm:$0xff]
      %v9778 = vpack.c.bf16 %v9762, %v9762
      %v9779 = vpack.c.bf16 %v9763, %v9763
      %v9780 = vpack.c.bf16 %v9764, %v9764
      %v9781 = vpack.c.bf16 %v9765, %v9765
      %v9782 = vpack.c.bf16 %v9766, %v9766
      %v9783 = vpack.c.bf16 %v9767, %v9767
      %v9784 = vpack.c.bf16 %v9768, %v9768
      %v9785 = vpack.c.bf16 %v9769, %v9769
      %v9786 = vpack.c.bf16 %v9770, %v9770
      %v9787 = vpack.c.bf16 %v9771, %v9771
      %v9788 = vpack.c.bf16 %v9772, %v9772
      %v9789 = vpack.c.bf16 %v9773, %v9773
      %v9790 = vpack.c.bf16 %v9774, %v9774
      %v9791 = vpack.c.bf16 %v9775, %v9775
      %v9792 = vpack.c.bf16 %v9776, %v9776
      %v9793 = vpack.c.bf16 %v9777, %v9777
      %s9794 = scalar_lea.vmem [#allocation5], 32
      %v9795 = vld [vmem:[%s9794] sm:$0xff]
      %v9796 = vld [vmem:[%s9794 + $0x10] sm:$0xff]
      %v9797 = vld [vmem:[%s9794 + $0x20] sm:$0xff]
      %v9798 = vld [vmem:[%s9794 + $0x30] sm:$0xff]
      %v9799 = vld [vmem:[%s9794 + $0x40] sm:$0xff]
      %v9800 = vld [vmem:[%s9794 + $0x50] sm:$0xff]
      %v9801 = vld [vmem:[%s9794 + $0x60] sm:$0xff]
      %v9802 = vld [vmem:[%s9794 + $0x70] sm:$0xff]
      %v9803 = vld [vmem:[%s9794 + $0xa0] sm:$0xff]
      %v9804 = vld [vmem:[%s9794 + $0xb0] sm:$0xff]
      %v9805 = vld [vmem:[%s9794 + $0xc0] sm:$0xff]
      %v9806 = vld [vmem:[%s9794 + $0xd0] sm:$0xff]
      %v9807 = vld [vmem:[%s9794 + $0xe0] sm:$0xff]
      %v9808 = vld [vmem:[%s9794 + $0xf0] sm:$0xff]
      %v9809 = vld [vmem:[%s9794 + $0x100] sm:$0xff]
      %v9810 = vld [vmem:[%s9794 + $0x110] sm:$0xff]
      %v9811 = vpack.c.bf16 %v9795, %v9795
      %v9812 = vpack.c.bf16 %v9796, %v9796
      %v9813 = vpack.c.bf16 %v9797, %v9797
      %v9814 = vpack.c.bf16 %v9798, %v9798
      %v9815 = vpack.c.bf16 %v9799, %v9799
      %v9816 = vpack.c.bf16 %v9800, %v9800
      %v9817 = vpack.c.bf16 %v9801, %v9801
      %v9818 = vpack.c.bf16 %v9802, %v9802
      %v9819 = vpack.c.bf16 %v9803, %v9803
      %v9820 = vpack.c.bf16 %v9804, %v9804
      %v9821 = vpack.c.bf16 %v9805, %v9805
      %v9822 = vpack.c.bf16 %v9806, %v9806
      %v9823 = vpack.c.bf16 %v9807, %v9807
      %v9824 = vpack.c.bf16 %v9808, %v9808
      %v9825 = vpack.c.bf16 %v9809, %v9809
      %v9826 = vpack.c.bf16 %v9810, %v9810
      %v9827 = vld [vmem:[%s9794 + $0x1] sm:$0xff]
      %v9828 = vld [vmem:[%s9794 + $0x11] sm:$0xff]
      %v9829 = vld [vmem:[%s9794 + $0x21] sm:$0xff]
      %v9830 = vld [vmem:[%s9794 + $0x31] sm:$0xff]
      %v9831 = vld [vmem:[%s9794 + $0x41] sm:$0xff]
      %v9832 = vld [vmem:[%s9794 + $0x51] sm:$0xff]
      %v9833 = vld [vmem:[%s9794 + $0x61] sm:$0xff]
      %v9834 = vld [vmem:[%s9794 + $0x71] sm:$0xff]
      %v9835 = vld [vmem:[%s9794 + $0xa1] sm:$0xff]
      %v9836 = vld [vmem:[%s9794 + $0xb1] sm:$0xff]
      %v9837 = vld [vmem:[%s9794 + $0xc1] sm:$0xff]
      %v9838 = vld [vmem:[%s9794 + $0xd1] sm:$0xff]
      %v9839 = vld [vmem:[%s9794 + $0xe1] sm:$0xff]
      %v9840 = vld [vmem:[%s9794 + $0xf1] sm:$0xff]
      %v9841 = vld [vmem:[%s9794 + $0x101] sm:$0xff]
      %v9842 = vld [vmem:[%s9794 + $0x111] sm:$0xff]
      %v9843 = vpack.c.bf16 %v9827, %v9827
      %v9844 = vpack.c.bf16 %v9828, %v9828
      %v9845 = vpack.c.bf16 %v9829, %v9829
      %v9846 = vpack.c.bf16 %v9830, %v9830
      %v9847 = vpack.c.bf16 %v9831, %v9831
      %v9848 = vpack.c.bf16 %v9832, %v9832
      %v9849 = vpack.c.bf16 %v9833, %v9833
      %v9850 = vpack.c.bf16 %v9834, %v9834
      %v9851 = vpack.c.bf16 %v9835, %v9835
      %v9852 = vpack.c.bf16 %v9836, %v9836
      %v9853 = vpack.c.bf16 %v9837, %v9837
      %v9854 = vpack.c.bf16 %v9838, %v9838
      %v9855 = vpack.c.bf16 %v9839, %v9839
      %v9856 = vpack.c.bf16 %v9840, %v9840
      %v9857 = vpack.c.bf16 %v9841, %v9841
      %v9858 = vpack.c.bf16 %v9842, %v9842
      %v9859 = vld [vmem:[%s9794 + $0x2] sm:$0xff]
      %v9860 = vld [vmem:[%s9794 + $0x12] sm:$0xff]
      %v9861 = vld [vmem:[%s9794 + $0x22] sm:$0xff]
      %v9862 = vld [vmem:[%s9794 + $0x32] sm:$0xff]
      %v9863 = vld [vmem:[%s9794 + $0x42] sm:$0xff]
      %v9864 = vld [vmem:[%s9794 + $0x52] sm:$0xff]
      %v9865 = vld [vmem:[%s9794 + $0x62] sm:$0xff]
      %v9866 = vld [vmem:[%s9794 + $0x72] sm:$0xff]
      %v9867 = vld [vmem:[%s9794 + $0xa2] sm:$0xff]
      %v9868 = vld [vmem:[%s9794 + $0xb2] sm:$0xff]
      %v9869 = vld [vmem:[%s9794 + $0xc2] sm:$0xff]
      %v9870 = vld [vmem:[%s9794 + $0xd2] sm:$0xff]
      %v9871 = vld [vmem:[%s9794 + $0xe2] sm:$0xff]
      %v9872 = vld [vmem:[%s9794 + $0xf2] sm:$0xff]
      %v9873 = vld [vmem:[%s9794 + $0x102] sm:$0xff]
      %v9874 = vld [vmem:[%s9794 + $0x112] sm:$0xff]
      %v9875 = vpack.c.bf16 %v9859, %v9859
      %v9876 = vpack.c.bf16 %v9860, %v9860
      %v9877 = vpack.c.bf16 %v9861, %v9861
      %v9878 = vpack.c.bf16 %v9862, %v9862
      %v9879 = vpack.c.bf16 %v9863, %v9863
      %v9880 = vpack.c.bf16 %v9864, %v9864
      %v9881 = vpack.c.bf16 %v9865, %v9865
      %v9882 = vpack.c.bf16 %v9866, %v9866
      %v9883 = vpack.c.bf16 %v9867, %v9867
      %v9884 = vpack.c.bf16 %v9868, %v9868
      %v9885 = vpack.c.bf16 %v9869, %v9869
      %v9886 = vpack.c.bf16 %v9870, %v9870
      %v9887 = vpack.c.bf16 %v9871, %v9871
      %v9888 = vpack.c.bf16 %v9872, %v9872
      %v9889 = vpack.c.bf16 %v9873, %v9873
      %v9890 = vpack.c.bf16 %v9874, %v9874
      %9907 = vrot.lane.b32.xlu0 %v9650, 64
      %v9908 = vpop.permute.xlu0 %9907
      %9909 = vrot.lane.b32.xlu0 %v9651, 64
      %v9910 = vpop.permute.xlu0 %9909
      %9911 = vrot.lane.b32.xlu0 %v9652, 64
      %v9912 = vpop.permute.xlu0 %9911
      %9913 = vrot.lane.b32.xlu0 %v9653, 64
      %v9914 = vpop.permute.xlu0 %9913
      %9915 = vrot.lane.b32.xlu0 %v9654, 64
      %v9916 = vpop.permute.xlu0 %9915
      %9917 = vrot.lane.b32.xlu0 %v9655, 64
      %v9918 = vpop.permute.xlu0 %9917
      %9919 = vrot.lane.b32.xlu0 %v9656, 64
      %v9920 = vpop.permute.xlu0 %9919
      %9921 = vrot.lane.b32.xlu0 %v9657, 64
      %v9922 = vpop.permute.xlu0 %9921
      %9923 = vrot.lane.b32.xlu0 %v9658, 64
      %v9924 = vpop.permute.xlu0 %9923
      %9925 = vrot.lane.b32.xlu0 %v9659, 64
      %v9926 = vpop.permute.xlu0 %9925
      %9927 = vrot.lane.b32.xlu0 %v9660, 64
      %v9928 = vpop.permute.xlu0 %9927
      %9929 = vrot.lane.b32.xlu0 %v9661, 64
      %v9930 = vpop.permute.xlu0 %9929
      %9931 = vrot.lane.b32.xlu0 %v9662, 64
      %v9932 = vpop.permute.xlu0 %9931
      %9933 = vrot.lane.b32.xlu0 %v9663, 64
      %v9934 = vpop.permute.xlu0 %9933
      %9935 = vrot.lane.b32.xlu0 %v9664, 64
      %v9936 = vpop.permute.xlu0 %9935
      %9937 = vrot.lane.b32.xlu0 %v9665, 64
      %v9938 = vpop.permute.xlu0 %9937
      %9955 = vrot.lane.b32.xlu0 %v9714, 64
      %v9956 = vpop.permute.xlu0 %9955
      %9957 = vrot.lane.b32.xlu0 %v9715, 64
      %v9958 = vpop.permute.xlu0 %9957
      %9959 = vrot.lane.b32.xlu0 %v9716, 64
      %v9960 = vpop.permute.xlu0 %9959
      %9961 = vrot.lane.b32.xlu0 %v9717, 64
      %v9962 = vpop.permute.xlu0 %9961
      %9963 = vrot.lane.b32.xlu0 %v9718, 64
      %v9964 = vpop.permute.xlu0 %9963
      %9965 = vrot.lane.b32.xlu0 %v9719, 64
      %v9966 = vpop.permute.xlu0 %9965
      %9967 = vrot.lane.b32.xlu0 %v9720, 64
      %v9968 = vpop.permute.xlu0 %9967
      %9969 = vrot.lane.b32.xlu0 %v9721, 64
      %v9970 = vpop.permute.xlu0 %9969
      %9971 = vrot.lane.b32.xlu0 %v9722, 64
      %v9972 = vpop.permute.xlu0 %9971
      %9973 = vrot.lane.b32.xlu0 %v9723, 64
      %v9974 = vpop.permute.xlu0 %9973
      %9975 = vrot.lane.b32.xlu0 %v9724, 64
      %v9976 = vpop.permute.xlu0 %9975
      %9977 = vrot.lane.b32.xlu0 %v9725, 64
      %v9978 = vpop.permute.xlu0 %9977
      %9979 = vrot.lane.b32.xlu0 %v9726, 64
      %v9980 = vpop.permute.xlu0 %9979
      %9981 = vrot.lane.b32.xlu0 %v9727, 64
      %v9982 = vpop.permute.xlu0 %9981
      %9983 = vrot.lane.b32.xlu0 %v9728, 64
      %v9984 = vpop.permute.xlu0 %9983
      %9985 = vrot.lane.b32.xlu0 %v9729, 64
      %v9986 = vpop.permute.xlu0 %9985
      %10003 = vrot.lane.b32.xlu0 %v9778, 64
      %v10004 = vpop.permute.xlu0 %10003
      %10005 = vrot.lane.b32.xlu0 %v9779, 64
      %v10006 = vpop.permute.xlu0 %10005
      %10007 = vrot.lane.b32.xlu0 %v9780, 64
      %v10008 = vpop.permute.xlu0 %10007
      %10009 = vrot.lane.b32.xlu0 %v9781, 64
      %v10010 = vpop.permute.xlu0 %10009
      %10011 = vrot.lane.b32.xlu0 %v9782, 64
      %v10012 = vpop.permute.xlu0 %10011
      %10013 = vrot.lane.b32.xlu0 %v9783, 64
      %v10014 = vpop.permute.xlu0 %10013
      %10015 = vrot.lane.b32.xlu0 %v9784, 64
      %v10016 = vpop.permute.xlu0 %10015
      %10017 = vrot.lane.b32.xlu0 %v9785, 64
      %v10018 = vpop.permute.xlu0 %10017
      %10019 = vrot.lane.b32.xlu0 %v9786, 64
      %v10020 = vpop.permute.xlu0 %10019
      %10021 = vrot.lane.b32.xlu0 %v9787, 64
      %v10022 = vpop.permute.xlu0 %10021
      %10023 = vrot.lane.b32.xlu0 %v9788, 64
      %v10024 = vpop.permute.xlu0 %10023
      %10025 = vrot.lane.b32.xlu0 %v9789, 64
      %v10026 = vpop.permute.xlu0 %10025
      %10027 = vrot.lane.b32.xlu0 %v9790, 64
      %v10028 = vpop.permute.xlu0 %10027
      %10029 = vrot.lane.b32.xlu0 %v9791, 64
      %v10030 = vpop.permute.xlu0 %10029
      %10031 = vrot.lane.b32.xlu0 %v9792, 64
      %v10032 = vpop.permute.xlu0 %10031
      %10033 = vrot.lane.b32.xlu0 %v9793, 64
      %v10034 = vpop.permute.xlu0 %10033
      %10051 = vrot.lane.b32.xlu0 %v9843, 64
      %v10052 = vpop.permute.xlu0 %10051
      %10053 = vrot.lane.b32.xlu0 %v9844, 64
      %v10054 = vpop.permute.xlu0 %10053
      %10055 = vrot.lane.b32.xlu0 %v9845, 64
      %v10056 = vpop.permute.xlu0 %10055
      %10057 = vrot.lane.b32.xlu0 %v9846, 64
      %v10058 = vpop.permute.xlu0 %10057
      %10059 = vrot.lane.b32.xlu0 %v9847, 64
      %v10060 = vpop.permute.xlu0 %10059
      %10061 = vrot.lane.b32.xlu0 %v9848, 64
      %v10062 = vpop.permute.xlu0 %10061
      %10063 = vrot.lane.b32.xlu0 %v9849, 64
      %v10064 = vpop.permute.xlu0 %10063
      %10065 = vrot.lane.b32.xlu0 %v9850, 64
      %v10066 = vpop.permute.xlu0 %10065
      %10067 = vrot.lane.b32.xlu0 %v9851, 64
      %v10068 = vpop.permute.xlu0 %10067
      %10069 = vrot.lane.b32.xlu0 %v9852, 64
      %v10070 = vpop.permute.xlu0 %10069
      %10071 = vrot.lane.b32.xlu0 %v9853, 64
      %v10072 = vpop.permute.xlu0 %10071
      %10073 = vrot.lane.b32.xlu0 %v9854, 64
      %v10074 = vpop.permute.xlu0 %10073
      %10075 = vrot.lane.b32.xlu0 %v9855, 64
      %v10076 = vpop.permute.xlu0 %10075
      %10077 = vrot.lane.b32.xlu0 %v9856, 64
      %v10078 = vpop.permute.xlu0 %10077
      %10079 = vrot.lane.b32.xlu0 %v9857, 64
      %v10080 = vpop.permute.xlu0 %10079
      %10081 = vrot.lane.b32.xlu0 %v9858, 64
      %v10082 = vpop.permute.xlu0 %10081
      %v10085 = vsel %vm4880, %v9618, %v9908
      %v10088 = vsel %vm4880, %v9619, %v9910
      %v10091 = vsel %vm4880, %v9620, %v9912
      %v10094 = vsel %vm4880, %v9621, %v9914
      %v10097 = vsel %vm4880, %v9622, %v9916
      %v10100 = vsel %vm4880, %v9623, %v9918
      %v10103 = vsel %vm4880, %v9624, %v9920
      %v10106 = vsel %vm4880, %v9625, %v9922
      %v10109 = vsel %vm4880, %v9626, %v9924
      %v10112 = vsel %vm4880, %v9627, %v9926
      %v10115 = vsel %vm4880, %v9628, %v9928
      %v10118 = vsel %vm4880, %v9629, %v9930
      %v10121 = vsel %vm4880, %v9630, %v9932
      %v10124 = vsel %vm4880, %v9631, %v9934
      %v10127 = vsel %vm4880, %v9632, %v9936
      %v10130 = vsel %vm4880, %v9633, %v9938
      %v10133 = vsel %vm4880, %v9682, %v9956
      %v10136 = vsel %vm4880, %v9683, %v9958
      %v10139 = vsel %vm4880, %v9684, %v9960
      %v10142 = vsel %vm4880, %v9685, %v9962
      %v10145 = vsel %vm4880, %v9686, %v9964
      %v10148 = vsel %vm4880, %v9687, %v9966
      %v10151 = vsel %vm4880, %v9688, %v9968
      %v10154 = vsel %vm4880, %v9689, %v9970
      %v10157 = vsel %vm4880, %v9690, %v9972
      %v10160 = vsel %vm4880, %v9691, %v9974
      %v10163 = vsel %vm4880, %v9692, %v9976
      %v10166 = vsel %vm4880, %v9693, %v9978
      %v10169 = vsel %vm4880, %v9694, %v9980
      %v10172 = vsel %vm4880, %v9695, %v9982
      %v10175 = vsel %vm4880, %v9696, %v9984
      %v10178 = vsel %vm4880, %v9697, %v9986
      %v10181 = vsel %vm4880, %v9746, %v10004
      %v10184 = vsel %vm4880, %v9747, %v10006
      %v10187 = vsel %vm4880, %v9748, %v10008
      %v10190 = vsel %vm4880, %v9749, %v10010
      %v10193 = vsel %vm4880, %v9750, %v10012
      %v10196 = vsel %vm4880, %v9751, %v10014
      %v10199 = vsel %vm4880, %v9752, %v10016
      %v10202 = vsel %vm4880, %v9753, %v10018
      %v10205 = vsel %vm4880, %v9754, %v10020
      %v10208 = vsel %vm4880, %v9755, %v10022
      %v10211 = vsel %vm4880, %v9756, %v10024
      %v10214 = vsel %vm4880, %v9757, %v10026
      %v10217 = vsel %vm4880, %v9758, %v10028
      %v10220 = vsel %vm4880, %v9759, %v10030
      %v10223 = vsel %vm4880, %v9760, %v10032
      %v10226 = vsel %vm4880, %v9761, %v10034
      %v10229 = vsel %vm4880, %v9811, %v10052
      %v10232 = vsel %vm4880, %v9812, %v10054
      %v10235 = vsel %vm4880, %v9813, %v10056
      %v10238 = vsel %vm4880, %v9814, %v10058
      %v10241 = vsel %vm4880, %v9815, %v10060
      %v10244 = vsel %vm4880, %v9816, %v10062
      %v10247 = vsel %vm4880, %v9817, %v10064
      %v10250 = vsel %vm4880, %v9818, %v10066
      %v10253 = vsel %vm4880, %v9819, %v10068
      %v10256 = vsel %vm4880, %v9820, %v10070
      %v10259 = vsel %vm4880, %v9821, %v10072
      %v10262 = vsel %vm4880, %v9822, %v10074
      %v10265 = vsel %vm4880, %v9823, %v10076
      %v10268 = vsel %vm4880, %v9824, %v10078
      %v10271 = vsel %vm4880, %v9825, %v10080
      %v10274 = vsel %vm4880, %v9826, %v10082
      %v10355 = vunpack.c.l.b16 %v10085
      %v10356 = vunpack.c.l.b16 %v10133
      %v10357 = vunpack.c.l.b16 %v10181
      %v10358 = vunpack.c.l.b16 %v10229
      %v10359 = vunpack.c.l.b16 %v9875
      %v10360 = vunpack.c.l.b16 %v10088
      %v10361 = vunpack.c.l.b16 %v10136
      %v10362 = vunpack.c.l.b16 %v10184
      %v10363 = vunpack.c.l.b16 %v10232
      %v10364 = vunpack.c.l.b16 %v9876
      %v10365 = vunpack.c.l.b16 %v10091
      %v10366 = vunpack.c.l.b16 %v10139
      %v10367 = vunpack.c.l.b16 %v10187
      %v10368 = vunpack.c.l.b16 %v10235
      %v10369 = vunpack.c.l.b16 %v9877
      %v10370 = vunpack.c.l.b16 %v10094
      %v10371 = vunpack.c.l.b16 %v10142
      %v10372 = vunpack.c.l.b16 %v10190
      %v10373 = vunpack.c.l.b16 %v10238
      %v10374 = vunpack.c.l.b16 %v9878
      %v10375 = vunpack.c.l.b16 %v10097
      %v10376 = vunpack.c.l.b16 %v10145
      %v10377 = vunpack.c.l.b16 %v10193
      %v10378 = vunpack.c.l.b16 %v10241
      %v10379 = vunpack.c.l.b16 %v9879
      %v10380 = vunpack.c.l.b16 %v10100
      %v10381 = vunpack.c.l.b16 %v10148
      %v10382 = vunpack.c.l.b16 %v10196
      %v10383 = vunpack.c.l.b16 %v10244
      %v10384 = vunpack.c.l.b16 %v9880
      %v10385 = vunpack.c.l.b16 %v10103
      %v10386 = vunpack.c.l.b16 %v10151
      %v10387 = vunpack.c.l.b16 %v10199
      %v10388 = vunpack.c.l.b16 %v10247
      %v10389 = vunpack.c.l.b16 %v9881
      %v10390 = vunpack.c.l.b16 %v10106
      %v10391 = vunpack.c.l.b16 %v10154
      %v10392 = vunpack.c.l.b16 %v10202
      %v10393 = vunpack.c.l.b16 %v10250
      %v10394 = vunpack.c.l.b16 %v9882
      %v10395 = vunpack.c.l.b16 %v10109
      %v10396 = vunpack.c.l.b16 %v10157
      %v10397 = vunpack.c.l.b16 %v10205
      %v10398 = vunpack.c.l.b16 %v10253
      %v10399 = vunpack.c.l.b16 %v9883
      %v10400 = vunpack.c.l.b16 %v10112
      %v10401 = vunpack.c.l.b16 %v10160
      %v10402 = vunpack.c.l.b16 %v10208
      %v10403 = vunpack.c.l.b16 %v10256
      %v10404 = vunpack.c.l.b16 %v9884
      %v10405 = vunpack.c.l.b16 %v10115
      %v10406 = vunpack.c.l.b16 %v10163
      %v10407 = vunpack.c.l.b16 %v10211
      %v10408 = vunpack.c.l.b16 %v10259
      %v10409 = vunpack.c.l.b16 %v9885
      %v10410 = vunpack.c.l.b16 %v10118
      %v10411 = vunpack.c.l.b16 %v10166
      %v10412 = vunpack.c.l.b16 %v10214
      %v10413 = vunpack.c.l.b16 %v10262
      %v10414 = vunpack.c.l.b16 %v9886
      %v10415 = vunpack.c.l.b16 %v10121
      %v10416 = vunpack.c.l.b16 %v10169
      %v10417 = vunpack.c.l.b16 %v10217
      %v10418 = vunpack.c.l.b16 %v10265
      %v10419 = vunpack.c.l.b16 %v9887
      %v10420 = vunpack.c.l.b16 %v10124
      %v10421 = vunpack.c.l.b16 %v10172
      %v10422 = vunpack.c.l.b16 %v10220
      %v10423 = vunpack.c.l.b16 %v10268
      %v10424 = vunpack.c.l.b16 %v9888
      %v10425 = vunpack.c.l.b16 %v10127
      %v10426 = vunpack.c.l.b16 %v10175
      %v10427 = vunpack.c.l.b16 %v10223
      %v10428 = vunpack.c.l.b16 %v10271
      %v10429 = vunpack.c.l.b16 %v9889
      %v10430 = vunpack.c.l.b16 %v10130
      %v10431 = vunpack.c.l.b16 %v10178
      %v10432 = vunpack.c.l.b16 %v10226
      %v10433 = vunpack.c.l.b16 %v10274
      %v10434 = vunpack.c.l.b16 %v9890
      %v10435 = vld [vmem:[%s7] sm:$0xf]
      %v10436 = vld [vmem:[%s7 + $0x4] sm:$0xf]
      %v10437 = vld [vmem:[%s7 + $0x8] sm:$0xf]
      %v10438 = vld [vmem:[%s7 + $0xc] sm:$0xf]
      %v10439 = vld [vmem:[%s7 + $0x10] sm:$0xf]
      %v10440 = vld [vmem:[%s7 + $0x14] sm:$0xf]
      %v10441 = vld [vmem:[%s7 + $0x18] sm:$0xf]
      %v10442 = vld [vmem:[%s7 + $0x1c] sm:$0xf]
      %v10443 = vld [vmem:[%s7 + $0x20] sm:$0xf]
      %v10444 = vld [vmem:[%s7 + $0x24] sm:$0xf]
      %v10445 = vld [vmem:[%s7 + $0x28] sm:$0xf]
      %v10446 = vld [vmem:[%s7 + $0x2c] sm:$0xf]
      %v10447 = vld [vmem:[%s7 + $0x30] sm:$0xf]
      %v10448 = vld [vmem:[%s7 + $0x34] sm:$0xf]
      %v10449 = vld [vmem:[%s7 + $0x38] sm:$0xf]
      %v10450 = vld [vmem:[%s7 + $0x3c] sm:$0xf]
      %v10451 = vld [vmem:[%s7 + $0x40] sm:$0xf]
      %v10452 = vld [vmem:[%s7 + $0x44] sm:$0xf]
      %v10453 = vld [vmem:[%s7 + $0x48] sm:$0xf]
      %v10454 = vld [vmem:[%s7 + $0x4c] sm:$0xf]
      %v10455 = vld [vmem:[%s7 + $0x50] sm:$0xf]
      %v10456 = vld [vmem:[%s7 + $0x54] sm:$0xf]
      %v10457 = vld [vmem:[%s7 + $0x58] sm:$0xf]
      %v10458 = vld [vmem:[%s7 + $0x5c] sm:$0xf]
      %v10459 = vld [vmem:[%s7 + $0x60] sm:$0xf]
      %v10460 = vld [vmem:[%s7 + $0x64] sm:$0xf]
      %v10461 = vld [vmem:[%s7 + $0x68] sm:$0xf]
      %v10462 = vld [vmem:[%s7 + $0x6c] sm:$0xf]
      %v10463 = vld [vmem:[%s7 + $0x70] sm:$0xf]
      %v10464 = vld [vmem:[%s7 + $0x74] sm:$0xf]
      %v10465 = vld [vmem:[%s7 + $0x78] sm:$0xf]
      %v10466 = vld [vmem:[%s7 + $0x7c] sm:$0xf]
      %v10467 = vld [vmem:[%s7 + $0x80] sm:$0xf]
      %v10468 = vld [vmem:[%s7 + $0x84] sm:$0xf]
      %v10469 = vld [vmem:[%s7 + $0x88] sm:$0xf]
      %v10470 = vld [vmem:[%s7 + $0x8c] sm:$0xf]
      %v10471 = vld [vmem:[%s7 + $0x90] sm:$0xf]
      %v10472 = vld [vmem:[%s7 + $0x94] sm:$0xf]
      %v10473 = vld [vmem:[%s7 + $0x98] sm:$0xf]
      %v10474 = vld [vmem:[%s7 + $0x9c] sm:$0xf]
      %v10475 = vld [vmem:[%s7 + $0xa0] sm:$0xf]
      %v10476 = vld [vmem:[%s7 + $0xa4] sm:$0xf]
      %v10477 = vld [vmem:[%s7 + $0xa8] sm:$0xf]
      %v10478 = vld [vmem:[%s7 + $0xac] sm:$0xf]
      %v10479 = vld [vmem:[%s7 + $0xb0] sm:$0xf]
      %v10480 = vld [vmem:[%s7 + $0xb4] sm:$0xf]
      %v10481 = vld [vmem:[%s7 + $0xb8] sm:$0xf]
      %v10482 = vld [vmem:[%s7 + $0xbc] sm:$0xf]
      %v10483 = vld [vmem:[%s7 + $0xc0] sm:$0xf]
      %v10484 = vld [vmem:[%s7 + $0xc4] sm:$0xf]
      %v10485 = vld [vmem:[%s7 + $0xc8] sm:$0xf]
      %v10486 = vld [vmem:[%s7 + $0xcc] sm:$0xf]
      %v10487 = vld [vmem:[%s7 + $0xd0] sm:$0xf]
      %v10488 = vld [vmem:[%s7 + $0xd4] sm:$0xf]
      %v10489 = vld [vmem:[%s7 + $0xd8] sm:$0xf]
      %v10490 = vld [vmem:[%s7 + $0xdc] sm:$0xf]
      %v10491 = vld [vmem:[%s7 + $0xe0] sm:$0xf]
      %v10492 = vld [vmem:[%s7 + $0xe4] sm:$0xf]
      %v10493 = vld [vmem:[%s7 + $0xe8] sm:$0xf]
      %v10494 = vld [vmem:[%s7 + $0xec] sm:$0xf]
      %v10495 = vld [vmem:[%s7 + $0xf0] sm:$0xf]
      %v10496 = vld [vmem:[%s7 + $0xf4] sm:$0xf]
      %v10497 = vld [vmem:[%s7 + $0xf8] sm:$0xf]
      %v10498 = vld [vmem:[%s7 + $0xfc] sm:$0xf]
      %v10499 = vld [vmem:[%s7 + $0x100] sm:$0xf]
      %v10500 = vld [vmem:[%s7 + $0x104] sm:$0xf]
      %v10501 = vld [vmem:[%s7 + $0x108] sm:$0xf]
      %v10502 = vld [vmem:[%s7 + $0x10c] sm:$0xf]
      %v10503 = vld [vmem:[%s7 + $0x110] sm:$0xf]
      %v10504 = vld [vmem:[%s7 + $0x114] sm:$0xf]
      %v10505 = vld [vmem:[%s7 + $0x118] sm:$0xf]
      %v10506 = vld [vmem:[%s7 + $0x11c] sm:$0xf]
      %v10507 = vld [vmem:[%s8] sm:$0x1]
      %v10509 = vlaneseq
      %v10510 = vshrl.u32 %v10509, 7
      %v10511 = vsub.s32 0, %v10510
      %v10512 = vrot.slane %v10507, %v10511
      %v10514 = vpack.c.b16 %v10360, %v10355
      %v10515 = vpack.c.b16 %v10361, %v10356
      %v10516 = vpack.c.b16 %v10362, %v10357
      %v10517 = vpack.c.b16 %v10363, %v10358
      %v10518 = vpack.c.b16 %v10364, %v10359
      %v10519 = vpack.c.b16 %v10370, %v10365
      %v10520 = vpack.c.b16 %v10371, %v10366
      %v10521 = vpack.c.b16 %v10372, %v10367
      %v10522 = vpack.c.b16 %v10373, %v10368
      %v10523 = vpack.c.b16 %v10374, %v10369
      %v10524 = vpack.c.b16 %v10380, %v10375
      %v10525 = vpack.c.b16 %v10381, %v10376
      %v10526 = vpack.c.b16 %v10382, %v10377
      %v10527 = vpack.c.b16 %v10383, %v10378
      %v10528 = vpack.c.b16 %v10384, %v10379
      %v10529 = vpack.c.b16 %v10390, %v10385
      %v10530 = vpack.c.b16 %v10391, %v10386
      %v10531 = vpack.c.b16 %v10392, %v10387
      %v10532 = vpack.c.b16 %v10393, %v10388
      %v10533 = vpack.c.b16 %v10394, %v10389
      %v10534 = vpack.c.b16 %v10400, %v10395
      %v10535 = vpack.c.b16 %v10401, %v10396
      %v10536 = vpack.c.b16 %v10402, %v10397
      %v10537 = vpack.c.b16 %v10403, %v10398
      %v10538 = vpack.c.b16 %v10404, %v10399
      %v10539 = vpack.c.b16 %v10410, %v10405
      %v10540 = vpack.c.b16 %v10411, %v10406
      %v10541 = vpack.c.b16 %v10412, %v10407
      %v10542 = vpack.c.b16 %v10413, %v10408
      %v10543 = vpack.c.b16 %v10414, %v10409
      %v10544 = vpack.c.b16 %v10420, %v10415
      %v10545 = vpack.c.b16 %v10421, %v10416
      %v10546 = vpack.c.b16 %v10422, %v10417
      %v10547 = vpack.c.b16 %v10423, %v10418
      %v10548 = vpack.c.b16 %v10424, %v10419
      %v10549 = vpack.c.b16 %v10430, %v10425
      %v10550 = vpack.c.b16 %v10431, %v10426
      %v10551 = vpack.c.b16 %v10432, %v10427
      %v10552 = vpack.c.b16 %v10433, %v10428
      %v10553 = vpack.c.b16 %v10434, %v10429
      %v10658 = vunpack.c.l.b16 %v10435
      %v10659 = vunpack.c.l.b16 %v10436
      %v10660 = vunpack.c.l.b16 %v10437
      %v10661 = vunpack.c.l.b16 %v10438
      %v10662 = vunpack.c.l.b16 %v10439
      %v10663 = vunpack.c.l.b16 %v10440
      %v10664 = vunpack.c.l.b16 %v10441
      %v10665 = vunpack.c.l.b16 %v10442
      %v10666 = vunpack.c.l.b16 %v10443
      %v10667 = vunpack.c.l.b16 %v10444
      %v10668 = vunpack.c.l.b16 %v10445
      %v10669 = vunpack.c.l.b16 %v10446
      %v10670 = vunpack.c.l.b16 %v10447
      %v10671 = vunpack.c.l.b16 %v10448
      %v10672 = vunpack.c.l.b16 %v10449
      %v10673 = vunpack.c.l.b16 %v10450
      %v10674 = vunpack.c.l.b16 %v10451
      %v10675 = vunpack.c.l.b16 %v10452
      %v10676 = vunpack.c.l.b16 %v10453
      %v10677 = vunpack.c.l.b16 %v10454
      %v10678 = vunpack.c.l.b16 %v10455
      %v10679 = vunpack.c.l.b16 %v10456
      %v10680 = vunpack.c.l.b16 %v10457
      %v10681 = vunpack.c.l.b16 %v10458
      %v10682 = vunpack.c.l.b16 %v10459
      %v10683 = vunpack.c.l.b16 %v10460
      %v10684 = vunpack.c.l.b16 %v10461
      %v10685 = vunpack.c.l.b16 %v10462
      %v10686 = vunpack.c.l.b16 %v10463
      %v10687 = vunpack.c.l.b16 %v10464
      %v10688 = vunpack.c.l.b16 %v10465
      %v10689 = vunpack.c.l.b16 %v10466
      %v10690 = vunpack.c.l.b16 %v10467
      %v10691 = vunpack.c.l.b16 %v10468
      %v10692 = vunpack.c.l.b16 %v10469
      %v10693 = vunpack.c.l.b16 %v10470
      %v10694 = vunpack.c.l.b16 %v10471
      %v10695 = vunpack.c.l.b16 %v10472
      %v10696 = vunpack.c.l.b16 %v10473
      %v10697 = vunpack.c.l.b16 %v10474
      %v10698 = vunpack.c.l.b16 %v10475
      %v10699 = vunpack.c.l.b16 %v10476
      %v10700 = vunpack.c.l.b16 %v10477
      %v10701 = vunpack.c.l.b16 %v10478
      %v10702 = vunpack.c.l.b16 %v10479
      %v10703 = vunpack.c.l.b16 %v10480
      %v10704 = vunpack.c.l.b16 %v10481
      %v10705 = vunpack.c.l.b16 %v10482
      %v10706 = vunpack.c.l.b16 %v10483
      %v10707 = vunpack.c.l.b16 %v10484
      %v10708 = vunpack.c.l.b16 %v10485
      %v10709 = vunpack.c.l.b16 %v10486
      %v10710 = vunpack.c.l.b16 %v10487
      %v10711 = vunpack.c.l.b16 %v10488
      %v10712 = vunpack.c.l.b16 %v10489
      %v10713 = vunpack.c.l.b16 %v10490
      %v10714 = vunpack.c.l.b16 %v10491
      %v10715 = vunpack.c.l.b16 %v10492
      %v10716 = vunpack.c.l.b16 %v10493
      %v10717 = vunpack.c.l.b16 %v10494
      %v10718 = vunpack.c.l.b16 %v10495
      %v10719 = vunpack.c.l.b16 %v10496
      %v10720 = vunpack.c.l.b16 %v10497
      %v10721 = vunpack.c.l.b16 %v10498
      %v10722 = vunpack.c.l.b16 %v10499
      %v10723 = vunpack.c.l.b16 %v10500
      %v10724 = vunpack.c.l.b16 %v10501
      %v10725 = vunpack.c.l.b16 %v10502
      %v10726 = vunpack.c.l.b16 %v10503
      %v10727 = vunpack.c.l.b16 %v10504
      %v10728 = vunpack.c.l.b16 %v10505
      %v10729 = vunpack.c.l.b16 %v10506
      %v10730 = vpack.c.b16 %v10659, %v10658
      %v10731 = vpack.c.b16 %v10661, %v10660
      %v10732 = vpack.c.b16 %v10663, %v10662
      %v10733 = vpack.c.b16 %v10665, %v10664
      %v10734 = vpack.c.b16 %v10667, %v10666
      %v10735 = vpack.c.b16 %v10669, %v10668
      %v10736 = vpack.c.b16 %v10671, %v10670
      %v10737 = vpack.c.b16 %v10673, %v10672
      %v10738 = vpack.c.b16 %v10675, %v10674
      %v10739 = vpack.c.b16 %v10677, %v10676
      %v10740 = vpack.c.b16 %v10679, %v10678
      %v10741 = vpack.c.b16 %v10681, %v10680
      %v10742 = vpack.c.b16 %v10683, %v10682
      %v10743 = vpack.c.b16 %v10685, %v10684
      %v10744 = vpack.c.b16 %v10687, %v10686
      %v10745 = vpack.c.b16 %v10689, %v10688
      %v10746 = vpack.c.b16 %v10691, %v10690
      %v10747 = vpack.c.b16 %v10693, %v10692
      %v10748 = vpack.c.b16 %v10695, %v10694
      %v10749 = vpack.c.b16 %v10697, %v10696
      %v10750 = vpack.c.b16 %v10699, %v10698
      %v10751 = vpack.c.b16 %v10701, %v10700
      %v10752 = vpack.c.b16 %v10703, %v10702
      %v10753 = vpack.c.b16 %v10705, %v10704
      %v10754 = vpack.c.b16 %v10707, %v10706
      %v10755 = vpack.c.b16 %v10709, %v10708
      %v10756 = vpack.c.b16 %v10711, %v10710
      %v10757 = vpack.c.b16 %v10713, %v10712
      %v10758 = vpack.c.b16 %v10715, %v10714
      %v10759 = vpack.c.b16 %v10717, %v10716
      %v10760 = vpack.c.b16 %v10719, %v10718
      %v10761 = vpack.c.b16 %v10721, %v10720
      %v10762 = vpack.c.b16 %v10723, %v10722
      %v10763 = vpack.c.b16 %v10725, %v10724
      %v10764 = vpack.c.b16 %v10727, %v10726
      %v10765 = vpack.c.b16 %v10729, %v10728
      %v10803 = vsel %vm4880, %v10518, 0
      %v10806 = vsel %vm4880, %v10523, 0
      %v10809 = vsel %vm4880, %v10528, 0
      %v10812 = vsel %vm4880, %v10533, 0
      %v10815 = vsel %vm4880, %v10538, 0
      %v10818 = vsel %vm4880, %v10543, 0
      %v10821 = vsel %vm4880, %v10548, 0
      %v10824 = vsel %vm4880, %v10553, 0
      %10826 = vmatprep.subr.bf16.mxu0 0
      %10827 = vmatpush1.bf16.msra.mxu0 %v10730
      %10828 = vmatprep.subr.bf16.mxu0 0
      %10829 = vmatpush1.bf16.msra.mxu0 %v10731
      %10830 = vmatprep.subr.bf16.mxu0 0
      %10831 = vmatpush1.bf16.msra.mxu0 %v10732
      %10832 = vmatprep.subr.bf16.mxu0 0
      %10833 = vmatpush1.bf16.msra.mxu0 %v10733
      %10834 = vmatprep.subr.bf16.mxu0 0
      %10835 = vmatpush1.bf16.msra.mxu0 %v10734
      %10836 = vmatprep.subr.bf16.mxu0 0
      %10837 = vmatpush1.bf16.msra.mxu0 %v10735
      %10838 = vmatprep.subr.bf16.mxu0 0
      %10839 = vmatpush1.bf16.msra.mxu0 %v10736
      %10840 = vmatprep.subr.bf16.mxu0 0
      %10841 = vmatpush1.bf16.msra.mxu0 %v10737
      %10842 = vmatprep.subr.bf16.mxu0 0
      %10843 = vmatpush1.bf16.msra.mxu0 %v10738
      %10844 = vmatprep.subr.bf16.mxu0 0
      %10845 = vmatpush1.bf16.msra.mxu0 %v10739
      %10846 = vmatprep.subr.bf16.mxu0 0
      %10847 = vmatpush1.bf16.msra.mxu0 %v10740
      %10848 = vmatprep.subr.bf16.mxu0 0
      %10849 = vmatpush1.bf16.msra.mxu0 %v10741
      %10850 = vmatprep.subr.bf16.mxu0 0
      %10851 = vmatpush1.bf16.msra.mxu0 %v10742
      %10852 = vmatprep.subr.bf16.mxu0 0
      %10853 = vmatpush1.bf16.msra.mxu0 %v10743
      %10854 = vmatprep.subr.bf16.mxu0 0
      %10855 = vmatpush1.bf16.msra.mxu0 %v10744
      %10856 = vmatprep.subr.bf16.mxu0 0
      %10857 = vmatpush1.bf16.msra.mxu0 %v10745
      %10858 = vmatprep.mubr.bf16.mxu0 %v10515
      %10859 = vmatmul.mubr.bf16.gmra.mrb[0].mxu0 %v10514
      %v10860 = vpop.f32.mrb[0].mxu0
      %v10861 = vadd.f32 %v10512, %v10860
      %v10862 = vpop.f32.mrb[0].mxu0
      %v10863 = vpop.f32.mrb[0].mxu0
      %v10864 = vadd.f32 %v10512, %v10863
      %v10865 = vpop.f32.mrb[0].mxu0
      %10866 = vmatprep.mubr.bf16.mxu0 %v10520
      %10867 = vmatmul.mubr.bf16.gmra.mrb[0].mxu0 %v10519
      %v10868 = vpop.f32.mrb[0].mxu0
      %v10869 = vadd.f32 %v10512, %v10868
      %v10870 = vpop.f32.mrb[0].mxu0
      %v10871 = vpop.f32.mrb[0].mxu0
      %v10872 = vadd.f32 %v10512, %v10871
      %v10873 = vpop.f32.mrb[0].mxu0
      %10874 = vmatprep.mubr.bf16.mxu0 %v10525
      %10875 = vmatmul.mubr.bf16.gmra.mrb[0].mxu0 %v10524
      %v10876 = vpop.f32.mrb[0].mxu0
      %v10877 = vadd.f32 %v10512, %v10876
      %v10878 = vpop.f32.mrb[0].mxu0
      %v10879 = vpop.f32.mrb[0].mxu0
      %v10880 = vadd.f32 %v10512, %v10879
      %v10881 = vpop.f32.mrb[0].mxu0
      %10882 = vmatprep.mubr.bf16.mxu0 %v10530
      %10883 = vmatmul.mubr.bf16.gmra.mrb[0].mxu0 %v10529
      %v10884 = vpop.f32.mrb[0].mxu0
      %v10885 = vadd.f32 %v10512, %v10884
      %v10886 = vpop.f32.mrb[0].mxu0
      %v10887 = vpop.f32.mrb[0].mxu0
      %v10888 = vadd.f32 %v10512, %v10887
      %v10889 = vpop.f32.mrb[0].mxu0
      %10890 = vmatprep.mubr.bf16.mxu0 %v10535
      %10891 = vmatmul.mubr.bf16.gmra.mrb[0].mxu0 %v10534
      %v10892 = vpop.f32.mrb[0].mxu0
      %v10893 = vadd.f32 %v10512, %v10892
      %v10894 = vpop.f32.mrb[0].mxu0
      %v10895 = vpop.f32.mrb[0].mxu0
      %v10896 = vadd.f32 %v10512, %v10895
      %v10897 = vpop.f32.mrb[0].mxu0
      %10898 = vmatprep.mubr.bf16.mxu0 %v10540
      %10899 = vmatmul.mubr.bf16.gmra.mrb[0].mxu0 %v10539
      %v10900 = vpop.f32.mrb[0].mxu0
      %v10901 = vadd.f32 %v10512, %v10900
      %v10902 = vpop.f32.mrb[0].mxu0
      %v10903 = vpop.f32.mrb[0].mxu0
      %v10904 = vadd.f32 %v10512, %v10903
      %v10905 = vpop.f32.mrb[0].mxu0
      %10906 = vmatprep.mubr.bf16.mxu0 %v10545
      %10907 = vmatmul.mubr.bf16.gmra.mrb[0].mxu0 %v10544
      %v10908 = vpop.f32.mrb[0].mxu0
      %v10909 = vadd.f32 %v10512, %v10908
      %v10910 = vpop.f32.mrb[0].mxu0
      %v10911 = vpop.f32.mrb[0].mxu0
      %v10912 = vadd.f32 %v10512, %v10911
      %v10913 = vpop.f32.mrb[0].mxu0
      %10914 = vmatprep.mubr.bf16.mxu0 %v10550
      %10915 = vmatmul.mubr.bf16.gmra.mrb[0].mxu0 %v10549
      %v10916 = vpop.f32.mrb[0].mxu0
      %v10917 = vadd.f32 %v10512, %v10916
      %v10918 = vpop.f32.mrb[0].mxu0
      %v10919 = vpop.f32.mrb[0].mxu0
      %v10920 = vadd.f32 %v10512, %v10919
      %v10921 = vpop.f32.mrb[0].mxu0
      %10922 = vdwg.mxu0
      %10923 = vmatprep.subr.bf16.mxu0 0
      %10924 = vmatpush1.bf16.msra.mxu0 %v10746
      %10925 = vmatprep.subr.bf16.mxu0 0
      %10926 = vmatpush1.bf16.msra.mxu0 %v10747
      %10927 = vmatprep.subr.bf16.mxu0 0
      %10928 = vmatpush1.bf16.msra.mxu0 %v10748
      %10929 = vmatprep.subr.bf16.mxu0 0
      %10930 = vmatpush1.bf16.msra.mxu0 %v10749
      %10931 = vmatprep.subr.bf16.mxu0 0
      %10932 = vmatpush1.bf16.msra.mxu0 %v10750
      %10933 = vmatprep.subr.bf16.mxu0 0
      %10934 = vmatpush1.bf16.msra.mxu0 %v10751
      %10935 = vmatprep.subr.bf16.mxu0 0
      %10936 = vmatpush1.bf16.msra.mxu0 %v10752
      %10937 = vmatprep.subr.bf16.mxu0 0
      %10938 = vmatpush1.bf16.msra.mxu0 %v10753
      %10939 = vmatprep.subr.bf16.mxu0 0
      %10940 = vmatpush1.bf16.msra.mxu0 %v10754
      %10941 = vmatprep.subr.bf16.mxu0 0
      %10942 = vmatpush1.bf16.msra.mxu0 %v10755
      %10943 = vmatprep.subr.bf16.mxu0 0
      %10944 = vmatpush1.bf16.msra.mxu0 %v10756
      %10945 = vmatprep.subr.bf16.mxu0 0
      %10946 = vmatpush1.bf16.msra.mxu0 %v10757
      %10947 = vmatprep.subr.bf16.mxu0 0
      %10948 = vmatpush1.bf16.msra.mxu0 %v10758
      %10949 = vmatprep.subr.bf16.mxu0 0
      %10950 = vmatpush1.bf16.msra.mxu0 %v10759
      %10951 = vmatprep.subr.bf16.mxu0 0
      %10952 = vmatpush1.bf16.msra.mxu0 %v10760
      %10953 = vmatprep.subr.bf16.mxu0 0
      %10954 = vmatpush1.bf16.msra.mxu0 %v10761
      %10955 = vmatprep.mubr.bf16.mxu0 %v10517
      %10956 = vmatmul.mubr.bf16.gmra.mrb[0].mxu0 %v10516
      %v10957 = vpop.f32.mrb[0].mxu0
      %v10958 = vadd.f32 %v10861, %v10957
      %v10959 = vpop.f32.mrb[0].mxu0
      %v10960 = vpop.f32.mrb[0].mxu0
      %v10961 = vadd.f32 %v10864, %v10960
      %v10962 = vpop.f32.mrb[0].mxu0
      %10963 = vmatprep.mubr.bf16.mxu0 %v10522
      %10964 = vmatmul.mubr.bf16.gmra.mrb[0].mxu0 %v10521
      %v10965 = vpop.f32.mrb[0].mxu0
      %v10966 = vadd.f32 %v10869, %v10965
      %v10967 = vpop.f32.mrb[0].mxu0
      %v10968 = vpop.f32.mrb[0].mxu0
      %v10969 = vadd.f32 %v10872, %v10968
      %v10970 = vpop.f32.mrb[0].mxu0
      %10971 = vmatprep.mubr.bf16.mxu0 %v10527
      %10972 = vmatmul.mubr.bf16.gmra.mrb[0].mxu0 %v10526
      %v10973 = vpop.f32.mrb[0].mxu0
      %v10974 = vadd.f32 %v10877, %v10973
      %v10975 = vpop.f32.mrb[0].mxu0
      %v10976 = vpop.f32.mrb[0].mxu0
      %v10977 = vadd.f32 %v10880, %v10976
      %v10978 = vpop.f32.mrb[0].mxu0
      %10979 = vmatprep.mubr.bf16.mxu0 %v10532
      %10980 = vmatmul.mubr.bf16.gmra.mrb[0].mxu0 %v10531
      %v10981 = vpop.f32.mrb[0].mxu0
      %v10982 = vadd.f32 %v10885, %v10981
      %v10983 = vpop.f32.mrb[0].mxu0
      %v10984 = vpop.f32.mrb[0].mxu0
      %v10985 = vadd.f32 %v10888, %v10984
      %v10986 = vpop.f32.mrb[0].mxu0
      %10987 = vmatprep.mubr.bf16.mxu0 %v10537
      %10988 = vmatmul.mubr.bf16.gmra.mrb[0].mxu0 %v10536
      %v10989 = vpop.f32.mrb[0].mxu0
      %v10990 = vadd.f32 %v10893, %v10989
      %v10991 = vpop.f32.mrb[0].mxu0
      %v10992 = vpop.f32.mrb[0].mxu0
      %v10993 = vadd.f32 %v10896, %v10992
      %v10994 = vpop.f32.mrb[0].mxu0
      %10995 = vmatprep.mubr.bf16.mxu0 %v10542
      %10996 = vmatmul.mubr.bf16.gmra.mrb[0].mxu0 %v10541
      %v10997 = vpop.f32.mrb[0].mxu0
      %v10998 = vadd.f32 %v10901, %v10997
      %v10999 = vpop.f32.mrb[0].mxu0
      %v11000 = vpop.f32.mrb[0].mxu0
      %v11001 = vadd.f32 %v10904, %v11000
      %v11002 = vpop.f32.mrb[0].mxu0
      %11003 = vmatprep.mubr.bf16.mxu0 %v10547
      %11004 = vmatmul.mubr.bf16.gmra.mrb[0].mxu0 %v10546
      %v11005 = vpop.f32.mrb[0].mxu0
      %v11006 = vadd.f32 %v10909, %v11005
      %v11007 = vpop.f32.mrb[0].mxu0
      %v11008 = vpop.f32.mrb[0].mxu0
      %v11009 = vadd.f32 %v10912, %v11008
      %v11010 = vpop.f32.mrb[0].mxu0
      %11011 = vmatprep.mubr.bf16.mxu0 %v10552
      %11012 = vmatmul.mubr.bf16.gmra.mrb[0].mxu0 %v10551
      %v11013 = vpop.f32.mrb[0].mxu0
      %v11014 = vadd.f32 %v10917, %v11013
      %v11015 = vpop.f32.mrb[0].mxu0
      %v11016 = vpop.f32.mrb[0].mxu0
      %v11017 = vadd.f32 %v10920, %v11016
      %v11018 = vpop.f32.mrb[0].mxu0
      %11019 = vdwg.mxu0
      %11020 = vmatprep.subr.bf16.mxu0 0
      %11021 = vmatpush1.bf16.msra.mxu0 %v10762
      %11022 = vmatprep.subr.bf16.mxu0 0
      %11023 = vmatpush1.bf16.msra.mxu0 %v10763
      %11024 = vmatprep.subr.bf16.mxu0 0
      %11025 = vmatpush1.bf16.msra.mxu0 %v10764
      %11026 = vmatprep.subr.bf16.mxu0 0
      %11027 = vmatpush1.bf16.msra.mxu0 %v10765
      %11028 = vmatprep.subr.bf16.mxu0 0
      %11029 = vmatpush1.bf16.msra.mxu0 0
      %11030 = vmatprep.subr.bf16.mxu0 0
      %11031 = vmatpush1.bf16.msra.mxu0 0
      %11032 = vmatprep.subr.bf16.mxu0 0
      %11033 = vmatpush1.bf16.msra.mxu0 0
      %11034 = vmatprep.subr.bf16.mxu0 0
      %11035 = vmatpush1.bf16.msra.mxu0 0
      %11036 = vmatprep.subr.bf16.mxu0 0
      %11037 = vmatpush1.bf16.msra.mxu0 0
      %11038 = vmatprep.subr.bf16.mxu0 0
      %11039 = vmatpush1.bf16.msra.mxu0 0
      %11040 = vmatprep.subr.bf16.mxu0 0
      %11041 = vmatpush1.bf16.msra.mxu0 0
      %11042 = vmatprep.subr.bf16.mxu0 0
      %11043 = vmatpush1.bf16.msra.mxu0 0
      %11044 = vmatprep.subr.bf16.mxu0 0
      %11045 = vmatpush1.bf16.msra.mxu0 0
      %11046 = vmatprep.subr.bf16.mxu0 0
      %11047 = vmatpush1.bf16.msra.mxu0 0
      %11048 = vmatprep.subr.bf16.mxu0 0
      %11049 = vmatpush1.bf16.msra.mxu0 0
      %11050 = vmatprep.subr.bf16.mxu0 0
      %11051 = vmatpush1.bf16.msra.mxu0 0
      %11052 = vmatprep.mubr.bf16.mxu0 0
      %11053 = vmatmul.mubr.bf16.gmra.mrb[0].mxu0 %v10803
      %v11054 = vpop.f32.mrb[0].mxu0
      %v11055 = vadd.f32 %v10958, %v11054
      %v11056 = vpop.f32.mrb[0].mxu0
      %v11057 = vpop.f32.mrb[0].mxu0
      %v11058 = vadd.f32 %v10961, %v11057
      %v11059 = vpop.f32.mrb[0].mxu0
      %11060 = vmatprep.mubr.bf16.mxu0 0
      %11061 = vmatmul.mubr.bf16.gmra.mrb[0].mxu0 %v10806
      %v11062 = vpop.f32.mrb[0].mxu0
      %v11063 = vadd.f32 %v10966, %v11062
      %v11064 = vpop.f32.mrb[0].mxu0
      %v11065 = vpop.f32.mrb[0].mxu0
      %v11066 = vadd.f32 %v10969, %v11065
      %v11067 = vpop.f32.mrb[0].mxu0
      %11068 = vmatprep.mubr.bf16.mxu0 0
      %11069 = vmatmul.mubr.bf16.gmra.mrb[0].mxu0 %v10809
      %v11070 = vpop.f32.mrb[0].mxu0
      %v11071 = vadd.f32 %v10974, %v11070
      %v11072 = vpop.f32.mrb[0].mxu0
      %v11073 = vpop.f32.mrb[0].mxu0
      %v11074 = vadd.f32 %v10977, %v11073
      %v11075 = vpop.f32.mrb[0].mxu0
      %11076 = vmatprep.mubr.bf16.mxu0 0
      %11077 = vmatmul.mubr.bf16.gmra.mrb[0].mxu0 %v10812
      %v11078 = vpop.f32.mrb[0].mxu0
      %v11079 = vadd.f32 %v10982, %v11078
      %v11080 = vpop.f32.mrb[0].mxu0
      %v11081 = vpop.f32.mrb[0].mxu0
      %v11082 = vadd.f32 %v10985, %v11081
      %v11083 = vpop.f32.mrb[0].mxu0
      %11084 = vmatprep.mubr.bf16.mxu0 0
      %11085 = vmatmul.mubr.bf16.gmra.mrb[0].mxu0 %v10815
      %v11086 = vpop.f32.mrb[0].mxu0
      %v11087 = vadd.f32 %v10990, %v11086
      %v11088 = vpop.f32.mrb[0].mxu0
      %v11089 = vpop.f32.mrb[0].mxu0
      %v11090 = vadd.f32 %v10993, %v11089
      %v11091 = vpop.f32.mrb[0].mxu0
      %11092 = vmatprep.mubr.bf16.mxu0 0
      %11093 = vmatmul.mubr.bf16.gmra.mrb[0].mxu0 %v10818
      %v11094 = vpop.f32.mrb[0].mxu0
      %v11095 = vadd.f32 %v10998, %v11094
      %v11096 = vpop.f32.mrb[0].mxu0
      %v11097 = vpop.f32.mrb[0].mxu0
      %v11098 = vadd.f32 %v11001, %v11097
      %v11099 = vpop.f32.mrb[0].mxu0
      %11100 = vmatprep.mubr.bf16.mxu0 0
      %11101 = vmatmul.mubr.bf16.gmra.mrb[0].mxu0 %v10821
      %v11102 = vpop.f32.mrb[0].mxu0
      %v11103 = vadd.f32 %v11006, %v11102
      %v11104 = vpop.f32.mrb[0].mxu0
      %v11105 = vpop.f32.mrb[0].mxu0
      %v11106 = vadd.f32 %v11009, %v11105
      %v11107 = vpop.f32.mrb[0].mxu0
      %11108 = vmatprep.mubr.bf16.mxu0 0
      %11109 = vmatmul.mubr.bf16.gmra.mrb[0].mxu0 %v10824
      %v11110 = vpop.f32.mrb[0].mxu0
      %v11111 = vadd.f32 %v11014, %v11110
      %v11112 = vpop.f32.mrb[0].mxu0
      %v11113 = vpop.f32.mrb[0].mxu0
      %v11114 = vadd.f32 %v11017, %v11113
      %v11115 = vpop.f32.mrb[0].mxu0
      %11116 = vdwg.mxu0
      %v11117 = vmax.f32 %v11055, 0.0
      %v11118 = vmax.f32 %v11058, 0.0
      %v11119 = vmax.f32 %v11063, 0.0
      %v11120 = vmax.f32 %v11066, 0.0
      %v11121 = vmax.f32 %v11071, 0.0
      %v11122 = vmax.f32 %v11074, 0.0
      %v11123 = vmax.f32 %v11079, 0.0
      %v11124 = vmax.f32 %v11082, 0.0
      %v11125 = vmax.f32 %v11087, 0.0
      %v11126 = vmax.f32 %v11090, 0.0
      %v11127 = vmax.f32 %v11095, 0.0
      %v11128 = vmax.f32 %v11098, 0.0
      %v11129 = vmax.f32 %v11103, 0.0
      %v11130 = vmax.f32 %v11106, 0.0
      %v11131 = vmax.f32 %v11111, 0.0
      %v11132 = vmax.f32 %v11114, 0.0
      %v11133 = vsel %vm4880, %v11117, -inf
      %v11134 = vsel %vm4880, %v11118, -inf
      %v11135 = vmax.f32 %v11133, %v11134
      %v11136 = vsel %vm4880, %v11119, -inf
      %v11137 = vsel %vm4880, %v11120, -inf
      %v11138 = vmax.f32 %v11136, %v11137
      %v11139 = vsel %vm4880, %v11121, -inf
      %v11140 = vsel %vm4880, %v11122, -inf
      %v11141 = vmax.f32 %v11139, %v11140
      %v11142 = vsel %vm4880, %v11123, -inf
      %v11143 = vsel %vm4880, %v11124, -inf
      %v11144 = vmax.f32 %v11142, %v11143
      %v11145 = vsel %vm4880, %v11125, -inf
      %v11146 = vsel %vm4880, %v11126, -inf
      %v11147 = vmax.f32 %v11145, %v11146
      %v11148 = vsel %vm4880, %v11127, -inf
      %v11149 = vsel %vm4880, %v11128, -inf
      %v11150 = vmax.f32 %v11148, %v11149
      %v11151 = vsel %vm4880, %v11129, -inf
      %v11152 = vsel %vm4880, %v11130, -inf
      %v11153 = vmax.f32 %v11151, %v11152
      %v11154 = vsel %vm4880, %v11131, -inf
      %v11155 = vsel %vm4880, %v11132, -inf
      %v11156 = vmax.f32 %v11154, %v11155
      %v11165 = vcombine.high %v11135, %v11135
      %v11167 = vunpack.c.l.s4 1983009808
      %v11168 = vunpack.c.0.s8 %v11167
      %v11169 = vlaneseq
      %v11170 = vshrl.u32 %v11169, 7
      %v11171 = vsub.s32 %v11168, %v11170
      %v11172 = vrot.slane %v11135, %v11171
      %v11174 = vunpack.c.l.s4 1983009808
      %v11175 = vunpack.c.0.s8 %v11174
      %v11176 = vlaneseq
      %v11177 = vshrl.u32 %v11176, 7
      %v11178 = vsub.s32 %v11175, %v11177
      %v11179 = vrot.slane %v11165, %v11178
      %v11180 = vcombine.high %v11172, %v11172
      %v11181 = vcombine.high %v11179, %v11179
      %v11182 = vcombine.high %v11138, %v11138
      %v11184 = vunpack.c.l.s4 1983009808
      %v11185 = vunpack.c.0.s8 %v11184
      %v11186 = vlaneseq
      %v11187 = vshrl.u32 %v11186, 7
      %v11188 = vsub.s32 %v11185, %v11187
      %v11189 = vrot.slane %v11138, %v11188
      %v11191 = vunpack.c.l.s4 1983009808
      %v11192 = vunpack.c.0.s8 %v11191
      %v11193 = vlaneseq
      %v11194 = vshrl.u32 %v11193, 7
      %v11195 = vsub.s32 %v11192, %v11194
      %v11196 = vrot.slane %v11182, %v11195
      %v11197 = vcombine.high %v11189, %v11189
      %v11198 = vcombine.high %v11196, %v11196
      %v11199 = vcombine.high %v11141, %v11141
      %v11201 = vunpack.c.l.s4 1983009808
      %v11202 = vunpack.c.0.s8 %v11201
      %v11203 = vlaneseq
      %v11204 = vshrl.u32 %v11203, 7
      %v11205 = vsub.s32 %v11202, %v11204
      %v11206 = vrot.slane %v11141, %v11205
      %v11208 = vunpack.c.l.s4 1983009808
      %v11209 = vunpack.c.0.s8 %v11208
      %v11210 = vlaneseq
      %v11211 = vshrl.u32 %v11210, 7
      %v11212 = vsub.s32 %v11209, %v11211
      %v11213 = vrot.slane %v11199, %v11212
      %v11214 = vcombine.high %v11206, %v11206
      %v11215 = vcombine.high %v11213, %v11213
      %v11216 = vcombine.high %v11144, %v11144
      %v11218 = vunpack.c.l.s4 1983009808
      %v11219 = vunpack.c.0.s8 %v11218
      %v11220 = vlaneseq
      %v11221 = vshrl.u32 %v11220, 7
      %v11222 = vsub.s32 %v11219, %v11221
      %v11223 = vrot.slane %v11144, %v11222
      %v11225 = vunpack.c.l.s4 1983009808
      %v11226 = vunpack.c.0.s8 %v11225
      %v11227 = vlaneseq
      %v11228 = vshrl.u32 %v11227, 7
      %v11229 = vsub.s32 %v11226, %v11228
      %v11230 = vrot.slane %v11216, %v11229
      %v11231 = vcombine.high %v11223, %v11223
      %v11232 = vcombine.high %v11230, %v11230
      %v11233 = vcombine.high %v11147, %v11147
      %v11235 = vunpack.c.l.s4 1983009808
      %v11236 = vunpack.c.0.s8 %v11235
      %v11237 = vlaneseq
      %v11238 = vshrl.u32 %v11237, 7
      %v11239 = vsub.s32 %v11236, %v11238
      %v11240 = vrot.slane %v11147, %v11239
      %v11242 = vunpack.c.l.s4 1983009808
      %v11243 = vunpack.c.0.s8 %v11242
      %v11244 = vlaneseq
      %v11245 = vshrl.u32 %v11244, 7
      %v11246 = vsub.s32 %v11243, %v11245
      %v11247 = vrot.slane %v11233, %v11246
      %v11248 = vcombine.high %v11240, %v11240
      %v11249 = vcombine.high %v11247, %v11247
      %v11250 = vcombine.high %v11150, %v11150
      %v11252 = vunpack.c.l.s4 1983009808
      %v11253 = vunpack.c.0.s8 %v11252
      %v11254 = vlaneseq
      %v11255 = vshrl.u32 %v11254, 7
      %v11256 = vsub.s32 %v11253, %v11255
      %v11257 = vrot.slane %v11150, %v11256
      %v11259 = vunpack.c.l.s4 1983009808
      %v11260 = vunpack.c.0.s8 %v11259
      %v11261 = vlaneseq
      %v11262 = vshrl.u32 %v11261, 7
      %v11263 = vsub.s32 %v11260, %v11262
      %v11264 = vrot.slane %v11250, %v11263
      %v11265 = vcombine.high %v11257, %v11257
      %v11266 = vcombine.high %v11264, %v11264
      %v11267 = vcombine.high %v11153, %v11153
      %v11269 = vunpack.c.l.s4 1983009808
      %v11270 = vunpack.c.0.s8 %v11269
      %v11271 = vlaneseq
      %v11272 = vshrl.u32 %v11271, 7
      %v11273 = vsub.s32 %v11270, %v11272
      %v11274 = vrot.slane %v11153, %v11273
      %v11276 = vunpack.c.l.s4 1983009808
      %v11277 = vunpack.c.0.s8 %v11276
      %v11278 = vlaneseq
      %v11279 = vshrl.u32 %v11278, 7
      %v11280 = vsub.s32 %v11277, %v11279
      %v11281 = vrot.slane %v11267, %v11280
      %v11282 = vcombine.high %v11274, %v11274
      %v11283 = vcombine.high %v11281, %v11281
      %v11284 = vcombine.high %v11156, %v11156
      %v11286 = vunpack.c.l.s4 1983009808
      %v11287 = vunpack.c.0.s8 %v11286
      %v11288 = vlaneseq
      %v11289 = vshrl.u32 %v11288, 7
      %v11290 = vsub.s32 %v11287, %v11289
      %v11291 = vrot.slane %v11156, %v11290
      %v11293 = vunpack.c.l.s4 1983009808
      %v11294 = vunpack.c.0.s8 %v11293
      %v11295 = vlaneseq
      %v11296 = vshrl.u32 %v11295, 7
      %v11297 = vsub.s32 %v11294, %v11296
      %v11298 = vrot.slane %v11284, %v11297
      %v11299 = vcombine.high %v11291, %v11291
      %v11300 = vcombine.high %v11298, %v11298
      %v11333 = vsel %vm9535, %v11172, -inf
      %v11334 = vrot.slane %v11333, 4
      %v11335 = vmax.f32 %v11333, %v11334
      %v11336 = vrot.slane %v11335, 2
      %v11337 = vmax.f32 %v11335, %v11336
      %v11338 = vrot.slane %v11337, 1
      %v11339 = vmax.f32 %v11337, %v11338
      %v11340 = vsel %vm9535, %v11180, -inf
      %v11341 = vrot.slane %v11340, 4
      %v11342 = vmax.f32 %v11340, %v11341
      %v11343 = vrot.slane %v11342, 2
      %v11344 = vmax.f32 %v11342, %v11343
      %v11345 = vrot.slane %v11344, 1
      %v11346 = vmax.f32 %v11344, %v11345
      %v11347 = vsel %vm9535, %v11179, -inf
      %v11348 = vrot.slane %v11347, 4
      %v11349 = vmax.f32 %v11347, %v11348
      %v11350 = vrot.slane %v11349, 2
      %v11351 = vmax.f32 %v11349, %v11350
      %v11352 = vrot.slane %v11351, 1
      %v11353 = vmax.f32 %v11351, %v11352
      %v11354 = vsel %vm9535, %v11181, -inf
      %v11355 = vrot.slane %v11354, 4
      %v11356 = vmax.f32 %v11354, %v11355
      %v11357 = vrot.slane %v11356, 2
      %v11358 = vmax.f32 %v11356, %v11357
      %v11359 = vrot.slane %v11358, 1
      %v11360 = vmax.f32 %v11358, %v11359
      %v11361 = vsel %vm9535, %v11189, -inf
      %v11362 = vrot.slane %v11361, 4
      %v11363 = vmax.f32 %v11361, %v11362
      %v11364 = vrot.slane %v11363, 2
      %v11365 = vmax.f32 %v11363, %v11364
      %v11366 = vrot.slane %v11365, 1
      %v11367 = vmax.f32 %v11365, %v11366
      %v11368 = vsel %vm9535, %v11197, -inf
      %v11369 = vrot.slane %v11368, 4
      %v11370 = vmax.f32 %v11368, %v11369
      %v11371 = vrot.slane %v11370, 2
      %v11372 = vmax.f32 %v11370, %v11371
      %v11373 = vrot.slane %v11372, 1
      %v11374 = vmax.f32 %v11372, %v11373
      %v11375 = vsel %vm9535, %v11196, -inf
      %v11376 = vrot.slane %v11375, 4
      %v11377 = vmax.f32 %v11375, %v11376
      %v11378 = vrot.slane %v11377, 2
      %v11379 = vmax.f32 %v11377, %v11378
      %v11380 = vrot.slane %v11379, 1
      %v11381 = vmax.f32 %v11379, %v11380
      %v11382 = vsel %vm9535, %v11198, -inf
      %v11383 = vrot.slane %v11382, 4
      %v11384 = vmax.f32 %v11382, %v11383
      %v11385 = vrot.slane %v11384, 2
      %v11386 = vmax.f32 %v11384, %v11385
      %v11387 = vrot.slane %v11386, 1
      %v11388 = vmax.f32 %v11386, %v11387
      %v11389 = vsel %vm9535, %v11206, -inf
      %v11390 = vrot.slane %v11389, 4
      %v11391 = vmax.f32 %v11389, %v11390
      %v11392 = vrot.slane %v11391, 2
      %v11393 = vmax.f32 %v11391, %v11392
      %v11394 = vrot.slane %v11393, 1
      %v11395 = vmax.f32 %v11393, %v11394
      %v11396 = vsel %vm9535, %v11214, -inf
      %v11397 = vrot.slane %v11396, 4
      %v11398 = vmax.f32 %v11396, %v11397
      %v11399 = vrot.slane %v11398, 2
      %v11400 = vmax.f32 %v11398, %v11399
      %v11401 = vrot.slane %v11400, 1
      %v11402 = vmax.f32 %v11400, %v11401
      %v11403 = vsel %vm9535, %v11213, -inf
      %v11404 = vrot.slane %v11403, 4
      %v11405 = vmax.f32 %v11403, %v11404
      %v11406 = vrot.slane %v11405, 2
      %v11407 = vmax.f32 %v11405, %v11406
      %v11408 = vrot.slane %v11407, 1
      %v11409 = vmax.f32 %v11407, %v11408
      %v11410 = vsel %vm9535, %v11215, -inf
      %v11411 = vrot.slane %v11410, 4
      %v11412 = vmax.f32 %v11410, %v11411
      %v11413 = vrot.slane %v11412, 2
      %v11414 = vmax.f32 %v11412, %v11413
      %v11415 = vrot.slane %v11414, 1
      %v11416 = vmax.f32 %v11414, %v11415
      %v11417 = vsel %vm9535, %v11223, -inf
      %v11418 = vrot.slane %v11417, 4
      %v11419 = vmax.f32 %v11417, %v11418
      %v11420 = vrot.slane %v11419, 2
      %v11421 = vmax.f32 %v11419, %v11420
      %v11422 = vrot.slane %v11421, 1
      %v11423 = vmax.f32 %v11421, %v11422
      %v11424 = vsel %vm9535, %v11231, -inf
      %v11425 = vrot.slane %v11424, 4
      %v11426 = vmax.f32 %v11424, %v11425
      %v11427 = vrot.slane %v11426, 2
      %v11428 = vmax.f32 %v11426, %v11427
      %v11429 = vrot.slane %v11428, 1
      %v11430 = vmax.f32 %v11428, %v11429
      %v11431 = vsel %vm9535, %v11230, -inf
      %v11432 = vrot.slane %v11431, 4
      %v11433 = vmax.f32 %v11431, %v11432
      %v11434 = vrot.slane %v11433, 2
      %v11435 = vmax.f32 %v11433, %v11434
      %v11436 = vrot.slane %v11435, 1
      %v11437 = vmax.f32 %v11435, %v11436
      %v11438 = vsel %vm9535, %v11232, -inf
      %v11439 = vrot.slane %v11438, 4
      %v11440 = vmax.f32 %v11438, %v11439
      %v11441 = vrot.slane %v11440, 2
      %v11442 = vmax.f32 %v11440, %v11441
      %v11443 = vrot.slane %v11442, 1
      %v11444 = vmax.f32 %v11442, %v11443
      %v11445 = vsel %vm9535, %v11240, -inf
      %v11446 = vrot.slane %v11445, 4
      %v11447 = vmax.f32 %v11445, %v11446
      %v11448 = vrot.slane %v11447, 2
      %v11449 = vmax.f32 %v11447, %v11448
      %v11450 = vrot.slane %v11449, 1
      %v11451 = vmax.f32 %v11449, %v11450
      %v11452 = vsel %vm9535, %v11248, -inf
      %v11453 = vrot.slane %v11452, 4
      %v11454 = vmax.f32 %v11452, %v11453
      %v11455 = vrot.slane %v11454, 2
      %v11456 = vmax.f32 %v11454, %v11455
      %v11457 = vrot.slane %v11456, 1
      %v11458 = vmax.f32 %v11456, %v11457
      %v11459 = vsel %vm9535, %v11247, -inf
      %v11460 = vrot.slane %v11459, 4
      %v11461 = vmax.f32 %v11459, %v11460
      %v11462 = vrot.slane %v11461, 2
      %v11463 = vmax.f32 %v11461, %v11462
      %v11464 = vrot.slane %v11463, 1
      %v11465 = vmax.f32 %v11463, %v11464
      %v11466 = vsel %vm9535, %v11249, -inf
      %v11467 = vrot.slane %v11466, 4
      %v11468 = vmax.f32 %v11466, %v11467
      %v11469 = vrot.slane %v11468, 2
      %v11470 = vmax.f32 %v11468, %v11469
      %v11471 = vrot.slane %v11470, 1
      %v11472 = vmax.f32 %v11470, %v11471
      %v11473 = vsel %vm9535, %v11257, -inf
      %v11474 = vrot.slane %v11473, 4
      %v11475 = vmax.f32 %v11473, %v11474
      %v11476 = vrot.slane %v11475, 2
      %v11477 = vmax.f32 %v11475, %v11476
      %v11478 = vrot.slane %v11477, 1
      %v11479 = vmax.f32 %v11477, %v11478
      %v11480 = vsel %vm9535, %v11265, -inf
      %v11481 = vrot.slane %v11480, 4
      %v11482 = vmax.f32 %v11480, %v11481
      %v11483 = vrot.slane %v11482, 2
      %v11484 = vmax.f32 %v11482, %v11483
      %v11485 = vrot.slane %v11484, 1
      %v11486 = vmax.f32 %v11484, %v11485
      %v11487 = vsel %vm9535, %v11264, -inf
      %v11488 = vrot.slane %v11487, 4
      %v11489 = vmax.f32 %v11487, %v11488
      %v11490 = vrot.slane %v11489, 2
      %v11491 = vmax.f32 %v11489, %v11490
      %v11492 = vrot.slane %v11491, 1
      %v11493 = vmax.f32 %v11491, %v11492
      %v11494 = vsel %vm9535, %v11266, -inf
      %v11495 = vrot.slane %v11494, 4
      %v11496 = vmax.f32 %v11494, %v11495
      %v11497 = vrot.slane %v11496, 2
      %v11498 = vmax.f32 %v11496, %v11497
      %v11499 = vrot.slane %v11498, 1
      %v11500 = vmax.f32 %v11498, %v11499
      %v11501 = vsel %vm9535, %v11274, -inf
      %v11502 = vrot.slane %v11501, 4
      %v11503 = vmax.f32 %v11501, %v11502
      %v11504 = vrot.slane %v11503, 2
      %v11505 = vmax.f32 %v11503, %v11504
      %v11506 = vrot.slane %v11505, 1
      %v11507 = vmax.f32 %v11505, %v11506
      %v11508 = vsel %vm9535, %v11282, -inf
      %v11509 = vrot.slane %v11508, 4
      %v11510 = vmax.f32 %v11508, %v11509
      %v11511 = vrot.slane %v11510, 2
      %v11512 = vmax.f32 %v11510, %v11511
      %v11513 = vrot.slane %v11512, 1
      %v11514 = vmax.f32 %v11512, %v11513
      %v11515 = vsel %vm9535, %v11281, -inf
      %v11516 = vrot.slane %v11515, 4
      %v11517 = vmax.f32 %v11515, %v11516
      %v11518 = vrot.slane %v11517, 2
      %v11519 = vmax.f32 %v11517, %v11518
      %v11520 = vrot.slane %v11519, 1
      %v11521 = vmax.f32 %v11519, %v11520
      %v11522 = vsel %vm9535, %v11283, -inf
      %v11523 = vrot.slane %v11522, 4
      %v11524 = vmax.f32 %v11522, %v11523
      %v11525 = vrot.slane %v11524, 2
      %v11526 = vmax.f32 %v11524, %v11525
      %v11527 = vrot.slane %v11526, 1
      %v11528 = vmax.f32 %v11526, %v11527
      %v11529 = vsel %vm9535, %v11291, -inf
      %v11530 = vrot.slane %v11529, 4
      %v11531 = vmax.f32 %v11529, %v11530
      %v11532 = vrot.slane %v11531, 2
      %v11533 = vmax.f32 %v11531, %v11532
      %v11534 = vrot.slane %v11533, 1
      %v11535 = vmax.f32 %v11533, %v11534
      %v11536 = vsel %vm9535, %v11299, -inf
      %v11537 = vrot.slane %v11536, 4
      %v11538 = vmax.f32 %v11536, %v11537
      %v11539 = vrot.slane %v11538, 2
      %v11540 = vmax.f32 %v11538, %v11539
      %v11541 = vrot.slane %v11540, 1
      %v11542 = vmax.f32 %v11540, %v11541
      %v11543 = vsel %vm9535, %v11298, -inf
      %v11544 = vrot.slane %v11543, 4
      %v11545 = vmax.f32 %v11543, %v11544
      %v11546 = vrot.slane %v11545, 2
      %v11547 = vmax.f32 %v11545, %v11546
      %v11548 = vrot.slane %v11547, 1
      %v11549 = vmax.f32 %v11547, %v11548
      %v11550 = vsel %vm9535, %v11300, -inf
      %v11551 = vrot.slane %v11550, 4
      %v11552 = vmax.f32 %v11550, %v11551
      %v11553 = vrot.slane %v11552, 2
      %v11554 = vmax.f32 %v11552, %v11553
      %v11555 = vrot.slane %v11554, 1
      %v11556 = vmax.f32 %v11554, %v11555
      %v11573 = vsel %vm8060, %v11346, %v11339
      %v11574 = vsel %vm8062, %v11353, %v11573
      %v11575 = vsel %vm8064, %v11360, %v11574
      %v11576 = vsel %vm8066, %v11367, %v11575
      %v11577 = vsel %vm8068, %v11374, %v11576
      %v11578 = vsel %vm8070, %v11381, %v11577
      %v11579 = vsel %vm8072, %v11388, %v11578
      %v11580 = vsel %vm8060, %v11402, %v11395
      %v11581 = vsel %vm8062, %v11409, %v11580
      %v11582 = vsel %vm8064, %v11416, %v11581
      %v11583 = vsel %vm8066, %v11423, %v11582
      %v11584 = vsel %vm8068, %v11430, %v11583
      %v11585 = vsel %vm8070, %v11437, %v11584
      %v11586 = vsel %vm8072, %v11444, %v11585
      %11589 = vxpose.xlu0.b32.start [1/16] %v11579, 128
      %11590 = vxpose.xlu0.b32.cont [2/16] %v11586, 128
      %11591 = vxpose.xlu0.b32.cont [3/16] 0.0, 128
      %11592 = vxpose.xlu0.b32.cont [4/16] 0.0, 128
      %11593 = vxpose.xlu0.b32.cont [5/16] 0.0, 128
      %11594 = vxpose.xlu0.b32.cont [6/16] 0.0, 128
      %11595 = vxpose.xlu0.b32.cont [7/16] 0.0, 128
      %11596 = vxpose.xlu0.b32.cont [8/16] 0.0, 128
      %11597 = vxpose.xlu0.b32.cont [9/16] 0.0, 128
      %11598 = vxpose.xlu0.b32.cont [10/16] 0.0, 128
      %11599 = vxpose.xlu0.b32.cont [11/16] 0.0, 128
      %11600 = vxpose.xlu0.b32.cont [12/16] 0.0, 128
      %11601 = vxpose.xlu0.b32.cont [13/16] 0.0, 128
      %11602 = vxpose.xlu0.b32.cont [14/16] 0.0, 128
      %11603 = vxpose.xlu0.b32.cont [15/16] 0.0, 128
      %11604 = vxpose.xlu0.b32.end [16/16] 0.0, 128
      %v11605 = vpop.trf.xlu0
      %v11606 = vpop.trf.xlu0
      %v11607 = vpop.trf.xlu0
      %v11608 = vpop.trf.xlu0
      %v11609 = vpop.trf.xlu0
      %v11610 = vpop.trf.xlu0
      %v11611 = vpop.trf.xlu0
      %v11612 = vpop.trf.xlu0
      %v11613 = vpop.trf.xlu0
      %v11614 = vpop.trf.xlu0
      %v11615 = vpop.trf.xlu0
      %v11616 = vpop.trf.xlu0
      %v11617 = vpop.trf.xlu0
      %v11618 = vpop.trf.xlu0
      %v11619 = vpop.trf.xlu0
      %v11620 = vpop.trf.xlu0
      %vm11621 = vcmask 130048
      %11622 = vst.msk [vmem:[%s339] sm:$0xff] %vm11621, %v11605
      %11623 = vst.msk [vmem:[%s339 + $0x8] sm:$0xff] %vm11621, %v11606
      %11624 = vst.msk [vmem:[%s339 + $0x10] sm:$0xff] %vm11621, %v11607
      %11625 = vst.msk [vmem:[%s339 + $0x18] sm:$0xff] %vm11621, %v11608
      %11626 = vst.msk [vmem:[%s339 + $0x20] sm:$0xff] %vm11621, %v11609
      %11627 = vst.msk [vmem:[%s339 + $0x28] sm:$0xff] %vm11621, %v11610
      %11628 = vst.msk [vmem:[%s339 + $0x30] sm:$0xff] %vm11621, %v11611
      %11629 = vst.msk [vmem:[%s339 + $0x38] sm:$0xff] %vm11621, %v11612
      %v11646 = vsel %vm8060, %v11458, %v11451
      %v11647 = vsel %vm8062, %v11465, %v11646
      %v11648 = vsel %vm8064, %v11472, %v11647
      %v11649 = vsel %vm8066, %v11479, %v11648
      %v11650 = vsel %vm8068, %v11486, %v11649
      %v11651 = vsel %vm8070, %v11493, %v11650
      %v11652 = vsel %vm8072, %v11500, %v11651
      %v11653 = vsel %vm8060, %v11514, %v11507
      %v11654 = vsel %vm8062, %v11521, %v11653
      %v11655 = vsel %vm8064, %v11528, %v11654
      %v11656 = vsel %vm8066, %v11535, %v11655
      %v11657 = vsel %vm8068, %v11542, %v11656
      %v11658 = vsel %vm8070, %v11549, %v11657
      %v11659 = vsel %vm8072, %v11556, %v11658
      %11662 = vxpose.xlu0.b32.start [1/16] %v11652, 128
      %11663 = vxpose.xlu0.b32.cont [2/16] %v11659, 128
      %11664 = vxpose.xlu0.b32.cont [3/16] 0.0, 128
      %11665 = vxpose.xlu0.b32.cont [4/16] 0.0, 128
      %11666 = vxpose.xlu0.b32.cont [5/16] 0.0, 128
      %11667 = vxpose.xlu0.b32.cont [6/16] 0.0, 128
      %11668 = vxpose.xlu0.b32.cont [7/16] 0.0, 128
      %11669 = vxpose.xlu0.b32.cont [8/16] 0.0, 128
      %11670 = vxpose.xlu0.b32.cont [9/16] 0.0, 128
      %11671 = vxpose.xlu0.b32.cont [10/16] 0.0, 128
      %11672 = vxpose.xlu0.b32.cont [11/16] 0.0, 128
      %11673 = vxpose.xlu0.b32.cont [12/16] 0.0, 128
      %11674 = vxpose.xlu0.b32.cont [13/16] 0.0, 128
      %11675 = vxpose.xlu0.b32.cont [14/16] 0.0, 128
      %11676 = vxpose.xlu0.b32.cont [15/16] 0.0, 128
      %11677 = vxpose.xlu0.b32.end [16/16] 0.0, 128
      %v11678 = vpop.trf.xlu0
      %v11679 = vpop.trf.xlu0
      %v11680 = vpop.trf.xlu0
      %v11681 = vpop.trf.xlu0
      %v11682 = vpop.trf.xlu0
      %v11683 = vpop.trf.xlu0
      %v11684 = vpop.trf.xlu0
      %v11685 = vpop.trf.xlu0
      %v11686 = vpop.trf.xlu0
      %v11687 = vpop.trf.xlu0
      %v11688 = vpop.trf.xlu0
      %v11689 = vpop.trf.xlu0
      %v11690 = vpop.trf.xlu0
      %v11691 = vpop.trf.xlu0
      %v11692 = vpop.trf.xlu0
      %v11693 = vpop.trf.xlu0
      %s11694 = scalar_lea.vmem %s339, 64
      %11695 = vst.msk [vmem:[%s11694] sm:$0xff] %vm11621, %v11678
      %11696 = vst.msk [vmem:[%s11694 + $0x8] sm:$0xff] %vm11621, %v11679
      %11697 = vst.msk [vmem:[%s11694 + $0x10] sm:$0xff] %vm11621, %v11680
      %11698 = vst.msk [vmem:[%s11694 + $0x18] sm:$0xff] %vm11621, %v11681
      %11699 = vst.msk [vmem:[%s11694 + $0x20] sm:$0xff] %vm11621, %v11682
      %11700 = vst.msk [vmem:[%s11694 + $0x28] sm:$0xff] %vm11621, %v11683
      %11701 = vst.msk [vmem:[%s11694 + $0x30] sm:$0xff] %vm11621, %v11684
      %11702 = vst.msk [vmem:[%s11694 + $0x38] sm:$0xff] %vm11621, %v11685
      %s11703 = smul.u32 2, %s20
      %p11704 = scmp.lt.s32.totalorder %s11703, 3
      %s11705 = scalar_select %p11704, %s11703, 3
      %s11706 = smul.addr %s11705, 8
      %s11707 = smul.addr %s11706, 8
      %s11708 = scalar_lea.vmem %s9, %s11707
      // Predicated region
      $region57: #{trunk_simple_forward.1} parent=55 // pred_check
        %p11709 = pneg %p232
      $region58: #{trunk_simple_forward.1} parent=55 // pred_check_branch
        %11711 = sbr.rel (%p11709) target = $region60
      $region59: #{trunk_simple_forward.1} parent=55 // pred_region
        %s11712 = smul.u32 2, %s20
      $region60: #{trunk_simple_forward.1} parent=55 // pred_fallthru
        _
    $region56: #{trunk_simple_forward.1} parent=5 // pred_fallthru
      _
    %p11713 = scmp.le.s32.totalorder 2, %s15
    // Predicated region
    $region61: #{trunk_simple_forward.1} parent=5 // pred_check
      %p11714 = pneg %p11713
    $region62: #{trunk_simple_forward.1} parent=5 // pred_check_branch
      %11716 = sbr.rel (%p11714) target = $region64
    $region63: #{trunk_simple_forward.1} parent=5 // pred_region
      %s11717 = ssub.s32 %s15, 2
      // Predicated region
      $region65: #{trunk_simple_forward.1} parent=63 // pred_check
        %p11718 = pneg %p238
      $region66: #{trunk_simple_forward.1} parent=63 // pred_check_branch
        %11720 = sbr.rel (%p11718) target = $region68
      $region67: #{trunk_simple_forward.1} parent=63 // pred_region
        %s11721 = smul.u32 2, %s21
        %p11722 = scmp.lt.s32.totalorder %s11721, 3
        %s11723 = scalar_select %p11722, %s11721, 3
        %s11724 = smul.addr %s11723, 8
        %s11725 = smul.addr %s11724, 8
        %s11726 = scalar_lea.vmem %s9, %s11725
      $region68: #{trunk_simple_forward.1} parent=63 // pred_fallthru
        _
    $region64: #{trunk_simple_forward.1} parent=5 // pred_fallthru
      _
  $region6: #{trunk_simple_forward.1} parent=0 // loop_footer
    %s19 = sadd.s32 1, %s15
  $region7: #{trunk_simple_forward.1} parent=0 // loop_footer_branch
    %14 = sbr.rel target = $region3
  $region8: #{trunk_simple_forward.1} parent=0 // loop_exit
    _

</llo_original>
